<compile_context>
chip_gen: v7x
topology: tpu7x:2x2x1
jax: 0.10.0
libtpu: 0.0.40
codegen_flags: <defaults>
</compile_context>

<pallas_src>
import functools
import math

import jax
import jax.numpy as jnp
from jax import lax
from jax.experimental import pallas as pl
from jax.experimental.pallas import tpu as pltpu

G = 128                                 # per-gate / per-channel padded lane width
_VMEM_LIMIT = 32 * 1024 * 1024          # explicit scoped-VMEM budget (fits v7x)


def _round_up(x, m):
    return (x + m - 1) // m * m


def _pick_rows(M, row_bytes, target_bytes=4 << 20, cap=4096):
    """Row-tile size: whole array when it fits, else ~4 MiB blocks."""
    tm = max(8, min(cap, (target_bytes // max(row_bytes, 1)) // 8 * 8))
    if M <= tm:
        return _round_up(M, 8)
    return tm


# ----------------------------------------------------------------------------
# Pallas kernels
# ----------------------------------------------------------------------------

def _conv_pool_kernel(x_ref, w_ref, b_ref, o_ref):
    """Fused conv-as-matmul + 2x2 max-pool + ReLU.

    x_ref : (tm, 4K)   one row per pooling window; the four window members'
            im2col patches are concatenated along the feature axis.
    w_ref : (4K, 4G)   block-diagonal (4 copies of the (K, G) conv matrix),
            so column block q holds the conv output of window member q.
    Epilogue: max over the four 128-lane column blocks, + bias, ReLU.
    """
    y = jnp.dot(x_ref[...].astype(jnp.bfloat16), w_ref[...],
                preferred_element_type=jnp.float32)
    m = jnp.maximum(jnp.maximum(y[:, 0 * G:1 * G], y[:, 1 * G:2 * G]),
                    jnp.maximum(y[:, 2 * G:3 * G], y[:, 3 * G:4 * G]))
    o_ref[...] = jnp.maximum(m + b_ref[...], 0.0).astype(o_ref.dtype)


def conv_pool(patches, w4, b):
    """patches: (M, 4K), w4: (4K, 4G) bf16, b: (1, G) f32 -> (M, G) bf16."""
    M, K4 = patches.shape
    tm = _pick_rows(M, K4 * patches.dtype.itemsize)
    Mp = _round_up(M, tm)
    if Mp != M:
        patches = jnp.pad(patches, ((0, Mp - M), (0, 0)))
    out = pl.pallas_call(
        _conv_pool_kernel,
        out_shape=jax.ShapeDtypeStruct((Mp, G), jnp.bfloat16),
        grid=(Mp // tm,),
        in_specs=[
            pl.BlockSpec((tm, K4), lambda i: (i, 0)),
            pl.BlockSpec((K4, 4 * G), lambda i: (0, 0)),
            pl.BlockSpec((1, G), lambda i: (0, 0)),
        ],
        out_specs=pl.BlockSpec((tm, G), lambda i: (i, 0)),
        compiler_params=pltpu.CompilerParams(
            dimension_semantics=("parallel",),
            vmem_limit_bytes=_VMEM_LIMIT),
    )(patches, w4, b)
    return out[:M] if Mp != M else out


def _down_gi_kernel(x_ref, wd_ref, bd_ref, wi_ref, bi_ref, o_ref):
    """Fused fc_down (Linear + ReLU) and GRU layer-0 input projection."""
    z = jnp.dot(x_ref[...].astype(jnp.bfloat16), wd_ref[...],
                preferred_element_type=jnp.float32)
    z = jnp.maximum(z + bd_ref[...], 0.0)
    o_ref[...] = jnp.dot(z.astype(jnp.bfloat16), wi_ref[...],
                         preferred_element_type=jnp.float32) + bi_ref[...]


def down_gi(feat, p):
    """feat: (M, 2048) bf16 -> gi0: (M, 3G) f32."""
    M, K = feat.shape
    tm = _pick_rows(M, K * feat.dtype.itemsize)
    Mp = _round_up(M, tm)
    if Mp != M:
        feat = jnp.pad(feat, ((0, Mp - M), (0, 0)))
    out = pl.pallas_call(
        _down_gi_kernel,
        out_shape=jax.ShapeDtypeStruct((Mp, 3 * G), jnp.float32),
        grid=(Mp // tm,),
        in_specs=[
            pl.BlockSpec((tm, K), lambda i: (i, 0)),
            pl.BlockSpec((K, G), lambda i: (0, 0)),
            pl.BlockSpec((1, G), lambda i: (0, 0)),
            pl.BlockSpec((G, 3 * G), lambda i: (0, 0)),
            pl.BlockSpec((1, 3 * G), lambda i: (0, 0)),
        ],
        out_specs=pl.BlockSpec((tm, 3 * G), lambda i: (i, 0)),
        compiler_params=pltpu.CompilerParams(
            dimension_semantics=("parallel",),
            vmem_limit_bytes=_VMEM_LIMIT),
    )(feat, p["w_down"], p["b_down"], p["wih0p"], p["bih0p"])
    return out[:M] if Mp != M else out


def _gru_kernel(gi_ref, h0_ref, whh0_ref, bhh0_ref, w1_ref, b1_ref,
                wr_ref, br_ref, y_ref, hn_ref):
    """Batched 2-layer GRU over T steps + fused fc_rnn (Linear + ReLU).

    gi_ref : (T, Bb, 3G) precomputed layer-0 input projection (per-gate
             128-lane blocks [r | z | n]).
    h0_ref : (2, Bb, G) initial hidden states (padded lanes / rows are zero).
    Per step: (Bb,G)@(G,3G) for layer-0 hh, two (Bb,G)@(G,4G) for the fused
    layer-1 gates (columns [r | z | n_ih | n_hh]) and (Bb,G)@(G,G) + ReLU for
    fc_rnn.  All matmul operands are bf16 (f32 accumulate); gate math is f32.
    """
    whh0 = whh0_ref[...]
    bhh0 = bhh0_ref[...]
    w1 = w1_ref[...]
    w1a = w1[:G]            # rows for the layer-1 input (= layer-0 output)
    w1b = w1[G:]            # rows for the layer-1 hidden state
    b1 = b1_ref[...]
    wr = wr_ref[...]
    br = br_ref[...]
    T = y_ref.shape[0]

    def step(t, carry):
        h0, h1 = carry                                     # (Bb, G) f32
        gi = gi_ref[t]                                     # (Bb, 3G) f32

        gh = jnp.dot(h0.astype(jnp.bfloat16), whh0,
                     preferred_element_type=jnp.float32) + bhh0
        r0 = jax.nn.sigmoid(gi[:, :G] + gh[:, :G])
        u0 = jax.nn.sigmoid(gi[:, G:2 * G] + gh[:, G:2 * G])
        n0 = jnp.tanh(gi[:, 2 * G:] + r0 * gh[:, 2 * G:])
        h0n = (1.0 - u0) * n0 + u0 * h0

        g1 = (jnp.dot(h0n.astype(jnp.bfloat16), w1a,
                      preferred_element_type=jnp.float32)
              + jnp.dot(h1.astype(jnp.bfloat16), w1b,
                        preferred_element_type=jnp.float32) + b1)
        r1 = jax.nn.sigmoid(g1[:, :G])
        u1 = jax.nn.sigmoid(g1[:, G:2 * G])
        n1 = jnp.tanh(g1[:, 2 * G:3 * G] + r1 * g1[:, 3 * G:])
        h1n = (1.0 - u1) * n1 + u1 * h1

        # fused fc_rnn (Dropout is an eval-mode identity)
        yt = jnp.dot(h1n.astype(jnp.bfloat16), wr,
                     preferred_element_type=jnp.float32) + br
        y_ref[t] = jnp.maximum(yt, 0.0)
        return (h0n, h1n)

    hf0, hf1 = lax.fori_loop(0, T, step, (h0_ref[0], h0_ref[1]), unroll=True)
    hn_ref[0] = hf0
    hn_ref[1] = hf1


def gru_forward(gi0, h_init, p, nblk):
    """gi0: (T, Bp, 3G) f32, h_init: (2, Bp, G) -> y: (T, Bp, G), hn: (2, Bp, G)."""
    T, Bp = gi0.shape[0], gi0.shape[1]
    Bb = Bp // nblk

    def w_spec(shape):
        return pl.BlockSpec(shape, lambda i: (0, 0))

    return pl.pallas_call(
        _gru_kernel,
        out_shape=(jax.ShapeDtypeStruct((T, Bp, G), jnp.float32),
                   jax.ShapeDtypeStruct((2, Bp, G), jnp.float32)),
        grid=(nblk,),
        in_specs=[
            pl.BlockSpec((T, Bb, 3 * G), lambda i: (0, i, 0)),
            pl.BlockSpec((2, Bb, G), lambda i: (0, i, 0)),
            w_spec((G, 3 * G)), w_spec((1, 3 * G)),
            w_spec((2 * G, 4 * G)), w_spec((1, 4 * G)),
            w_spec((G, G)), w_spec((1, G)),
        ],
        out_specs=(pl.BlockSpec((T, Bb, G), lambda i: (0, i, 0)),
                   pl.BlockSpec((2, Bb, G), lambda i: (0, i, 0))),
        compiler_params=pltpu.CompilerParams(
            dimension_semantics=("parallel",),   # batch blocks (v7x 2 TCs)
            vmem_limit_bytes=_VMEM_LIMIT),
    )(gi0, h_init, p["whh0p"], p["bhh0p"], p["w1cat"], p["b1cat"],
      p["w_rnnp"], p["b_rnnp"])


# ----------------------------------------------------------------------------
# Forward pass (glue: im2col / free reshapes in plain JAX, compute in Pallas)
# ----------------------------------------------------------------------------

def _im2col_pool(x_nhwc, k, out_hw):
    """k x k im2col with the four members of each 2x2 pooling window
    concatenated along the feature axis.

    Returns (bf * (out_hw//2)^2, 4*k*k*c): rows ordered (img, r_half, c_half),
    features ordered (dr, dc, kh, kw, c) — matching the block-diagonal conv
    weights built in init_params.
    """
    pats = jnp.concatenate(
        [x_nhwc[:, ki:ki + out_hw, kj:kj + out_hw, :]
         for ki in range(k) for kj in range(k)], axis=-1)
    bf, K = pats.shape[0], pats.shape[-1]
    oh = out_hw // 2
    g = pats.reshape(bf, oh, 2, oh, 2, K).transpose(0, 1, 3, 2, 4, 5)
    return g.reshape(bf * oh * oh, 4 * K)


def encoder_rnn_forward(params, x, hidden=None, nz=32):
    """x: (batch, frame, 1, 28, 28) -> (z1: (batch, frame, nz),
                                        hidden: (2, batch, nz))"""
    batch, frame = x.shape[:2]
    bf = batch * frame

    # NCHW -> NHWC
    xi = x.reshape(bf, 1, 28, 28).transpose(0, 2, 3, 1)           # (bf,28,28,1)

    # conv1 (1->20, k=5) + 2x2 max-pool + ReLU, fused in one pallas_call
    p1 = _im2col_pool(xi, 5, 24)                                  # (bf*144, 100) f32
    h1 = conv_pool(p1, params["w1m4"], params["b1"])              # (bf*144, 128) bf16
    h1 = h1.reshape(bf, 12, 12, G)

    # conv2 (20->50, k=5) + 2x2 max-pool + ReLU, fused
    # TODO(synk): conv2 patch extraction is still an XLA-side im2col (per-tap
    # accumulation with h1 resident in VMEM would remove it entirely).
    # TODO(synk): Dropout2d(p=0.5) after conv2 is an eval-mode identity.
    p2 = _im2col_pool(h1[..., :20], 5, 8)                         # (bf*16, 2000) bf16
    h2 = conv_pool(p2, params["w2m4"], params["b2"])              # (bf*16, 128) bf16

    # fc_down (Linear+ReLU) + GRU layer-0 input projection, fused.  h2 is NHWC
    # with 128-padded channels; w_down's rows were permuted at init so this
    # flatten is free (no channel-first transpose / slice).
    feat = h2.reshape(bf, 4 * 4 * G)                              # (bf, 2048) bf16
    gi0 = down_gi(feat, params)                                   # (bf, 3G) f32

    # batch padding / blocking for the GRU
    Bp = _round_up(batch, 8)
    nblk = 2 if Bp >= 16 else 1
    if nblk == 2:
        Bp = _round_up(batch, 16)
    gi0 = gi0.reshape(batch, frame, 3 * G)
    if Bp != batch:
        gi0 = jnp.pad(gi0, ((0, Bp - batch), (0, 0), (0, 0)))
    gi0 = jnp.transpose(gi0, (1, 0, 2))                           # (T, Bp, 3G)

    if hidden is None:
        h_init = jnp.zeros((2, Bp, G), jnp.float32)
    else:
        h_init = jnp.zeros((2, Bp, G), jnp.float32).at[:, :batch, :nz].set(hidden)

    # 2-layer GRU over frames (batched recurrence) + fused fc_rnn.
    # TODO(synk): fc_rnn Dropout(p=0.5) is an eval-mode identity.
    y, hn = gru_forward(gi0, h_init, params, nblk)                # (T,Bp,G),(2,Bp,G)

    z1 = jnp.transpose(y, (1, 0, 2))[:batch, :, :nz]
    hidden_state = hn[:, :batch, :nz]
    return z1, hidden_state


# ----------------------------------------------------------------------------
# Deterministic parameter initialization (torch-default-like uniform) with
# lane-dense (128-padded), bf16, pooling-fused layouts.
# ----------------------------------------------------------------------------

def init_params(key, nz=32):
    assert nz <= G
    ks = jax.random.split(key, 16)

    def u(k, shape, fan_in):
        s = 1.0 / math.sqrt(fan_in)
        return jax.random.uniform(k, shape, jnp.float32, -s, s)

    w1 = u(ks[0], (20, 1, 5, 5), 25);    b1 = u(ks[1], (20,), 25)
    w2 = u(ks[2], (50, 20, 5, 5), 500);  b2 = u(ks[3], (50,), 500)
    w_down = u(ks[4], (nz, 800), 800);   b_down = u(ks[5], (nz,), 800)
    wih0 = u(ks[6], (3 * nz, nz), nz);   whh0 = u(ks[7], (3 * nz, nz), nz)
    bih0 = u(ks[8], (3 * nz,), nz);      bhh0 = u(ks[9], (3 * nz,), nz)
    wih1 = u(ks[10], (3 * nz, nz), nz);  whh1 = u(ks[11], (3 * nz, nz), nz)
    bih1 = u(ks[12], (3 * nz,), nz);     bhh1 = u(ks[13], (3 * nz,), nz)
    w_rnn = u(ks[14], (nz, nz), nz);     b_rnn = u(ks[15], (nz,), nz)

    def pad_cols(w):
        return jnp.pad(w, ((0, 0), (0, G - w.shape[1])))

    def pad_bias(b):
        return jnp.pad(b.reshape(1, -1), ((0, 0), (0, G - b.shape[0])))

    def block_diag4(wm):
        # wm: (K, 128) conv matrix -> (4K, 512) block diagonal, bf16
        K = wm.shape[0]
        out = jnp.zeros((4 * K, 4 * G), jnp.float32)
        for q in range(4):
            out = out.at[q * K:(q + 1) * K, q * G:(q + 1) * G].set(wm)
        return out.astype(jnp.bfloat16)

    # conv weights flattened as (kh*kw*in_c, out_c), out channels 0-padded to
    # 128 lanes, then replicated block-diagonally for the fused pool epilogue.
    w1m = pad_cols(jnp.transpose(w1, (2, 3, 1, 0)).reshape(25, 20))
    w2m = pad_cols(jnp.transpose(w2, (2, 3, 1, 0)).reshape(500, 50))

    # fc_down: rows permuted to the NHWC (r, c, ch) flatten of 128-padded h2
    wd = w_down.reshape(nz, 50, 4, 4)                 # (n, ch, r, c)
    wd = jnp.transpose(wd, (2, 3, 1, 0))              # (r, c, ch, n)
    wd = jnp.pad(wd, ((0, 0), (0, 0), (0, G - 50), (0, 0)))
    wd = pad_cols(wd.reshape(4 * 4 * G, nz))          # (2048, 128)

    def gate_pad_w(w_t):
        # w_t: (in_real, 3*nz) torch column order [r | z | n]; scatter each
        # gate into its own 128-lane block, rows padded to G.
        out = jnp.zeros((G, 3 * G), jnp.float32)
        for g in range(3):
            out = out.at[:w_t.shape[0], g * G:g * G + nz].set(
                w_t[:, g * nz:(g + 1) * nz])
        return out

    def gate_pad_b(b):
        out = jnp.zeros((1, 3 * G), jnp.float32)
        for g in range(3):
            out = out.at[0, g * G:g * G + nz].set(b[g * nz:(g + 1) * nz])
        return out

    # fused layer-1 weight: rows [h0n-pad(G) ; h1-pad(G)],
    # columns [r | z | n_ih | n_hh] (each a 128-lane block).
    wih1_t, whh1_t = wih1.T, whh1.T
    w1cat = jnp.zeros((2 * G, 4 * G), jnp.float32)
    w1cat = w1cat.at[:nz, 0 * G:0 * G + nz].set(wih1_t[:, 0 * nz:1 * nz])
    w1cat = w1cat.at[:nz, 1 * G:1 * G + nz].set(wih1_t[:, 1 * nz:2 * nz])
    w1cat = w1cat.at[:nz, 2 * G:2 * G + nz].set(wih1_t[:, 2 * nz:3 * nz])
    w1cat = w1cat.at[G:G + nz, 0 * G:0 * G + nz].set(whh1_t[:, 0 * nz:1 * nz])
    w1cat = w1cat.at[G:G + nz, 1 * G:1 * G + nz].set(whh1_t[:, 1 * nz:2 * nz])
    w1cat = w1cat.at[G:G + nz, 3 * G:3 * G + nz].set(whh1_t[:, 2 * nz:3 * nz])
    b1cat = jnp.zeros((1, 4 * G), jnp.float32)
    b1cat = b1cat.at[0, 0 * G:0 * G + nz].set(bih1[:nz] + bhh1[:nz])
    b1cat = b1cat.at[0, 1 * G:1 * G + nz].set(bih1[nz:2 * nz] + bhh1[nz:2 * nz])
    b1cat = b1cat.at[0, 2 * G:2 * G + nz].set(bih1[2 * nz:])
    b1cat = b1cat.at[0, 3 * G:3 * G + nz].set(bhh1[2 * nz:])

    w_rnnp = jnp.zeros((G, G), jnp.float32).at[:nz, :nz].set(w_rnn.T)
    b_rnnp = jnp.zeros((1, G), jnp.float32).at[0, :nz].set(b_rnn)

    return dict(
        # fused conv+pool weights (bf16) and biases (f32, added post-max)
        w1m4=block_diag4(w1m), b1=pad_bias(b1),
        w2m4=block_diag4(w2m), b2=pad_bias(b2),
        # fused fc_down + GRU layer-0 input projection
        w_down=wd.astype(jnp.bfloat16), b_down=pad_bias(b_down),
        wih0p=gate_pad_w(wih0.T).astype(jnp.bfloat16), bih0p=gate_pad_b(bih0),
        # GRU recurrence (bf16 matmul weights, f32 biases)
        whh0p=gate_pad_w(whh0.T).astype(jnp.bfloat16), bhh0p=gate_pad_b(bhh0),
        w1cat=w1cat.astype(jnp.bfloat16), b1cat=b1cat,
        w_rnnp=w_rnnp.astype(jnp.bfloat16), b_rnnp=b_rnnp,
    )


# ----------------------------------------------------------------------------
# Main
# ----------------------------------------------------------------------------

if __name__ == "__main__":
    batch, frame, nz = 2, 4, 32      # spatial must be 28x28 (fc_down is 50*4*4)
    key = jax.random.PRNGKey(0)
    kx, kp = jax.random.split(key)
    x = jax.random.normal(kx, (batch, frame, 1, 28, 28), jnp.float32)
    params = init_params(kp, nz=nz)

    fwd = jax.jit(functools.partial(encoder_rnn_forward, nz=nz))
    z1, hidden = fwd(params, x)
    jax.block_until_ready((z1, hidden))

    assert z1.shape == (batch, frame, nz)
    assert hidden.shape == (2, batch, nz)
    print("KERNEL_OK")
</pallas_src>

<mosaic_0001>
module attributes {stable_mosaic.version = 11 : i64} {
  func.func @_conv_pool_kernel(%arg0: i32, %arg1: memref<1152x100xf32, #tpu.memory_space<vmem>>, %arg2: memref<100x512xbf16, #tpu.memory_space<vmem>>, %arg3: memref<1x128xf32, #tpu.memory_space<vmem>>, %arg4: memref<1152x128xbf16, #tpu.memory_space<vmem>>) attributes {dimension_semantics = [#tpu.dimension_semantics<parallel>], iteration_bounds = array<i64: 1>, scalar_prefetch = 0 : i64, scratch_operands = 0 : i64, tpu.core_type = #tpu.core_type<tc>, window_params = [{transform_indices = @transform_0, window_bounds = array<i64: 1152, 100>}, {pipeline_mode = #tpu.pipeline_mode<synchronous>, transform_indices = @transform_1, window_bounds = array<i64: 100, 512>}, {pipeline_mode = #tpu.pipeline_mode<synchronous>, transform_indices = @transform_2, window_bounds = array<i64: 1, 128>}, {transform_indices = @transform_3, window_bounds = array<i64: 1152, 128>}]} {
    %c0 = arith.constant 0 : index
    %c0_0 = arith.constant 0 : index
    %0 = vector.load %arg1[%c0, %c0_0] : memref<1152x100xf32, #tpu.memory_space<vmem>>, vector<1152x100xf32>
    %1 = arith.truncf %0 : vector<1152x100xf32> to vector<1152x100xbf16>
    %c0_1 = arith.constant 0 : index
    %c0_2 = arith.constant 0 : index
    %2 = vector.load %arg2[%c0_1, %c0_2] : memref<100x512xbf16, #tpu.memory_space<vmem>>, vector<100x512xbf16>
    %cst = arith.constant dense<0.000000e+00> : vector<1152x512xf32>
    %3 = tpu.matmul %1, %2, %cst {dimension_numbers = #tpu.dot_dimension_numbers<[1], [0], [0], [1], [0, 0, 1, 1], [], []>} : vector<1152x100xbf16>, vector<100x512xbf16>, vector<1152x512xf32> -> vector<1152x512xf32>
    %4 = vector.extract_strided_slice %3 {offsets = [0, 0], sizes = [1152, 128], strides = [1, 1]} : vector<1152x512xf32> to vector<1152x128xf32>
    %5 = vector.extract_strided_slice %3 {offsets = [0, 128], sizes = [1152, 128], strides = [1, 1]} : vector<1152x512xf32> to vector<1152x128xf32>
    %6 = arith.maximumf %4, %5 : vector<1152x128xf32>
    %7 = vector.extract_strided_slice %3 {offsets = [0, 256], sizes = [1152, 128], strides = [1, 1]} : vector<1152x512xf32> to vector<1152x128xf32>
    %8 = vector.extract_strided_slice %3 {offsets = [0, 384], sizes = [1152, 128], strides = [1, 1]} : vector<1152x512xf32> to vector<1152x128xf32>
    %9 = arith.maximumf %7, %8 : vector<1152x128xf32>
    %10 = arith.maximumf %6, %9 : vector<1152x128xf32>
    %c0_3 = arith.constant 0 : index
    %c0_4 = arith.constant 0 : index
    %11 = vector.load %arg3[%c0_3, %c0_4] : memref<1x128xf32, #tpu.memory_space<vmem>>, vector<1x128xf32>
    %12 = vector.broadcast %11 : vector<1x128xf32> to vector<1152x128xf32>
    %13 = arith.addf %10, %12 : vector<1152x128xf32>
    %cst_5 = arith.constant 0.000000e+00 : f32
    %14 = vector.broadcast %cst_5 : f32 to vector<1152x128xf32>
    %15 = arith.maximumf %13, %14 : vector<1152x128xf32>
    %16 = arith.truncf %15 : vector<1152x128xf32> to vector<1152x128xbf16>
    %c0_6 = arith.constant 0 : index
    %c0_7 = arith.constant 0 : index
    %17 = vector.load %arg4[%c0_6, %c0_7] : memref<1152x128xbf16, #tpu.memory_space<vmem>>, vector<1152x128xbf16>
    tpu.vector_store %arg4[%c0_6, %c0_7], %16 {strides = array<i32>} : memref<1152x128xbf16, #tpu.memory_space<vmem>>, vector<1152x128xbf16>,
    return
  }
  func.func @transform_0(%arg0: i32) -> (i32, i32) {
    %c0_i32 = arith.constant 0 : i32
    %c0_i32_0 = arith.constant 0 : i32
    return %arg0, %c0_i32 : i32, i32
  }
  func.func @transform_1(%arg0: i32) -> (i32, i32) {
    %c0_i32 = arith.constant 0 : i32
    %c0_i32_0 = arith.constant 0 : i32
    %c0_i32_1 = arith.constant 0 : i32
    return %c0_i32, %c0_i32_0 : i32, i32
  }
  func.func @transform_2(%arg0: i32) -> (i32, i32) {
    %c0_i32 = arith.constant 0 : i32
    %c0_i32_0 = arith.constant 0 : i32
    %c0_i32_1 = arith.constant 0 : i32
    return %c0_i32, %c0_i32_0 : i32, i32
  }
  func.func @transform_3(%arg0: i32) -> (i32, i32) {
    %c0_i32 = arith.constant 0 : i32
    %c0_i32_0 = arith.constant 0 : i32
    return %arg0, %c0_i32 : i32, i32
  }
}

module attributes {stable_mosaic.version = 11 : i64} {
  func.func @_conv_pool_kernel(%arg0: i32, %arg1: memref<128x2000xbf16, #tpu.memory_space<vmem>>, %arg2: memref<2000x512xbf16, #tpu.memory_space<vmem>>, %arg3: memref<1x128xf32, #tpu.memory_space<vmem>>, %arg4: memref<128x128xbf16, #tpu.memory_space<vmem>>) attributes {dimension_semantics = [#tpu.dimension_semantics<parallel>], iteration_bounds = array<i64: 1>, scalar_prefetch = 0 : i64, scratch_operands = 0 : i64, tpu.core_type = #tpu.core_type<tc>, window_params = [{transform_indices = @transform_0, window_bounds = array<i64: 128, 2000>}, {pipeline_mode = #tpu.pipeline_mode<synchronous>, transform_indices = @transform_1, window_bounds = array<i64: 2000, 512>}, {pipeline_mode = #tpu.pipeline_mode<synchronous>, transform_indices = @transform_2, window_bounds = array<i64: 1, 128>}, {transform_indices = @transform_3, window_bounds = array<i64: 128, 128>}]} {
    %c0 = arith.constant 0 : index
    %c0_0 = arith.constant 0 : index
    %0 = vector.load %arg1[%c0, %c0_0] : memref<128x2000xbf16, #tpu.memory_space<vmem>>, vector<128x2000xbf16>
    %c0_1 = arith.constant 0 : index
    %c0_2 = arith.constant 0 : index
    %1 = vector.load %arg2[%c0_1, %c0_2] : memref<2000x512xbf16, #tpu.memory_space<vmem>>, vector<2000x512xbf16>
    %cst = arith.constant dense<0.000000e+00> : vector<128x512xf32>
    %2 = tpu.matmul %0, %1, %cst {dimension_numbers = #tpu.dot_dimension_numbers<[1], [0], [0], [1], [0, 0, 1, 1], [], []>} : vector<128x2000xbf16>, vector<2000x512xbf16>, vector<128x512xf32> -> vector<128x512xf32>
    %3 = vector.extract_strided_slice %2 {offsets = [0, 0], sizes = [128, 128], strides = [1, 1]} : vector<128x512xf32> to vector<128x128xf32>
    %4 = vector.extract_strided_slice %2 {offsets = [0, 128], sizes = [128, 128], strides = [1, 1]} : vector<128x512xf32> to vector<128x128xf32>
    %5 = arith.maximumf %3, %4 : vector<128x128xf32>
    %6 = vector.extract_strided_slice %2 {offsets = [0, 256], sizes = [128, 128], strides = [1, 1]} : vector<128x512xf32> to vector<128x128xf32>
    %7 = vector.extract_strided_slice %2 {offsets = [0, 384], sizes = [128, 128], strides = [1, 1]} : vector<128x512xf32> to vector<128x128xf32>
    %8 = arith.maximumf %6, %7 : vector<128x128xf32>
    %9 = arith.maximumf %5, %8 : vector<128x128xf32>
    %c0_3 = arith.constant 0 : index
    %c0_4 = arith.constant 0 : index
    %10 = vector.load %arg3[%c0_3, %c0_4] : memref<1x128xf32, #tpu.memory_space<vmem>>, vector<1x128xf32>
    %11 = vector.broadcast %10 : vector<1x128xf32> to vector<128x128xf32>
    %12 = arith.addf %9, %11 : vector<128x128xf32>
    %cst_5 = arith.constant 0.000000e+00 : f32
    %13 = vector.broadcast %cst_5 : f32 to vector<128x128xf32>
    %14 = arith.maximumf %12, %13 : vector<128x128xf32>
    %15 = arith.truncf %14 : vector<128x128xf32> to vector<128x128xbf16>
    %c0_6 = arith.constant 0 : index
    %c0_7 = arith.constant 0 : index
    %16 = vector.load %arg4[%c0_6, %c0_7] : memref<128x128xbf16, #tpu.memory_space<vmem>>, vector<128x128xbf16>
    tpu.vector_store %arg4[%c0_6, %c0_7], %15 {strides = array<i32>} : memref<128x128xbf16, #tpu.memory_space<vmem>>, vector<128x128xbf16>,
    return
  }
  func.func @transform_0(%arg0: i32) -> (i32, i32) {
    %c0_i32 = arith.constant 0 : i32
    %c0_i32_0 = arith.constant 0 : i32
    return %arg0, %c0_i32 : i32, i32
  }
  func.func @transform_1(%arg0: i32) -> (i32, i32) {
    %c0_i32 = arith.constant 0 : i32
    %c0_i32_0 = arith.constant 0 : i32
    %c0_i32_1 = arith.constant 0 : i32
    return %c0_i32, %c0_i32_0 : i32, i32
  }
  func.func @transform_2(%arg0: i32) -> (i32, i32) {
    %c0_i32 = arith.constant 0 : i32
    %c0_i32_0 = arith.constant 0 : i32
    %c0_i32_1 = arith.constant 0 : i32
    return %c0_i32, %c0_i32_0 : i32, i32
  }
  func.func @transform_3(%arg0: i32) -> (i32, i32) {
    %c0_i32 = arith.constant 0 : i32
    %c0_i32_0 = arith.constant 0 : i32
    return %arg0, %c0_i32 : i32, i32
  }
}

module attributes {stable_mosaic.version = 11 : i64} {
  func.func @_down_gi_kernel(%arg0: i32, %arg1: memref<8x2048xbf16, #tpu.memory_space<vmem>>, %arg2: memref<2048x128xbf16, #tpu.memory_space<vmem>>, %arg3: memref<1x128xf32, #tpu.memory_space<vmem>>, %arg4: memref<128x384xbf16, #tpu.memory_space<vmem>>, %arg5: memref<1x384xf32, #tpu.memory_space<vmem>>, %arg6: memref<8x384xf32, #tpu.memory_space<vmem>>) attributes {dimension_semantics = [#tpu.dimension_semantics<parallel>], iteration_bounds = array<i64: 1>, scalar_prefetch = 0 : i64, scratch_operands = 0 : i64, tpu.core_type = #tpu.core_type<tc>, window_params = [{transform_indices = @transform_0, window_bounds = array<i64: 8, 2048>}, {pipeline_mode = #tpu.pipeline_mode<synchronous>, transform_indices = @transform_1, window_bounds = array<i64: 2048, 128>}, {pipeline_mode = #tpu.pipeline_mode<synchronous>, transform_indices = @transform_2, window_bounds = array<i64: 1, 128>}, {pipeline_mode = #tpu.pipeline_mode<synchronous>, transform_indices = @transform_3, window_bounds = array<i64: 128, 384>}, {pipeline_mode = #tpu.pipeline_mode<synchronous>, transform_indices = @transform_4, window_bounds = array<i64: 1, 384>}, {transform_indices = @transform_5, window_bounds = array<i64: 8, 384>}]} {
    %c0 = arith.constant 0 : index
    %c0_0 = arith.constant 0 : index
    %0 = vector.load %arg1[%c0, %c0_0] : memref<8x2048xbf16, #tpu.memory_space<vmem>>, vector<8x2048xbf16>
    %c0_1 = arith.constant 0 : index
    %c0_2 = arith.constant 0 : index
    %1 = vector.load %arg2[%c0_1, %c0_2] : memref<2048x128xbf16, #tpu.memory_space<vmem>>, vector<2048x128xbf16>
    %cst = arith.constant dense<0.000000e+00> : vector<8x128xf32>
    %2 = tpu.matmul %0, %1, %cst {dimension_numbers = #tpu.dot_dimension_numbers<[1], [0], [0], [1], [0, 0, 1, 1], [], []>} : vector<8x2048xbf16>, vector<2048x128xbf16>, vector<8x128xf32> -> vector<8x128xf32>
    %c0_3 = arith.constant 0 : index
    %c0_4 = arith.constant 0 : index
    %3 = vector.load %arg3[%c0_3, %c0_4] : memref<1x128xf32, #tpu.memory_space<vmem>>, vector<1x128xf32>
    %4 = vector.broadcast %3 : vector<1x128xf32> to vector<8x128xf32>
    %5 = arith.addf %2, %4 : vector<8x128xf32>
    %cst_5 = arith.constant 0.000000e+00 : f32
    %6 = vector.broadcast %cst_5 : f32 to vector<8x128xf32>
    %7 = arith.maximumf %5, %6 : vector<8x128xf32>
    %8 = arith.truncf %7 : vector<8x128xf32> to vector<8x128xbf16>
    %c0_6 = arith.constant 0 : index
    %c0_7 = arith.constant 0 : index
    %9 = vector.load %arg4[%c0_6, %c0_7] : memref<128x384xbf16, #tpu.memory_space<vmem>>, vector<128x384xbf16>
    %cst_8 = arith.constant dense<0.000000e+00> : vector<8x384xf32>
    %10 = tpu.matmul %8, %9, %cst_8 {dimension_numbers = #tpu.dot_dimension_numbers<[1], [0], [0], [1], [0, 0, 1, 1], [], []>} : vector<8x128xbf16>, vector<128x384xbf16>, vector<8x384xf32> -> vector<8x384xf32>
    %c0_9 = arith.constant 0 : index
    %c0_10 = arith.constant 0 : index
    %11 = vector.load %arg5[%c0_9, %c0_10] : memref<1x384xf32, #tpu.memory_space<vmem>>, vector<1x384xf32>
    %12 = vector.broadcast %11 : vector<1x384xf32> to vector<8x384xf32>
    %13 = arith.addf %10, %12 : vector<8x384xf32>
    %c0_11 = arith.constant 0 : index
    %c0_12 = arith.constant 0 : index
    %14 = vector.load %arg6[%c0_11, %c0_12] : memref<8x384xf32, #tpu.memory_space<vmem>>, vector<8x384xf32>
    tpu.vector_store %arg6[%c0_11, %c0_12], %13 {strides = array<i32>} : memref<8x384xf32, #tpu.memory_space<vmem>>, vector<8x384xf32>,
    return
  }
  func.func @transform_0(%arg0: i32) -> (i32, i32) {
    %c0_i32 = arith.constant 0 : i32
    %c0_i32_0 = arith.constant 0 : i32
    return %arg0, %c0_i32 : i32, i32
  }
  func.func @transform_1(%arg0: i32) -> (i32, i32) {
    %c0_i32 = arith.constant 0 : i32
    %c0_i32_0 = arith.constant 0 : i32
    %c0_i32_1 = arith.constant 0 : i32
    return %c0_i32, %c0_i32_0 : i32, i32
  }
  func.func @transform_2(%arg0: i32) -> (i32, i32) {
    %c0_i32 = arith.constant 0 : i32
    %c0_i32_0 = arith.constant 0 : i32
    %c0_i32_1 = arith.constant 0 : i32
    return %c0_i32, %c0_i32_0 : i32, i32
  }
  func.func @transform_3(%arg0: i32) -> (i32, i32) {
    %c0_i32 = arith.constant 0 : i32
    %c0_i32_0 = arith.constant 0 : i32
    %c0_i32_1 = arith.constant 0 : i32
    return %c0_i32, %c0_i32_0 : i32, i32
  }
  func.func @transform_4(%arg0: i32) -> (i32, i32) {
    %c0_i32 = arith.constant 0 : i32
    %c0_i32_0 = arith.constant 0 : i32
    %c0_i32_1 = arith.constant 0 : i32
    return %c0_i32, %c0_i32_0 : i32, i32
  }
  func.func @transform_5(%arg0: i32) -> (i32, i32) {
    %c0_i32 = arith.constant 0 : i32
    %c0_i32_0 = arith.constant 0 : i32
    return %arg0, %c0_i32 : i32, i32
  }
}

module attributes {stable_mosaic.version = 11 : i64} {
  func.func @_gru_kernel(%arg0: i32, %arg1: memref<4x8x384xf32, #tpu.memory_space<vmem>>, %arg2: memref<2x8x128xf32, #tpu.memory_space<vmem>>, %arg3: memref<128x384xbf16, #tpu.memory_space<vmem>>, %arg4: memref<1x384xf32, #tpu.memory_space<vmem>>, %arg5: memref<256x512xbf16, #tpu.memory_space<vmem>>, %arg6: memref<1x512xf32, #tpu.memory_space<vmem>>, %arg7: memref<128x128xbf16, #tpu.memory_space<vmem>>, %arg8: memref<1x128xf32, #tpu.memory_space<vmem>>, %arg9: memref<4x8x128xf32, #tpu.memory_space<vmem>>, %arg10: memref<2x8x128xf32, #tpu.memory_space<vmem>>) attributes {dimension_semantics = [#tpu.dimension_semantics<parallel>], iteration_bounds = array<i64: 1>, scalar_prefetch = 0 : i64, scratch_operands = 0 : i64, tpu.core_type = #tpu.core_type<tc>, window_params = [{transform_indices = @transform_0, window_bounds = array<i64: 4, 8, 384>}, {transform_indices = @transform_1, window_bounds = array<i64: 2, 8, 128>}, {pipeline_mode = #tpu.pipeline_mode<synchronous>, transform_indices = @transform_2, window_bounds = array<i64: 128, 384>}, {pipeline_mode = #tpu.pipeline_mode<synchronous>, transform_indices = @transform_3, window_bounds = array<i64: 1, 384>}, {pipeline_mode = #tpu.pipeline_mode<synchronous>, transform_indices = @transform_4, window_bounds = array<i64: 256, 512>}, {pipeline_mode = #tpu.pipeline_mode<synchronous>, transform_indices = @transform_5, window_bounds = array<i64: 1, 512>}, {pipeline_mode = #tpu.pipeline_mode<synchronous>, transform_indices = @transform_6, window_bounds = array<i64: 128, 128>}, {pipeline_mode = #tpu.pipeline_mode<synchronous>, transform_indices = @transform_7, window_bounds = array<i64: 1, 128>}, {transform_indices = @transform_8, window_bounds = array<i64: 4, 8, 128>}, {transform_indices = @transform_9, window_bounds = array<i64: 2, 8, 128>}]} {
    %c0 = arith.constant 0 : index
    %c0_0 = arith.constant 0 : index
    %0 = vector.load %arg3[%c0, %c0_0] : memref<128x384xbf16, #tpu.memory_space<vmem>>, vector<128x384xbf16>
    %c0_1 = arith.constant 0 : index
    %c0_2 = arith.constant 0 : index
    %1 = vector.load %arg4[%c0_1, %c0_2] : memref<1x384xf32, #tpu.memory_space<vmem>>, vector<1x384xf32>
    %c0_3 = arith.constant 0 : index
    %c0_4 = arith.constant 0 : index
    %2 = vector.load %arg5[%c0_3, %c0_4] : memref<256x512xbf16, #tpu.memory_space<vmem>>, vector<256x512xbf16>
    %3 = vector.extract_strided_slice %2 {offsets = [0, 0], sizes = [128, 512], strides = [1, 1]} : vector<256x512xbf16> to vector<128x512xbf16>
    %4 = vector.extract_strided_slice %2 {offsets = [128, 0], sizes = [128, 512], strides = [1, 1]} : vector<256x512xbf16> to vector<128x512xbf16>
    %c0_5 = arith.constant 0 : index
    %c0_6 = arith.constant 0 : index
    %5 = vector.load %arg6[%c0_5, %c0_6] : memref<1x512xf32, #tpu.memory_space<vmem>>, vector<1x512xf32>
    %c0_7 = arith.constant 0 : index
    %c0_8 = arith.constant 0 : index
    %6 = vector.load %arg7[%c0_7, %c0_8] : memref<128x128xbf16, #tpu.memory_space<vmem>>, vector<128x128xbf16>
    %c0_9 = arith.constant 0 : index
    %c0_10 = arith.constant 0 : index
    %7 = vector.load %arg8[%c0_9, %c0_10] : memref<1x128xf32, #tpu.memory_space<vmem>>, vector<1x128xf32>
    %c0_11 = arith.constant 0 : index
    %c0_12 = arith.constant 0 : index
    %c0_13 = arith.constant 0 : index
    %8 = vector.load %arg2[%c0_11, %c0_12, %c0_13] : memref<2x8x128xf32, #tpu.memory_space<vmem>>, vector<1x8x128xf32>
    %9 = vector.shape_cast %8 : vector<1x8x128xf32> to vector<8x128xf32>
    %c1 = arith.constant 1 : index
    %c0_14 = arith.constant 0 : index
    %c0_15 = arith.constant 0 : index
    %10 = vector.load %arg2[%c1, %c0_14, %c0_15] : memref<2x8x128xf32, #tpu.memory_space<vmem>>, vector<1x8x128xf32>
    %11 = vector.shape_cast %10 : vector<1x8x128xf32> to vector<8x128xf32>
    %c0_i32 = arith.constant 0 : i32
    %12 = arith.index_cast %c0_i32 : i32 to index
    %c0_16 = arith.constant 0 : index
    %c0_17 = arith.constant 0 : index
    %13 = vector.load %arg1[%12, %c0_16, %c0_17] : memref<4x8x384xf32, #tpu.memory_space<vmem>>, vector<1x8x384xf32>
    %14 = vector.shape_cast %13 : vector<1x8x384xf32> to vector<8x384xf32>
    %15 = arith.truncf %9 : vector<8x128xf32> to vector<8x128xbf16>
    %cst = arith.constant dense<0.000000e+00> : vector<8x384xf32>
    %16 = tpu.matmul %15, %0, %cst {dimension_numbers = #tpu.dot_dimension_numbers<[1], [0], [0], [1], [0, 0, 1, 1], [], []>} : vector<8x128xbf16>, vector<128x384xbf16>, vector<8x384xf32> -> vector<8x384xf32>
    %17 = vector.broadcast %1 : vector<1x384xf32> to vector<8x384xf32>
    %18 = arith.addf %16, %17 : vector<8x384xf32>
    %19 = vector.extract_strided_slice %14 {offsets = [0, 0], sizes = [8, 128], strides = [1, 1]} : vector<8x384xf32> to vector<8x128xf32>
    %20 = vector.extract_strided_slice %18 {offsets = [0, 0], sizes = [8, 128], strides = [1, 1]} : vector<8x384xf32> to vector<8x128xf32>
    %21 = arith.addf %19, %20 : vector<8x128xf32>
    %22 = arith.negf %21 : vector<8x128xf32>
    %23 = math.exp %22 : vector<8x128xf32>
    %cst_18 = arith.constant 1.000000e+00 : f32
    %24 = vector.broadcast %cst_18 : f32 to vector<8x128xf32>
    %25 = arith.addf %24, %23 : vector<8x128xf32>
    %26 = arith.divf %24, %25 : vector<8x128xf32>
    %27 = vector.extract_strided_slice %14 {offsets = [0, 128], sizes = [8, 128], strides = [1, 1]} : vector<8x384xf32> to vector<8x128xf32>
    %28 = vector.extract_strided_slice %18 {offsets = [0, 128], sizes = [8, 128], strides = [1, 1]} : vector<8x384xf32> to vector<8x128xf32>
    %29 = arith.addf %27, %28 : vector<8x128xf32>
    %30 = arith.negf %29 : vector<8x128xf32>
    %31 = math.exp %30 : vector<8x128xf32>
    %cst_19 = arith.constant 1.000000e+00 : f32
    %32 = vector.broadcast %cst_19 : f32 to vector<8x128xf32>
    %33 = arith.addf %32, %31 : vector<8x128xf32>
    %34 = arith.divf %32, %33 : vector<8x128xf32>
    %35 = vector.extract_strided_slice %14 {offsets = [0, 256], sizes = [8, 128], strides = [1, 1]} : vector<8x384xf32> to vector<8x128xf32>
    %36 = vector.extract_strided_slice %18 {offsets = [0, 256], sizes = [8, 128], strides = [1, 1]} : vector<8x384xf32> to vector<8x128xf32>
    %37 = arith.mulf %26, %36 : vector<8x128xf32>
    %38 = arith.addf %35, %37 : vector<8x128xf32>
    %39 = math.tanh %38 : vector<8x128xf32>
    %cst_20 = arith.constant 1.000000e+00 : f32
    %40 = vector.broadcast %cst_20 : f32 to vector<8x128xf32>
    %41 = arith.subf %40, %34 : vector<8x128xf32>
    %42 = arith.mulf %41, %39 : vector<8x128xf32>
    %43 = arith.mulf %34, %9 : vector<8x128xf32>
    %44 = arith.addf %42, %43 : vector<8x128xf32>
    %45 = arith.truncf %44 : vector<8x128xf32> to vector<8x128xbf16>
    %cst_21 = arith.constant dense<0.000000e+00> : vector<8x512xf32>
    %46 = tpu.matmul %45, %3, %cst_21 {dimension_numbers = #tpu.dot_dimension_numbers<[1], [0], [0], [1], [0, 0, 1, 1], [], []>} : vector<8x128xbf16>, vector<128x512xbf16>, vector<8x512xf32> -> vector<8x512xf32>
    %47 = arith.truncf %11 : vector<8x128xf32> to vector<8x128xbf16>
    %cst_22 = arith.constant dense<0.000000e+00> : vector<8x512xf32>
    %48 = tpu.matmul %47, %4, %cst_22 {dimension_numbers = #tpu.dot_dimension_numbers<[1], [0], [0], [1], [0, 0, 1, 1], [], []>} : vector<8x128xbf16>, vector<128x512xbf16>, vector<8x512xf32> -> vector<8x512xf32>
    %49 = arith.addf %46, %48 : vector<8x512xf32>
    %50 = vector.broadcast %5 : vector<1x512xf32> to vector<8x512xf32>
    %51 = arith.addf %49, %50 : vector<8x512xf32>
    %52 = vector.extract_strided_slice %51 {offsets = [0, 0], sizes = [8, 128], strides = [1, 1]} : vector<8x512xf32> to vector<8x128xf32>
    %53 = arith.negf %52 : vector<8x128xf32>
    %54 = math.exp %53 : vector<8x128xf32>
    %cst_23 = arith.constant 1.000000e+00 : f32
    %55 = vector.broadcast %cst_23 : f32 to vector<8x128xf32>
    %56 = arith.addf %55, %54 : vector<8x128xf32>
    %57 = arith.divf %55, %56 : vector<8x128xf32>
    %58 = vector.extract_strided_slice %51 {offsets = [0, 128], sizes = [8, 128], strides = [1, 1]} : vector<8x512xf32> to vector<8x128xf32>
    %59 = arith.negf %58 : vector<8x128xf32>
    %60 = math.exp %59 : vector<8x128xf32>
    %cst_24 = arith.constant 1.000000e+00 : f32
    %61 = vector.broadcast %cst_24 : f32 to vector<8x128xf32>
    %62 = arith.addf %61, %60 : vector<8x128xf32>
    %63 = arith.divf %61, %62 : vector<8x128xf32>
    %64 = vector.extract_strided_slice %51 {offsets = [0, 256], sizes = [8, 128], strides = [1, 1]} : vector<8x512xf32> to vector<8x128xf32>
    %65 = vector.extract_strided_slice %51 {offsets = [0, 384], sizes = [8, 128], strides = [1, 1]} : vector<8x512xf32> to vector<8x128xf32>
    %66 = arith.mulf %57, %65 : vector<8x128xf32>
    %67 = arith.addf %64, %66 : vector<8x128xf32>
    %68 = math.tanh %67 : vector<8x128xf32>
    %cst_25 = arith.constant 1.000000e+00 : f32
    %69 = vector.broadcast %cst_25 : f32 to vector<8x128xf32>
    %70 = arith.subf %69, %63 : vector<8x128xf32>
    %71 = arith.mulf %70, %68 : vector<8x128xf32>
    %72 = arith.mulf %63, %11 : vector<8x128xf32>
    %73 = arith.addf %71, %72 : vector<8x128xf32>
    %74 = arith.truncf %73 : vector<8x128xf32> to vector<8x128xbf16>
    %cst_26 = arith.constant dense<0.000000e+00> : vector<8x128xf32>
    %75 = tpu.matmul %74, %6, %cst_26 {dimension_numbers = #tpu.dot_dimension_numbers<[1], [0], [0], [1], [0, 0, 1, 1], [], []>} : vector<8x128xbf16>, vector<128x128xbf16>, vector<8x128xf32> -> vector<8x128xf32>
    %76 = vector.broadcast %7 : vector<1x128xf32> to vector<8x128xf32>
    %77 = arith.addf %75, %76 : vector<8x128xf32>
    %cst_27 = arith.constant 0.000000e+00 : f32
    %78 = vector.broadcast %cst_27 : f32 to vector<8x128xf32>
    %79 = arith.maximumf %77, %78 : vector<8x128xf32>
    %80 = arith.index_cast %c0_i32 : i32 to index
    %c0_28 = arith.constant 0 : index
    %c0_29 = arith.constant 0 : index
    %81 = vector.load %arg9[%80, %c0_28, %c0_29] : memref<4x8x128xf32, #tpu.memory_space<vmem>>, vector<1x8x128xf32>
    %82 = vector.shape_cast %81 : vector<1x8x128xf32> to vector<8x128xf32>
    %83 = vector.shape_cast %79 : vector<8x128xf32> to vector<1x8x128xf32>
    tpu.vector_store %arg9[%80, %c0_28, %c0_29], %83 {strides = array<i32>} : memref<4x8x128xf32, #tpu.memory_space<vmem>>, vector<1x8x128xf32>,
    %c1_i32 = arith.constant 1 : i32
    %84 = arith.index_cast %c1_i32 : i32 to index
    %c0_30 = arith.constant 0 : index
    %c0_31 = arith.constant 0 : index
    %85 = vector.load %arg1[%84, %c0_30, %c0_31] : memref<4x8x384xf32, #tpu.memory_space<vmem>>, vector<1x8x384xf32>
    %86 = vector.shape_cast %85 : vector<1x8x384xf32> to vector<8x384xf32>
    %87 = arith.truncf %44 : vector<8x128xf32> to vector<8x128xbf16>
    %cst_32 = arith.constant dense<0.000000e+00> : vector<8x384xf32>
    %88 = tpu.matmul %87, %0, %cst_32 {dimension_numbers = #tpu.dot_dimension_numbers<[1], [0], [0], [1], [0, 0, 1, 1], [], []>} : vector<8x128xbf16>, vector<128x384xbf16>, vector<8x384xf32> -> vector<8x384xf32>
    %89 = vector.broadcast %1 : vector<1x384xf32> to vector<8x384xf32>
    %90 = arith.addf %88, %89 : vector<8x384xf32>
    %91 = vector.extract_strided_slice %86 {offsets = [0, 0], sizes = [8, 128], strides = [1, 1]} : vector<8x384xf32> to vector<8x128xf32>
    %92 = vector.extract_strided_slice %90 {offsets = [0, 0], sizes = [8, 128], strides = [1, 1]} : vector<8x384xf32> to vector<8x128xf32>
    %93 = arith.addf %91, %92 : vector<8x128xf32>
    %94 = arith.negf %93 : vector<8x128xf32>
    %95 = math.exp %94 : vector<8x128xf32>
    %cst_33 = arith.constant 1.000000e+00 : f32
    %96 = vector.broadcast %cst_33 : f32 to vector<8x128xf32>
    %97 = arith.addf %96, %95 : vector<8x128xf32>
    %98 = arith.divf %96, %97 : vector<8x128xf32>
    %99 = vector.extract_strided_slice %86 {offsets = [0, 128], sizes = [8, 128], strides = [1, 1]} : vector<8x384xf32> to vector<8x128xf32>
    %100 = vector.extract_strided_slice %90 {offsets = [0, 128], sizes = [8, 128], strides = [1, 1]} : vector<8x384xf32> to vector<8x128xf32>
    %101 = arith.addf %99, %100 : vector<8x128xf32>
    %102 = arith.negf %101 : vector<8x128xf32>
    %103 = math.exp %102 : vector<8x128xf32>
    %cst_34 = arith.constant 1.000000e+00 : f32
    %104 = vector.broadcast %cst_34 : f32 to vector<8x128xf32>
    %105 = arith.addf %104, %103 : vector<8x128xf32>
    %106 = arith.divf %104, %105 : vector<8x128xf32>
    %107 = vector.extract_strided_slice %86 {offsets = [0, 256], sizes = [8, 128], strides = [1, 1]} : vector<8x384xf32> to vector<8x128xf32>
    %108 = vector.extract_strided_slice %90 {offsets = [0, 256], sizes = [8, 128], strides = [1, 1]} : vector<8x384xf32> to vector<8x128xf32>
    %109 = arith.mulf %98, %108 : vector<8x128xf32>
    %110 = arith.addf %107, %109 : vector<8x128xf32>
    %111 = math.tanh %110 : vector<8x128xf32>
    %cst_35 = arith.constant 1.000000e+00 : f32
    %112 = vector.broadcast %cst_35 : f32 to vector<8x128xf32>
    %113 = arith.subf %112, %106 : vector<8x128xf32>
    %114 = arith.mulf %113, %111 : vector<8x128xf32>
    %115 = arith.mulf %106, %44 : vector<8x128xf32>
    %116 = arith.addf %114, %115 : vector<8x128xf32>
    %117 = arith.truncf %116 : vector<8x128xf32> to vector<8x128xbf16>
    %cst_36 = arith.constant dense<0.000000e+00> : vector<8x512xf32>
    %118 = tpu.matmul %117, %3, %cst_36 {dimension_numbers = #tpu.dot_dimension_numbers<[1], [0], [0], [1], [0, 0, 1, 1], [], []>} : vector<8x128xbf16>, vector<128x512xbf16>, vector<8x512xf32> -> vector<8x512xf32>
    %119 = arith.truncf %73 : vector<8x128xf32> to vector<8x128xbf16>
    %cst_37 = arith.constant dense<0.000000e+00> : vector<8x512xf32>
    %120 = tpu.matmul %119, %4, %cst_37 {dimension_numbers = #tpu.dot_dimension_numbers<[1], [0], [0], [1], [0, 0, 1, 1], [], []>} : vector<8x128xbf16>, vector<128x512xbf16>, vector<8x512xf32> -> vector<8x512xf32>
    %121 = arith.addf %118, %120 : vector<8x512xf32>
    %122 = vector.broadcast %5 : vector<1x512xf32> to vector<8x512xf32>
    %123 = arith.addf %121, %122 : vector<8x512xf32>
    %124 = vector.extract_strided_slice %123 {offsets = [0, 0], sizes = [8, 128], strides = [1, 1]} : vector<8x512xf32> to vector<8x128xf32>
    %125 = arith.negf %124 : vector<8x128xf32>
    %126 = math.exp %125 : vector<8x128xf32>
    %cst_38 = arith.constant 1.000000e+00 : f32
    %127 = vector.broadcast %cst_38 : f32 to vector<8x128xf32>
    %128 = arith.addf %127, %126 : vector<8x128xf32>
    %129 = arith.divf %127, %128 : vector<8x128xf32>
    %130 = vector.extract_strided_slice %123 {offsets = [0, 128], sizes = [8, 128], strides = [1, 1]} : vector<8x512xf32> to vector<8x128xf32>
    %131 = arith.negf %130 : vector<8x128xf32>
    %132 = math.exp %131 : vector<8x128xf32>
    %cst_39 = arith.constant 1.000000e+00 : f32
    %133 = vector.broadcast %cst_39 : f32 to vector<8x128xf32>
    %134 = arith.addf %133, %132 : vector<8x128xf32>
    %135 = arith.divf %133, %134 : vector<8x128xf32>
    %136 = vector.extract_strided_slice %123 {offsets = [0, 256], sizes = [8, 128], strides = [1, 1]} : vector<8x512xf32> to vector<8x128xf32>
    %137 = vector.extract_strided_slice %123 {offsets = [0, 384], sizes = [8, 128], strides = [1, 1]} : vector<8x512xf32> to vector<8x128xf32>
    %138 = arith.mulf %129, %137 : vector<8x128xf32>
    %139 = arith.addf %136, %138 : vector<8x128xf32>
    %140 = math.tanh %139 : vector<8x128xf32>
    %cst_40 = arith.constant 1.000000e+00 : f32
    %141 = vector.broadcast %cst_40 : f32 to vector<8x128xf32>
    %142 = arith.subf %141, %135 : vector<8x128xf32>
    %143 = arith.mulf %142, %140 : vector<8x128xf32>
    %144 = arith.mulf %135, %73 : vector<8x128xf32>
    %145 = arith.addf %143, %144 : vector<8x128xf32>
    %146 = arith.truncf %145 : vector<8x128xf32> to vector<8x128xbf16>
    %cst_41 = arith.constant dense<0.000000e+00> : vector<8x128xf32>
    %147 = tpu.matmul %146, %6, %cst_41 {dimension_numbers = #tpu.dot_dimension_numbers<[1], [0], [0], [1], [0, 0, 1, 1], [], []>} : vector<8x128xbf16>, vector<128x128xbf16>, vector<8x128xf32> -> vector<8x128xf32>
    %148 = vector.broadcast %7 : vector<1x128xf32> to vector<8x128xf32>
    %149 = arith.addf %147, %148 : vector<8x128xf32>
    %cst_42 = arith.constant 0.000000e+00 : f32
    %150 = vector.broadcast %cst_42 : f32 to vector<8x128xf32>
    %151 = arith.maximumf %149, %150 : vector<8x128xf32>
    %152 = arith.index_cast %c1_i32 : i32 to index
    %c0_43 = arith.constant 0 : index
    %c0_44 = arith.constant 0 : index
    %153 = vector.load %arg9[%152, %c0_43, %c0_44] : memref<4x8x128xf32, #tpu.memory_space<vmem>>, vector<1x8x128xf32>
    %154 = vector.shape_cast %153 : vector<1x8x128xf32> to vector<8x128xf32>
    %155 = vector.shape_cast %151 : vector<8x128xf32> to vector<1x8x128xf32>
    tpu.vector_store %arg9[%152, %c0_43, %c0_44], %155 {strides = array<i32>} : memref<4x8x128xf32, #tpu.memory_space<vmem>>, vector<1x8x128xf32>,
    %c2_i32 = arith.constant 2 : i32
    %156 = arith.index_cast %c2_i32 : i32 to index
    %c0_45 = arith.constant 0 : index
    %c0_46 = arith.constant 0 : index
    %157 = vector.load %arg1[%156, %c0_45, %c0_46] : memref<4x8x384xf32, #tpu.memory_space<vmem>>, vector<1x8x384xf32>
    %158 = vector.shape_cast %157 : vector<1x8x384xf32> to vector<8x384xf32>
    %159 = arith.truncf %116 : vector<8x128xf32> to vector<8x128xbf16>
    %cst_47 = arith.constant dense<0.000000e+00> : vector<8x384xf32>
    %160 = tpu.matmul %159, %0, %cst_47 {dimension_numbers = #tpu.dot_dimension_numbers<[1], [0], [0], [1], [0, 0, 1, 1], [], []>} : vector<8x128xbf16>, vector<128x384xbf16>, vector<8x384xf32> -> vector<8x384xf32>
    %161 = vector.broadcast %1 : vector<1x384xf32> to vector<8x384xf32>
    %162 = arith.addf %160, %161 : vector<8x384xf32>
    %163 = vector.extract_strided_slice %158 {offsets = [0, 0], sizes = [8, 128], strides = [1, 1]} : vector<8x384xf32> to vector<8x128xf32>
    %164 = vector.extract_strided_slice %162 {offsets = [0, 0], sizes = [8, 128], strides = [1, 1]} : vector<8x384xf32> to vector<8x128xf32>
    %165 = arith.addf %163, %164 : vector<8x128xf32>
    %166 = arith.negf %165 : vector<8x128xf32>
    %167 = math.exp %166 : vector<8x128xf32>
    %cst_48 = arith.constant 1.000000e+00 : f32
    %168 = vector.broadcast %cst_48 : f32 to vector<8x128xf32>
    %169 = arith.addf %168, %167 : vector<8x128xf32>
    %170 = arith.divf %168, %169 : vector<8x128xf32>
    %171 = vector.extract_strided_slice %158 {offsets = [0, 128], sizes = [8, 128], strides = [1, 1]} : vector<8x384xf32> to vector<8x128xf32>
    %172 = vector.extract_strided_slice %162 {offsets = [0, 128], sizes = [8, 128], strides = [1, 1]} : vector<8x384xf32> to vector<8x128xf32>
    %173 = arith.addf %171, %172 : vector<8x128xf32>
    %174 = arith.negf %173 : vector<8x128xf32>
    %175 = math.exp %174 : vector<8x128xf32>
    %cst_49 = arith.constant 1.000000e+00 : f32
    %176 = vector.broadcast %cst_49 : f32 to vector<8x128xf32>
    %177 = arith.addf %176, %175 : vector<8x128xf32>
    %178 = arith.divf %176, %177 : vector<8x128xf32>
    %179 = vector.extract_strided_slice %158 {offsets = [0, 256], sizes = [8, 128], strides = [1, 1]} : vector<8x384xf32> to vector<8x128xf32>
    %180 = vector.extract_strided_slice %162 {offsets = [0, 256], sizes = [8, 128], strides = [1, 1]} : vector<8x384xf32> to vector<8x128xf32>
    %181 = arith.mulf %170, %180 : vector<8x128xf32>
    %182 = arith.addf %179, %181 : vector<8x128xf32>
    %183 = math.tanh %182 : vector<8x128xf32>
    %cst_50 = arith.constant 1.000000e+00 : f32
    %184 = vector.broadcast %cst_50 : f32 to vector<8x128xf32>
    %185 = arith.subf %184, %178 : vector<8x128xf32>
    %186 = arith.mulf %185, %183 : vector<8x128xf32>
    %187 = arith.mulf %178, %116 : vector<8x128xf32>
    %188 = arith.addf %186, %187 : vector<8x128xf32>
    %189 = arith.truncf %188 : vector<8x128xf32> to vector<8x128xbf16>
    %cst_51 = arith.constant dense<0.000000e+00> : vector<8x512xf32>
    %190 = tpu.matmul %189, %3, %cst_51 {dimension_numbers = #tpu.dot_dimension_numbers<[1], [0], [0], [1], [0, 0, 1, 1], [], []>} : vector<8x128xbf16>, vector<128x512xbf16>, vector<8x512xf32> -> vector<8x512xf32>
    %191 = arith.truncf %145 : vector<8x128xf32> to vector<8x128xbf16>
    %cst_52 = arith.constant dense<0.000000e+00> : vector<8x512xf32>
    %192 = tpu.matmul %191, %4, %cst_52 {dimension_numbers = #tpu.dot_dimension_numbers<[1], [0], [0], [1], [0, 0, 1, 1], [], []>} : vector<8x128xbf16>, vector<128x512xbf16>, vector<8x512xf32> -> vector<8x512xf32>
    %193 = arith.addf %190, %192 : vector<8x512xf32>
    %194 = vector.broadcast %5 : vector<1x512xf32> to vector<8x512xf32>
    %195 = arith.addf %193, %194 : vector<8x512xf32>
    %196 = vector.extract_strided_slice %195 {offsets = [0, 0], sizes = [8, 128], strides = [1, 1]} : vector<8x512xf32> to vector<8x128xf32>
    %197 = arith.negf %196 : vector<8x128xf32>
    %198 = math.exp %197 : vector<8x128xf32>
    %cst_53 = arith.constant 1.000000e+00 : f32
    %199 = vector.broadcast %cst_53 : f32 to vector<8x128xf32>
    %200 = arith.addf %199, %198 : vector<8x128xf32>
    %201 = arith.divf %199, %200 : vector<8x128xf32>
    %202 = vector.extract_strided_slice %195 {offsets = [0, 128], sizes = [8, 128], strides = [1, 1]} : vector<8x512xf32> to vector<8x128xf32>
    %203 = arith.negf %202 : vector<8x128xf32>
    %204 = math.exp %203 : vector<8x128xf32>
    %cst_54 = arith.constant 1.000000e+00 : f32
    %205 = vector.broadcast %cst_54 : f32 to vector<8x128xf32>
    %206 = arith.addf %205, %204 : vector<8x128xf32>
    %207 = arith.divf %205, %206 : vector<8x128xf32>
    %208 = vector.extract_strided_slice %195 {offsets = [0, 256], sizes = [8, 128], strides = [1, 1]} : vector<8x512xf32> to vector<8x128xf32>
    %209 = vector.extract_strided_slice %195 {offsets = [0, 384], sizes = [8, 128], strides = [1, 1]} : vector<8x512xf32> to vector<8x128xf32>
    %210 = arith.mulf %201, %209 : vector<8x128xf32>
    %211 = arith.addf %208, %210 : vector<8x128xf32>
    %212 = math.tanh %211 : vector<8x128xf32>
    %cst_55 = arith.constant 1.000000e+00 : f32
    %213 = vector.broadcast %cst_55 : f32 to vector<8x128xf32>
    %214 = arith.subf %213, %207 : vector<8x128xf32>
    %215 = arith.mulf %214, %212 : vector<8x128xf32>
    %216 = arith.mulf %207, %145 : vector<8x128xf32>
    %217 = arith.addf %215, %216 : vector<8x128xf32>
    %218 = arith.truncf %217 : vector<8x128xf32> to vector<8x128xbf16>
    %cst_56 = arith.constant dense<0.000000e+00> : vector<8x128xf32>
    %219 = tpu.matmul %218, %6, %cst_56 {dimension_numbers = #tpu.dot_dimension_numbers<[1], [0], [0], [1], [0, 0, 1, 1], [], []>} : vector<8x128xbf16>, vector<128x128xbf16>, vector<8x128xf32> -> vector<8x128xf32>
    %220 = vector.broadcast %7 : vector<1x128xf32> to vector<8x128xf32>
    %221 = arith.addf %219, %220 : vector<8x128xf32>
    %cst_57 = arith.constant 0.000000e+00 : f32
    %222 = vector.broadcast %cst_57 : f32 to vector<8x128xf32>
    %223 = arith.maximumf %221, %222 : vector<8x128xf32>
    %224 = arith.index_cast %c2_i32 : i32 to index
    %c0_58 = arith.constant 0 : index
    %c0_59 = arith.constant 0 : index
    %225 = vector.load %arg9[%224, %c0_58, %c0_59] : memref<4x8x128xf32, #tpu.memory_space<vmem>>, vector<1x8x128xf32>
    %226 = vector.shape_cast %225 : vector<1x8x128xf32> to vector<8x128xf32>
    %227 = vector.shape_cast %223 : vector<8x128xf32> to vector<1x8x128xf32>
    tpu.vector_store %arg9[%224, %c0_58, %c0_59], %227 {strides = array<i32>} : memref<4x8x128xf32, #tpu.memory_space<vmem>>, vector<1x8x128xf32>,
    %c3_i32 = arith.constant 3 : i32
    %228 = arith.index_cast %c3_i32 : i32 to index
    %c0_60 = arith.constant 0 : index
    %c0_61 = arith.constant 0 : index
    %229 = vector.load %arg1[%228, %c0_60, %c0_61] : memref<4x8x384xf32, #tpu.memory_space<vmem>>, vector<1x8x384xf32>
    %230 = vector.shape_cast %229 : vector<1x8x384xf32> to vector<8x384xf32>
    %231 = arith.truncf %188 : vector<8x128xf32> to vector<8x128xbf16>
    %cst_62 = arith.constant dense<0.000000e+00> : vector<8x384xf32>
    %232 = tpu.matmul %231, %0, %cst_62 {dimension_numbers = #tpu.dot_dimension_numbers<[1], [0], [0], [1], [0, 0, 1, 1], [], []>} : vector<8x128xbf16>, vector<128x384xbf16>, vector<8x384xf32> -> vector<8x384xf32>
    %233 = vector.broadcast %1 : vector<1x384xf32> to vector<8x384xf32>
    %234 = arith.addf %232, %233 : vector<8x384xf32>
    %235 = vector.extract_strided_slice %230 {offsets = [0, 0], sizes = [8, 128], strides = [1, 1]} : vector<8x384xf32> to vector<8x128xf32>
    %236 = vector.extract_strided_slice %234 {offsets = [0, 0], sizes = [8, 128], strides = [1, 1]} : vector<8x384xf32> to vector<8x128xf32>
    %237 = arith.addf %235, %236 : vector<8x128xf32>
    %238 = arith.negf %237 : vector<8x128xf32>
    %239 = math.exp %238 : vector<8x128xf32>
    %cst_63 = arith.constant 1.000000e+00 : f32
    %240 = vector.broadcast %cst_63 : f32 to vector<8x128xf32>
    %241 = arith.addf %240, %239 : vector<8x128xf32>
    %242 = arith.divf %240, %241 : vector<8x128xf32>
    %243 = vector.extract_strided_slice %230 {offsets = [0, 128], sizes = [8, 128], strides = [1, 1]} : vector<8x384xf32> to vector<8x128xf32>
    %244 = vector.extract_strided_slice %234 {offsets = [0, 128], sizes = [8, 128], strides = [1, 1]} : vector<8x384xf32> to vector<8x128xf32>
    %245 = arith.addf %243, %244 : vector<8x128xf32>
    %246 = arith.negf %245 : vector<8x128xf32>
    %247 = math.exp %246 : vector<8x128xf32>
    %cst_64 = arith.constant 1.000000e+00 : f32
    %248 = vector.broadcast %cst_64 : f32 to vector<8x128xf32>
    %249 = arith.addf %248, %247 : vector<8x128xf32>
    %250 = arith.divf %248, %249 : vector<8x128xf32>
    %251 = vector.extract_strided_slice %230 {offsets = [0, 256], sizes = [8, 128], strides = [1, 1]} : vector<8x384xf32> to vector<8x128xf32>
    %252 = vector.extract_strided_slice %234 {offsets = [0, 256], sizes = [8, 128], strides = [1, 1]} : vector<8x384xf32> to vector<8x128xf32>
    %253 = arith.mulf %242, %252 : vector<8x128xf32>
    %254 = arith.addf %251, %253 : vector<8x128xf32>
    %255 = math.tanh %254 : vector<8x128xf32>
    %cst_65 = arith.constant 1.000000e+00 : f32
    %256 = vector.broadcast %cst_65 : f32 to vector<8x128xf32>
    %257 = arith.subf %256, %250 : vector<8x128xf32>
    %258 = arith.mulf %257, %255 : vector<8x128xf32>
    %259 = arith.mulf %250, %188 : vector<8x128xf32>
    %260 = arith.addf %258, %259 : vector<8x128xf32>
    %261 = arith.truncf %260 : vector<8x128xf32> to vector<8x128xbf16>
    %cst_66 = arith.constant dense<0.000000e+00> : vector<8x512xf32>
    %262 = tpu.matmul %261, %3, %cst_66 {dimension_numbers = #tpu.dot_dimension_numbers<[1], [0], [0], [1], [0, 0, 1, 1], [], []>} : vector<8x128xbf16>, vector<128x512xbf16>, vector<8x512xf32> -> vector<8x512xf32>
    %263 = arith.truncf %217 : vector<8x128xf32> to vector<8x128xbf16>
    %cst_67 = arith.constant dense<0.000000e+00> : vector<8x512xf32>
    %264 = tpu.matmul %263, %4, %cst_67 {dimension_numbers = #tpu.dot_dimension_numbers<[1], [0], [0], [1], [0, 0, 1, 1], [], []>} : vector<8x128xbf16>, vector<128x512xbf16>, vector<8x512xf32> -> vector<8x512xf32>
    %265 = arith.addf %262, %264 : vector<8x512xf32>
    %266 = vector.broadcast %5 : vector<1x512xf32> to vector<8x512xf32>
    %267 = arith.addf %265, %266 : vector<8x512xf32>
    %268 = vector.extract_strided_slice %267 {offsets = [0, 0], sizes = [8, 128], strides = [1, 1]} : vector<8x512xf32> to vector<8x128xf32>
    %269 = arith.negf %268 : vector<8x128xf32>
    %270 = math.exp %269 : vector<8x128xf32>
    %cst_68 = arith.constant 1.000000e+00 : f32
    %271 = vector.broadcast %cst_68 : f32 to vector<8x128xf32>
    %272 = arith.addf %271, %270 : vector<8x128xf32>
    %273 = arith.divf %271, %272 : vector<8x128xf32>
    %274 = vector.extract_strided_slice %267 {offsets = [0, 128], sizes = [8, 128], strides = [1, 1]} : vector<8x512xf32> to vector<8x128xf32>
    %275 = arith.negf %274 : vector<8x128xf32>
    %276 = math.exp %275 : vector<8x128xf32>
    %cst_69 = arith.constant 1.000000e+00 : f32
    %277 = vector.broadcast %cst_69 : f32 to vector<8x128xf32>
    %278 = arith.addf %277, %276 : vector<8x128xf32>
    %279 = arith.divf %277, %278 : vector<8x128xf32>
    %280 = vector.extract_strided_slice %267 {offsets = [0, 256], sizes = [8, 128], strides = [1, 1]} : vector<8x512xf32> to vector<8x128xf32>
    %281 = vector.extract_strided_slice %267 {offsets = [0, 384], sizes = [8, 128], strides = [1, 1]} : vector<8x512xf32> to vector<8x128xf32>
    %282 = arith.mulf %273, %281 : vector<8x128xf32>
    %283 = arith.addf %280, %282 : vector<8x128xf32>
    %284 = math.tanh %283 : vector<8x128xf32>
    %cst_70 = arith.constant 1.000000e+00 : f32
    %285 = vector.broadcast %cst_70 : f32 to vector<8x128xf32>
    %286 = arith.subf %285, %279 : vector<8x128xf32>
    %287 = arith.mulf %286, %284 : vector<8x128xf32>
    %288 = arith.mulf %279, %217 : vector<8x128xf32>
    %289 = arith.addf %287, %288 : vector<8x128xf32>
    %290 = arith.truncf %289 : vector<8x128xf32> to vector<8x128xbf16>
    %cst_71 = arith.constant dense<0.000000e+00> : vector<8x128xf32>
    %291 = tpu.matmul %290, %6, %cst_71 {dimension_numbers = #tpu.dot_dimension_numbers<[1], [0], [0], [1], [0, 0, 1, 1], [], []>} : vector<8x128xbf16>, vector<128x128xbf16>, vector<8x128xf32> -> vector<8x128xf32>
    %292 = vector.broadcast %7 : vector<1x128xf32> to vector<8x128xf32>
    %293 = arith.addf %291, %292 : vector<8x128xf32>
    %cst_72 = arith.constant 0.000000e+00 : f32
    %294 = vector.broadcast %cst_72 : f32 to vector<8x128xf32>
    %295 = arith.maximumf %293, %294 : vector<8x128xf32>
    %296 = arith.index_cast %c3_i32 : i32 to index
    %c0_73 = arith.constant 0 : index
    %c0_74 = arith.constant 0 : index
    %297 = vector.load %arg9[%296, %c0_73, %c0_74] : memref<4x8x128xf32, #tpu.memory_space<vmem>>, vector<1x8x128xf32>
    %298 = vector.shape_cast %297 : vector<1x8x128xf32> to vector<8x128xf32>
    %299 = vector.shape_cast %295 : vector<8x128xf32> to vector<1x8x128xf32>
    tpu.vector_store %arg9[%296, %c0_73, %c0_74], %299 {strides = array<i32>} : memref<4x8x128xf32, #tpu.memory_space<vmem>>, vector<1x8x128xf32>,
    %c4_i32 = arith.constant 4 : i32
    %c0_75 = arith.constant 0 : index
    %c0_76 = arith.constant 0 : index
    %c0_77 = arith.constant 0 : index
    %300 = vector.load %arg10[%c0_75, %c0_76, %c0_77] : memref<2x8x128xf32, #tpu.memory_space<vmem>>, vector<1x8x128xf32>
    %301 = vector.shape_cast %300 : vector<1x8x128xf32> to vector<8x128xf32>
    %302 = vector.shape_cast %260 : vector<8x128xf32> to vector<1x8x128xf32>
    tpu.vector_store %arg10[%c0_75, %c0_76, %c0_77], %302 {strides = array<i32>} : memref<2x8x128xf32, #tpu.memory_space<vmem>>, vector<1x8x128xf32>,
    %c1_78 = arith.constant 1 : index
    %c0_79 = arith.constant 0 : index
    %c0_80 = arith.constant 0 : index
    %303 = vector.load %arg10[%c1_78, %c0_79, %c0_80] : memref<2x8x128xf32, #tpu.memory_space<vmem>>, vector<1x8x128xf32>
    %304 = vector.shape_cast %303 : vector<1x8x128xf32> to vector<8x128xf32>
    %305 = vector.shape_cast %289 : vector<8x128xf32> to vector<1x8x128xf32>
    tpu.vector_store %arg10[%c1_78, %c0_79, %c0_80], %305 {strides = array<i32>} : memref<2x8x128xf32, #tpu.memory_space<vmem>>, vector<1x8x128xf32>,
    return
  }
  func.func @transform_0(%arg0: i32) -> (i32, i32, i32) {
    %c0_i32 = arith.constant 0 : i32
    %c0_i32_0 = arith.constant 0 : i32
    %c0_i32_1 = arith.constant 0 : i32
    return %c0_i32, %arg0, %c0_i32_0 : i32, i32, i32
  }
  func.func @transform_1(%arg0: i32) -> (i32, i32, i32) {
    %c0_i32 = arith.constant 0 : i32
    %c0_i32_0 = arith.constant 0 : i32
    %c0_i32_1 = arith.constant 0 : i32
    return %c0_i32, %arg0, %c0_i32_0 : i32, i32, i32
  }
  func.func @transform_2(%arg0: i32) -> (i32, i32) {
    %c0_i32 = arith.constant 0 : i32
    %c0_i32_0 = arith.constant 0 : i32
    %c0_i32_1 = arith.constant 0 : i32
    return %c0_i32, %c0_i32_0 : i32, i32
  }
  func.func @transform_3(%arg0: i32) -> (i32, i32) {
    %c0_i32 = arith.constant 0 : i32
    %c0_i32_0 = arith.constant 0 : i32
    %c0_i32_1 = arith.constant 0 : i32
    return %c0_i32, %c0_i32_0 : i32, i32
  }
  func.func @transform_4(%arg0: i32) -> (i32, i32) {
    %c0_i32 = arith.constant 0 : i32
    %c0_i32_0 = arith.constant 0 : i32
    %c0_i32_1 = arith.constant 0 : i32
    return %c0_i32, %c0_i32_0 : i32, i32
  }
  func.func @transform_5(%arg0: i32) -> (i32, i32) {
    %c0_i32 = arith.constant 0 : i32
    %c0_i32_0 = arith.constant 0 : i32
    %c0_i32_1 = arith.constant 0 : i32
    return %c0_i32, %c0_i32_0 : i32, i32
  }
  func.func @transform_6(%arg0: i32) -> (i32, i32) {
    %c0_i32 = arith.constant 0 : i32
    %c0_i32_0 = arith.constant 0 : i32
    %c0_i32_1 = arith.constant 0 : i32
    return %c0_i32, %c0_i32_0 : i32, i32
  }
  func.func @transform_7(%arg0: i32) -> (i32, i32) {
    %c0_i32 = arith.constant 0 : i32
    %c0_i32_0 = arith.constant 0 : i32
    %c0_i32_1 = arith.constant 0 : i32
    return %c0_i32, %c0_i32_0 : i32, i32
  }
  func.func @transform_8(%arg0: i32) -> (i32, i32, i32) {
    %c0_i32 = arith.constant 0 : i32
    %c0_i32_0 = arith.constant 0 : i32
    %c0_i32_1 = arith.constant 0 : i32
    return %c0_i32, %arg0, %c0_i32_0 : i32, i32, i32
  }
  func.func @transform_9(%arg0: i32) -> (i32, i32, i32) {
    %c0_i32 = arith.constant 0 : i32
    %c0_i32_0 = arith.constant 0 : i32
    %c0_i32_1 = arith.constant 0 : i32
    return %c0_i32, %arg0, %c0_i32_0 : i32, i32, i32
  }
}

</mosaic_0001>

<llo_original>
// kernel: encoder_rnn_forward.4
$region0: #{encoder_rnn_forward.4}
  #allocation0 [shape = 'u32[]', space=smem, size = 0x4, offset = 0x4, fixed_abs, tag = 'smem constant byte address 0x4 - core index']
  #allocation1 [shape = 'u32[144,128]{1,0:T(1,128)}', space=vmem, size = 0x12000, scoped, tag = 'internal scratch']
  %s0 = inlined_call_operand.vmem [shape: f32[1152,100], index: 0, kind: input, shape index: {}]
  %s1 = inlined_call_operand.vmem [shape: bf16[100,512], index: 1, kind: input, shape index: {}]
  %s2 = inlined_call_operand.vmem [shape: f32[1,128], index: 2, kind: input, shape index: {}]
  %s3 = inlined_call_operand.vmem [shape: bf16[1152,128], index: 3, kind: output, shape index: {}]
  %s4 = sld [smem:[#allocation0]]
  $region22: #{encoder_rnn_forward.4} parent=0
    _
  %s6 = ssub.s32 1, %s4
  %s7 = scalar_select 0, %s6, %s4
  // Predicated region
  $region2: #{encoder_rnn_forward.4} parent=0 // pred_check
    _
  $region3: #{encoder_rnn_forward.4} parent=0 // pred_check_branch
    %9 = sbr.rel (0) target = $region5
  $region4: #{encoder_rnn_forward.4} parent=0 // pred_region
    _
  $region5: #{encoder_rnn_forward.4} parent=0 // pred_fallthru
    _
  // Predicated region
  $region6: #{encoder_rnn_forward.4} parent=0 // pred_check
    _
  $region7: #{encoder_rnn_forward.4} parent=0 // pred_check_branch
    %11 = sbr.rel (0) target = $region9
  $region8: #{encoder_rnn_forward.4} parent=0 // pred_region
    _
  $region9: #{encoder_rnn_forward.4} parent=0 // pred_fallthru
    _
  // Predicated region
  $region10: #{encoder_rnn_forward.4} parent=0 // pred_check
    _
  $region11: #{encoder_rnn_forward.4} parent=0 // pred_check_branch
    %13 = sbr.rel (0) target = $region13
  $region12: #{encoder_rnn_forward.4} parent=0 // pred_region
    _
  $region13: #{encoder_rnn_forward.4} parent=0 // pred_fallthru
    _
  %v15 = vld [vmem:[%s0] sm:$0xff]
  %v16 = vld [vmem:[%s0 + $0x8] sm:$0xff]
  %v17 = vld [vmem:[%s0 + $0x10] sm:$0xff]
  %v18 = vld [vmem:[%s0 + $0x18] sm:$0xff]
  %v19 = vld [vmem:[%s0 + $0x20] sm:$0xff]
  %v20 = vld [vmem:[%s0 + $0x28] sm:$0xff]
  %v21 = vld [vmem:[%s0 + $0x30] sm:$0xff]
  %v22 = vld [vmem:[%s0 + $0x38] sm:$0xff]
  %v23 = vld [vmem:[%s0 + $0x40] sm:$0xff]
  %v24 = vld [vmem:[%s0 + $0x48] sm:$0xff]
  %v25 = vld [vmem:[%s0 + $0x50] sm:$0xff]
  %v26 = vld [vmem:[%s0 + $0x58] sm:$0xff]
  %v27 = vld [vmem:[%s0 + $0x60] sm:$0xff]
  %v28 = vld [vmem:[%s0 + $0x68] sm:$0xff]
  %v29 = vld [vmem:[%s0 + $0x70] sm:$0xff]
  %v30 = vld [vmem:[%s0 + $0x78] sm:$0xff]
  %v31 = vld [vmem:[%s0 + $0x80] sm:$0xff]
  %v32 = vld [vmem:[%s0 + $0x88] sm:$0xff]
  %v33 = vld [vmem:[%s0 + $0x90] sm:$0xff]
  %v34 = vld [vmem:[%s0 + $0x98] sm:$0xff]
  %v35 = vld [vmem:[%s0 + $0xa0] sm:$0xff]
  %v36 = vld [vmem:[%s0 + $0xa8] sm:$0xff]
  %v37 = vld [vmem:[%s0 + $0xb0] sm:$0xff]
  %v38 = vld [vmem:[%s0 + $0xb8] sm:$0xff]
  %v39 = vld [vmem:[%s0 + $0xc0] sm:$0xff]
  %v40 = vld [vmem:[%s0 + $0xc8] sm:$0xff]
  %v41 = vld [vmem:[%s0 + $0xd0] sm:$0xff]
  %v42 = vld [vmem:[%s0 + $0xd8] sm:$0xff]
  %v43 = vld [vmem:[%s0 + $0xe0] sm:$0xff]
  %v44 = vld [vmem:[%s0 + $0xe8] sm:$0xff]
  %v45 = vld [vmem:[%s0 + $0xf0] sm:$0xff]
  %v46 = vld [vmem:[%s0 + $0xf8] sm:$0xff]
  %v47 = vld [vmem:[%s0 + $0x100] sm:$0xff]
  %v48 = vld [vmem:[%s0 + $0x108] sm:$0xff]
  %v49 = vld [vmem:[%s0 + $0x110] sm:$0xff]
  %v50 = vld [vmem:[%s0 + $0x118] sm:$0xff]
  %v51 = vld [vmem:[%s0 + $0x120] sm:$0xff]
  %v52 = vld [vmem:[%s0 + $0x128] sm:$0xff]
  %v53 = vld [vmem:[%s0 + $0x130] sm:$0xff]
  %v54 = vld [vmem:[%s0 + $0x138] sm:$0xff]
  %v55 = vld [vmem:[%s0 + $0x140] sm:$0xff]
  %v56 = vld [vmem:[%s0 + $0x148] sm:$0xff]
  %v57 = vld [vmem:[%s0 + $0x150] sm:$0xff]
  %v58 = vld [vmem:[%s0 + $0x158] sm:$0xff]
  %v59 = vld [vmem:[%s0 + $0x160] sm:$0xff]
  %v60 = vld [vmem:[%s0 + $0x168] sm:$0xff]
  %v61 = vld [vmem:[%s0 + $0x170] sm:$0xff]
  %v62 = vld [vmem:[%s0 + $0x178] sm:$0xff]
  %v63 = vld [vmem:[%s0 + $0x180] sm:$0xff]
  %v64 = vld [vmem:[%s0 + $0x188] sm:$0xff]
  %v65 = vld [vmem:[%s0 + $0x190] sm:$0xff]
  %v66 = vld [vmem:[%s0 + $0x198] sm:$0xff]
  %v67 = vld [vmem:[%s0 + $0x1a0] sm:$0xff]
  %v68 = vld [vmem:[%s0 + $0x1a8] sm:$0xff]
  %v69 = vld [vmem:[%s0 + $0x1b0] sm:$0xff]
  %v70 = vld [vmem:[%s0 + $0x1b8] sm:$0xff]
  %v71 = vld [vmem:[%s0 + $0x1c0] sm:$0xff]
  %v72 = vld [vmem:[%s0 + $0x1c8] sm:$0xff]
  %v73 = vld [vmem:[%s0 + $0x1d0] sm:$0xff]
  %v74 = vld [vmem:[%s0 + $0x1d8] sm:$0xff]
  %v75 = vld [vmem:[%s0 + $0x1e0] sm:$0xff]
  %v76 = vld [vmem:[%s0 + $0x1e8] sm:$0xff]
  %v77 = vld [vmem:[%s0 + $0x1f0] sm:$0xff]
  %v78 = vld [vmem:[%s0 + $0x1f8] sm:$0xff]
  %v79 = vld [vmem:[%s0 + $0x200] sm:$0xff]
  %v80 = vld [vmem:[%s0 + $0x208] sm:$0xff]
  %v81 = vld [vmem:[%s0 + $0x210] sm:$0xff]
  %v82 = vld [vmem:[%s0 + $0x218] sm:$0xff]
  %v83 = vld [vmem:[%s0 + $0x220] sm:$0xff]
  %v84 = vld [vmem:[%s0 + $0x228] sm:$0xff]
  %v85 = vld [vmem:[%s0 + $0x230] sm:$0xff]
  %v86 = vld [vmem:[%s0 + $0x238] sm:$0xff]
  %v87 = vld [vmem:[%s0 + $0x240] sm:$0xff]
  %v88 = vld [vmem:[%s0 + $0x248] sm:$0xff]
  %v89 = vld [vmem:[%s0 + $0x250] sm:$0xff]
  %v90 = vld [vmem:[%s0 + $0x258] sm:$0xff]
  %v91 = vld [vmem:[%s0 + $0x260] sm:$0xff]
  %v92 = vld [vmem:[%s0 + $0x268] sm:$0xff]
  %v93 = vld [vmem:[%s0 + $0x270] sm:$0xff]
  %v94 = vld [vmem:[%s0 + $0x278] sm:$0xff]
  %v95 = vld [vmem:[%s0 + $0x280] sm:$0xff]
  %v96 = vld [vmem:[%s0 + $0x288] sm:$0xff]
  %v97 = vld [vmem:[%s0 + $0x290] sm:$0xff]
  %v98 = vld [vmem:[%s0 + $0x298] sm:$0xff]
  %v99 = vld [vmem:[%s0 + $0x2a0] sm:$0xff]
  %v100 = vld [vmem:[%s0 + $0x2a8] sm:$0xff]
  %v101 = vld [vmem:[%s0 + $0x2b0] sm:$0xff]
  %v102 = vld [vmem:[%s0 + $0x2b8] sm:$0xff]
  %v103 = vld [vmem:[%s0 + $0x2c0] sm:$0xff]
  %v104 = vld [vmem:[%s0 + $0x2c8] sm:$0xff]
  %v105 = vld [vmem:[%s0 + $0x2d0] sm:$0xff]
  %v106 = vld [vmem:[%s0 + $0x2d8] sm:$0xff]
  %v107 = vld [vmem:[%s0 + $0x2e0] sm:$0xff]
  %v108 = vld [vmem:[%s0 + $0x2e8] sm:$0xff]
  %v109 = vld [vmem:[%s0 + $0x2f0] sm:$0xff]
  %v110 = vld [vmem:[%s0 + $0x2f8] sm:$0xff]
  %v111 = vld [vmem:[%s0 + $0x300] sm:$0xff]
  %v112 = vld [vmem:[%s0 + $0x308] sm:$0xff]
  %v113 = vld [vmem:[%s0 + $0x310] sm:$0xff]
  %v114 = vld [vmem:[%s0 + $0x318] sm:$0xff]
  %v115 = vld [vmem:[%s0 + $0x320] sm:$0xff]
  %v116 = vld [vmem:[%s0 + $0x328] sm:$0xff]
  %v117 = vld [vmem:[%s0 + $0x330] sm:$0xff]
  %v118 = vld [vmem:[%s0 + $0x338] sm:$0xff]
  %v119 = vld [vmem:[%s0 + $0x340] sm:$0xff]
  %v120 = vld [vmem:[%s0 + $0x348] sm:$0xff]
  %v121 = vld [vmem:[%s0 + $0x350] sm:$0xff]
  %v122 = vld [vmem:[%s0 + $0x358] sm:$0xff]
  %v123 = vld [vmem:[%s0 + $0x360] sm:$0xff]
  %v124 = vld [vmem:[%s0 + $0x368] sm:$0xff]
  %v125 = vld [vmem:[%s0 + $0x370] sm:$0xff]
  %v126 = vld [vmem:[%s0 + $0x378] sm:$0xff]
  %v127 = vld [vmem:[%s0 + $0x380] sm:$0xff]
  %v128 = vld [vmem:[%s0 + $0x388] sm:$0xff]
  %v129 = vld [vmem:[%s0 + $0x390] sm:$0xff]
  %v130 = vld [vmem:[%s0 + $0x398] sm:$0xff]
  %v131 = vld [vmem:[%s0 + $0x3a0] sm:$0xff]
  %v132 = vld [vmem:[%s0 + $0x3a8] sm:$0xff]
  %v133 = vld [vmem:[%s0 + $0x3b0] sm:$0xff]
  %v134 = vld [vmem:[%s0 + $0x3b8] sm:$0xff]
  %v135 = vld [vmem:[%s0 + $0x3c0] sm:$0xff]
  %v136 = vld [vmem:[%s0 + $0x3c8] sm:$0xff]
  %v137 = vld [vmem:[%s0 + $0x3d0] sm:$0xff]
  %v138 = vld [vmem:[%s0 + $0x3d8] sm:$0xff]
  %v139 = vld [vmem:[%s0 + $0x3e0] sm:$0xff]
  %v140 = vld [vmem:[%s0 + $0x3e8] sm:$0xff]
  %v141 = vld [vmem:[%s0 + $0x3f0] sm:$0xff]
  %v142 = vld [vmem:[%s0 + $0x3f8] sm:$0xff]
  %v143 = vld [vmem:[%s0 + $0x400] sm:$0xff]
  %v144 = vld [vmem:[%s0 + $0x408] sm:$0xff]
  %v145 = vld [vmem:[%s0 + $0x410] sm:$0xff]
  %v146 = vld [vmem:[%s0 + $0x418] sm:$0xff]
  %v147 = vld [vmem:[%s0 + $0x420] sm:$0xff]
  %v148 = vld [vmem:[%s0 + $0x428] sm:$0xff]
  %v149 = vld [vmem:[%s0 + $0x430] sm:$0xff]
  %v150 = vld [vmem:[%s0 + $0x438] sm:$0xff]
  %v151 = vld [vmem:[%s0 + $0x440] sm:$0xff]
  %v152 = vld [vmem:[%s0 + $0x448] sm:$0xff]
  %v153 = vld [vmem:[%s0 + $0x450] sm:$0xff]
  %v154 = vld [vmem:[%s0 + $0x458] sm:$0xff]
  %v155 = vld [vmem:[%s0 + $0x460] sm:$0xff]
  %v156 = vld [vmem:[%s0 + $0x468] sm:$0xff]
  %v157 = vld [vmem:[%s0 + $0x470] sm:$0xff]
  %v158 = vld [vmem:[%s0 + $0x478] sm:$0xff]
  %v159 = vpack.c.bf16 %v16, %v15
  %v160 = vpack.c.bf16 %v18, %v17
  %v161 = vpack.c.bf16 %v20, %v19
  %v162 = vpack.c.bf16 %v22, %v21
  %v163 = vpack.c.bf16 %v24, %v23
  %v164 = vpack.c.bf16 %v26, %v25
  %v165 = vpack.c.bf16 %v28, %v27
  %v166 = vpack.c.bf16 %v30, %v29
  %v167 = vpack.c.bf16 %v32, %v31
  %v168 = vpack.c.bf16 %v34, %v33
  %v169 = vpack.c.bf16 %v36, %v35
  %v170 = vpack.c.bf16 %v38, %v37
  %v171 = vpack.c.bf16 %v40, %v39
  %v172 = vpack.c.bf16 %v42, %v41
  %v173 = vpack.c.bf16 %v44, %v43
  %v174 = vpack.c.bf16 %v46, %v45
  %v175 = vpack.c.bf16 %v48, %v47
  %v176 = vpack.c.bf16 %v50, %v49
  %v177 = vpack.c.bf16 %v52, %v51
  %v178 = vpack.c.bf16 %v54, %v53
  %v179 = vpack.c.bf16 %v56, %v55
  %v180 = vpack.c.bf16 %v58, %v57
  %v181 = vpack.c.bf16 %v60, %v59
  %v182 = vpack.c.bf16 %v62, %v61
  %v183 = vpack.c.bf16 %v64, %v63
  %v184 = vpack.c.bf16 %v66, %v65
  %v185 = vpack.c.bf16 %v68, %v67
  %v186 = vpack.c.bf16 %v70, %v69
  %v187 = vpack.c.bf16 %v72, %v71
  %v188 = vpack.c.bf16 %v74, %v73
  %v189 = vpack.c.bf16 %v76, %v75
  %v190 = vpack.c.bf16 %v78, %v77
  %v191 = vpack.c.bf16 %v80, %v79
  %v192 = vpack.c.bf16 %v82, %v81
  %v193 = vpack.c.bf16 %v84, %v83
  %v194 = vpack.c.bf16 %v86, %v85
  %v195 = vpack.c.bf16 %v88, %v87
  %v196 = vpack.c.bf16 %v90, %v89
  %v197 = vpack.c.bf16 %v92, %v91
  %v198 = vpack.c.bf16 %v94, %v93
  %v199 = vpack.c.bf16 %v96, %v95
  %v200 = vpack.c.bf16 %v98, %v97
  %v201 = vpack.c.bf16 %v100, %v99
  %v202 = vpack.c.bf16 %v102, %v101
  %v203 = vpack.c.bf16 %v104, %v103
  %v204 = vpack.c.bf16 %v106, %v105
  %v205 = vpack.c.bf16 %v108, %v107
  %v206 = vpack.c.bf16 %v110, %v109
  %v207 = vpack.c.bf16 %v112, %v111
  %v208 = vpack.c.bf16 %v114, %v113
  %v209 = vpack.c.bf16 %v116, %v115
  %v210 = vpack.c.bf16 %v118, %v117
  %v211 = vpack.c.bf16 %v120, %v119
  %v212 = vpack.c.bf16 %v122, %v121
  %v213 = vpack.c.bf16 %v124, %v123
  %v214 = vpack.c.bf16 %v126, %v125
  %v215 = vpack.c.bf16 %v128, %v127
  %v216 = vpack.c.bf16 %v130, %v129
  %v217 = vpack.c.bf16 %v132, %v131
  %v218 = vpack.c.bf16 %v134, %v133
  %v219 = vpack.c.bf16 %v136, %v135
  %v220 = vpack.c.bf16 %v138, %v137
  %v221 = vpack.c.bf16 %v140, %v139
  %v222 = vpack.c.bf16 %v142, %v141
  %v223 = vpack.c.bf16 %v144, %v143
  %v224 = vpack.c.bf16 %v146, %v145
  %v225 = vpack.c.bf16 %v148, %v147
  %v226 = vpack.c.bf16 %v150, %v149
  %v227 = vpack.c.bf16 %v152, %v151
  %v228 = vpack.c.bf16 %v154, %v153
  %v229 = vpack.c.bf16 %v156, %v155
  %v230 = vpack.c.bf16 %v158, %v157
  %v231 = vld [vmem:[%s1] sm:$0xff]
  %v232 = vld [vmem:[%s1 + $0x8] sm:$0xff]
  %v233 = vld [vmem:[%s1 + $0x10] sm:$0xff]
  %v234 = vld [vmem:[%s1 + $0x18] sm:$0xff]
  %v235 = vld [vmem:[%s1 + $0x20] sm:$0xff]
  %v236 = vld [vmem:[%s1 + $0x28] sm:$0xff]
  %v237 = vld [vmem:[%s1 + $0x30] sm:$0xff]
  %v238 = vld [vmem:[%s1 + $0x38] sm:$0xff]
  %v239 = vld [vmem:[%s1 + $0x40] sm:$0xff]
  %v240 = vld [vmem:[%s1 + $0x48] sm:$0xff]
  %v241 = vld [vmem:[%s1 + $0x50] sm:$0xff]
  %v242 = vld [vmem:[%s1 + $0x58] sm:$0xff]
  %v243 = vld [vmem:[%s1 + $0x60] sm:$0xff]
  %v244 = vld [vmem:[%s1 + $0x68] sm:$0xff]
  %v245 = vld [vmem:[%s1 + $0x70] sm:$0xff]
  %v246 = vld [vmem:[%s1 + $0x78] sm:$0xff]
  %v247 = vld [vmem:[%s1 + $0x80] sm:$0xff]
  %v248 = vld [vmem:[%s1 + $0x88] sm:$0xff]
  %v249 = vld [vmem:[%s1 + $0x90] sm:$0xff]
  %v250 = vld [vmem:[%s1 + $0x98] sm:$0xff]
  %v251 = vld [vmem:[%s1 + $0xa0] sm:$0xff]
  %v252 = vld [vmem:[%s1 + $0xa8] sm:$0xff]
  %v253 = vld [vmem:[%s1 + $0xb0] sm:$0xff]
  %v254 = vld [vmem:[%s1 + $0xb8] sm:$0xff]
  %v255 = vld [vmem:[%s1 + $0xc0] sm:$0x33]
  %v256 = vld [vmem:[%s1 + $0xc8] sm:$0x33]
  %v283 = vunpack.c.l.b16 %v231
  %v284 = vunpack.c.h.b16 %v231
  %v285 = vunpack.c.l.b16 %v232
  %v286 = vunpack.c.h.b16 %v232
  %v287 = vunpack.c.l.b16 %v233
  %v288 = vunpack.c.h.b16 %v233
  %v289 = vunpack.c.l.b16 %v234
  %v290 = vunpack.c.h.b16 %v234
  %v291 = vunpack.c.l.b16 %v235
  %v292 = vunpack.c.h.b16 %v235
  %v293 = vunpack.c.l.b16 %v236
  %v294 = vunpack.c.h.b16 %v236
  %v295 = vunpack.c.l.b16 %v237
  %v296 = vunpack.c.h.b16 %v237
  %v297 = vunpack.c.l.b16 %v238
  %v298 = vunpack.c.h.b16 %v238
  %v299 = vunpack.c.l.b16 %v239
  %v300 = vunpack.c.h.b16 %v239
  %v301 = vunpack.c.l.b16 %v240
  %v302 = vunpack.c.h.b16 %v240
  %v303 = vunpack.c.l.b16 %v241
  %v304 = vunpack.c.h.b16 %v241
  %v305 = vunpack.c.l.b16 %v242
  %v306 = vunpack.c.h.b16 %v242
  %v307 = vunpack.c.l.b16 %v243
  %v308 = vunpack.c.h.b16 %v243
  %v309 = vunpack.c.l.b16 %v244
  %v310 = vunpack.c.h.b16 %v244
  %v311 = vunpack.c.l.b16 %v245
  %v312 = vunpack.c.h.b16 %v245
  %v313 = vunpack.c.l.b16 %v246
  %v314 = vunpack.c.h.b16 %v246
  %v315 = vunpack.c.l.b16 %v247
  %v316 = vunpack.c.h.b16 %v247
  %v317 = vunpack.c.l.b16 %v248
  %v318 = vunpack.c.h.b16 %v248
  %v319 = vunpack.c.l.b16 %v249
  %v320 = vunpack.c.h.b16 %v249
  %v321 = vunpack.c.l.b16 %v250
  %v322 = vunpack.c.h.b16 %v250
  %v323 = vunpack.c.l.b16 %v251
  %v324 = vunpack.c.h.b16 %v251
  %v325 = vunpack.c.l.b16 %v252
  %v326 = vunpack.c.h.b16 %v252
  %v327 = vunpack.c.l.b16 %v253
  %v328 = vunpack.c.h.b16 %v253
  %v329 = vunpack.c.l.b16 %v254
  %v330 = vunpack.c.h.b16 %v254
  %v331 = vunpack.c.l.b16 %v255
  %v332 = vunpack.c.h.b16 %v255
  %v333 = vunpack.c.l.b16 %v256
  %v334 = vunpack.c.h.b16 %v256
  %v335 = vpack.c.b16 %v287, %v283
  %v336 = vpack.c.b16 %v288, %v284
  %v337 = vpack.c.b16 %v289, %v285
  %v338 = vpack.c.b16 %v290, %v286
  %v339 = vpack.c.b16 %v295, %v291
  %v340 = vpack.c.b16 %v296, %v292
  %v341 = vpack.c.b16 %v297, %v293
  %v342 = vpack.c.b16 %v298, %v294
  %v343 = vpack.c.b16 %v303, %v299
  %v344 = vpack.c.b16 %v304, %v300
  %v345 = vpack.c.b16 %v305, %v301
  %v346 = vpack.c.b16 %v306, %v302
  %v347 = vpack.c.b16 %v311, %v307
  %v348 = vpack.c.b16 %v312, %v308
  %v349 = vpack.c.b16 %v313, %v309
  %v350 = vpack.c.b16 %v314, %v310
  %v351 = vpack.c.b16 %v319, %v315
  %v352 = vpack.c.b16 %v320, %v316
  %v353 = vpack.c.b16 %v321, %v317
  %v354 = vpack.c.b16 %v322, %v318
  %v355 = vpack.c.b16 %v327, %v323
  %v356 = vpack.c.b16 %v328, %v324
  %v357 = vpack.c.b16 %v329, %v325
  %v358 = vpack.c.b16 %v330, %v326
  %v359 = vpack.c.b16 %v331, %v331
  %v360 = vpack.c.b16 %v332, %v332
  %v361 = vpack.c.b16 %v333, %v333
  %v362 = vpack.c.b16 %v334, %v334
  %vm387 = vcmask 818176
  %v389 = vsel %vm387, %v159, 0
  %v392 = vsel %vm387, %v160, 0
  %v395 = vsel %vm387, %v161, 0
  %v398 = vsel %vm387, %v162, 0
  %v401 = vsel %vm387, %v163, 0
  %v404 = vsel %vm387, %v164, 0
  %v407 = vsel %vm387, %v165, 0
  %v410 = vsel %vm387, %v166, 0
  %v413 = vsel %vm387, %v167, 0
  %v416 = vsel %vm387, %v168, 0
  %v419 = vsel %vm387, %v169, 0
  %v422 = vsel %vm387, %v170, 0
  %v425 = vsel %vm387, %v171, 0
  %v428 = vsel %vm387, %v172, 0
  %v431 = vsel %vm387, %v173, 0
  %v434 = vsel %vm387, %v174, 0
  %v437 = vsel %vm387, %v175, 0
  %v440 = vsel %vm387, %v176, 0
  %v443 = vsel %vm387, %v177, 0
  %v446 = vsel %vm387, %v178, 0
  %v449 = vsel %vm387, %v179, 0
  %v452 = vsel %vm387, %v180, 0
  %v455 = vsel %vm387, %v181, 0
  %v458 = vsel %vm387, %v182, 0
  %v461 = vsel %vm387, %v183, 0
  %v464 = vsel %vm387, %v184, 0
  %v467 = vsel %vm387, %v185, 0
  %v470 = vsel %vm387, %v186, 0
  %v473 = vsel %vm387, %v187, 0
  %v476 = vsel %vm387, %v188, 0
  %v479 = vsel %vm387, %v189, 0
  %v482 = vsel %vm387, %v190, 0
  %v485 = vsel %vm387, %v191, 0
  %v488 = vsel %vm387, %v192, 0
  %v491 = vsel %vm387, %v193, 0
  %v494 = vsel %vm387, %v194, 0
  %v497 = vsel %vm387, %v195, 0
  %v500 = vsel %vm387, %v196, 0
  %v503 = vsel %vm387, %v197, 0
  %v506 = vsel %vm387, %v198, 0
  %v509 = vsel %vm387, %v199, 0
  %v512 = vsel %vm387, %v200, 0
  %v515 = vsel %vm387, %v201, 0
  %v518 = vsel %vm387, %v202, 0
  %v521 = vsel %vm387, %v203, 0
  %v524 = vsel %vm387, %v204, 0
  %v527 = vsel %vm387, %v205, 0
  %v530 = vsel %vm387, %v206, 0
  %v533 = vsel %vm387, %v207, 0
  %v536 = vsel %vm387, %v208, 0
  %v539 = vsel %vm387, %v209, 0
  %v542 = vsel %vm387, %v210, 0
  %v545 = vsel %vm387, %v211, 0
  %v548 = vsel %vm387, %v212, 0
  %v551 = vsel %vm387, %v213, 0
  %v554 = vsel %vm387, %v214, 0
  %v557 = vsel %vm387, %v215, 0
  %v560 = vsel %vm387, %v216, 0
  %v563 = vsel %vm387, %v217, 0
  %v566 = vsel %vm387, %v218, 0
  %v569 = vsel %vm387, %v219, 0
  %v572 = vsel %vm387, %v220, 0
  %v575 = vsel %vm387, %v221, 0
  %v578 = vsel %vm387, %v222, 0
  %v581 = vsel %vm387, %v223, 0
  %v584 = vsel %vm387, %v224, 0
  %v587 = vsel %vm387, %v225, 0
  %v590 = vsel %vm387, %v226, 0
  %v593 = vsel %vm387, %v227, 0
  %v596 = vsel %vm387, %v228, 0
  %v599 = vsel %vm387, %v229, 0
  %v602 = vsel %vm387, %v230, 0
  %vm604 = vcmask 1041408
  %v606 = vsel %vm604, %v359, 0
  %v609 = vsel %vm604, %v360, 0
  %v612 = vsel %vm604, %v361, 0
  %v615 = vsel %vm604, %v362, 0
  %617 = vmatprep.subr.bf16.mxu0 %v336
  %618 = vmatpush1.bf16.msra.mxu0 %v335
  %619 = vmatprep.subr.bf16.mxu0 %v340
  %620 = vmatpush1.bf16.msra.mxu0 %v339
  %621 = vmatprep.subr.bf16.mxu0 %v344
  %622 = vmatpush1.bf16.msra.mxu0 %v343
  %623 = vmatprep.subr.bf16.mxu0 %v348
  %624 = vmatpush1.bf16.msra.mxu0 %v347
  %625 = vmatprep.subr.bf16.mxu0 %v352
  %626 = vmatpush1.bf16.msra.mxu0 %v351
  %627 = vmatprep.subr.bf16.mxu0 %v356
  %628 = vmatpush1.bf16.msra.mxu0 %v355
  %629 = vmatprep.subr.bf16.mxu0 %v609
  %630 = vmatpush1.bf16.msra.mxu0 %v606
  %631 = vmatprep.subr.bf16.mxu0 0
  %632 = vmatpush1.bf16.msra.mxu0 0
  %633 = vmatprep.subr.bf16.mxu0 0
  %634 = vmatpush1.bf16.msra.mxu0 0
  %635 = vmatprep.subr.bf16.mxu0 0
  %636 = vmatpush1.bf16.msra.mxu0 0
  %637 = vmatprep.subr.bf16.mxu0 0
  %638 = vmatpush1.bf16.msra.mxu0 0
  %639 = vmatprep.subr.bf16.mxu0 0
  %640 = vmatpush1.bf16.msra.mxu0 0
  %641 = vmatprep.subr.bf16.mxu0 0
  %642 = vmatpush1.bf16.msra.mxu0 0
  %643 = vmatprep.subr.bf16.mxu0 0
  %644 = vmatpush1.bf16.msra.mxu0 0
  %645 = vmatprep.subr.bf16.mxu0 0
  %646 = vmatpush1.bf16.msra.mxu0 0
  %647 = vmatprep.subr.bf16.mxu0 0
  %648 = vmatpush1.bf16.msra.mxu0 0
  %649 = vmatprep.mubr.bf16.mxu0 0
  %650 = vmatmul.mubr.bf16.gmra.mrb[0].mxu0 %v389
  %v651 = vpop.f32.mrb[0].mxu0
  %v652 = vadd.f32 0.0, %v651
  %v653 = vpop.f32.mrb[0].mxu0
  %v654 = vadd.f32 0.0, %v653
  %v655 = vpop.f32.mrb[0].mxu0
  %v656 = vadd.f32 0.0, %v655
  %v657 = vpop.f32.mrb[0].mxu0
  %v658 = vadd.f32 0.0, %v657
  %659 = vmatprep.mubr.bf16.mxu0 0
  %660 = vmatmul.mubr.bf16.gmra.mrb[0].mxu0 %v392
  %v661 = vpop.f32.mrb[0].mxu0
  %v662 = vadd.f32 0.0, %v661
  %v663 = vpop.f32.mrb[0].mxu0
  %v664 = vadd.f32 0.0, %v663
  %v665 = vpop.f32.mrb[0].mxu0
  %v666 = vadd.f32 0.0, %v665
  %v667 = vpop.f32.mrb[0].mxu0
  %v668 = vadd.f32 0.0, %v667
  %669 = vmatprep.mubr.bf16.mxu0 0
  %670 = vmatmul.mubr.bf16.gmra.mrb[0].mxu0 %v395
  %v671 = vpop.f32.mrb[0].mxu0
  %v672 = vadd.f32 0.0, %v671
  %v673 = vpop.f32.mrb[0].mxu0
  %v674 = vadd.f32 0.0, %v673
  %v675 = vpop.f32.mrb[0].mxu0
  %v676 = vadd.f32 0.0, %v675
  %v677 = vpop.f32.mrb[0].mxu0
  %v678 = vadd.f32 0.0, %v677
  %679 = vmatprep.mubr.bf16.mxu0 0
  %680 = vmatmul.mubr.bf16.gmra.mrb[0].mxu0 %v398
  %v681 = vpop.f32.mrb[0].mxu0
  %v682 = vadd.f32 0.0, %v681
  %v683 = vpop.f32.mrb[0].mxu0
  %v684 = vadd.f32 0.0, %v683
  %v685 = vpop.f32.mrb[0].mxu0
  %v686 = vadd.f32 0.0, %v685
  %v687 = vpop.f32.mrb[0].mxu0
  %v688 = vadd.f32 0.0, %v687
  %689 = vmatprep.mubr.bf16.mxu0 0
  %690 = vmatmul.mubr.bf16.gmra.mrb[0].mxu0 %v401
  %v691 = vpop.f32.mrb[0].mxu0
  %v692 = vadd.f32 0.0, %v691
  %v693 = vpop.f32.mrb[0].mxu0
  %v694 = vadd.f32 0.0, %v693
  %v695 = vpop.f32.mrb[0].mxu0
  %v696 = vadd.f32 0.0, %v695
  %v697 = vpop.f32.mrb[0].mxu0
  %v698 = vadd.f32 0.0, %v697
  %699 = vmatprep.mubr.bf16.mxu0 0
  %700 = vmatmul.mubr.bf16.gmra.mrb[0].mxu0 %v404
  %v701 = vpop.f32.mrb[0].mxu0
  %v702 = vadd.f32 0.0, %v701
  %v703 = vpop.f32.mrb[0].mxu0
  %v704 = vadd.f32 0.0, %v703
  %v705 = vpop.f32.mrb[0].mxu0
  %v706 = vadd.f32 0.0, %v705
  %v707 = vpop.f32.mrb[0].mxu0
  %v708 = vadd.f32 0.0, %v707
  %709 = vmatprep.mubr.bf16.mxu0 0
  %710 = vmatmul.mubr.bf16.gmra.mrb[0].mxu0 %v407
  %v711 = vpop.f32.mrb[0].mxu0
  %v712 = vadd.f32 0.0, %v711
  %v713 = vpop.f32.mrb[0].mxu0
  %v714 = vadd.f32 0.0, %v713
  %v715 = vpop.f32.mrb[0].mxu0
  %v716 = vadd.f32 0.0, %v715
  %v717 = vpop.f32.mrb[0].mxu0
  %v718 = vadd.f32 0.0, %v717
  %719 = vmatprep.mubr.bf16.mxu0 0
  %720 = vmatmul.mubr.bf16.gmra.mrb[0].mxu0 %v410
  %v721 = vpop.f32.mrb[0].mxu0
  %v722 = vadd.f32 0.0, %v721
  %v723 = vpop.f32.mrb[0].mxu0
  %v724 = vadd.f32 0.0, %v723
  %v725 = vpop.f32.mrb[0].mxu0
  %v726 = vadd.f32 0.0, %v725
  %v727 = vpop.f32.mrb[0].mxu0
  %v728 = vadd.f32 0.0, %v727
  %729 = vmatprep.mubr.bf16.mxu0 0
  %730 = vmatmul.mubr.bf16.gmra.mrb[0].mxu0 %v413
  %v731 = vpop.f32.mrb[0].mxu0
  %v732 = vadd.f32 0.0, %v731
  %v733 = vpop.f32.mrb[0].mxu0
  %v734 = vadd.f32 0.0, %v733
  %v735 = vpop.f32.mrb[0].mxu0
  %v736 = vadd.f32 0.0, %v735
  %v737 = vpop.f32.mrb[0].mxu0
  %v738 = vadd.f32 0.0, %v737
  %739 = vmatprep.mubr.bf16.mxu0 0
  %740 = vmatmul.mubr.bf16.gmra.mrb[0].mxu0 %v416
  %v741 = vpop.f32.mrb[0].mxu0
  %v742 = vadd.f32 0.0, %v741
  %v743 = vpop.f32.mrb[0].mxu0
  %v744 = vadd.f32 0.0, %v743
  %v745 = vpop.f32.mrb[0].mxu0
  %v746 = vadd.f32 0.0, %v745
  %v747 = vpop.f32.mrb[0].mxu0
  %v748 = vadd.f32 0.0, %v747
  %749 = vmatprep.mubr.bf16.mxu0 0
  %750 = vmatmul.mubr.bf16.gmra.mrb[0].mxu0 %v419
  %v751 = vpop.f32.mrb[0].mxu0
  %v752 = vadd.f32 0.0, %v751
  %v753 = vpop.f32.mrb[0].mxu0
  %v754 = vadd.f32 0.0, %v753
  %v755 = vpop.f32.mrb[0].mxu0
  %v756 = vadd.f32 0.0, %v755
  %v757 = vpop.f32.mrb[0].mxu0
  %v758 = vadd.f32 0.0, %v757
  %759 = vmatprep.mubr.bf16.mxu0 0
  %760 = vmatmul.mubr.bf16.gmra.mrb[0].mxu0 %v422
  %v761 = vpop.f32.mrb[0].mxu0
  %v762 = vadd.f32 0.0, %v761
  %v763 = vpop.f32.mrb[0].mxu0
  %v764 = vadd.f32 0.0, %v763
  %v765 = vpop.f32.mrb[0].mxu0
  %v766 = vadd.f32 0.0, %v765
  %v767 = vpop.f32.mrb[0].mxu0
  %v768 = vadd.f32 0.0, %v767
  %769 = vmatprep.mubr.bf16.mxu0 0
  %770 = vmatmul.mubr.bf16.gmra.mrb[0].mxu0 %v425
  %v771 = vpop.f32.mrb[0].mxu0
  %v772 = vadd.f32 0.0, %v771
  %v773 = vpop.f32.mrb[0].mxu0
  %v774 = vadd.f32 0.0, %v773
  %v775 = vpop.f32.mrb[0].mxu0
  %v776 = vadd.f32 0.0, %v775
  %v777 = vpop.f32.mrb[0].mxu0
  %v778 = vadd.f32 0.0, %v777
  %779 = vmatprep.mubr.bf16.mxu0 0
  %780 = vmatmul.mubr.bf16.gmra.mrb[0].mxu0 %v428
  %v781 = vpop.f32.mrb[0].mxu0
  %v782 = vadd.f32 0.0, %v781
  %v783 = vpop.f32.mrb[0].mxu0
  %v784 = vadd.f32 0.0, %v783
  %v785 = vpop.f32.mrb[0].mxu0
  %v786 = vadd.f32 0.0, %v785
  %v787 = vpop.f32.mrb[0].mxu0
  %v788 = vadd.f32 0.0, %v787
  %789 = vmatprep.mubr.bf16.mxu0 0
  %790 = vmatmul.mubr.bf16.gmra.mrb[0].mxu0 %v431
  %v791 = vpop.f32.mrb[0].mxu0
  %v792 = vadd.f32 0.0, %v791
  %v793 = vpop.f32.mrb[0].mxu0
  %v794 = vadd.f32 0.0, %v793
  %v795 = vpop.f32.mrb[0].mxu0
  %v796 = vadd.f32 0.0, %v795
  %v797 = vpop.f32.mrb[0].mxu0
  %v798 = vadd.f32 0.0, %v797
  %799 = vmatprep.mubr.bf16.mxu0 0
  %800 = vmatmul.mubr.bf16.gmra.mrb[0].mxu0 %v434
  %v801 = vpop.f32.mrb[0].mxu0
  %v802 = vadd.f32 0.0, %v801
  %v803 = vpop.f32.mrb[0].mxu0
  %v804 = vadd.f32 0.0, %v803
  %v805 = vpop.f32.mrb[0].mxu0
  %v806 = vadd.f32 0.0, %v805
  %v807 = vpop.f32.mrb[0].mxu0
  %v808 = vadd.f32 0.0, %v807
  %809 = vmatprep.mubr.bf16.mxu0 0
  %810 = vmatmul.mubr.bf16.gmra.mrb[0].mxu0 %v437
  %v811 = vpop.f32.mrb[0].mxu0
  %v812 = vadd.f32 0.0, %v811
  %v813 = vpop.f32.mrb[0].mxu0
  %v814 = vadd.f32 0.0, %v813
  %v815 = vpop.f32.mrb[0].mxu0
  %v816 = vadd.f32 0.0, %v815
  %v817 = vpop.f32.mrb[0].mxu0
  %v818 = vadd.f32 0.0, %v817
  %819 = vmatprep.mubr.bf16.mxu0 0
  %820 = vmatmul.mubr.bf16.gmra.mrb[0].mxu0 %v440
  %v821 = vpop.f32.mrb[0].mxu0
  %v822 = vadd.f32 0.0, %v821
  %v823 = vpop.f32.mrb[0].mxu0
  %v824 = vadd.f32 0.0, %v823
  %v825 = vpop.f32.mrb[0].mxu0
  %v826 = vadd.f32 0.0, %v825
  %v827 = vpop.f32.mrb[0].mxu0
  %v828 = vadd.f32 0.0, %v827
  %829 = vmatprep.mubr.bf16.mxu0 0
  %830 = vmatmul.mubr.bf16.gmra.mrb[0].mxu0 %v443
  %v831 = vpop.f32.mrb[0].mxu0
  %v832 = vadd.f32 0.0, %v831
  %v833 = vpop.f32.mrb[0].mxu0
  %v834 = vadd.f32 0.0, %v833
  %v835 = vpop.f32.mrb[0].mxu0
  %v836 = vadd.f32 0.0, %v835
  %v837 = vpop.f32.mrb[0].mxu0
  %v838 = vadd.f32 0.0, %v837
  %839 = vmatprep.mubr.bf16.mxu0 0
  %840 = vmatmul.mubr.bf16.gmra.mrb[0].mxu0 %v446
  %v841 = vpop.f32.mrb[0].mxu0
  %v842 = vadd.f32 0.0, %v841
  %v843 = vpop.f32.mrb[0].mxu0
  %v844 = vadd.f32 0.0, %v843
  %v845 = vpop.f32.mrb[0].mxu0
  %v846 = vadd.f32 0.0, %v845
  %v847 = vpop.f32.mrb[0].mxu0
  %v848 = vadd.f32 0.0, %v847
  %849 = vmatprep.mubr.bf16.mxu0 0
  %850 = vmatmul.mubr.bf16.gmra.mrb[0].mxu0 %v449
  %v851 = vpop.f32.mrb[0].mxu0
  %v852 = vadd.f32 0.0, %v851
  %v853 = vpop.f32.mrb[0].mxu0
  %v854 = vadd.f32 0.0, %v853
  %v855 = vpop.f32.mrb[0].mxu0
  %v856 = vadd.f32 0.0, %v855
  %v857 = vpop.f32.mrb[0].mxu0
  %v858 = vadd.f32 0.0, %v857
  %859 = vmatprep.mubr.bf16.mxu0 0
  %860 = vmatmul.mubr.bf16.gmra.mrb[0].mxu0 %v452
  %v861 = vpop.f32.mrb[0].mxu0
  %v862 = vadd.f32 0.0, %v861
  %v863 = vpop.f32.mrb[0].mxu0
  %v864 = vadd.f32 0.0, %v863
  %v865 = vpop.f32.mrb[0].mxu0
  %v866 = vadd.f32 0.0, %v865
  %v867 = vpop.f32.mrb[0].mxu0
  %v868 = vadd.f32 0.0, %v867
  %869 = vmatprep.mubr.bf16.mxu0 0
  %870 = vmatmul.mubr.bf16.gmra.mrb[0].mxu0 %v455
  %v871 = vpop.f32.mrb[0].mxu0
  %v872 = vadd.f32 0.0, %v871
  %v873 = vpop.f32.mrb[0].mxu0
  %v874 = vadd.f32 0.0, %v873
  %v875 = vpop.f32.mrb[0].mxu0
  %v876 = vadd.f32 0.0, %v875
  %v877 = vpop.f32.mrb[0].mxu0
  %v878 = vadd.f32 0.0, %v877
  %879 = vmatprep.mubr.bf16.mxu0 0
  %880 = vmatmul.mubr.bf16.gmra.mrb[0].mxu0 %v458
  %v881 = vpop.f32.mrb[0].mxu0
  %v882 = vadd.f32 0.0, %v881
  %v883 = vpop.f32.mrb[0].mxu0
  %v884 = vadd.f32 0.0, %v883
  %v885 = vpop.f32.mrb[0].mxu0
  %v886 = vadd.f32 0.0, %v885
  %v887 = vpop.f32.mrb[0].mxu0
  %v888 = vadd.f32 0.0, %v887
  %889 = vmatprep.mubr.bf16.mxu0 0
  %890 = vmatmul.mubr.bf16.gmra.mrb[0].mxu0 %v461
  %v891 = vpop.f32.mrb[0].mxu0
  %v892 = vadd.f32 0.0, %v891
  %v893 = vpop.f32.mrb[0].mxu0
  %v894 = vadd.f32 0.0, %v893
  %v895 = vpop.f32.mrb[0].mxu0
  %v896 = vadd.f32 0.0, %v895
  %v897 = vpop.f32.mrb[0].mxu0
  %v898 = vadd.f32 0.0, %v897
  %899 = vmatprep.mubr.bf16.mxu0 0
  %900 = vmatmul.mubr.bf16.gmra.mrb[0].mxu0 %v464
  %v901 = vpop.f32.mrb[0].mxu0
  %v902 = vadd.f32 0.0, %v901
  %v903 = vpop.f32.mrb[0].mxu0
  %v904 = vadd.f32 0.0, %v903
  %v905 = vpop.f32.mrb[0].mxu0
  %v906 = vadd.f32 0.0, %v905
  %v907 = vpop.f32.mrb[0].mxu0
  %v908 = vadd.f32 0.0, %v907
  %909 = vmatprep.mubr.bf16.mxu0 0
  %910 = vmatmul.mubr.bf16.gmra.mrb[0].mxu0 %v467
  %v911 = vpop.f32.mrb[0].mxu0
  %v912 = vadd.f32 0.0, %v911
  %v913 = vpop.f32.mrb[0].mxu0
  %v914 = vadd.f32 0.0, %v913
  %v915 = vpop.f32.mrb[0].mxu0
  %v916 = vadd.f32 0.0, %v915
  %v917 = vpop.f32.mrb[0].mxu0
  %v918 = vadd.f32 0.0, %v917
  %919 = vmatprep.mubr.bf16.mxu0 0
  %920 = vmatmul.mubr.bf16.gmra.mrb[0].mxu0 %v470
  %v921 = vpop.f32.mrb[0].mxu0
  %v922 = vadd.f32 0.0, %v921
  %v923 = vpop.f32.mrb[0].mxu0
  %v924 = vadd.f32 0.0, %v923
  %v925 = vpop.f32.mrb[0].mxu0
  %v926 = vadd.f32 0.0, %v925
  %v927 = vpop.f32.mrb[0].mxu0
  %v928 = vadd.f32 0.0, %v927
  %929 = vmatprep.mubr.bf16.mxu0 0
  %930 = vmatmul.mubr.bf16.gmra.mrb[0].mxu0 %v473
  %v931 = vpop.f32.mrb[0].mxu0
  %v932 = vadd.f32 0.0, %v931
  %v933 = vpop.f32.mrb[0].mxu0
  %v934 = vadd.f32 0.0, %v933
  %v935 = vpop.f32.mrb[0].mxu0
  %v936 = vadd.f32 0.0, %v935
  %v937 = vpop.f32.mrb[0].mxu0
  %v938 = vadd.f32 0.0, %v937
  %939 = vmatprep.mubr.bf16.mxu0 0
  %940 = vmatmul.mubr.bf16.gmra.mrb[0].mxu0 %v476
  %v941 = vpop.f32.mrb[0].mxu0
  %v942 = vadd.f32 0.0, %v941
  %v943 = vpop.f32.mrb[0].mxu0
  %v944 = vadd.f32 0.0, %v943
  %v945 = vpop.f32.mrb[0].mxu0
  %v946 = vadd.f32 0.0, %v945
  %v947 = vpop.f32.mrb[0].mxu0
  %v948 = vadd.f32 0.0, %v947
  %949 = vmatprep.mubr.bf16.mxu0 0
  %950 = vmatmul.mubr.bf16.gmra.mrb[0].mxu0 %v479
  %v951 = vpop.f32.mrb[0].mxu0
  %v952 = vadd.f32 0.0, %v951
  %v953 = vpop.f32.mrb[0].mxu0
  %v954 = vadd.f32 0.0, %v953
  %v955 = vpop.f32.mrb[0].mxu0
  %v956 = vadd.f32 0.0, %v955
  %v957 = vpop.f32.mrb[0].mxu0
  %v958 = vadd.f32 0.0, %v957
  %959 = vmatprep.mubr.bf16.mxu0 0
  %960 = vmatmul.mubr.bf16.gmra.mrb[0].mxu0 %v482
  %v961 = vpop.f32.mrb[0].mxu0
  %v962 = vadd.f32 0.0, %v961
  %v963 = vpop.f32.mrb[0].mxu0
  %v964 = vadd.f32 0.0, %v963
  %v965 = vpop.f32.mrb[0].mxu0
  %v966 = vadd.f32 0.0, %v965
  %v967 = vpop.f32.mrb[0].mxu0
  %v968 = vadd.f32 0.0, %v967
  %969 = vmatprep.mubr.bf16.mxu0 0
  %970 = vmatmul.mubr.bf16.gmra.mrb[0].mxu0 %v485
  %v971 = vpop.f32.mrb[0].mxu0
  %v972 = vadd.f32 0.0, %v971
  %v973 = vpop.f32.mrb[0].mxu0
  %v974 = vadd.f32 0.0, %v973
  %v975 = vpop.f32.mrb[0].mxu0
  %v976 = vadd.f32 0.0, %v975
  %v977 = vpop.f32.mrb[0].mxu0
  %v978 = vadd.f32 0.0, %v977
  %979 = vmatprep.mubr.bf16.mxu0 0
  %980 = vmatmul.mubr.bf16.gmra.mrb[0].mxu0 %v488
  %v981 = vpop.f32.mrb[0].mxu0
  %v982 = vadd.f32 0.0, %v981
  %v983 = vpop.f32.mrb[0].mxu0
  %v984 = vadd.f32 0.0, %v983
  %v985 = vpop.f32.mrb[0].mxu0
  %v986 = vadd.f32 0.0, %v985
  %v987 = vpop.f32.mrb[0].mxu0
  %v988 = vadd.f32 0.0, %v987
  %989 = vmatprep.mubr.bf16.mxu0 0
  %990 = vmatmul.mubr.bf16.gmra.mrb[0].mxu0 %v491
  %v991 = vpop.f32.mrb[0].mxu0
  %v992 = vadd.f32 0.0, %v991
  %v993 = vpop.f32.mrb[0].mxu0
  %v994 = vadd.f32 0.0, %v993
  %v995 = vpop.f32.mrb[0].mxu0
  %v996 = vadd.f32 0.0, %v995
  %v997 = vpop.f32.mrb[0].mxu0
  %v998 = vadd.f32 0.0, %v997
  %999 = vmatprep.mubr.bf16.mxu0 0
  %1000 = vmatmul.mubr.bf16.gmra.mrb[0].mxu0 %v494
  %v1001 = vpop.f32.mrb[0].mxu0
  %v1002 = vadd.f32 0.0, %v1001
  %v1003 = vpop.f32.mrb[0].mxu0
  %v1004 = vadd.f32 0.0, %v1003
  %v1005 = vpop.f32.mrb[0].mxu0
  %v1006 = vadd.f32 0.0, %v1005
  %v1007 = vpop.f32.mrb[0].mxu0
  %v1008 = vadd.f32 0.0, %v1007
  %1009 = vmatprep.mubr.bf16.mxu0 0
  %1010 = vmatmul.mubr.bf16.gmra.mrb[0].mxu0 %v497
  %v1011 = vpop.f32.mrb[0].mxu0
  %v1012 = vadd.f32 0.0, %v1011
  %v1013 = vpop.f32.mrb[0].mxu0
  %v1014 = vadd.f32 0.0, %v1013
  %v1015 = vpop.f32.mrb[0].mxu0
  %v1016 = vadd.f32 0.0, %v1015
  %v1017 = vpop.f32.mrb[0].mxu0
  %v1018 = vadd.f32 0.0, %v1017
  %1019 = vmatprep.mubr.bf16.mxu0 0
  %1020 = vmatmul.mubr.bf16.gmra.mrb[0].mxu0 %v500
  %v1021 = vpop.f32.mrb[0].mxu0
  %v1022 = vadd.f32 0.0, %v1021
  %v1023 = vpop.f32.mrb[0].mxu0
  %v1024 = vadd.f32 0.0, %v1023
  %v1025 = vpop.f32.mrb[0].mxu0
  %v1026 = vadd.f32 0.0, %v1025
  %v1027 = vpop.f32.mrb[0].mxu0
  %v1028 = vadd.f32 0.0, %v1027
  %1029 = vmatprep.mubr.bf16.mxu0 0
  %1030 = vmatmul.mubr.bf16.gmra.mrb[0].mxu0 %v503
  %v1031 = vpop.f32.mrb[0].mxu0
  %v1032 = vadd.f32 0.0, %v1031
  %v1033 = vpop.f32.mrb[0].mxu0
  %v1034 = vadd.f32 0.0, %v1033
  %v1035 = vpop.f32.mrb[0].mxu0
  %v1036 = vadd.f32 0.0, %v1035
  %v1037 = vpop.f32.mrb[0].mxu0
  %v1038 = vadd.f32 0.0, %v1037
  %1039 = vmatprep.mubr.bf16.mxu0 0
  %1040 = vmatmul.mubr.bf16.gmra.mrb[0].mxu0 %v506
  %v1041 = vpop.f32.mrb[0].mxu0
  %v1042 = vadd.f32 0.0, %v1041
  %v1043 = vpop.f32.mrb[0].mxu0
  %v1044 = vadd.f32 0.0, %v1043
  %v1045 = vpop.f32.mrb[0].mxu0
  %v1046 = vadd.f32 0.0, %v1045
  %v1047 = vpop.f32.mrb[0].mxu0
  %v1048 = vadd.f32 0.0, %v1047
  %1049 = vmatprep.mubr.bf16.mxu0 0
  %1050 = vmatmul.mubr.bf16.gmra.mrb[0].mxu0 %v509
  %v1051 = vpop.f32.mrb[0].mxu0
  %v1052 = vadd.f32 0.0, %v1051
  %v1053 = vpop.f32.mrb[0].mxu0
  %v1054 = vadd.f32 0.0, %v1053
  %v1055 = vpop.f32.mrb[0].mxu0
  %v1056 = vadd.f32 0.0, %v1055
  %v1057 = vpop.f32.mrb[0].mxu0
  %v1058 = vadd.f32 0.0, %v1057
  %1059 = vmatprep.mubr.bf16.mxu0 0
  %1060 = vmatmul.mubr.bf16.gmra.mrb[0].mxu0 %v512
  %v1061 = vpop.f32.mrb[0].mxu0
  %v1062 = vadd.f32 0.0, %v1061
  %v1063 = vpop.f32.mrb[0].mxu0
  %v1064 = vadd.f32 0.0, %v1063
  %v1065 = vpop.f32.mrb[0].mxu0
  %v1066 = vadd.f32 0.0, %v1065
  %v1067 = vpop.f32.mrb[0].mxu0
  %v1068 = vadd.f32 0.0, %v1067
  %1069 = vmatprep.mubr.bf16.mxu0 0
  %1070 = vmatmul.mubr.bf16.gmra.mrb[0].mxu0 %v515
  %v1071 = vpop.f32.mrb[0].mxu0
  %v1072 = vadd.f32 0.0, %v1071
  %v1073 = vpop.f32.mrb[0].mxu0
  %v1074 = vadd.f32 0.0, %v1073
  %v1075 = vpop.f32.mrb[0].mxu0
  %v1076 = vadd.f32 0.0, %v1075
  %v1077 = vpop.f32.mrb[0].mxu0
  %v1078 = vadd.f32 0.0, %v1077
  %1079 = vmatprep.mubr.bf16.mxu0 0
  %1080 = vmatmul.mubr.bf16.gmra.mrb[0].mxu0 %v518
  %v1081 = vpop.f32.mrb[0].mxu0
  %v1082 = vadd.f32 0.0, %v1081
  %v1083 = vpop.f32.mrb[0].mxu0
  %v1084 = vadd.f32 0.0, %v1083
  %v1085 = vpop.f32.mrb[0].mxu0
  %v1086 = vadd.f32 0.0, %v1085
  %v1087 = vpop.f32.mrb[0].mxu0
  %v1088 = vadd.f32 0.0, %v1087
  %1089 = vmatprep.mubr.bf16.mxu0 0
  %1090 = vmatmul.mubr.bf16.gmra.mrb[0].mxu0 %v521
  %v1091 = vpop.f32.mrb[0].mxu0
  %v1092 = vadd.f32 0.0, %v1091
  %v1093 = vpop.f32.mrb[0].mxu0
  %v1094 = vadd.f32 0.0, %v1093
  %v1095 = vpop.f32.mrb[0].mxu0
  %v1096 = vadd.f32 0.0, %v1095
  %v1097 = vpop.f32.mrb[0].mxu0
  %v1098 = vadd.f32 0.0, %v1097
  %1099 = vmatprep.mubr.bf16.mxu0 0
  %1100 = vmatmul.mubr.bf16.gmra.mrb[0].mxu0 %v524
  %v1101 = vpop.f32.mrb[0].mxu0
  %v1102 = vadd.f32 0.0, %v1101
  %v1103 = vpop.f32.mrb[0].mxu0
  %v1104 = vadd.f32 0.0, %v1103
  %v1105 = vpop.f32.mrb[0].mxu0
  %v1106 = vadd.f32 0.0, %v1105
  %v1107 = vpop.f32.mrb[0].mxu0
  %v1108 = vadd.f32 0.0, %v1107
  %1109 = vmatprep.mubr.bf16.mxu0 0
  %1110 = vmatmul.mubr.bf16.gmra.mrb[0].mxu0 %v527
  %v1111 = vpop.f32.mrb[0].mxu0
  %v1112 = vadd.f32 0.0, %v1111
  %v1113 = vpop.f32.mrb[0].mxu0
  %v1114 = vadd.f32 0.0, %v1113
  %v1115 = vpop.f32.mrb[0].mxu0
  %v1116 = vadd.f32 0.0, %v1115
  %v1117 = vpop.f32.mrb[0].mxu0
  %v1118 = vadd.f32 0.0, %v1117
  %1119 = vmatprep.mubr.bf16.mxu0 0
  %1120 = vmatmul.mubr.bf16.gmra.mrb[0].mxu0 %v530
  %v1121 = vpop.f32.mrb[0].mxu0
  %v1122 = vadd.f32 0.0, %v1121
  %v1123 = vpop.f32.mrb[0].mxu0
  %v1124 = vadd.f32 0.0, %v1123
  %v1125 = vpop.f32.mrb[0].mxu0
  %v1126 = vadd.f32 0.0, %v1125
  %v1127 = vpop.f32.mrb[0].mxu0
  %v1128 = vadd.f32 0.0, %v1127
  %1129 = vmatprep.mubr.bf16.mxu0 0
  %1130 = vmatmul.mubr.bf16.gmra.mrb[0].mxu0 %v533
  %v1131 = vpop.f32.mrb[0].mxu0
  %v1132 = vadd.f32 0.0, %v1131
  %v1133 = vpop.f32.mrb[0].mxu0
  %v1134 = vadd.f32 0.0, %v1133
  %v1135 = vpop.f32.mrb[0].mxu0
  %v1136 = vadd.f32 0.0, %v1135
  %v1137 = vpop.f32.mrb[0].mxu0
  %v1138 = vadd.f32 0.0, %v1137
  %1139 = vmatprep.mubr.bf16.mxu0 0
  %1140 = vmatmul.mubr.bf16.gmra.mrb[0].mxu0 %v536
  %v1141 = vpop.f32.mrb[0].mxu0
  %v1142 = vadd.f32 0.0, %v1141
  %v1143 = vpop.f32.mrb[0].mxu0
  %v1144 = vadd.f32 0.0, %v1143
  %v1145 = vpop.f32.mrb[0].mxu0
  %v1146 = vadd.f32 0.0, %v1145
  %v1147 = vpop.f32.mrb[0].mxu0
  %v1148 = vadd.f32 0.0, %v1147
  %1149 = vmatprep.mubr.bf16.mxu0 0
  %1150 = vmatmul.mubr.bf16.gmra.mrb[0].mxu0 %v539
  %v1151 = vpop.f32.mrb[0].mxu0
  %v1152 = vadd.f32 0.0, %v1151
  %v1153 = vpop.f32.mrb[0].mxu0
  %v1154 = vadd.f32 0.0, %v1153
  %v1155 = vpop.f32.mrb[0].mxu0
  %v1156 = vadd.f32 0.0, %v1155
  %v1157 = vpop.f32.mrb[0].mxu0
  %v1158 = vadd.f32 0.0, %v1157
  %1159 = vmatprep.mubr.bf16.mxu0 0
  %1160 = vmatmul.mubr.bf16.gmra.mrb[0].mxu0 %v542
  %v1161 = vpop.f32.mrb[0].mxu0
  %v1162 = vadd.f32 0.0, %v1161
  %v1163 = vpop.f32.mrb[0].mxu0
  %v1164 = vadd.f32 0.0, %v1163
  %v1165 = vpop.f32.mrb[0].mxu0
  %v1166 = vadd.f32 0.0, %v1165
  %v1167 = vpop.f32.mrb[0].mxu0
  %v1168 = vadd.f32 0.0, %v1167
  %1169 = vmatprep.mubr.bf16.mxu0 0
  %1170 = vmatmul.mubr.bf16.gmra.mrb[0].mxu0 %v545
  %v1171 = vpop.f32.mrb[0].mxu0
  %v1172 = vadd.f32 0.0, %v1171
  %v1173 = vpop.f32.mrb[0].mxu0
  %v1174 = vadd.f32 0.0, %v1173
  %v1175 = vpop.f32.mrb[0].mxu0
  %v1176 = vadd.f32 0.0, %v1175
  %v1177 = vpop.f32.mrb[0].mxu0
  %v1178 = vadd.f32 0.0, %v1177
  %1179 = vmatprep.mubr.bf16.mxu0 0
  %1180 = vmatmul.mubr.bf16.gmra.mrb[0].mxu0 %v548
  %v1181 = vpop.f32.mrb[0].mxu0
  %v1182 = vadd.f32 0.0, %v1181
  %v1183 = vpop.f32.mrb[0].mxu0
  %v1184 = vadd.f32 0.0, %v1183
  %v1185 = vpop.f32.mrb[0].mxu0
  %v1186 = vadd.f32 0.0, %v1185
  %v1187 = vpop.f32.mrb[0].mxu0
  %v1188 = vadd.f32 0.0, %v1187
  %1189 = vmatprep.mubr.bf16.mxu0 0
  %1190 = vmatmul.mubr.bf16.gmra.mrb[0].mxu0 %v551
  %v1191 = vpop.f32.mrb[0].mxu0
  %v1192 = vadd.f32 0.0, %v1191
  %v1193 = vpop.f32.mrb[0].mxu0
  %v1194 = vadd.f32 0.0, %v1193
  %v1195 = vpop.f32.mrb[0].mxu0
  %v1196 = vadd.f32 0.0, %v1195
  %v1197 = vpop.f32.mrb[0].mxu0
  %v1198 = vadd.f32 0.0, %v1197
  %1199 = vmatprep.mubr.bf16.mxu0 0
  %1200 = vmatmul.mubr.bf16.gmra.mrb[0].mxu0 %v554
  %v1201 = vpop.f32.mrb[0].mxu0
  %v1202 = vadd.f32 0.0, %v1201
  %v1203 = vpop.f32.mrb[0].mxu0
  %v1204 = vadd.f32 0.0, %v1203
  %v1205 = vpop.f32.mrb[0].mxu0
  %v1206 = vadd.f32 0.0, %v1205
  %v1207 = vpop.f32.mrb[0].mxu0
  %v1208 = vadd.f32 0.0, %v1207
  %1209 = vmatprep.mubr.bf16.mxu0 0
  %1210 = vmatmul.mubr.bf16.gmra.mrb[0].mxu0 %v557
  %v1211 = vpop.f32.mrb[0].mxu0
  %v1212 = vadd.f32 0.0, %v1211
  %v1213 = vpop.f32.mrb[0].mxu0
  %v1214 = vadd.f32 0.0, %v1213
  %v1215 = vpop.f32.mrb[0].mxu0
  %v1216 = vadd.f32 0.0, %v1215
  %v1217 = vpop.f32.mrb[0].mxu0
  %v1218 = vadd.f32 0.0, %v1217
  %1219 = vmatprep.mubr.bf16.mxu0 0
  %1220 = vmatmul.mubr.bf16.gmra.mrb[0].mxu0 %v560
  %v1221 = vpop.f32.mrb[0].mxu0
  %v1222 = vadd.f32 0.0, %v1221
  %v1223 = vpop.f32.mrb[0].mxu0
  %v1224 = vadd.f32 0.0, %v1223
  %v1225 = vpop.f32.mrb[0].mxu0
  %v1226 = vadd.f32 0.0, %v1225
  %v1227 = vpop.f32.mrb[0].mxu0
  %v1228 = vadd.f32 0.0, %v1227
  %1229 = vmatprep.mubr.bf16.mxu0 0
  %1230 = vmatmul.mubr.bf16.gmra.mrb[0].mxu0 %v563
  %v1231 = vpop.f32.mrb[0].mxu0
  %v1232 = vadd.f32 0.0, %v1231
  %v1233 = vpop.f32.mrb[0].mxu0
  %v1234 = vadd.f32 0.0, %v1233
  %v1235 = vpop.f32.mrb[0].mxu0
  %v1236 = vadd.f32 0.0, %v1235
  %v1237 = vpop.f32.mrb[0].mxu0
  %v1238 = vadd.f32 0.0, %v1237
  %1239 = vmatprep.mubr.bf16.mxu0 0
  %1240 = vmatmul.mubr.bf16.gmra.mrb[0].mxu0 %v566
  %v1241 = vpop.f32.mrb[0].mxu0
  %v1242 = vadd.f32 0.0, %v1241
  %v1243 = vpop.f32.mrb[0].mxu0
  %v1244 = vadd.f32 0.0, %v1243
  %v1245 = vpop.f32.mrb[0].mxu0
  %v1246 = vadd.f32 0.0, %v1245
  %v1247 = vpop.f32.mrb[0].mxu0
  %v1248 = vadd.f32 0.0, %v1247
  %1249 = vmatprep.mubr.bf16.mxu0 0
  %1250 = vmatmul.mubr.bf16.gmra.mrb[0].mxu0 %v569
  %v1251 = vpop.f32.mrb[0].mxu0
  %v1252 = vadd.f32 0.0, %v1251
  %v1253 = vpop.f32.mrb[0].mxu0
  %v1254 = vadd.f32 0.0, %v1253
  %v1255 = vpop.f32.mrb[0].mxu0
  %v1256 = vadd.f32 0.0, %v1255
  %v1257 = vpop.f32.mrb[0].mxu0
  %v1258 = vadd.f32 0.0, %v1257
  %1259 = vmatprep.mubr.bf16.mxu0 0
  %1260 = vmatmul.mubr.bf16.gmra.mrb[0].mxu0 %v572
  %v1261 = vpop.f32.mrb[0].mxu0
  %v1262 = vadd.f32 0.0, %v1261
  %v1263 = vpop.f32.mrb[0].mxu0
  %v1264 = vadd.f32 0.0, %v1263
  %v1265 = vpop.f32.mrb[0].mxu0
  %v1266 = vadd.f32 0.0, %v1265
  %v1267 = vpop.f32.mrb[0].mxu0
  %v1268 = vadd.f32 0.0, %v1267
  %1269 = vmatprep.mubr.bf16.mxu0 0
  %1270 = vmatmul.mubr.bf16.gmra.mrb[0].mxu0 %v575
  %v1271 = vpop.f32.mrb[0].mxu0
  %v1272 = vadd.f32 0.0, %v1271
  %v1273 = vpop.f32.mrb[0].mxu0
  %v1274 = vadd.f32 0.0, %v1273
  %v1275 = vpop.f32.mrb[0].mxu0
  %v1276 = vadd.f32 0.0, %v1275
  %v1277 = vpop.f32.mrb[0].mxu0
  %v1278 = vadd.f32 0.0, %v1277
  %1279 = vmatprep.mubr.bf16.mxu0 0
  %1280 = vmatmul.mubr.bf16.gmra.mrb[0].mxu0 %v578
  %v1281 = vpop.f32.mrb[0].mxu0
  %v1282 = vadd.f32 0.0, %v1281
  %v1283 = vpop.f32.mrb[0].mxu0
  %v1284 = vadd.f32 0.0, %v1283
  %v1285 = vpop.f32.mrb[0].mxu0
  %v1286 = vadd.f32 0.0, %v1285
  %v1287 = vpop.f32.mrb[0].mxu0
  %v1288 = vadd.f32 0.0, %v1287
  %1289 = vmatprep.mubr.bf16.mxu0 0
  %1290 = vmatmul.mubr.bf16.gmra.mrb[0].mxu0 %v581
  %v1291 = vpop.f32.mrb[0].mxu0
  %v1292 = vadd.f32 0.0, %v1291
  %v1293 = vpop.f32.mrb[0].mxu0
  %v1294 = vadd.f32 0.0, %v1293
  %v1295 = vpop.f32.mrb[0].mxu0
  %v1296 = vadd.f32 0.0, %v1295
  %v1297 = vpop.f32.mrb[0].mxu0
  %v1298 = vadd.f32 0.0, %v1297
  %1299 = vmatprep.mubr.bf16.mxu0 0
  %1300 = vmatmul.mubr.bf16.gmra.mrb[0].mxu0 %v584
  %v1301 = vpop.f32.mrb[0].mxu0
  %v1302 = vadd.f32 0.0, %v1301
  %v1303 = vpop.f32.mrb[0].mxu0
  %v1304 = vadd.f32 0.0, %v1303
  %v1305 = vpop.f32.mrb[0].mxu0
  %v1306 = vadd.f32 0.0, %v1305
  %v1307 = vpop.f32.mrb[0].mxu0
  %v1308 = vadd.f32 0.0, %v1307
  %1309 = vmatprep.mubr.bf16.mxu0 0
  %1310 = vmatmul.mubr.bf16.gmra.mrb[0].mxu0 %v587
  %v1311 = vpop.f32.mrb[0].mxu0
  %v1312 = vadd.f32 0.0, %v1311
  %v1313 = vpop.f32.mrb[0].mxu0
  %v1314 = vadd.f32 0.0, %v1313
  %v1315 = vpop.f32.mrb[0].mxu0
  %v1316 = vadd.f32 0.0, %v1315
  %v1317 = vpop.f32.mrb[0].mxu0
  %v1318 = vadd.f32 0.0, %v1317
  %1319 = vmatprep.mubr.bf16.mxu0 0
  %1320 = vmatmul.mubr.bf16.gmra.mrb[0].mxu0 %v590
  %v1321 = vpop.f32.mrb[0].mxu0
  %v1322 = vadd.f32 0.0, %v1321
  %v1323 = vpop.f32.mrb[0].mxu0
  %v1324 = vadd.f32 0.0, %v1323
  %v1325 = vpop.f32.mrb[0].mxu0
  %v1326 = vadd.f32 0.0, %v1325
  %v1327 = vpop.f32.mrb[0].mxu0
  %v1328 = vadd.f32 0.0, %v1327
  %1329 = vmatprep.mubr.bf16.mxu0 0
  %1330 = vmatmul.mubr.bf16.gmra.mrb[0].mxu0 %v593
  %v1331 = vpop.f32.mrb[0].mxu0
  %v1332 = vadd.f32 0.0, %v1331
  %v1333 = vpop.f32.mrb[0].mxu0
  %v1334 = vadd.f32 0.0, %v1333
  %v1335 = vpop.f32.mrb[0].mxu0
  %v1336 = vadd.f32 0.0, %v1335
  %v1337 = vpop.f32.mrb[0].mxu0
  %v1338 = vadd.f32 0.0, %v1337
  %1339 = vmatprep.mubr.bf16.mxu0 0
  %1340 = vmatmul.mubr.bf16.gmra.mrb[0].mxu0 %v596
  %v1341 = vpop.f32.mrb[0].mxu0
  %v1342 = vadd.f32 0.0, %v1341
  %v1343 = vpop.f32.mrb[0].mxu0
  %v1344 = vadd.f32 0.0, %v1343
  %v1345 = vpop.f32.mrb[0].mxu0
  %v1346 = vadd.f32 0.0, %v1345
  %v1347 = vpop.f32.mrb[0].mxu0
  %v1348 = vadd.f32 0.0, %v1347
  %1349 = vmatprep.mubr.bf16.mxu0 0
  %1350 = vmatmul.mubr.bf16.gmra.mrb[0].mxu0 %v599
  %v1351 = vpop.f32.mrb[0].mxu0
  %v1352 = vadd.f32 0.0, %v1351
  %v1353 = vpop.f32.mrb[0].mxu0
  %v1354 = vadd.f32 0.0, %v1353
  %v1355 = vpop.f32.mrb[0].mxu0
  %v1356 = vadd.f32 0.0, %v1355
  %v1357 = vpop.f32.mrb[0].mxu0
  %v1358 = vadd.f32 0.0, %v1357
  %1359 = vmatprep.mubr.bf16.mxu0 0
  %1360 = vmatmul.mubr.bf16.gmra.mrb[0].mxu0 %v602
  %v1361 = vpop.f32.mrb[0].mxu0
  %v1362 = vadd.f32 0.0, %v1361
  %v1363 = vpop.f32.mrb[0].mxu0
  %v1364 = vadd.f32 0.0, %v1363
  %v1365 = vpop.f32.mrb[0].mxu0
  %v1366 = vadd.f32 0.0, %v1365
  %v1367 = vpop.f32.mrb[0].mxu0
  %v1368 = vadd.f32 0.0, %v1367
  %1369 = vdwg.mxu0
  %1370 = vmatprep.subr.bf16.mxu0 %v338
  %1371 = vmatpush1.bf16.msra.mxu0 %v337
  %1372 = vmatprep.subr.bf16.mxu0 %v342
  %1373 = vmatpush1.bf16.msra.mxu0 %v341
  %1374 = vmatprep.subr.bf16.mxu0 %v346
  %1375 = vmatpush1.bf16.msra.mxu0 %v345
  %1376 = vmatprep.subr.bf16.mxu0 %v350
  %1377 = vmatpush1.bf16.msra.mxu0 %v349
  %1378 = vmatprep.subr.bf16.mxu0 %v354
  %1379 = vmatpush1.bf16.msra.mxu0 %v353
  %1380 = vmatprep.subr.bf16.mxu0 %v358
  %1381 = vmatpush1.bf16.msra.mxu0 %v357
  %1382 = vmatprep.subr.bf16.mxu0 %v615
  %1383 = vmatpush1.bf16.msra.mxu0 %v612
  %1384 = vmatprep.subr.bf16.mxu0 0
  %1385 = vmatpush1.bf16.msra.mxu0 0
  %1386 = vmatprep.subr.bf16.mxu0 0
  %1387 = vmatpush1.bf16.msra.mxu0 0
  %1388 = vmatprep.subr.bf16.mxu0 0
  %1389 = vmatpush1.bf16.msra.mxu0 0
  %1390 = vmatprep.subr.bf16.mxu0 0
  %1391 = vmatpush1.bf16.msra.mxu0 0
  %1392 = vmatprep.subr.bf16.mxu0 0
  %1393 = vmatpush1.bf16.msra.mxu0 0
  %1394 = vmatprep.subr.bf16.mxu0 0
  %1395 = vmatpush1.bf16.msra.mxu0 0
  %1396 = vmatprep.subr.bf16.mxu0 0
  %1397 = vmatpush1.bf16.msra.mxu0 0
  %1398 = vmatprep.subr.bf16.mxu0 0
  %1399 = vmatpush1.bf16.msra.mxu0 0
  %1400 = vmatprep.subr.bf16.mxu0 0
  %1401 = vmatpush1.bf16.msra.mxu0 0
  %1402 = vmatprep.mubr.bf16.mxu0 0
  %1403 = vmatmul.mubr.bf16.gmra.mrb[0].mxu0 %v389
  %v1404 = vpop.f32.mrb[0].mxu0
  %v1405 = vadd.f32 0.0, %v1404
  %v1406 = vpop.f32.mrb[0].mxu0
  %v1407 = vadd.f32 0.0, %v1406
  %v1408 = vpop.f32.mrb[0].mxu0
  %v1409 = vadd.f32 0.0, %v1408
  %v1410 = vpop.f32.mrb[0].mxu0
  %v1411 = vadd.f32 0.0, %v1410
  %1412 = vmatprep.mubr.bf16.mxu0 0
  %1413 = vmatmul.mubr.bf16.gmra.mrb[0].mxu0 %v392
  %v1414 = vpop.f32.mrb[0].mxu0
  %v1415 = vadd.f32 0.0, %v1414
  %v1416 = vpop.f32.mrb[0].mxu0
  %v1417 = vadd.f32 0.0, %v1416
  %v1418 = vpop.f32.mrb[0].mxu0
  %v1419 = vadd.f32 0.0, %v1418
  %v1420 = vpop.f32.mrb[0].mxu0
  %v1421 = vadd.f32 0.0, %v1420
  %1422 = vmatprep.mubr.bf16.mxu0 0
  %1423 = vmatmul.mubr.bf16.gmra.mrb[0].mxu0 %v395
  %v1424 = vpop.f32.mrb[0].mxu0
  %v1425 = vadd.f32 0.0, %v1424
  %v1426 = vpop.f32.mrb[0].mxu0
  %v1427 = vadd.f32 0.0, %v1426
  %v1428 = vpop.f32.mrb[0].mxu0
  %v1429 = vadd.f32 0.0, %v1428
  %v1430 = vpop.f32.mrb[0].mxu0
  %v1431 = vadd.f32 0.0, %v1430
  %1432 = vmatprep.mubr.bf16.mxu0 0
  %1433 = vmatmul.mubr.bf16.gmra.mrb[0].mxu0 %v398
  %v1434 = vpop.f32.mrb[0].mxu0
  %v1435 = vadd.f32 0.0, %v1434
  %v1436 = vpop.f32.mrb[0].mxu0
  %v1437 = vadd.f32 0.0, %v1436
  %v1438 = vpop.f32.mrb[0].mxu0
  %v1439 = vadd.f32 0.0, %v1438
  %v1440 = vpop.f32.mrb[0].mxu0
  %v1441 = vadd.f32 0.0, %v1440
  %1442 = vmatprep.mubr.bf16.mxu0 0
  %1443 = vmatmul.mubr.bf16.gmra.mrb[0].mxu0 %v401
  %v1444 = vpop.f32.mrb[0].mxu0
  %v1445 = vadd.f32 0.0, %v1444
  %v1446 = vpop.f32.mrb[0].mxu0
  %v1447 = vadd.f32 0.0, %v1446
  %v1448 = vpop.f32.mrb[0].mxu0
  %v1449 = vadd.f32 0.0, %v1448
  %v1450 = vpop.f32.mrb[0].mxu0
  %v1451 = vadd.f32 0.0, %v1450
  %1452 = vmatprep.mubr.bf16.mxu0 0
  %1453 = vmatmul.mubr.bf16.gmra.mrb[0].mxu0 %v404
  %v1454 = vpop.f32.mrb[0].mxu0
  %v1455 = vadd.f32 0.0, %v1454
  %v1456 = vpop.f32.mrb[0].mxu0
  %v1457 = vadd.f32 0.0, %v1456
  %v1458 = vpop.f32.mrb[0].mxu0
  %v1459 = vadd.f32 0.0, %v1458
  %v1460 = vpop.f32.mrb[0].mxu0
  %v1461 = vadd.f32 0.0, %v1460
  %1462 = vmatprep.mubr.bf16.mxu0 0
  %1463 = vmatmul.mubr.bf16.gmra.mrb[0].mxu0 %v407
  %v1464 = vpop.f32.mrb[0].mxu0
  %v1465 = vadd.f32 0.0, %v1464
  %v1466 = vpop.f32.mrb[0].mxu0
  %v1467 = vadd.f32 0.0, %v1466
  %v1468 = vpop.f32.mrb[0].mxu0
  %v1469 = vadd.f32 0.0, %v1468
  %v1470 = vpop.f32.mrb[0].mxu0
  %v1471 = vadd.f32 0.0, %v1470
  %1472 = vmatprep.mubr.bf16.mxu0 0
  %1473 = vmatmul.mubr.bf16.gmra.mrb[0].mxu0 %v410
  %v1474 = vpop.f32.mrb[0].mxu0
  %v1475 = vadd.f32 0.0, %v1474
  %v1476 = vpop.f32.mrb[0].mxu0
  %v1477 = vadd.f32 0.0, %v1476
  %v1478 = vpop.f32.mrb[0].mxu0
  %v1479 = vadd.f32 0.0, %v1478
  %v1480 = vpop.f32.mrb[0].mxu0
  %v1481 = vadd.f32 0.0, %v1480
  %1482 = vmatprep.mubr.bf16.mxu0 0
  %1483 = vmatmul.mubr.bf16.gmra.mrb[0].mxu0 %v413
  %v1484 = vpop.f32.mrb[0].mxu0
  %v1485 = vadd.f32 0.0, %v1484
  %v1486 = vpop.f32.mrb[0].mxu0
  %v1487 = vadd.f32 0.0, %v1486
  %v1488 = vpop.f32.mrb[0].mxu0
  %v1489 = vadd.f32 0.0, %v1488
  %v1490 = vpop.f32.mrb[0].mxu0
  %v1491 = vadd.f32 0.0, %v1490
  %1492 = vmatprep.mubr.bf16.mxu0 0
  %1493 = vmatmul.mubr.bf16.gmra.mrb[0].mxu0 %v416
  %v1494 = vpop.f32.mrb[0].mxu0
  %v1495 = vadd.f32 0.0, %v1494
  %v1496 = vpop.f32.mrb[0].mxu0
  %v1497 = vadd.f32 0.0, %v1496
  %v1498 = vpop.f32.mrb[0].mxu0
  %v1499 = vadd.f32 0.0, %v1498
  %v1500 = vpop.f32.mrb[0].mxu0
  %v1501 = vadd.f32 0.0, %v1500
  %1502 = vmatprep.mubr.bf16.mxu0 0
  %1503 = vmatmul.mubr.bf16.gmra.mrb[0].mxu0 %v419
  %v1504 = vpop.f32.mrb[0].mxu0
  %v1505 = vadd.f32 0.0, %v1504
  %v1506 = vpop.f32.mrb[0].mxu0
  %v1507 = vadd.f32 0.0, %v1506
  %v1508 = vpop.f32.mrb[0].mxu0
  %v1509 = vadd.f32 0.0, %v1508
  %v1510 = vpop.f32.mrb[0].mxu0
  %v1511 = vadd.f32 0.0, %v1510
  %1512 = vmatprep.mubr.bf16.mxu0 0
  %1513 = vmatmul.mubr.bf16.gmra.mrb[0].mxu0 %v422
  %v1514 = vpop.f32.mrb[0].mxu0
  %v1515 = vadd.f32 0.0, %v1514
  %v1516 = vpop.f32.mrb[0].mxu0
  %v1517 = vadd.f32 0.0, %v1516
  %v1518 = vpop.f32.mrb[0].mxu0
  %v1519 = vadd.f32 0.0, %v1518
  %v1520 = vpop.f32.mrb[0].mxu0
  %v1521 = vadd.f32 0.0, %v1520
  %1522 = vmatprep.mubr.bf16.mxu0 0
  %1523 = vmatmul.mubr.bf16.gmra.mrb[0].mxu0 %v425
  %v1524 = vpop.f32.mrb[0].mxu0
  %v1525 = vadd.f32 0.0, %v1524
  %v1526 = vpop.f32.mrb[0].mxu0
  %v1527 = vadd.f32 0.0, %v1526
  %v1528 = vpop.f32.mrb[0].mxu0
  %v1529 = vadd.f32 0.0, %v1528
  %v1530 = vpop.f32.mrb[0].mxu0
  %v1531 = vadd.f32 0.0, %v1530
  %1532 = vmatprep.mubr.bf16.mxu0 0
  %1533 = vmatmul.mubr.bf16.gmra.mrb[0].mxu0 %v428
  %v1534 = vpop.f32.mrb[0].mxu0
  %v1535 = vadd.f32 0.0, %v1534
  %v1536 = vpop.f32.mrb[0].mxu0
  %v1537 = vadd.f32 0.0, %v1536
  %v1538 = vpop.f32.mrb[0].mxu0
  %v1539 = vadd.f32 0.0, %v1538
  %v1540 = vpop.f32.mrb[0].mxu0
  %v1541 = vadd.f32 0.0, %v1540
  %1542 = vmatprep.mubr.bf16.mxu0 0
  %1543 = vmatmul.mubr.bf16.gmra.mrb[0].mxu0 %v431
  %v1544 = vpop.f32.mrb[0].mxu0
  %v1545 = vadd.f32 0.0, %v1544
  %v1546 = vpop.f32.mrb[0].mxu0
  %v1547 = vadd.f32 0.0, %v1546
  %v1548 = vpop.f32.mrb[0].mxu0
  %v1549 = vadd.f32 0.0, %v1548
  %v1550 = vpop.f32.mrb[0].mxu0
  %v1551 = vadd.f32 0.0, %v1550
  %1552 = vmatprep.mubr.bf16.mxu0 0
  %1553 = vmatmul.mubr.bf16.gmra.mrb[0].mxu0 %v434
  %v1554 = vpop.f32.mrb[0].mxu0
  %v1555 = vadd.f32 0.0, %v1554
  %v1556 = vpop.f32.mrb[0].mxu0
  %v1557 = vadd.f32 0.0, %v1556
  %v1558 = vpop.f32.mrb[0].mxu0
  %v1559 = vadd.f32 0.0, %v1558
  %v1560 = vpop.f32.mrb[0].mxu0
  %v1561 = vadd.f32 0.0, %v1560
  %1562 = vmatprep.mubr.bf16.mxu0 0
  %1563 = vmatmul.mubr.bf16.gmra.mrb[0].mxu0 %v437
  %v1564 = vpop.f32.mrb[0].mxu0
  %v1565 = vadd.f32 0.0, %v1564
  %v1566 = vpop.f32.mrb[0].mxu0
  %v1567 = vadd.f32 0.0, %v1566
  %v1568 = vpop.f32.mrb[0].mxu0
  %v1569 = vadd.f32 0.0, %v1568
  %v1570 = vpop.f32.mrb[0].mxu0
  %v1571 = vadd.f32 0.0, %v1570
  %1572 = vmatprep.mubr.bf16.mxu0 0
  %1573 = vmatmul.mubr.bf16.gmra.mrb[0].mxu0 %v440
  %v1574 = vpop.f32.mrb[0].mxu0
  %v1575 = vadd.f32 0.0, %v1574
  %v1576 = vpop.f32.mrb[0].mxu0
  %v1577 = vadd.f32 0.0, %v1576
  %v1578 = vpop.f32.mrb[0].mxu0
  %v1579 = vadd.f32 0.0, %v1578
  %v1580 = vpop.f32.mrb[0].mxu0
  %v1581 = vadd.f32 0.0, %v1580
  %1582 = vmatprep.mubr.bf16.mxu0 0
  %1583 = vmatmul.mubr.bf16.gmra.mrb[0].mxu0 %v443
  %v1584 = vpop.f32.mrb[0].mxu0
  %v1585 = vadd.f32 0.0, %v1584
  %v1586 = vpop.f32.mrb[0].mxu0
  %v1587 = vadd.f32 0.0, %v1586
  %v1588 = vpop.f32.mrb[0].mxu0
  %v1589 = vadd.f32 0.0, %v1588
  %v1590 = vpop.f32.mrb[0].mxu0
  %v1591 = vadd.f32 0.0, %v1590
  %1592 = vmatprep.mubr.bf16.mxu0 0
  %1593 = vmatmul.mubr.bf16.gmra.mrb[0].mxu0 %v446
  %v1594 = vpop.f32.mrb[0].mxu0
  %v1595 = vadd.f32 0.0, %v1594
  %v1596 = vpop.f32.mrb[0].mxu0
  %v1597 = vadd.f32 0.0, %v1596
  %v1598 = vpop.f32.mrb[0].mxu0
  %v1599 = vadd.f32 0.0, %v1598
  %v1600 = vpop.f32.mrb[0].mxu0
  %v1601 = vadd.f32 0.0, %v1600
  %1602 = vmatprep.mubr.bf16.mxu0 0
  %1603 = vmatmul.mubr.bf16.gmra.mrb[0].mxu0 %v449
  %v1604 = vpop.f32.mrb[0].mxu0
  %v1605 = vadd.f32 0.0, %v1604
  %v1606 = vpop.f32.mrb[0].mxu0
  %v1607 = vadd.f32 0.0, %v1606
  %v1608 = vpop.f32.mrb[0].mxu0
  %v1609 = vadd.f32 0.0, %v1608
  %v1610 = vpop.f32.mrb[0].mxu0
  %v1611 = vadd.f32 0.0, %v1610
  %1612 = vmatprep.mubr.bf16.mxu0 0
  %1613 = vmatmul.mubr.bf16.gmra.mrb[0].mxu0 %v452
  %v1614 = vpop.f32.mrb[0].mxu0
  %v1615 = vadd.f32 0.0, %v1614
  %v1616 = vpop.f32.mrb[0].mxu0
  %v1617 = vadd.f32 0.0, %v1616
  %v1618 = vpop.f32.mrb[0].mxu0
  %v1619 = vadd.f32 0.0, %v1618
  %v1620 = vpop.f32.mrb[0].mxu0
  %v1621 = vadd.f32 0.0, %v1620
  %1622 = vmatprep.mubr.bf16.mxu0 0
  %1623 = vmatmul.mubr.bf16.gmra.mrb[0].mxu0 %v455
  %v1624 = vpop.f32.mrb[0].mxu0
  %v1625 = vadd.f32 0.0, %v1624
  %v1626 = vpop.f32.mrb[0].mxu0
  %v1627 = vadd.f32 0.0, %v1626
  %v1628 = vpop.f32.mrb[0].mxu0
  %v1629 = vadd.f32 0.0, %v1628
  %v1630 = vpop.f32.mrb[0].mxu0
  %v1631 = vadd.f32 0.0, %v1630
  %1632 = vmatprep.mubr.bf16.mxu0 0
  %1633 = vmatmul.mubr.bf16.gmra.mrb[0].mxu0 %v458
  %v1634 = vpop.f32.mrb[0].mxu0
  %v1635 = vadd.f32 0.0, %v1634
  %v1636 = vpop.f32.mrb[0].mxu0
  %v1637 = vadd.f32 0.0, %v1636
  %v1638 = vpop.f32.mrb[0].mxu0
  %v1639 = vadd.f32 0.0, %v1638
  %v1640 = vpop.f32.mrb[0].mxu0
  %v1641 = vadd.f32 0.0, %v1640
  %1642 = vmatprep.mubr.bf16.mxu0 0
  %1643 = vmatmul.mubr.bf16.gmra.mrb[0].mxu0 %v461
  %v1644 = vpop.f32.mrb[0].mxu0
  %v1645 = vadd.f32 0.0, %v1644
  %v1646 = vpop.f32.mrb[0].mxu0
  %v1647 = vadd.f32 0.0, %v1646
  %v1648 = vpop.f32.mrb[0].mxu0
  %v1649 = vadd.f32 0.0, %v1648
  %v1650 = vpop.f32.mrb[0].mxu0
  %v1651 = vadd.f32 0.0, %v1650
  %1652 = vmatprep.mubr.bf16.mxu0 0
  %1653 = vmatmul.mubr.bf16.gmra.mrb[0].mxu0 %v464
  %v1654 = vpop.f32.mrb[0].mxu0
  %v1655 = vadd.f32 0.0, %v1654
  %v1656 = vpop.f32.mrb[0].mxu0
  %v1657 = vadd.f32 0.0, %v1656
  %v1658 = vpop.f32.mrb[0].mxu0
  %v1659 = vadd.f32 0.0, %v1658
  %v1660 = vpop.f32.mrb[0].mxu0
  %v1661 = vadd.f32 0.0, %v1660
  %1662 = vmatprep.mubr.bf16.mxu0 0
  %1663 = vmatmul.mubr.bf16.gmra.mrb[0].mxu0 %v467
  %v1664 = vpop.f32.mrb[0].mxu0
  %v1665 = vadd.f32 0.0, %v1664
  %v1666 = vpop.f32.mrb[0].mxu0
  %v1667 = vadd.f32 0.0, %v1666
  %v1668 = vpop.f32.mrb[0].mxu0
  %v1669 = vadd.f32 0.0, %v1668
  %v1670 = vpop.f32.mrb[0].mxu0
  %v1671 = vadd.f32 0.0, %v1670
  %1672 = vmatprep.mubr.bf16.mxu0 0
  %1673 = vmatmul.mubr.bf16.gmra.mrb[0].mxu0 %v470
  %v1674 = vpop.f32.mrb[0].mxu0
  %v1675 = vadd.f32 0.0, %v1674
  %v1676 = vpop.f32.mrb[0].mxu0
  %v1677 = vadd.f32 0.0, %v1676
  %v1678 = vpop.f32.mrb[0].mxu0
  %v1679 = vadd.f32 0.0, %v1678
  %v1680 = vpop.f32.mrb[0].mxu0
  %v1681 = vadd.f32 0.0, %v1680
  %1682 = vmatprep.mubr.bf16.mxu0 0
  %1683 = vmatmul.mubr.bf16.gmra.mrb[0].mxu0 %v473
  %v1684 = vpop.f32.mrb[0].mxu0
  %v1685 = vadd.f32 0.0, %v1684
  %v1686 = vpop.f32.mrb[0].mxu0
  %v1687 = vadd.f32 0.0, %v1686
  %v1688 = vpop.f32.mrb[0].mxu0
  %v1689 = vadd.f32 0.0, %v1688
  %v1690 = vpop.f32.mrb[0].mxu0
  %v1691 = vadd.f32 0.0, %v1690
  %1692 = vmatprep.mubr.bf16.mxu0 0
  %1693 = vmatmul.mubr.bf16.gmra.mrb[0].mxu0 %v476
  %v1694 = vpop.f32.mrb[0].mxu0
  %v1695 = vadd.f32 0.0, %v1694
  %v1696 = vpop.f32.mrb[0].mxu0
  %v1697 = vadd.f32 0.0, %v1696
  %v1698 = vpop.f32.mrb[0].mxu0
  %v1699 = vadd.f32 0.0, %v1698
  %v1700 = vpop.f32.mrb[0].mxu0
  %v1701 = vadd.f32 0.0, %v1700
  %1702 = vmatprep.mubr.bf16.mxu0 0
  %1703 = vmatmul.mubr.bf16.gmra.mrb[0].mxu0 %v479
  %v1704 = vpop.f32.mrb[0].mxu0
  %v1705 = vadd.f32 0.0, %v1704
  %v1706 = vpop.f32.mrb[0].mxu0
  %v1707 = vadd.f32 0.0, %v1706
  %v1708 = vpop.f32.mrb[0].mxu0
  %v1709 = vadd.f32 0.0, %v1708
  %v1710 = vpop.f32.mrb[0].mxu0
  %v1711 = vadd.f32 0.0, %v1710
  %1712 = vmatprep.mubr.bf16.mxu0 0
  %1713 = vmatmul.mubr.bf16.gmra.mrb[0].mxu0 %v482
  %v1714 = vpop.f32.mrb[0].mxu0
  %v1715 = vadd.f32 0.0, %v1714
  %v1716 = vpop.f32.mrb[0].mxu0
  %v1717 = vadd.f32 0.0, %v1716
  %v1718 = vpop.f32.mrb[0].mxu0
  %v1719 = vadd.f32 0.0, %v1718
  %v1720 = vpop.f32.mrb[0].mxu0
  %v1721 = vadd.f32 0.0, %v1720
  %1722 = vmatprep.mubr.bf16.mxu0 0
  %1723 = vmatmul.mubr.bf16.gmra.mrb[0].mxu0 %v485
  %v1724 = vpop.f32.mrb[0].mxu0
  %v1725 = vadd.f32 0.0, %v1724
  %v1726 = vpop.f32.mrb[0].mxu0
  %v1727 = vadd.f32 0.0, %v1726
  %v1728 = vpop.f32.mrb[0].mxu0
  %v1729 = vadd.f32 0.0, %v1728
  %v1730 = vpop.f32.mrb[0].mxu0
  %v1731 = vadd.f32 0.0, %v1730
  %1732 = vmatprep.mubr.bf16.mxu0 0
  %1733 = vmatmul.mubr.bf16.gmra.mrb[0].mxu0 %v488
  %v1734 = vpop.f32.mrb[0].mxu0
  %v1735 = vadd.f32 0.0, %v1734
  %v1736 = vpop.f32.mrb[0].mxu0
  %v1737 = vadd.f32 0.0, %v1736
  %v1738 = vpop.f32.mrb[0].mxu0
  %v1739 = vadd.f32 0.0, %v1738
  %v1740 = vpop.f32.mrb[0].mxu0
  %v1741 = vadd.f32 0.0, %v1740
  %1742 = vmatprep.mubr.bf16.mxu0 0
  %1743 = vmatmul.mubr.bf16.gmra.mrb[0].mxu0 %v491
  %v1744 = vpop.f32.mrb[0].mxu0
  %v1745 = vadd.f32 0.0, %v1744
  %v1746 = vpop.f32.mrb[0].mxu0
  %v1747 = vadd.f32 0.0, %v1746
  %v1748 = vpop.f32.mrb[0].mxu0
  %v1749 = vadd.f32 0.0, %v1748
  %v1750 = vpop.f32.mrb[0].mxu0
  %v1751 = vadd.f32 0.0, %v1750
  %1752 = vmatprep.mubr.bf16.mxu0 0
  %1753 = vmatmul.mubr.bf16.gmra.mrb[0].mxu0 %v494
  %v1754 = vpop.f32.mrb[0].mxu0
  %v1755 = vadd.f32 0.0, %v1754
  %v1756 = vpop.f32.mrb[0].mxu0
  %v1757 = vadd.f32 0.0, %v1756
  %v1758 = vpop.f32.mrb[0].mxu0
  %v1759 = vadd.f32 0.0, %v1758
  %v1760 = vpop.f32.mrb[0].mxu0
  %v1761 = vadd.f32 0.0, %v1760
  %1762 = vmatprep.mubr.bf16.mxu0 0
  %1763 = vmatmul.mubr.bf16.gmra.mrb[0].mxu0 %v497
  %v1764 = vpop.f32.mrb[0].mxu0
  %v1765 = vadd.f32 0.0, %v1764
  %v1766 = vpop.f32.mrb[0].mxu0
  %v1767 = vadd.f32 0.0, %v1766
  %v1768 = vpop.f32.mrb[0].mxu0
  %v1769 = vadd.f32 0.0, %v1768
  %v1770 = vpop.f32.mrb[0].mxu0
  %v1771 = vadd.f32 0.0, %v1770
  %1772 = vmatprep.mubr.bf16.mxu0 0
  %1773 = vmatmul.mubr.bf16.gmra.mrb[0].mxu0 %v500
  %v1774 = vpop.f32.mrb[0].mxu0
  %v1775 = vadd.f32 0.0, %v1774
  %v1776 = vpop.f32.mrb[0].mxu0
  %v1777 = vadd.f32 0.0, %v1776
  %v1778 = vpop.f32.mrb[0].mxu0
  %v1779 = vadd.f32 0.0, %v1778
  %v1780 = vpop.f32.mrb[0].mxu0
  %v1781 = vadd.f32 0.0, %v1780
  %1782 = vmatprep.mubr.bf16.mxu0 0
  %1783 = vmatmul.mubr.bf16.gmra.mrb[0].mxu0 %v503
  %v1784 = vpop.f32.mrb[0].mxu0
  %v1785 = vadd.f32 0.0, %v1784
  %v1786 = vpop.f32.mrb[0].mxu0
  %v1787 = vadd.f32 0.0, %v1786
  %v1788 = vpop.f32.mrb[0].mxu0
  %v1789 = vadd.f32 0.0, %v1788
  %v1790 = vpop.f32.mrb[0].mxu0
  %v1791 = vadd.f32 0.0, %v1790
  %1792 = vmatprep.mubr.bf16.mxu0 0
  %1793 = vmatmul.mubr.bf16.gmra.mrb[0].mxu0 %v506
  %v1794 = vpop.f32.mrb[0].mxu0
  %v1795 = vadd.f32 0.0, %v1794
  %v1796 = vpop.f32.mrb[0].mxu0
  %v1797 = vadd.f32 0.0, %v1796
  %v1798 = vpop.f32.mrb[0].mxu0
  %v1799 = vadd.f32 0.0, %v1798
  %v1800 = vpop.f32.mrb[0].mxu0
  %v1801 = vadd.f32 0.0, %v1800
  %1802 = vmatprep.mubr.bf16.mxu0 0
  %1803 = vmatmul.mubr.bf16.gmra.mrb[0].mxu0 %v509
  %v1804 = vpop.f32.mrb[0].mxu0
  %v1805 = vadd.f32 0.0, %v1804
  %v1806 = vpop.f32.mrb[0].mxu0
  %v1807 = vadd.f32 0.0, %v1806
  %v1808 = vpop.f32.mrb[0].mxu0
  %v1809 = vadd.f32 0.0, %v1808
  %v1810 = vpop.f32.mrb[0].mxu0
  %v1811 = vadd.f32 0.0, %v1810
  %1812 = vmatprep.mubr.bf16.mxu0 0
  %1813 = vmatmul.mubr.bf16.gmra.mrb[0].mxu0 %v512
  %v1814 = vpop.f32.mrb[0].mxu0
  %v1815 = vadd.f32 0.0, %v1814
  %v1816 = vpop.f32.mrb[0].mxu0
  %v1817 = vadd.f32 0.0, %v1816
  %v1818 = vpop.f32.mrb[0].mxu0
  %v1819 = vadd.f32 0.0, %v1818
  %v1820 = vpop.f32.mrb[0].mxu0
  %v1821 = vadd.f32 0.0, %v1820
  %1822 = vmatprep.mubr.bf16.mxu0 0
  %1823 = vmatmul.mubr.bf16.gmra.mrb[0].mxu0 %v515
  %v1824 = vpop.f32.mrb[0].mxu0
  %v1825 = vadd.f32 0.0, %v1824
  %v1826 = vpop.f32.mrb[0].mxu0
  %v1827 = vadd.f32 0.0, %v1826
  %v1828 = vpop.f32.mrb[0].mxu0
  %v1829 = vadd.f32 0.0, %v1828
  %v1830 = vpop.f32.mrb[0].mxu0
  %v1831 = vadd.f32 0.0, %v1830
  %1832 = vmatprep.mubr.bf16.mxu0 0
  %1833 = vmatmul.mubr.bf16.gmra.mrb[0].mxu0 %v518
  %v1834 = vpop.f32.mrb[0].mxu0
  %v1835 = vadd.f32 0.0, %v1834
  %v1836 = vpop.f32.mrb[0].mxu0
  %v1837 = vadd.f32 0.0, %v1836
  %v1838 = vpop.f32.mrb[0].mxu0
  %v1839 = vadd.f32 0.0, %v1838
  %v1840 = vpop.f32.mrb[0].mxu0
  %v1841 = vadd.f32 0.0, %v1840
  %1842 = vmatprep.mubr.bf16.mxu0 0
  %1843 = vmatmul.mubr.bf16.gmra.mrb[0].mxu0 %v521
  %v1844 = vpop.f32.mrb[0].mxu0
  %v1845 = vadd.f32 0.0, %v1844
  %v1846 = vpop.f32.mrb[0].mxu0
  %v1847 = vadd.f32 0.0, %v1846
  %v1848 = vpop.f32.mrb[0].mxu0
  %v1849 = vadd.f32 0.0, %v1848
  %v1850 = vpop.f32.mrb[0].mxu0
  %v1851 = vadd.f32 0.0, %v1850
  %1852 = vmatprep.mubr.bf16.mxu0 0
  %1853 = vmatmul.mubr.bf16.gmra.mrb[0].mxu0 %v524
  %v1854 = vpop.f32.mrb[0].mxu0
  %v1855 = vadd.f32 0.0, %v1854
  %v1856 = vpop.f32.mrb[0].mxu0
  %v1857 = vadd.f32 0.0, %v1856
  %v1858 = vpop.f32.mrb[0].mxu0
  %v1859 = vadd.f32 0.0, %v1858
  %v1860 = vpop.f32.mrb[0].mxu0
  %v1861 = vadd.f32 0.0, %v1860
  %1862 = vmatprep.mubr.bf16.mxu0 0
  %1863 = vmatmul.mubr.bf16.gmra.mrb[0].mxu0 %v527
  %v1864 = vpop.f32.mrb[0].mxu0
  %v1865 = vadd.f32 0.0, %v1864
  %v1866 = vpop.f32.mrb[0].mxu0
  %v1867 = vadd.f32 0.0, %v1866
  %v1868 = vpop.f32.mrb[0].mxu0
  %v1869 = vadd.f32 0.0, %v1868
  %v1870 = vpop.f32.mrb[0].mxu0
  %v1871 = vadd.f32 0.0, %v1870
  %1872 = vmatprep.mubr.bf16.mxu0 0
  %1873 = vmatmul.mubr.bf16.gmra.mrb[0].mxu0 %v530
  %v1874 = vpop.f32.mrb[0].mxu0
  %v1875 = vadd.f32 0.0, %v1874
  %v1876 = vpop.f32.mrb[0].mxu0
  %v1877 = vadd.f32 0.0, %v1876
  %v1878 = vpop.f32.mrb[0].mxu0
  %v1879 = vadd.f32 0.0, %v1878
  %v1880 = vpop.f32.mrb[0].mxu0
  %v1881 = vadd.f32 0.0, %v1880
  %1882 = vmatprep.mubr.bf16.mxu0 0
  %1883 = vmatmul.mubr.bf16.gmra.mrb[0].mxu0 %v533
  %v1884 = vpop.f32.mrb[0].mxu0
  %v1885 = vadd.f32 0.0, %v1884
  %v1886 = vpop.f32.mrb[0].mxu0
  %v1887 = vadd.f32 0.0, %v1886
  %v1888 = vpop.f32.mrb[0].mxu0
  %v1889 = vadd.f32 0.0, %v1888
  %v1890 = vpop.f32.mrb[0].mxu0
  %v1891 = vadd.f32 0.0, %v1890
  %1892 = vmatprep.mubr.bf16.mxu0 0
  %1893 = vmatmul.mubr.bf16.gmra.mrb[0].mxu0 %v536
  %v1894 = vpop.f32.mrb[0].mxu0
  %v1895 = vadd.f32 0.0, %v1894
  %v1896 = vpop.f32.mrb[0].mxu0
  %v1897 = vadd.f32 0.0, %v1896
  %v1898 = vpop.f32.mrb[0].mxu0
  %v1899 = vadd.f32 0.0, %v1898
  %v1900 = vpop.f32.mrb[0].mxu0
  %v1901 = vadd.f32 0.0, %v1900
  %1902 = vmatprep.mubr.bf16.mxu0 0
  %1903 = vmatmul.mubr.bf16.gmra.mrb[0].mxu0 %v539
  %v1904 = vpop.f32.mrb[0].mxu0
  %v1905 = vadd.f32 0.0, %v1904
  %v1906 = vpop.f32.mrb[0].mxu0
  %v1907 = vadd.f32 0.0, %v1906
  %v1908 = vpop.f32.mrb[0].mxu0
  %v1909 = vadd.f32 0.0, %v1908
  %v1910 = vpop.f32.mrb[0].mxu0
  %v1911 = vadd.f32 0.0, %v1910
  %1912 = vmatprep.mubr.bf16.mxu0 0
  %1913 = vmatmul.mubr.bf16.gmra.mrb[0].mxu0 %v542
  %v1914 = vpop.f32.mrb[0].mxu0
  %v1915 = vadd.f32 0.0, %v1914
  %v1916 = vpop.f32.mrb[0].mxu0
  %v1917 = vadd.f32 0.0, %v1916
  %v1918 = vpop.f32.mrb[0].mxu0
  %v1919 = vadd.f32 0.0, %v1918
  %v1920 = vpop.f32.mrb[0].mxu0
  %v1921 = vadd.f32 0.0, %v1920
  %1922 = vmatprep.mubr.bf16.mxu0 0
  %1923 = vmatmul.mubr.bf16.gmra.mrb[0].mxu0 %v545
  %v1924 = vpop.f32.mrb[0].mxu0
  %v1925 = vadd.f32 0.0, %v1924
  %v1926 = vpop.f32.mrb[0].mxu0
  %v1927 = vadd.f32 0.0, %v1926
  %v1928 = vpop.f32.mrb[0].mxu0
  %v1929 = vadd.f32 0.0, %v1928
  %v1930 = vpop.f32.mrb[0].mxu0
  %v1931 = vadd.f32 0.0, %v1930
  %1932 = vmatprep.mubr.bf16.mxu0 0
  %1933 = vmatmul.mubr.bf16.gmra.mrb[0].mxu0 %v548
  %v1934 = vpop.f32.mrb[0].mxu0
  %v1935 = vadd.f32 0.0, %v1934
  %v1936 = vpop.f32.mrb[0].mxu0
  %v1937 = vadd.f32 0.0, %v1936
  %v1938 = vpop.f32.mrb[0].mxu0
  %v1939 = vadd.f32 0.0, %v1938
  %v1940 = vpop.f32.mrb[0].mxu0
  %v1941 = vadd.f32 0.0, %v1940
  %1942 = vmatprep.mubr.bf16.mxu0 0
  %1943 = vmatmul.mubr.bf16.gmra.mrb[0].mxu0 %v551
  %v1944 = vpop.f32.mrb[0].mxu0
  %v1945 = vadd.f32 0.0, %v1944
  %v1946 = vpop.f32.mrb[0].mxu0
  %v1947 = vadd.f32 0.0, %v1946
  %v1948 = vpop.f32.mrb[0].mxu0
  %v1949 = vadd.f32 0.0, %v1948
  %v1950 = vpop.f32.mrb[0].mxu0
  %v1951 = vadd.f32 0.0, %v1950
  %1952 = vmatprep.mubr.bf16.mxu0 0
  %1953 = vmatmul.mubr.bf16.gmra.mrb[0].mxu0 %v554
  %v1954 = vpop.f32.mrb[0].mxu0
  %v1955 = vadd.f32 0.0, %v1954
  %v1956 = vpop.f32.mrb[0].mxu0
  %v1957 = vadd.f32 0.0, %v1956
  %v1958 = vpop.f32.mrb[0].mxu0
  %v1959 = vadd.f32 0.0, %v1958
  %v1960 = vpop.f32.mrb[0].mxu0
  %v1961 = vadd.f32 0.0, %v1960
  %1962 = vmatprep.mubr.bf16.mxu0 0
  %1963 = vmatmul.mubr.bf16.gmra.mrb[0].mxu0 %v557
  %v1964 = vpop.f32.mrb[0].mxu0
  %v1965 = vadd.f32 0.0, %v1964
  %v1966 = vpop.f32.mrb[0].mxu0
  %v1967 = vadd.f32 0.0, %v1966
  %v1968 = vpop.f32.mrb[0].mxu0
  %v1969 = vadd.f32 0.0, %v1968
  %v1970 = vpop.f32.mrb[0].mxu0
  %v1971 = vadd.f32 0.0, %v1970
  %1972 = vmatprep.mubr.bf16.mxu0 0
  %1973 = vmatmul.mubr.bf16.gmra.mrb[0].mxu0 %v560
  %v1974 = vpop.f32.mrb[0].mxu0
  %v1975 = vadd.f32 0.0, %v1974
  %v1976 = vpop.f32.mrb[0].mxu0
  %v1977 = vadd.f32 0.0, %v1976
  %v1978 = vpop.f32.mrb[0].mxu0
  %v1979 = vadd.f32 0.0, %v1978
  %v1980 = vpop.f32.mrb[0].mxu0
  %v1981 = vadd.f32 0.0, %v1980
  %1982 = vmatprep.mubr.bf16.mxu0 0
  %1983 = vmatmul.mubr.bf16.gmra.mrb[0].mxu0 %v563
  %v1984 = vpop.f32.mrb[0].mxu0
  %v1985 = vadd.f32 0.0, %v1984
  %v1986 = vpop.f32.mrb[0].mxu0
  %v1987 = vadd.f32 0.0, %v1986
  %v1988 = vpop.f32.mrb[0].mxu0
  %v1989 = vadd.f32 0.0, %v1988
  %v1990 = vpop.f32.mrb[0].mxu0
  %v1991 = vadd.f32 0.0, %v1990
  %1992 = vmatprep.mubr.bf16.mxu0 0
  %1993 = vmatmul.mubr.bf16.gmra.mrb[0].mxu0 %v566
  %v1994 = vpop.f32.mrb[0].mxu0
  %v1995 = vadd.f32 0.0, %v1994
  %v1996 = vpop.f32.mrb[0].mxu0
  %v1997 = vadd.f32 0.0, %v1996
  %v1998 = vpop.f32.mrb[0].mxu0
  %v1999 = vadd.f32 0.0, %v1998
  %v2000 = vpop.f32.mrb[0].mxu0
  %v2001 = vadd.f32 0.0, %v2000
  %2002 = vmatprep.mubr.bf16.mxu0 0
  %2003 = vmatmul.mubr.bf16.gmra.mrb[0].mxu0 %v569
  %v2004 = vpop.f32.mrb[0].mxu0
  %v2005 = vadd.f32 0.0, %v2004
  %v2006 = vpop.f32.mrb[0].mxu0
  %v2007 = vadd.f32 0.0, %v2006
  %v2008 = vpop.f32.mrb[0].mxu0
  %v2009 = vadd.f32 0.0, %v2008
  %v2010 = vpop.f32.mrb[0].mxu0
  %v2011 = vadd.f32 0.0, %v2010
  %2012 = vmatprep.mubr.bf16.mxu0 0
  %2013 = vmatmul.mubr.bf16.gmra.mrb[0].mxu0 %v572
  %v2014 = vpop.f32.mrb[0].mxu0
  %v2015 = vadd.f32 0.0, %v2014
  %v2016 = vpop.f32.mrb[0].mxu0
  %v2017 = vadd.f32 0.0, %v2016
  %v2018 = vpop.f32.mrb[0].mxu0
  %v2019 = vadd.f32 0.0, %v2018
  %v2020 = vpop.f32.mrb[0].mxu0
  %v2021 = vadd.f32 0.0, %v2020
  %2022 = vmatprep.mubr.bf16.mxu0 0
  %2023 = vmatmul.mubr.bf16.gmra.mrb[0].mxu0 %v575
  %v2024 = vpop.f32.mrb[0].mxu0
  %v2025 = vadd.f32 0.0, %v2024
  %v2026 = vpop.f32.mrb[0].mxu0
  %v2027 = vadd.f32 0.0, %v2026
  %v2028 = vpop.f32.mrb[0].mxu0
  %v2029 = vadd.f32 0.0, %v2028
  %v2030 = vpop.f32.mrb[0].mxu0
  %v2031 = vadd.f32 0.0, %v2030
  %2032 = vmatprep.mubr.bf16.mxu0 0
  %2033 = vmatmul.mubr.bf16.gmra.mrb[0].mxu0 %v578
  %v2034 = vpop.f32.mrb[0].mxu0
  %v2035 = vadd.f32 0.0, %v2034
  %v2036 = vpop.f32.mrb[0].mxu0
  %v2037 = vadd.f32 0.0, %v2036
  %v2038 = vpop.f32.mrb[0].mxu0
  %v2039 = vadd.f32 0.0, %v2038
  %v2040 = vpop.f32.mrb[0].mxu0
  %v2041 = vadd.f32 0.0, %v2040
  %2042 = vmatprep.mubr.bf16.mxu0 0
  %2043 = vmatmul.mubr.bf16.gmra.mrb[0].mxu0 %v581
  %v2044 = vpop.f32.mrb[0].mxu0
  %v2045 = vadd.f32 0.0, %v2044
  %v2046 = vpop.f32.mrb[0].mxu0
  %v2047 = vadd.f32 0.0, %v2046
  %v2048 = vpop.f32.mrb[0].mxu0
  %v2049 = vadd.f32 0.0, %v2048
  %v2050 = vpop.f32.mrb[0].mxu0
  %v2051 = vadd.f32 0.0, %v2050
  %2052 = vmatprep.mubr.bf16.mxu0 0
  %2053 = vmatmul.mubr.bf16.gmra.mrb[0].mxu0 %v584
  %v2054 = vpop.f32.mrb[0].mxu0
  %v2055 = vadd.f32 0.0, %v2054
  %v2056 = vpop.f32.mrb[0].mxu0
  %v2057 = vadd.f32 0.0, %v2056
  %v2058 = vpop.f32.mrb[0].mxu0
  %v2059 = vadd.f32 0.0, %v2058
  %v2060 = vpop.f32.mrb[0].mxu0
  %v2061 = vadd.f32 0.0, %v2060
  %2062 = vmatprep.mubr.bf16.mxu0 0
  %2063 = vmatmul.mubr.bf16.gmra.mrb[0].mxu0 %v587
  %v2064 = vpop.f32.mrb[0].mxu0
  %v2065 = vadd.f32 0.0, %v2064
  %v2066 = vpop.f32.mrb[0].mxu0
  %v2067 = vadd.f32 0.0, %v2066
  %v2068 = vpop.f32.mrb[0].mxu0
  %v2069 = vadd.f32 0.0, %v2068
  %v2070 = vpop.f32.mrb[0].mxu0
  %v2071 = vadd.f32 0.0, %v2070
  %2072 = vmatprep.mubr.bf16.mxu0 0
  %2073 = vmatmul.mubr.bf16.gmra.mrb[0].mxu0 %v590
  %v2074 = vpop.f32.mrb[0].mxu0
  %v2075 = vadd.f32 0.0, %v2074
  %v2076 = vpop.f32.mrb[0].mxu0
  %v2077 = vadd.f32 0.0, %v2076
  %v2078 = vpop.f32.mrb[0].mxu0
  %v2079 = vadd.f32 0.0, %v2078
  %v2080 = vpop.f32.mrb[0].mxu0
  %v2081 = vadd.f32 0.0, %v2080
  %2082 = vmatprep.mubr.bf16.mxu0 0
  %2083 = vmatmul.mubr.bf16.gmra.mrb[0].mxu0 %v593
  %v2084 = vpop.f32.mrb[0].mxu0
  %v2085 = vadd.f32 0.0, %v2084
  %v2086 = vpop.f32.mrb[0].mxu0
  %v2087 = vadd.f32 0.0, %v2086
  %v2088 = vpop.f32.mrb[0].mxu0
  %v2089 = vadd.f32 0.0, %v2088
  %v2090 = vpop.f32.mrb[0].mxu0
  %v2091 = vadd.f32 0.0, %v2090
  %2092 = vmatprep.mubr.bf16.mxu0 0
  %2093 = vmatmul.mubr.bf16.gmra.mrb[0].mxu0 %v596
  %v2094 = vpop.f32.mrb[0].mxu0
  %v2095 = vadd.f32 0.0, %v2094
  %v2096 = vpop.f32.mrb[0].mxu0
  %v2097 = vadd.f32 0.0, %v2096
  %v2098 = vpop.f32.mrb[0].mxu0
  %v2099 = vadd.f32 0.0, %v2098
  %v2100 = vpop.f32.mrb[0].mxu0
  %v2101 = vadd.f32 0.0, %v2100
  %2102 = vmatprep.mubr.bf16.mxu0 0
  %2103 = vmatmul.mubr.bf16.gmra.mrb[0].mxu0 %v599
  %v2104 = vpop.f32.mrb[0].mxu0
  %v2105 = vadd.f32 0.0, %v2104
  %v2106 = vpop.f32.mrb[0].mxu0
  %v2107 = vadd.f32 0.0, %v2106
  %v2108 = vpop.f32.mrb[0].mxu0
  %v2109 = vadd.f32 0.0, %v2108
  %v2110 = vpop.f32.mrb[0].mxu0
  %v2111 = vadd.f32 0.0, %v2110
  %2112 = vmatprep.mubr.bf16.mxu0 0
  %2113 = vmatmul.mubr.bf16.gmra.mrb[0].mxu0 %v602
  %v2114 = vpop.f32.mrb[0].mxu0
  %v2115 = vadd.f32 0.0, %v2114
  %v2116 = vpop.f32.mrb[0].mxu0
  %v2117 = vadd.f32 0.0, %v2116
  %v2118 = vpop.f32.mrb[0].mxu0
  %v2119 = vadd.f32 0.0, %v2118
  %v2120 = vpop.f32.mrb[0].mxu0
  %v2121 = vadd.f32 0.0, %v2120
  %2122 = vdwg.mxu0
  %v2123 = vmax.f32 %v652, %v654
  %v2124 = vmax.f32 %v656, %v658
  %v2125 = vmax.f32 %v662, %v664
  %v2126 = vmax.f32 %v666, %v668
  %v2127 = vmax.f32 %v672, %v674
  %v2128 = vmax.f32 %v676, %v678
  %v2129 = vmax.f32 %v682, %v684
  %v2130 = vmax.f32 %v686, %v688
  %v2131 = vmax.f32 %v692, %v694
  %v2132 = vmax.f32 %v696, %v698
  %v2133 = vmax.f32 %v702, %v704
  %v2134 = vmax.f32 %v706, %v708
  %v2135 = vmax.f32 %v712, %v714
  %v2136 = vmax.f32 %v716, %v718
  %v2137 = vmax.f32 %v722, %v724
  %v2138 = vmax.f32 %v726, %v728
  %v2139 = vmax.f32 %v732, %v734
  %v2140 = vmax.f32 %v736, %v738
  %v2141 = vmax.f32 %v742, %v744
  %v2142 = vmax.f32 %v746, %v748
  %v2143 = vmax.f32 %v752, %v754
  %v2144 = vmax.f32 %v756, %v758
  %v2145 = vmax.f32 %v762, %v764
  %v2146 = vmax.f32 %v766, %v768
  %v2147 = vmax.f32 %v772, %v774
  %v2148 = vmax.f32 %v776, %v778
  %v2149 = vmax.f32 %v782, %v784
  %v2150 = vmax.f32 %v786, %v788
  %v2151 = vmax.f32 %v792, %v794
  %v2152 = vmax.f32 %v796, %v798
  %v2153 = vmax.f32 %v802, %v804
  %v2154 = vmax.f32 %v806, %v808
  %v2155 = vmax.f32 %v812, %v814
  %v2156 = vmax.f32 %v816, %v818
  %v2157 = vmax.f32 %v822, %v824
  %v2158 = vmax.f32 %v826, %v828
  %v2159 = vmax.f32 %v832, %v834
  %v2160 = vmax.f32 %v836, %v838
  %v2161 = vmax.f32 %v842, %v844
  %v2162 = vmax.f32 %v846, %v848
  %v2163 = vmax.f32 %v852, %v854
  %v2164 = vmax.f32 %v856, %v858
  %v2165 = vmax.f32 %v862, %v864
  %v2166 = vmax.f32 %v866, %v868
  %v2167 = vmax.f32 %v872, %v874
  %v2168 = vmax.f32 %v876, %v878
  %v2169 = vmax.f32 %v882, %v884
  %v2170 = vmax.f32 %v886, %v888
  %v2171 = vmax.f32 %v892, %v894
  %v2172 = vmax.f32 %v896, %v898
  %v2173 = vmax.f32 %v902, %v904
  %v2174 = vmax.f32 %v906, %v908
  %v2175 = vmax.f32 %v912, %v914
  %v2176 = vmax.f32 %v916, %v918
  %v2177 = vmax.f32 %v922, %v924
  %v2178 = vmax.f32 %v926, %v928
  %v2179 = vmax.f32 %v932, %v934
  %v2180 = vmax.f32 %v936, %v938
  %v2181 = vmax.f32 %v942, %v944
  %v2182 = vmax.f32 %v946, %v948
  %v2183 = vmax.f32 %v952, %v954
  %v2184 = vmax.f32 %v956, %v958
  %v2185 = vmax.f32 %v962, %v964
  %v2186 = vmax.f32 %v966, %v968
  %v2187 = vmax.f32 %v972, %v974
  %v2188 = vmax.f32 %v976, %v978
  %v2189 = vmax.f32 %v982, %v984
  %v2190 = vmax.f32 %v986, %v988
  %v2191 = vmax.f32 %v992, %v994
  %v2192 = vmax.f32 %v996, %v998
  %v2193 = vmax.f32 %v1002, %v1004
  %v2194 = vmax.f32 %v1006, %v1008
  %v2195 = vmax.f32 %v1012, %v1014
  %v2196 = vmax.f32 %v1016, %v1018
  %v2197 = vmax.f32 %v1022, %v1024
  %v2198 = vmax.f32 %v1026, %v1028
  %v2199 = vmax.f32 %v1032, %v1034
  %v2200 = vmax.f32 %v1036, %v1038
  %v2201 = vmax.f32 %v1042, %v1044
  %v2202 = vmax.f32 %v1046, %v1048
  %v2203 = vmax.f32 %v1052, %v1054
  %v2204 = vmax.f32 %v1056, %v1058
  %v2205 = vmax.f32 %v1062, %v1064
  %v2206 = vmax.f32 %v1066, %v1068
  %v2207 = vmax.f32 %v1072, %v1074
  %v2208 = vmax.f32 %v1076, %v1078
  %v2209 = vmax.f32 %v1082, %v1084
  %v2210 = vmax.f32 %v1086, %v1088
  %v2211 = vmax.f32 %v1092, %v1094
  %v2212 = vmax.f32 %v1096, %v1098
  %v2213 = vmax.f32 %v1102, %v1104
  %v2214 = vmax.f32 %v1106, %v1108
  %v2215 = vmax.f32 %v1112, %v1114
  %v2216 = vmax.f32 %v1116, %v1118
  %v2217 = vmax.f32 %v1122, %v1124
  %v2218 = vmax.f32 %v1126, %v1128
  %v2219 = vmax.f32 %v1132, %v1134
  %v2220 = vmax.f32 %v1136, %v1138
  %v2221 = vmax.f32 %v1142, %v1144
  %v2222 = vmax.f32 %v1146, %v1148
  %v2223 = vmax.f32 %v1152, %v1154
  %v2224 = vmax.f32 %v1156, %v1158
  %v2225 = vmax.f32 %v1162, %v1164
  %v2226 = vmax.f32 %v1166, %v1168
  %v2227 = vmax.f32 %v1172, %v1174
  %v2228 = vmax.f32 %v1176, %v1178
  %v2229 = vmax.f32 %v1182, %v1184
  %v2230 = vmax.f32 %v1186, %v1188
  %v2231 = vmax.f32 %v1192, %v1194
  %v2232 = vmax.f32 %v1196, %v1198
  %v2233 = vmax.f32 %v1202, %v1204
  %v2234 = vmax.f32 %v1206, %v1208
  %v2235 = vmax.f32 %v1212, %v1214
  %v2236 = vmax.f32 %v1216, %v1218
  %v2237 = vmax.f32 %v1222, %v1224
  %v2238 = vmax.f32 %v1226, %v1228
  %v2239 = vmax.f32 %v1232, %v1234
  %v2240 = vmax.f32 %v1236, %v1238
  %v2241 = vmax.f32 %v1242, %v1244
  %v2242 = vmax.f32 %v1246, %v1248
  %v2243 = vmax.f32 %v1252, %v1254
  %v2244 = vmax.f32 %v1256, %v1258
  %v2245 = vmax.f32 %v1262, %v1264
  %v2246 = vmax.f32 %v1266, %v1268
  %v2247 = vmax.f32 %v1272, %v1274
  %v2248 = vmax.f32 %v1276, %v1278
  %v2249 = vmax.f32 %v1282, %v1284
  %v2250 = vmax.f32 %v1286, %v1288
  %v2251 = vmax.f32 %v1292, %v1294
  %v2252 = vmax.f32 %v1296, %v1298
  %v2253 = vmax.f32 %v1302, %v1304
  %v2254 = vmax.f32 %v1306, %v1308
  %v2255 = vmax.f32 %v1312, %v1314
  %v2256 = vmax.f32 %v1316, %v1318
  %v2257 = vmax.f32 %v1322, %v1324
  %v2258 = vmax.f32 %v1326, %v1328
  %v2259 = vmax.f32 %v1332, %v1334
  %v2260 = vmax.f32 %v1336, %v1338
  %v2261 = vmax.f32 %v1342, %v1344
  %v2262 = vmax.f32 %v1346, %v1348
  %v2263 = vmax.f32 %v1352, %v1354
  %v2264 = vmax.f32 %v1356, %v1358
  %v2265 = vmax.f32 %v1362, %v1364
  %v2266 = vmax.f32 %v1366, %v1368
  %v2267 = vmax.f32 %v1405, %v1407
  %v2268 = vmax.f32 %v1409, %v1411
  %v2269 = vmax.f32 %v1415, %v1417
  %v2270 = vmax.f32 %v1419, %v1421
  %v2271 = vmax.f32 %v1425, %v1427
  %v2272 = vmax.f32 %v1429, %v1431
  %v2273 = vmax.f32 %v1435, %v1437
  %v2274 = vmax.f32 %v1439, %v1441
  %v2275 = vmax.f32 %v1445, %v1447
  %v2276 = vmax.f32 %v1449, %v1451
  %v2277 = vmax.f32 %v1455, %v1457
  %v2278 = vmax.f32 %v1459, %v1461
  %v2279 = vmax.f32 %v1465, %v1467
  %v2280 = vmax.f32 %v1469, %v1471
  %v2281 = vmax.f32 %v1475, %v1477
  %v2282 = vmax.f32 %v1479, %v1481
  %v2283 = vmax.f32 %v1485, %v1487
  %v2284 = vmax.f32 %v1489, %v1491
  %v2285 = vmax.f32 %v1495, %v1497
  %v2286 = vmax.f32 %v1499, %v1501
  %v2287 = vmax.f32 %v1505, %v1507
  %v2288 = vmax.f32 %v1509, %v1511
  %v2289 = vmax.f32 %v1515, %v1517
  %v2290 = vmax.f32 %v1519, %v1521
  %v2291 = vmax.f32 %v1525, %v1527
  %v2292 = vmax.f32 %v1529, %v1531
  %v2293 = vmax.f32 %v1535, %v1537
  %v2294 = vmax.f32 %v1539, %v1541
  %v2295 = vmax.f32 %v1545, %v1547
  %v2296 = vmax.f32 %v1549, %v1551
  %v2297 = vmax.f32 %v1555, %v1557
  %v2298 = vmax.f32 %v1559, %v1561
  %v2299 = vmax.f32 %v1565, %v1567
  %v2300 = vmax.f32 %v1569, %v1571
  %v2301 = vmax.f32 %v1575, %v1577
  %v2302 = vmax.f32 %v1579, %v1581
  %v2303 = vmax.f32 %v1585, %v1587
  %v2304 = vmax.f32 %v1589, %v1591
  %v2305 = vmax.f32 %v1595, %v1597
  %v2306 = vmax.f32 %v1599, %v1601
  %v2307 = vmax.f32 %v1605, %v1607
  %v2308 = vmax.f32 %v1609, %v1611
  %v2309 = vmax.f32 %v1615, %v1617
  %v2310 = vmax.f32 %v1619, %v1621
  %v2311 = vmax.f32 %v1625, %v1627
  %v2312 = vmax.f32 %v1629, %v1631
  %v2313 = vmax.f32 %v1635, %v1637
  %v2314 = vmax.f32 %v1639, %v1641
  %v2315 = vmax.f32 %v1645, %v1647
  %v2316 = vmax.f32 %v1649, %v1651
  %v2317 = vmax.f32 %v1655, %v1657
  %v2318 = vmax.f32 %v1659, %v1661
  %v2319 = vmax.f32 %v1665, %v1667
  %v2320 = vmax.f32 %v1669, %v1671
  %v2321 = vmax.f32 %v1675, %v1677
  %v2322 = vmax.f32 %v1679, %v1681
  %v2323 = vmax.f32 %v1685, %v1687
  %v2324 = vmax.f32 %v1689, %v1691
  %v2325 = vmax.f32 %v1695, %v1697
  %v2326 = vmax.f32 %v1699, %v1701
  %v2327 = vmax.f32 %v1705, %v1707
  %v2328 = vmax.f32 %v1709, %v1711
  %v2329 = vmax.f32 %v1715, %v1717
  %v2330 = vmax.f32 %v1719, %v1721
  %v2331 = vmax.f32 %v1725, %v1727
  %v2332 = vmax.f32 %v1729, %v1731
  %v2333 = vmax.f32 %v1735, %v1737
  %v2334 = vmax.f32 %v1739, %v1741
  %v2335 = vmax.f32 %v1745, %v1747
  %v2336 = vmax.f32 %v1749, %v1751
  %v2337 = vmax.f32 %v1755, %v1757
  %v2338 = vmax.f32 %v1759, %v1761
  %v2339 = vmax.f32 %v1765, %v1767
  %v2340 = vmax.f32 %v1769, %v1771
  %v2341 = vmax.f32 %v1775, %v1777
  %v2342 = vmax.f32 %v1779, %v1781
  %v2343 = vmax.f32 %v1785, %v1787
  %v2344 = vmax.f32 %v1789, %v1791
  %v2345 = vmax.f32 %v1795, %v1797
  %v2346 = vmax.f32 %v1799, %v1801
  %v2347 = vmax.f32 %v1805, %v1807
  %v2348 = vmax.f32 %v1809, %v1811
  %v2349 = vmax.f32 %v1815, %v1817
  %v2350 = vmax.f32 %v1819, %v1821
  %v2351 = vmax.f32 %v1825, %v1827
  %v2352 = vmax.f32 %v1829, %v1831
  %v2353 = vmax.f32 %v1835, %v1837
  %v2354 = vmax.f32 %v1839, %v1841
  %v2355 = vmax.f32 %v1845, %v1847
  %v2356 = vmax.f32 %v1849, %v1851
  %v2357 = vmax.f32 %v1855, %v1857
  %v2358 = vmax.f32 %v1859, %v1861
  %v2359 = vmax.f32 %v1865, %v1867
  %v2360 = vmax.f32 %v1869, %v1871
  %v2361 = vmax.f32 %v1875, %v1877
  %v2362 = vmax.f32 %v1879, %v1881
  %v2363 = vmax.f32 %v1885, %v1887
  %v2364 = vmax.f32 %v1889, %v1891
  %v2365 = vmax.f32 %v1895, %v1897
  %v2366 = vmax.f32 %v1899, %v1901
  %v2367 = vmax.f32 %v1905, %v1907
  %v2368 = vmax.f32 %v1909, %v1911
  %v2369 = vmax.f32 %v1915, %v1917
  %v2370 = vmax.f32 %v1919, %v1921
  %v2371 = vmax.f32 %v1925, %v1927
  %v2372 = vmax.f32 %v1929, %v1931
  %v2373 = vmax.f32 %v1935, %v1937
  %v2374 = vmax.f32 %v1939, %v1941
  %v2375 = vmax.f32 %v1945, %v1947
  %v2376 = vmax.f32 %v1949, %v1951
  %v2377 = vmax.f32 %v1955, %v1957
  %v2378 = vmax.f32 %v1959, %v1961
  %v2379 = vmax.f32 %v1965, %v1967
  %v2380 = vmax.f32 %v1969, %v1971
  %v2381 = vmax.f32 %v1975, %v1977
  %v2382 = vmax.f32 %v1979, %v1981
  %v2383 = vmax.f32 %v1985, %v1987
  %v2384 = vmax.f32 %v1989, %v1991
  %v2385 = vmax.f32 %v1995, %v1997
  %v2386 = vmax.f32 %v1999, %v2001
  %v2387 = vmax.f32 %v2005, %v2007
  %v2388 = vmax.f32 %v2009, %v2011
  %v2389 = vmax.f32 %v2015, %v2017
  %v2390 = vmax.f32 %v2019, %v2021
  %v2391 = vmax.f32 %v2025, %v2027
  %v2392 = vmax.f32 %v2029, %v2031
  %v2393 = vmax.f32 %v2035, %v2037
  %v2394 = vmax.f32 %v2039, %v2041
  %v2395 = vmax.f32 %v2045, %v2047
  %v2396 = vmax.f32 %v2049, %v2051
  %v2397 = vmax.f32 %v2055, %v2057
  %v2398 = vmax.f32 %v2059, %v2061
  %v2399 = vmax.f32 %v2065, %v2067
  %v2400 = vmax.f32 %v2069, %v2071
  %v2401 = vmax.f32 %v2075, %v2077
  %v2402 = vmax.f32 %v2079, %v2081
  %v2403 = vmax.f32 %v2085, %v2087
  %v2404 = vmax.f32 %v2089, %v2091
  %v2405 = vmax.f32 %v2095, %v2097
  %v2406 = vmax.f32 %v2099, %v2101
  %v2407 = vmax.f32 %v2105, %v2107
  %v2408 = vmax.f32 %v2109, %v2111
  %v2409 = vmax.f32 %v2115, %v2117
  %v2410 = vmax.f32 %v2119, %v2121
  %v2411 = vmax.f32 %v2123, %v2267
  %v2412 = vmax.f32 %v2124, %v2268
  %v2413 = vmax.f32 %v2125, %v2269
  %v2414 = vmax.f32 %v2126, %v2270
  %v2415 = vmax.f32 %v2127, %v2271
  %v2416 = vmax.f32 %v2128, %v2272
  %v2417 = vmax.f32 %v2129, %v2273
  %v2418 = vmax.f32 %v2130, %v2274
  %v2419 = vmax.f32 %v2131, %v2275
  %v2420 = vmax.f32 %v2132, %v2276
  %v2421 = vmax.f32 %v2133, %v2277
  %v2422 = vmax.f32 %v2134, %v2278
  %v2423 = vmax.f32 %v2135, %v2279
  %v2424 = vmax.f32 %v2136, %v2280
  %v2425 = vmax.f32 %v2137, %v2281
  %v2426 = vmax.f32 %v2138, %v2282
  %v2427 = vmax.f32 %v2139, %v2283
  %v2428 = vmax.f32 %v2140, %v2284
  %v2429 = vmax.f32 %v2141, %v2285
  %v2430 = vmax.f32 %v2142, %v2286
  %v2431 = vmax.f32 %v2143, %v2287
  %v2432 = vmax.f32 %v2144, %v2288
  %v2433 = vmax.f32 %v2145, %v2289
  %v2434 = vmax.f32 %v2146, %v2290
  %v2435 = vmax.f32 %v2147, %v2291
  %v2436 = vmax.f32 %v2148, %v2292
  %v2437 = vmax.f32 %v2149, %v2293
  %v2438 = vmax.f32 %v2150, %v2294
  %v2439 = vmax.f32 %v2151, %v2295
  %v2440 = vmax.f32 %v2152, %v2296
  %v2441 = vmax.f32 %v2153, %v2297
  %v2442 = vmax.f32 %v2154, %v2298
  %v2443 = vmax.f32 %v2155, %v2299
  %v2444 = vmax.f32 %v2156, %v2300
  %v2445 = vmax.f32 %v2157, %v2301
  %v2446 = vmax.f32 %v2158, %v2302
  %v2447 = vmax.f32 %v2159, %v2303
  %v2448 = vmax.f32 %v2160, %v2304
  %v2449 = vmax.f32 %v2161, %v2305
  %v2450 = vmax.f32 %v2162, %v2306
  %v2451 = vmax.f32 %v2163, %v2307
  %v2452 = vmax.f32 %v2164, %v2308
  %v2453 = vmax.f32 %v2165, %v2309
  %v2454 = vmax.f32 %v2166, %v2310
  %v2455 = vmax.f32 %v2167, %v2311
  %v2456 = vmax.f32 %v2168, %v2312
  %v2457 = vmax.f32 %v2169, %v2313
  %v2458 = vmax.f32 %v2170, %v2314
  %v2459 = vmax.f32 %v2171, %v2315
  %v2460 = vmax.f32 %v2172, %v2316
  %v2461 = vmax.f32 %v2173, %v2317
  %v2462 = vmax.f32 %v2174, %v2318
  %v2463 = vmax.f32 %v2175, %v2319
  %v2464 = vmax.f32 %v2176, %v2320
  %v2465 = vmax.f32 %v2177, %v2321
  %v2466 = vmax.f32 %v2178, %v2322
  %v2467 = vmax.f32 %v2179, %v2323
  %v2468 = vmax.f32 %v2180, %v2324
  %v2469 = vmax.f32 %v2181, %v2325
  %v2470 = vmax.f32 %v2182, %v2326
  %v2471 = vmax.f32 %v2183, %v2327
  %v2472 = vmax.f32 %v2184, %v2328
  %v2473 = vmax.f32 %v2185, %v2329
  %v2474 = vmax.f32 %v2186, %v2330
  %v2475 = vmax.f32 %v2187, %v2331
  %v2476 = vmax.f32 %v2188, %v2332
  %v2477 = vmax.f32 %v2189, %v2333
  %v2478 = vmax.f32 %v2190, %v2334
  %v2479 = vmax.f32 %v2191, %v2335
  %v2480 = vmax.f32 %v2192, %v2336
  %v2481 = vmax.f32 %v2193, %v2337
  %v2482 = vmax.f32 %v2194, %v2338
  %v2483 = vmax.f32 %v2195, %v2339
  %v2484 = vmax.f32 %v2196, %v2340
  %v2485 = vmax.f32 %v2197, %v2341
  %v2486 = vmax.f32 %v2198, %v2342
  %v2487 = vmax.f32 %v2199, %v2343
  %v2488 = vmax.f32 %v2200, %v2344
  %v2489 = vmax.f32 %v2201, %v2345
  %v2490 = vmax.f32 %v2202, %v2346
  %v2491 = vmax.f32 %v2203, %v2347
  %v2492 = vmax.f32 %v2204, %v2348
  %v2493 = vmax.f32 %v2205, %v2349
  %v2494 = vmax.f32 %v2206, %v2350
  %v2495 = vmax.f32 %v2207, %v2351
  %v2496 = vmax.f32 %v2208, %v2352
  %v2497 = vmax.f32 %v2209, %v2353
  %v2498 = vmax.f32 %v2210, %v2354
  %v2499 = vmax.f32 %v2211, %v2355
  %v2500 = vmax.f32 %v2212, %v2356
  %v2501 = vmax.f32 %v2213, %v2357
  %v2502 = vmax.f32 %v2214, %v2358
  %v2503 = vmax.f32 %v2215, %v2359
  %v2504 = vmax.f32 %v2216, %v2360
  %v2505 = vmax.f32 %v2217, %v2361
  %v2506 = vmax.f32 %v2218, %v2362
  %v2507 = vmax.f32 %v2219, %v2363
  %v2508 = vmax.f32 %v2220, %v2364
  %v2509 = vmax.f32 %v2221, %v2365
  %v2510 = vmax.f32 %v2222, %v2366
  %v2511 = vmax.f32 %v2223, %v2367
  %v2512 = vmax.f32 %v2224, %v2368
  %v2513 = vmax.f32 %v2225, %v2369
  %v2514 = vmax.f32 %v2226, %v2370
  %v2515 = vmax.f32 %v2227, %v2371
  %v2516 = vmax.f32 %v2228, %v2372
  %v2517 = vmax.f32 %v2229, %v2373
  %v2518 = vmax.f32 %v2230, %v2374
  %v2519 = vmax.f32 %v2231, %v2375
  %v2520 = vmax.f32 %v2232, %v2376
  %v2521 = vmax.f32 %v2233, %v2377
  %v2522 = vmax.f32 %v2234, %v2378
  %v2523 = vmax.f32 %v2235, %v2379
  %v2524 = vmax.f32 %v2236, %v2380
  %v2525 = vmax.f32 %v2237, %v2381
  %v2526 = vmax.f32 %v2238, %v2382
  %v2527 = vmax.f32 %v2239, %v2383
  %v2528 = vmax.f32 %v2240, %v2384
  %v2529 = vmax.f32 %v2241, %v2385
  %v2530 = vmax.f32 %v2242, %v2386
  %v2531 = vmax.f32 %v2243, %v2387
  %v2532 = vmax.f32 %v2244, %v2388
  %v2533 = vmax.f32 %v2245, %v2389
  %v2534 = vmax.f32 %v2246, %v2390
  %v2535 = vmax.f32 %v2247, %v2391
  %v2536 = vmax.f32 %v2248, %v2392
  %v2537 = vmax.f32 %v2249, %v2393
  %v2538 = vmax.f32 %v2250, %v2394
  %v2539 = vmax.f32 %v2251, %v2395
  %v2540 = vmax.f32 %v2252, %v2396
  %v2541 = vmax.f32 %v2253, %v2397
  %v2542 = vmax.f32 %v2254, %v2398
  %v2543 = vmax.f32 %v2255, %v2399
  %v2544 = vmax.f32 %v2256, %v2400
  %v2545 = vmax.f32 %v2257, %v2401
  %v2546 = vmax.f32 %v2258, %v2402
  %v2547 = vmax.f32 %v2259, %v2403
  %v2548 = vmax.f32 %v2260, %v2404
  %v2549 = vmax.f32 %v2261, %v2405
  %v2550 = vmax.f32 %v2262, %v2406
  %v2551 = vmax.f32 %v2263, %v2407
  %v2552 = vmax.f32 %v2264, %v2408
  %v2553 = vmax.f32 %v2265, %v2409
  %v2554 = vmax.f32 %v2266, %v2410
  %v2555 = vld [vmem:[%s2] sm:$0x1]
  %v2557 = vlaneseq
  %v2558 = vshrl.u32 %v2557, 7
  %v2559 = vsub.s32 0, %v2558
  %v2560 = vrot.slane %v2555, %v2559
  %v2562 = vadd.f32 %v2411, %v2560
  %v2563 = vadd.f32 %v2412, %v2560
  %v2564 = vadd.f32 %v2413, %v2560
  %v2565 = vadd.f32 %v2414, %v2560
  %v2566 = vadd.f32 %v2415, %v2560
  %v2567 = vadd.f32 %v2416, %v2560
  %v2568 = vadd.f32 %v2417, %v2560
  %v2569 = vadd.f32 %v2418, %v2560
  %v2570 = vadd.f32 %v2419, %v2560
  %v2571 = vadd.f32 %v2420, %v2560
  %v2572 = vadd.f32 %v2421, %v2560
  %v2573 = vadd.f32 %v2422, %v2560
  %v2574 = vadd.f32 %v2423, %v2560
  %v2575 = vadd.f32 %v2424, %v2560
  %v2576 = vadd.f32 %v2425, %v2560
  %v2577 = vadd.f32 %v2426, %v2560
  %v2578 = vadd.f32 %v2427, %v2560
  %v2579 = vadd.f32 %v2428, %v2560
  %v2580 = vadd.f32 %v2429, %v2560
  %v2581 = vadd.f32 %v2430, %v2560
  %v2582 = vadd.f32 %v2431, %v2560
  %v2583 = vadd.f32 %v2432, %v2560
  %v2584 = vadd.f32 %v2433, %v2560
  %v2585 = vadd.f32 %v2434, %v2560
  %v2586 = vadd.f32 %v2435, %v2560
  %v2587 = vadd.f32 %v2436, %v2560
  %v2588 = vadd.f32 %v2437, %v2560
  %v2589 = vadd.f32 %v2438, %v2560
  %v2590 = vadd.f32 %v2439, %v2560
  %v2591 = vadd.f32 %v2440, %v2560
  %v2592 = vadd.f32 %v2441, %v2560
  %v2593 = vadd.f32 %v2442, %v2560
  %v2594 = vadd.f32 %v2443, %v2560
  %v2595 = vadd.f32 %v2444, %v2560
  %v2596 = vadd.f32 %v2445, %v2560
  %v2597 = vadd.f32 %v2446, %v2560
  %v2598 = vadd.f32 %v2447, %v2560
  %v2599 = vadd.f32 %v2448, %v2560
  %v2600 = vadd.f32 %v2449, %v2560
  %v2601 = vadd.f32 %v2450, %v2560
  %v2602 = vadd.f32 %v2451, %v2560
  %v2603 = vadd.f32 %v2452, %v2560
  %v2604 = vadd.f32 %v2453, %v2560
  %v2605 = vadd.f32 %v2454, %v2560
  %v2606 = vadd.f32 %v2455, %v2560
  %v2607 = vadd.f32 %v2456, %v2560
  %v2608 = vadd.f32 %v2457, %v2560
  %v2609 = vadd.f32 %v2458, %v2560
  %v2610 = vadd.f32 %v2459, %v2560
  %v2611 = vadd.f32 %v2460, %v2560
  %v2612 = vadd.f32 %v2461, %v2560
  %v2613 = vadd.f32 %v2462, %v2560
  %v2614 = vadd.f32 %v2463, %v2560
  %v2615 = vadd.f32 %v2464, %v2560
  %v2616 = vadd.f32 %v2465, %v2560
  %v2617 = vadd.f32 %v2466, %v2560
  %v2618 = vadd.f32 %v2467, %v2560
  %v2619 = vadd.f32 %v2468, %v2560
  %v2620 = vadd.f32 %v2469, %v2560
  %v2621 = vadd.f32 %v2470, %v2560
  %v2622 = vadd.f32 %v2471, %v2560
  %v2623 = vadd.f32 %v2472, %v2560
  %v2624 = vadd.f32 %v2473, %v2560
  %v2625 = vadd.f32 %v2474, %v2560
  %v2626 = vadd.f32 %v2475, %v2560
  %v2627 = vadd.f32 %v2476, %v2560
  %v2628 = vadd.f32 %v2477, %v2560
  %v2629 = vadd.f32 %v2478, %v2560
  %v2630 = vadd.f32 %v2479, %v2560
  %v2631 = vadd.f32 %v2480, %v2560
  %v2632 = vadd.f32 %v2481, %v2560
  %v2633 = vadd.f32 %v2482, %v2560
  %v2634 = vadd.f32 %v2483, %v2560
  %v2635 = vadd.f32 %v2484, %v2560
  %v2636 = vadd.f32 %v2485, %v2560
  %v2637 = vadd.f32 %v2486, %v2560
  %v2638 = vadd.f32 %v2487, %v2560
  %v2639 = vadd.f32 %v2488, %v2560
  %v2640 = vadd.f32 %v2489, %v2560
  %v2641 = vadd.f32 %v2490, %v2560
  %v2642 = vadd.f32 %v2491, %v2560
  %v2643 = vadd.f32 %v2492, %v2560
  %v2644 = vadd.f32 %v2493, %v2560
  %v2645 = vadd.f32 %v2494, %v2560
  %v2646 = vadd.f32 %v2495, %v2560
  %v2647 = vadd.f32 %v2496, %v2560
  %v2648 = vadd.f32 %v2497, %v2560
  %v2649 = vadd.f32 %v2498, %v2560
  %v2650 = vadd.f32 %v2499, %v2560
  %v2651 = vadd.f32 %v2500, %v2560
  %v2652 = vadd.f32 %v2501, %v2560
  %v2653 = vadd.f32 %v2502, %v2560
  %v2654 = vadd.f32 %v2503, %v2560
  %v2655 = vadd.f32 %v2504, %v2560
  %v2656 = vadd.f32 %v2505, %v2560
  %v2657 = vadd.f32 %v2506, %v2560
  %v2658 = vadd.f32 %v2507, %v2560
  %v2659 = vadd.f32 %v2508, %v2560
  %v2660 = vadd.f32 %v2509, %v2560
  %v2661 = vadd.f32 %v2510, %v2560
  %v2662 = vadd.f32 %v2511, %v2560
  %v2663 = vadd.f32 %v2512, %v2560
  %v2664 = vadd.f32 %v2513, %v2560
  %v2665 = vadd.f32 %v2514, %v2560
  %v2666 = vadd.f32 %v2515, %v2560
  %v2667 = vadd.f32 %v2516, %v2560
  %v2668 = vadd.f32 %v2517, %v2560
  %v2669 = vadd.f32 %v2518, %v2560
  %v2670 = vadd.f32 %v2519, %v2560
  %v2671 = vadd.f32 %v2520, %v2560
  %v2672 = vadd.f32 %v2521, %v2560
  %v2673 = vadd.f32 %v2522, %v2560
  %v2674 = vadd.f32 %v2523, %v2560
  %v2675 = vadd.f32 %v2524, %v2560
  %v2676 = vadd.f32 %v2525, %v2560
  %v2677 = vadd.f32 %v2526, %v2560
  %v2678 = vadd.f32 %v2527, %v2560
  %v2679 = vadd.f32 %v2528, %v2560
  %v2680 = vadd.f32 %v2529, %v2560
  %v2681 = vadd.f32 %v2530, %v2560
  %v2682 = vadd.f32 %v2531, %v2560
  %v2683 = vadd.f32 %v2532, %v2560
  %v2684 = vadd.f32 %v2533, %v2560
  %v2685 = vadd.f32 %v2534, %v2560
  %v2686 = vadd.f32 %v2535, %v2560
  %v2687 = vadd.f32 %v2536, %v2560
  %v2688 = vadd.f32 %v2537, %v2560
  %v2689 = vadd.f32 %v2538, %v2560
  %v2690 = vadd.f32 %v2539, %v2560
  %v2691 = vadd.f32 %v2540, %v2560
  %v2692 = vadd.f32 %v2541, %v2560
  %v2693 = vadd.f32 %v2542, %v2560
  %v2694 = vadd.f32 %v2543, %v2560
  %v2695 = vadd.f32 %v2544, %v2560
  %v2696 = vadd.f32 %v2545, %v2560
  %v2697 = vadd.f32 %v2546, %v2560
  %v2698 = vadd.f32 %v2547, %v2560
  %v2699 = vadd.f32 %v2548, %v2560
  %v2700 = vadd.f32 %v2549, %v2560
  %v2701 = vadd.f32 %v2550, %v2560
  %v2702 = vadd.f32 %v2551, %v2560
  %v2703 = vadd.f32 %v2552, %v2560
  %v2704 = vadd.f32 %v2553, %v2560
  %v2705 = vadd.f32 %v2554, %v2560
  %v2706 = vmax.f32 %v2562, 0.0
  %v2707 = vmax.f32 %v2563, 0.0
  %v2708 = vmax.f32 %v2564, 0.0
  %v2709 = vmax.f32 %v2565, 0.0
  %v2710 = vmax.f32 %v2566, 0.0
  %v2711 = vmax.f32 %v2567, 0.0
  %v2712 = vmax.f32 %v2568, 0.0
  %v2713 = vmax.f32 %v2569, 0.0
  %v2714 = vmax.f32 %v2570, 0.0
  %v2715 = vmax.f32 %v2571, 0.0
  %v2716 = vmax.f32 %v2572, 0.0
  %v2717 = vmax.f32 %v2573, 0.0
  %v2718 = vmax.f32 %v2574, 0.0
  %v2719 = vmax.f32 %v2575, 0.0
  %v2720 = vmax.f32 %v2576, 0.0
  %v2721 = vmax.f32 %v2577, 0.0
  %v2722 = vmax.f32 %v2578, 0.0
  %v2723 = vmax.f32 %v2579, 0.0
  %v2724 = vmax.f32 %v2580, 0.0
  %v2725 = vmax.f32 %v2581, 0.0
  %v2726 = vmax.f32 %v2582, 0.0
  %v2727 = vmax.f32 %v2583, 0.0
  %v2728 = vmax.f32 %v2584, 0.0
  %v2729 = vmax.f32 %v2585, 0.0
  %v2730 = vmax.f32 %v2586, 0.0
  %v2731 = vmax.f32 %v2587, 0.0
  %v2732 = vmax.f32 %v2588, 0.0
  %v2733 = vmax.f32 %v2589, 0.0
  %v2734 = vmax.f32 %v2590, 0.0
  %v2735 = vmax.f32 %v2591, 0.0
  %v2736 = vmax.f32 %v2592, 0.0
  %v2737 = vmax.f32 %v2593, 0.0
  %v2738 = vmax.f32 %v2594, 0.0
  %v2739 = vmax.f32 %v2595, 0.0
  %v2740 = vmax.f32 %v2596, 0.0
  %v2741 = vmax.f32 %v2597, 0.0
  %v2742 = vmax.f32 %v2598, 0.0
  %v2743 = vmax.f32 %v2599, 0.0
  %v2744 = vmax.f32 %v2600, 0.0
  %v2745 = vmax.f32 %v2601, 0.0
  %v2746 = vmax.f32 %v2602, 0.0
  %v2747 = vmax.f32 %v2603, 0.0
  %v2748 = vmax.f32 %v2604, 0.0
  %v2749 = vmax.f32 %v2605, 0.0
  %v2750 = vmax.f32 %v2606, 0.0
  %v2751 = vmax.f32 %v2607, 0.0
  %v2752 = vmax.f32 %v2608, 0.0
  %v2753 = vmax.f32 %v2609, 0.0
  %v2754 = vmax.f32 %v2610, 0.0
  %v2755 = vmax.f32 %v2611, 0.0
  %v2756 = vmax.f32 %v2612, 0.0
  %v2757 = vmax.f32 %v2613, 0.0
  %v2758 = vmax.f32 %v2614, 0.0
  %v2759 = vmax.f32 %v2615, 0.0
  %v2760 = vmax.f32 %v2616, 0.0
  %v2761 = vmax.f32 %v2617, 0.0
  %v2762 = vmax.f32 %v2618, 0.0
  %v2763 = vmax.f32 %v2619, 0.0
  %v2764 = vmax.f32 %v2620, 0.0
  %v2765 = vmax.f32 %v2621, 0.0
  %v2766 = vmax.f32 %v2622, 0.0
  %v2767 = vmax.f32 %v2623, 0.0
  %v2768 = vmax.f32 %v2624, 0.0
  %v2769 = vmax.f32 %v2625, 0.0
  %v2770 = vmax.f32 %v2626, 0.0
  %v2771 = vmax.f32 %v2627, 0.0
  %v2772 = vmax.f32 %v2628, 0.0
  %v2773 = vmax.f32 %v2629, 0.0
  %v2774 = vmax.f32 %v2630, 0.0
  %v2775 = vmax.f32 %v2631, 0.0
  %v2776 = vmax.f32 %v2632, 0.0
  %v2777 = vmax.f32 %v2633, 0.0
  %v2778 = vmax.f32 %v2634, 0.0
  %v2779 = vmax.f32 %v2635, 0.0
  %v2780 = vmax.f32 %v2636, 0.0
  %v2781 = vmax.f32 %v2637, 0.0
  %v2782 = vmax.f32 %v2638, 0.0
  %v2783 = vmax.f32 %v2639, 0.0
  %v2784 = vmax.f32 %v2640, 0.0
  %v2785 = vmax.f32 %v2641, 0.0
  %v2786 = vmax.f32 %v2642, 0.0
  %v2787 = vmax.f32 %v2643, 0.0
  %v2788 = vmax.f32 %v2644, 0.0
  %v2789 = vmax.f32 %v2645, 0.0
  %v2790 = vmax.f32 %v2646, 0.0
  %v2791 = vmax.f32 %v2647, 0.0
  %v2792 = vmax.f32 %v2648, 0.0
  %v2793 = vmax.f32 %v2649, 0.0
  %v2794 = vmax.f32 %v2650, 0.0
  %v2795 = vmax.f32 %v2651, 0.0
  %v2796 = vmax.f32 %v2652, 0.0
  %v2797 = vmax.f32 %v2653, 0.0
  %v2798 = vmax.f32 %v2654, 0.0
  %v2799 = vmax.f32 %v2655, 0.0
  %v2800 = vmax.f32 %v2656, 0.0
  %v2801 = vmax.f32 %v2657, 0.0
  %v2802 = vmax.f32 %v2658, 0.0
  %v2803 = vmax.f32 %v2659, 0.0
  %v2804 = vmax.f32 %v2660, 0.0
  %v2805 = vmax.f32 %v2661, 0.0
  %v2806 = vmax.f32 %v2662, 0.0
  %v2807 = vmax.f32 %v2663, 0.0
  %v2808 = vmax.f32 %v2664, 0.0
  %v2809 = vmax.f32 %v2665, 0.0
  %v2810 = vmax.f32 %v2666, 0.0
  %v2811 = vmax.f32 %v2667, 0.0
  %v2812 = vmax.f32 %v2668, 0.0
  %v2813 = vmax.f32 %v2669, 0.0
  %v2814 = vmax.f32 %v2670, 0.0
  %v2815 = vmax.f32 %v2671, 0.0
  %v2816 = vmax.f32 %v2672, 0.0
  %v2817 = vmax.f32 %v2673, 0.0
  %v2818 = vmax.f32 %v2674, 0.0
  %v2819 = vmax.f32 %v2675, 0.0
  %v2820 = vmax.f32 %v2676, 0.0
  %v2821 = vmax.f32 %v2677, 0.0
  %v2822 = vmax.f32 %v2678, 0.0
  %v2823 = vmax.f32 %v2679, 0.0
  %v2824 = vmax.f32 %v2680, 0.0
  %v2825 = vmax.f32 %v2681, 0.0
  %v2826 = vmax.f32 %v2682, 0.0
  %v2827 = vmax.f32 %v2683, 0.0
  %v2828 = vmax.f32 %v2684, 0.0
  %v2829 = vmax.f32 %v2685, 0.0
  %v2830 = vmax.f32 %v2686, 0.0
  %v2831 = vmax.f32 %v2687, 0.0
  %v2832 = vmax.f32 %v2688, 0.0
  %v2833 = vmax.f32 %v2689, 0.0
  %v2834 = vmax.f32 %v2690, 0.0
  %v2835 = vmax.f32 %v2691, 0.0
  %v2836 = vmax.f32 %v2692, 0.0
  %v2837 = vmax.f32 %v2693, 0.0
  %v2838 = vmax.f32 %v2694, 0.0
  %v2839 = vmax.f32 %v2695, 0.0
  %v2840 = vmax.f32 %v2696, 0.0
  %v2841 = vmax.f32 %v2697, 0.0
  %v2842 = vmax.f32 %v2698, 0.0
  %v2843 = vmax.f32 %v2699, 0.0
  %v2844 = vmax.f32 %v2700, 0.0
  %v2845 = vmax.f32 %v2701, 0.0
  %v2846 = vmax.f32 %v2702, 0.0
  %v2847 = vmax.f32 %v2703, 0.0
  %v2848 = vmax.f32 %v2704, 0.0
  %v2849 = vmax.f32 %v2705, 0.0
  %v2850 = vpack.c.bf16 %v2707, %v2706
  %v2851 = vpack.c.bf16 %v2709, %v2708
  %v2852 = vpack.c.bf16 %v2711, %v2710
  %v2853 = vpack.c.bf16 %v2713, %v2712
  %v2854 = vpack.c.bf16 %v2715, %v2714
  %v2855 = vpack.c.bf16 %v2717, %v2716
  %v2856 = vpack.c.bf16 %v2719, %v2718
  %v2857 = vpack.c.bf16 %v2721, %v2720
  %v2858 = vpack.c.bf16 %v2723, %v2722
  %v2859 = vpack.c.bf16 %v2725, %v2724
  %v2860 = vpack.c.bf16 %v2727, %v2726
  %v2861 = vpack.c.bf16 %v2729, %v2728
  %v2862 = vpack.c.bf16 %v2731, %v2730
  %v2863 = vpack.c.bf16 %v2733, %v2732
  %v2864 = vpack.c.bf16 %v2735, %v2734
  %v2865 = vpack.c.bf16 %v2737, %v2736
  %v2866 = vpack.c.bf16 %v2739, %v2738
  %v2867 = vpack.c.bf16 %v2741, %v2740
  %v2868 = vpack.c.bf16 %v2743, %v2742
  %v2869 = vpack.c.bf16 %v2745, %v2744
  %v2870 = vpack.c.bf16 %v2747, %v2746
  %v2871 = vpack.c.bf16 %v2749, %v2748
  %v2872 = vpack.c.bf16 %v2751, %v2750
  %v2873 = vpack.c.bf16 %v2753, %v2752
  %v2874 = vpack.c.bf16 %v2755, %v2754
  %v2875 = vpack.c.bf16 %v2757, %v2756
  %v2876 = vpack.c.bf16 %v2759, %v2758
  %v2877 = vpack.c.bf16 %v2761, %v2760
  %v2878 = vpack.c.bf16 %v2763, %v2762
  %v2879 = vpack.c.bf16 %v2765, %v2764
  %v2880 = vpack.c.bf16 %v2767, %v2766
  %v2881 = vpack.c.bf16 %v2769, %v2768
  %v2882 = vpack.c.bf16 %v2771, %v2770
  %v2883 = vpack.c.bf16 %v2773, %v2772
  %v2884 = vpack.c.bf16 %v2775, %v2774
  %v2885 = vpack.c.bf16 %v2777, %v2776
  %v2886 = vpack.c.bf16 %v2779, %v2778
  %v2887 = vpack.c.bf16 %v2781, %v2780
  %v2888 = vpack.c.bf16 %v2783, %v2782
  %v2889 = vpack.c.bf16 %v2785, %v2784
  %v2890 = vpack.c.bf16 %v2787, %v2786
  %v2891 = vpack.c.bf16 %v2789, %v2788
  %v2892 = vpack.c.bf16 %v2791, %v2790
  %v2893 = vpack.c.bf16 %v2793, %v2792
  %v2894 = vpack.c.bf16 %v2795, %v2794
  %v2895 = vpack.c.bf16 %v2797, %v2796
  %v2896 = vpack.c.bf16 %v2799, %v2798
  %v2897 = vpack.c.bf16 %v2801, %v2800
  %v2898 = vpack.c.bf16 %v2803, %v2802
  %v2899 = vpack.c.bf16 %v2805, %v2804
  %v2900 = vpack.c.bf16 %v2807, %v2806
  %v2901 = vpack.c.bf16 %v2809, %v2808
  %v2902 = vpack.c.bf16 %v2811, %v2810
  %v2903 = vpack.c.bf16 %v2813, %v2812
  %v2904 = vpack.c.bf16 %v2815, %v2814
  %v2905 = vpack.c.bf16 %v2817, %v2816
  %v2906 = vpack.c.bf16 %v2819, %v2818
  %v2907 = vpack.c.bf16 %v2821, %v2820
  %v2908 = vpack.c.bf16 %v2823, %v2822
  %v2909 = vpack.c.bf16 %v2825, %v2824
  %v2910 = vpack.c.bf16 %v2827, %v2826
  %v2911 = vpack.c.bf16 %v2829, %v2828
  %v2912 = vpack.c.bf16 %v2831, %v2830
  %v2913 = vpack.c.bf16 %v2833, %v2832
  %v2914 = vpack.c.bf16 %v2835, %v2834
  %v2915 = vpack.c.bf16 %v2837, %v2836
  %v2916 = vpack.c.bf16 %v2839, %v2838
  %v2917 = vpack.c.bf16 %v2841, %v2840
  %v2918 = vpack.c.bf16 %v2843, %v2842
  %v2919 = vpack.c.bf16 %v2845, %v2844
  %v2920 = vpack.c.bf16 %v2847, %v2846
  %v2921 = vpack.c.bf16 %v2849, %v2848
  %v2994 = vunpack.c.l.b16 %v2850
  %v2995 = vunpack.c.h.b16 %v2850
  %v2996 = vunpack.c.l.b16 %v2851
  %v2997 = vunpack.c.h.b16 %v2851
  %v2998 = vunpack.c.l.b16 %v2852
  %v2999 = vunpack.c.h.b16 %v2852
  %v3000 = vunpack.c.l.b16 %v2853
  %v3001 = vunpack.c.h.b16 %v2853
  %v3002 = vunpack.c.l.b16 %v2854
  %v3003 = vunpack.c.h.b16 %v2854
  %v3004 = vunpack.c.l.b16 %v2855
  %v3005 = vunpack.c.h.b16 %v2855
  %v3006 = vunpack.c.l.b16 %v2856
  %v3007 = vunpack.c.h.b16 %v2856
  %v3008 = vunpack.c.l.b16 %v2857
  %v3009 = vunpack.c.h.b16 %v2857
  %v3010 = vunpack.c.l.b16 %v2858
  %v3011 = vunpack.c.h.b16 %v2858
  %v3012 = vunpack.c.l.b16 %v2859
  %v3013 = vunpack.c.h.b16 %v2859
  %v3014 = vunpack.c.l.b16 %v2860
  %v3015 = vunpack.c.h.b16 %v2860
  %v3016 = vunpack.c.l.b16 %v2861
  %v3017 = vunpack.c.h.b16 %v2861
  %v3018 = vunpack.c.l.b16 %v2862
  %v3019 = vunpack.c.h.b16 %v2862
  %v3020 = vunpack.c.l.b16 %v2863
  %v3021 = vunpack.c.h.b16 %v2863
  %v3022 = vunpack.c.l.b16 %v2864
  %v3023 = vunpack.c.h.b16 %v2864
  %v3024 = vunpack.c.l.b16 %v2865
  %v3025 = vunpack.c.h.b16 %v2865
  %v3026 = vunpack.c.l.b16 %v2866
  %v3027 = vunpack.c.h.b16 %v2866
  %v3028 = vunpack.c.l.b16 %v2867
  %v3029 = vunpack.c.h.b16 %v2867
  %v3030 = vunpack.c.l.b16 %v2868
  %v3031 = vunpack.c.h.b16 %v2868
  %v3032 = vunpack.c.l.b16 %v2869
  %v3033 = vunpack.c.h.b16 %v2869
  %v3034 = vunpack.c.l.b16 %v2870
  %v3035 = vunpack.c.h.b16 %v2870
  %v3036 = vunpack.c.l.b16 %v2871
  %v3037 = vunpack.c.h.b16 %v2871
  %v3038 = vunpack.c.l.b16 %v2872
  %v3039 = vunpack.c.h.b16 %v2872
  %v3040 = vunpack.c.l.b16 %v2873
  %v3041 = vunpack.c.h.b16 %v2873
  %v3042 = vunpack.c.l.b16 %v2874
  %v3043 = vunpack.c.h.b16 %v2874
  %v3044 = vunpack.c.l.b16 %v2875
  %v3045 = vunpack.c.h.b16 %v2875
  %v3046 = vunpack.c.l.b16 %v2876
  %v3047 = vunpack.c.h.b16 %v2876
  %v3048 = vunpack.c.l.b16 %v2877
  %v3049 = vunpack.c.h.b16 %v2877
  %v3050 = vunpack.c.l.b16 %v2878
  %v3051 = vunpack.c.h.b16 %v2878
  %v3052 = vunpack.c.l.b16 %v2879
  %v3053 = vunpack.c.h.b16 %v2879
  %v3054 = vunpack.c.l.b16 %v2880
  %v3055 = vunpack.c.h.b16 %v2880
  %v3056 = vunpack.c.l.b16 %v2881
  %v3057 = vunpack.c.h.b16 %v2881
  %v3058 = vunpack.c.l.b16 %v2882
  %v3059 = vunpack.c.h.b16 %v2882
  %v3060 = vunpack.c.l.b16 %v2883
  %v3061 = vunpack.c.h.b16 %v2883
  %v3062 = vunpack.c.l.b16 %v2884
  %v3063 = vunpack.c.h.b16 %v2884
  %v3064 = vunpack.c.l.b16 %v2885
  %v3065 = vunpack.c.h.b16 %v2885
  %v3066 = vunpack.c.l.b16 %v2886
  %v3067 = vunpack.c.h.b16 %v2886
  %v3068 = vunpack.c.l.b16 %v2887
  %v3069 = vunpack.c.h.b16 %v2887
  %v3070 = vunpack.c.l.b16 %v2888
  %v3071 = vunpack.c.h.b16 %v2888
  %v3072 = vunpack.c.l.b16 %v2889
  %v3073 = vunpack.c.h.b16 %v2889
  %v3074 = vunpack.c.l.b16 %v2890
  %v3075 = vunpack.c.h.b16 %v2890
  %v3076 = vunpack.c.l.b16 %v2891
  %v3077 = vunpack.c.h.b16 %v2891
  %v3078 = vunpack.c.l.b16 %v2892
  %v3079 = vunpack.c.h.b16 %v2892
  %v3080 = vunpack.c.l.b16 %v2893
  %v3081 = vunpack.c.h.b16 %v2893
  %v3082 = vunpack.c.l.b16 %v2894
  %v3083 = vunpack.c.h.b16 %v2894
  %v3084 = vunpack.c.l.b16 %v2895
  %v3085 = vunpack.c.h.b16 %v2895
  %v3086 = vunpack.c.l.b16 %v2896
  %v3087 = vunpack.c.h.b16 %v2896
  %v3088 = vunpack.c.l.b16 %v2897
  %v3089 = vunpack.c.h.b16 %v2897
  %v3090 = vunpack.c.l.b16 %v2898
  %v3091 = vunpack.c.h.b16 %v2898
  %v3092 = vunpack.c.l.b16 %v2899
  %v3093 = vunpack.c.h.b16 %v2899
  %v3094 = vunpack.c.l.b16 %v2900
  %v3095 = vunpack.c.h.b16 %v2900
  %v3096 = vunpack.c.l.b16 %v2901
  %v3097 = vunpack.c.h.b16 %v2901
  %v3098 = vunpack.c.l.b16 %v2902
  %v3099 = vunpack.c.h.b16 %v2902
  %v3100 = vunpack.c.l.b16 %v2903
  %v3101 = vunpack.c.h.b16 %v2903
  %v3102 = vunpack.c.l.b16 %v2904
  %v3103 = vunpack.c.h.b16 %v2904
  %v3104 = vunpack.c.l.b16 %v2905
  %v3105 = vunpack.c.h.b16 %v2905
  %v3106 = vunpack.c.l.b16 %v2906
  %v3107 = vunpack.c.h.b16 %v2906
  %v3108 = vunpack.c.l.b16 %v2907
  %v3109 = vunpack.c.h.b16 %v2907
  %v3110 = vunpack.c.l.b16 %v2908
  %v3111 = vunpack.c.h.b16 %v2908
  %v3112 = vunpack.c.l.b16 %v2909
  %v3113 = vunpack.c.h.b16 %v2909
  %v3114 = vunpack.c.l.b16 %v2910
  %v3115 = vunpack.c.h.b16 %v2910
  %v3116 = vunpack.c.l.b16 %v2911
  %v3117 = vunpack.c.h.b16 %v2911
  %v3118 = vunpack.c.l.b16 %v2912
  %v3119 = vunpack.c.h.b16 %v2912
  %v3120 = vunpack.c.l.b16 %v2913
  %v3121 = vunpack.c.h.b16 %v2913
  %v3122 = vunpack.c.l.b16 %v2914
  %v3123 = vunpack.c.h.b16 %v2914
  %v3124 = vunpack.c.l.b16 %v2915
  %v3125 = vunpack.c.h.b16 %v2915
  %v3126 = vunpack.c.l.b16 %v2916
  %v3127 = vunpack.c.h.b16 %v2916
  %v3128 = vunpack.c.l.b16 %v2917
  %v3129 = vunpack.c.h.b16 %v2917
  %v3130 = vunpack.c.l.b16 %v2918
  %v3131 = vunpack.c.h.b16 %v2918
  %v3132 = vunpack.c.l.b16 %v2919
  %v3133 = vunpack.c.h.b16 %v2919
  %v3134 = vunpack.c.l.b16 %v2920
  %v3135 = vunpack.c.h.b16 %v2920
  %v3136 = vunpack.c.l.b16 %v2921
  %v3137 = vunpack.c.h.b16 %v2921
  %v3138 = vpack.c.b16 %v2994, %v2994
  %v3139 = vpack.c.b16 %v2995, %v2995
  %v3140 = vpack.c.b16 %v2996, %v2996
  %v3141 = vpack.c.b16 %v2997, %v2997
  %v3142 = vpack.c.b16 %v2998, %v2998
  %v3143 = vpack.c.b16 %v2999, %v2999
  %v3144 = vpack.c.b16 %v3000, %v3000
  %v3145 = vpack.c.b16 %v3001, %v3001
  %v3146 = vpack.c.b16 %v3002, %v3002
  %v3147 = vpack.c.b16 %v3003, %v3003
  %v3148 = vpack.c.b16 %v3004, %v3004
  %v3149 = vpack.c.b16 %v3005, %v3005
  %v3150 = vpack.c.b16 %v3006, %v3006
  %v3151 = vpack.c.b16 %v3007, %v3007
  %v3152 = vpack.c.b16 %v3008, %v3008
  %v3153 = vpack.c.b16 %v3009, %v3009
  %v3154 = vpack.c.b16 %v3010, %v3010
  %v3155 = vpack.c.b16 %v3011, %v3011
  %v3156 = vpack.c.b16 %v3012, %v3012
  %v3157 = vpack.c.b16 %v3013, %v3013
  %v3158 = vpack.c.b16 %v3014, %v3014
  %v3159 = vpack.c.b16 %v3015, %v3015
  %v3160 = vpack.c.b16 %v3016, %v3016
  %v3161 = vpack.c.b16 %v3017, %v3017
  %v3162 = vpack.c.b16 %v3018, %v3018
  %v3163 = vpack.c.b16 %v3019, %v3019
  %v3164 = vpack.c.b16 %v3020, %v3020
  %v3165 = vpack.c.b16 %v3021, %v3021
  %v3166 = vpack.c.b16 %v3022, %v3022
  %v3167 = vpack.c.b16 %v3023, %v3023
  %v3168 = vpack.c.b16 %v3024, %v3024
  %v3169 = vpack.c.b16 %v3025, %v3025
  %v3170 = vpack.c.b16 %v3026, %v3026
  %v3171 = vpack.c.b16 %v3027, %v3027
  %v3172 = vpack.c.b16 %v3028, %v3028
  %v3173 = vpack.c.b16 %v3029, %v3029
  %v3174 = vpack.c.b16 %v3030, %v3030
  %v3175 = vpack.c.b16 %v3031, %v3031
  %v3176 = vpack.c.b16 %v3032, %v3032
  %v3177 = vpack.c.b16 %v3033, %v3033
  %v3178 = vpack.c.b16 %v3034, %v3034
  %v3179 = vpack.c.b16 %v3035, %v3035
  %v3180 = vpack.c.b16 %v3036, %v3036
  %v3181 = vpack.c.b16 %v3037, %v3037
  %v3182 = vpack.c.b16 %v3038, %v3038
  %v3183 = vpack.c.b16 %v3039, %v3039
  %v3184 = vpack.c.b16 %v3040, %v3040
  %v3185 = vpack.c.b16 %v3041, %v3041
  %v3186 = vpack.c.b16 %v3042, %v3042
  %v3187 = vpack.c.b16 %v3043, %v3043
  %v3188 = vpack.c.b16 %v3044, %v3044
  %v3189 = vpack.c.b16 %v3045, %v3045
  %v3190 = vpack.c.b16 %v3046, %v3046
  %v3191 = vpack.c.b16 %v3047, %v3047
  %v3192 = vpack.c.b16 %v3048, %v3048
  %v3193 = vpack.c.b16 %v3049, %v3049
  %v3194 = vpack.c.b16 %v3050, %v3050
  %v3195 = vpack.c.b16 %v3051, %v3051
  %v3196 = vpack.c.b16 %v3052, %v3052
  %v3197 = vpack.c.b16 %v3053, %v3053
  %v3198 = vpack.c.b16 %v3054, %v3054
  %v3199 = vpack.c.b16 %v3055, %v3055
  %v3200 = vpack.c.b16 %v3056, %v3056
  %v3201 = vpack.c.b16 %v3057, %v3057
  %v3202 = vpack.c.b16 %v3058, %v3058
  %v3203 = vpack.c.b16 %v3059, %v3059
  %v3204 = vpack.c.b16 %v3060, %v3060
  %v3205 = vpack.c.b16 %v3061, %v3061
  %v3206 = vpack.c.b16 %v3062, %v3062
  %v3207 = vpack.c.b16 %v3063, %v3063
  %v3208 = vpack.c.b16 %v3064, %v3064
  %v3209 = vpack.c.b16 %v3065, %v3065
  %v3210 = vpack.c.b16 %v3066, %v3066
  %v3211 = vpack.c.b16 %v3067, %v3067
  %v3212 = vpack.c.b16 %v3068, %v3068
  %v3213 = vpack.c.b16 %v3069, %v3069
  %v3214 = vpack.c.b16 %v3070, %v3070
  %v3215 = vpack.c.b16 %v3071, %v3071
  %v3216 = vpack.c.b16 %v3072, %v3072
  %v3217 = vpack.c.b16 %v3073, %v3073
  %v3218 = vpack.c.b16 %v3074, %v3074
  %v3219 = vpack.c.b16 %v3075, %v3075
  %v3220 = vpack.c.b16 %v3076, %v3076
  %v3221 = vpack.c.b16 %v3077, %v3077
  %v3222 = vpack.c.b16 %v3078, %v3078
  %v3223 = vpack.c.b16 %v3079, %v3079
  %v3224 = vpack.c.b16 %v3080, %v3080
  %v3225 = vpack.c.b16 %v3081, %v3081
  %v3226 = vpack.c.b16 %v3082, %v3082
  %v3227 = vpack.c.b16 %v3083, %v3083
  %v3228 = vpack.c.b16 %v3084, %v3084
  %v3229 = vpack.c.b16 %v3085, %v3085
  %v3230 = vpack.c.b16 %v3086, %v3086
  %v3231 = vpack.c.b16 %v3087, %v3087
  %v3232 = vpack.c.b16 %v3088, %v3088
  %v3233 = vpack.c.b16 %v3089, %v3089
  %v3234 = vpack.c.b16 %v3090, %v3090
  %v3235 = vpack.c.b16 %v3091, %v3091
  %v3236 = vpack.c.b16 %v3092, %v3092
  %v3237 = vpack.c.b16 %v3093, %v3093
  %v3238 = vpack.c.b16 %v3094, %v3094
  %v3239 = vpack.c.b16 %v3095, %v3095
  %v3240 = vpack.c.b16 %v3096, %v3096
  %v3241 = vpack.c.b16 %v3097, %v3097
  %v3242 = vpack.c.b16 %v3098, %v3098
  %v3243 = vpack.c.b16 %v3099, %v3099
  %v3244 = vpack.c.b16 %v3100, %v3100
  %v3245 = vpack.c.b16 %v3101, %v3101
  %v3246 = vpack.c.b16 %v3102, %v3102
  %v3247 = vpack.c.b16 %v3103, %v3103
  %v3248 = vpack.c.b16 %v3104, %v3104
  %v3249 = vpack.c.b16 %v3105, %v3105
  %v3250 = vpack.c.b16 %v3106, %v3106
  %v3251 = vpack.c.b16 %v3107, %v3107
  %v3252 = vpack.c.b16 %v3108, %v3108
  %v3253 = vpack.c.b16 %v3109, %v3109
  %v3254 = vpack.c.b16 %v3110, %v3110
  %v3255 = vpack.c.b16 %v3111, %v3111
  %v3256 = vpack.c.b16 %v3112, %v3112
  %v3257 = vpack.c.b16 %v3113, %v3113
  %v3258 = vpack.c.b16 %v3114, %v3114
  %v3259 = vpack.c.b16 %v3115, %v3115
  %v3260 = vpack.c.b16 %v3116, %v3116
  %v3261 = vpack.c.b16 %v3117, %v3117
  %v3262 = vpack.c.b16 %v3118, %v3118
  %v3263 = vpack.c.b16 %v3119, %v3119
  %v3264 = vpack.c.b16 %v3120, %v3120
  %v3265 = vpack.c.b16 %v3121, %v3121
  %v3266 = vpack.c.b16 %v3122, %v3122
  %v3267 = vpack.c.b16 %v3123, %v3123
  %v3268 = vpack.c.b16 %v3124, %v3124
  %v3269 = vpack.c.b16 %v3125, %v3125
  %v3270 = vpack.c.b16 %v3126, %v3126
  %v3271 = vpack.c.b16 %v3127, %v3127
  %v3272 = vpack.c.b16 %v3128, %v3128
  %v3273 = vpack.c.b16 %v3129, %v3129
  %v3274 = vpack.c.b16 %v3130, %v3130
  %v3275 = vpack.c.b16 %v3131, %v3131
  %v3276 = vpack.c.b16 %v3132, %v3132
  %v3277 = vpack.c.b16 %v3133, %v3133
  %v3278 = vpack.c.b16 %v3134, %v3134
  %v3279 = vpack.c.b16 %v3135, %v3135
  %v3280 = vpack.c.b16 %v3136, %v3136
  %v3281 = vpack.c.b16 %v3137, %v3137
  %3426 = vst [vmem:[%s3] sm:$0xf] %v3138
  %3427 = vst [vmem:[%s3 + $0x4] sm:$0xf] %v3139
  %3428 = vst [vmem:[%s3 + $0x8] sm:$0xf] %v3140
  %3429 = vst [vmem:[%s3 + $0xc] sm:$0xf] %v3141
  %3430 = vst [vmem:[%s3 + $0x10] sm:$0xf] %v3142
  %3431 = vst [vmem:[%s3 + $0x14] sm:$0xf] %v3143
  %3432 = vst [vmem:[%s3 + $0x18] sm:$0xf] %v3144
  %3433 = vst [vmem:[%s3 + $0x1c] sm:$0xf] %v3145
  %3434 = vst [vmem:[%s3 + $0x20] sm:$0xf] %v3146
  %3435 = vst [vmem:[%s3 + $0x24] sm:$0xf] %v3147
  %3436 = vst [vmem:[%s3 + $0x28] sm:$0xf] %v3148
  %3437 = vst [vmem:[%s3 + $0x2c] sm:$0xf] %v3149
  %3438 = vst [vmem:[%s3 + $0x30] sm:$0xf] %v3150
  %3439 = vst [vmem:[%s3 + $0x34] sm:$0xf] %v3151
  %3440 = vst [vmem:[%s3 + $0x38] sm:$0xf] %v3152
  %3441 = vst [vmem:[%s3 + $0x3c] sm:$0xf] %v3153
  %3442 = vst [vmem:[%s3 + $0x40] sm:$0xf] %v3154
  %3443 = vst [vmem:[%s3 + $0x44] sm:$0xf] %v3155
  %3444 = vst [vmem:[%s3 + $0x48] sm:$0xf] %v3156
  %3445 = vst [vmem:[%s3 + $0x4c] sm:$0xf] %v3157
  %3446 = vst [vmem:[%s3 + $0x50] sm:$0xf] %v3158
  %3447 = vst [vmem:[%s3 + $0x54] sm:$0xf] %v3159
  %3448 = vst [vmem:[%s3 + $0x58] sm:$0xf] %v3160
  %3449 = vst [vmem:[%s3 + $0x5c] sm:$0xf] %v3161
  %3450 = vst [vmem:[%s3 + $0x60] sm:$0xf] %v3162
  %3451 = vst [vmem:[%s3 + $0x64] sm:$0xf] %v3163
  %3452 = vst [vmem:[%s3 + $0x68] sm:$0xf] %v3164
  %3453 = vst [vmem:[%s3 + $0x6c] sm:$0xf] %v3165
  %3454 = vst [vmem:[%s3 + $0x70] sm:$0xf] %v3166
  %3455 = vst [vmem:[%s3 + $0x74] sm:$0xf] %v3167
  %3456 = vst [vmem:[%s3 + $0x78] sm:$0xf] %v3168
  %3457 = vst [vmem:[%s3 + $0x7c] sm:$0xf] %v3169
  %3458 = vst [vmem:[%s3 + $0x80] sm:$0xf] %v3170
  %3459 = vst [vmem:[%s3 + $0x84] sm:$0xf] %v3171
  %3460 = vst [vmem:[%s3 + $0x88] sm:$0xf] %v3172
  %3461 = vst [vmem:[%s3 + $0x8c] sm:$0xf] %v3173
  %3462 = vst [vmem:[%s3 + $0x90] sm:$0xf] %v3174
  %3463 = vst [vmem:[%s3 + $0x94] sm:$0xf] %v3175
  %3464 = vst [vmem:[%s3 + $0x98] sm:$0xf] %v3176
  %3465 = vst [vmem:[%s3 + $0x9c] sm:$0xf] %v3177
  %3466 = vst [vmem:[%s3 + $0xa0] sm:$0xf] %v3178
  %3467 = vst [vmem:[%s3 + $0xa4] sm:$0xf] %v3179
  %3468 = vst [vmem:[%s3 + $0xa8] sm:$0xf] %v3180
  %3469 = vst [vmem:[%s3 + $0xac] sm:$0xf] %v3181
  %3470 = vst [vmem:[%s3 + $0xb0] sm:$0xf] %v3182
  %3471 = vst [vmem:[%s3 + $0xb4] sm:$0xf] %v3183
  %3472 = vst [vmem:[%s3 + $0xb8] sm:$0xf] %v3184
  %3473 = vst [vmem:[%s3 + $0xbc] sm:$0xf] %v3185
  %3474 = vst [vmem:[%s3 + $0xc0] sm:$0xf] %v3186
  %3475 = vst [vmem:[%s3 + $0xc4] sm:$0xf] %v3187
  %3476 = vst [vmem:[%s3 + $0xc8] sm:$0xf] %v3188
  %3477 = vst [vmem:[%s3 + $0xcc] sm:$0xf] %v3189
  %3478 = vst [vmem:[%s3 + $0xd0] sm:$0xf] %v3190
  %3479 = vst [vmem:[%s3 + $0xd4] sm:$0xf] %v3191
  %3480 = vst [vmem:[%s3 + $0xd8] sm:$0xf] %v3192
  %3481 = vst [vmem:[%s3 + $0xdc] sm:$0xf] %v3193
  %3482 = vst [vmem:[%s3 + $0xe0] sm:$0xf] %v3194
  %3483 = vst [vmem:[%s3 + $0xe4] sm:$0xf] %v3195
  %3484 = vst [vmem:[%s3 + $0xe8] sm:$0xf] %v3196
  %3485 = vst [vmem:[%s3 + $0xec] sm:$0xf] %v3197
  %3486 = vst [vmem:[%s3 + $0xf0] sm:$0xf] %v3198
  %3487 = vst [vmem:[%s3 + $0xf4] sm:$0xf] %v3199
  %3488 = vst [vmem:[%s3 + $0xf8] sm:$0xf] %v3200
  %3489 = vst [vmem:[%s3 + $0xfc] sm:$0xf] %v3201
  %3490 = vst [vmem:[%s3 + $0x100] sm:$0xf] %v3202
  %3491 = vst [vmem:[%s3 + $0x104] sm:$0xf] %v3203
  %3492 = vst [vmem:[%s3 + $0x108] sm:$0xf] %v3204
  %3493 = vst [vmem:[%s3 + $0x10c] sm:$0xf] %v3205
  %3494 = vst [vmem:[%s3 + $0x110] sm:$0xf] %v3206
  %3495 = vst [vmem:[%s3 + $0x114] sm:$0xf] %v3207
  %3496 = vst [vmem:[%s3 + $0x118] sm:$0xf] %v3208
  %3497 = vst [vmem:[%s3 + $0x11c] sm:$0xf] %v3209
  %3498 = vst [vmem:[%s3 + $0x120] sm:$0xf] %v3210
  %3499 = vst [vmem:[%s3 + $0x124] sm:$0xf] %v3211
  %3500 = vst [vmem:[%s3 + $0x128] sm:$0xf] %v3212
  %3501 = vst [vmem:[%s3 + $0x12c] sm:$0xf] %v3213
  %3502 = vst [vmem:[%s3 + $0x130] sm:$0xf] %v3214
  %3503 = vst [vmem:[%s3 + $0x134] sm:$0xf] %v3215
  %3504 = vst [vmem:[%s3 + $0x138] sm:$0xf] %v3216
  %3505 = vst [vmem:[%s3 + $0x13c] sm:$0xf] %v3217
  %3506 = vst [vmem:[%s3 + $0x140] sm:$0xf] %v3218
  %3507 = vst [vmem:[%s3 + $0x144] sm:$0xf] %v3219
  %3508 = vst [vmem:[%s3 + $0x148] sm:$0xf] %v3220
  %3509 = vst [vmem:[%s3 + $0x14c] sm:$0xf] %v3221
  %3510 = vst [vmem:[%s3 + $0x150] sm:$0xf] %v3222
  %3511 = vst [vmem:[%s3 + $0x154] sm:$0xf] %v3223
  %3512 = vst [vmem:[%s3 + $0x158] sm:$0xf] %v3224
  %3513 = vst [vmem:[%s3 + $0x15c] sm:$0xf] %v3225
  %3514 = vst [vmem:[%s3 + $0x160] sm:$0xf] %v3226
  %3515 = vst [vmem:[%s3 + $0x164] sm:$0xf] %v3227
  %3516 = vst [vmem:[%s3 + $0x168] sm:$0xf] %v3228
  %3517 = vst [vmem:[%s3 + $0x16c] sm:$0xf] %v3229
  %3518 = vst [vmem:[%s3 + $0x170] sm:$0xf] %v3230
  %3519 = vst [vmem:[%s3 + $0x174] sm:$0xf] %v3231
  %3520 = vst [vmem:[%s3 + $0x178] sm:$0xf] %v3232
  %3521 = vst [vmem:[%s3 + $0x17c] sm:$0xf] %v3233
  %3522 = vst [vmem:[%s3 + $0x180] sm:$0xf] %v3234
  %3523 = vst [vmem:[%s3 + $0x184] sm:$0xf] %v3235
  %3524 = vst [vmem:[%s3 + $0x188] sm:$0xf] %v3236
  %3525 = vst [vmem:[%s3 + $0x18c] sm:$0xf] %v3237
  %3526 = vst [vmem:[%s3 + $0x190] sm:$0xf] %v3238
  %3527 = vst [vmem:[%s3 + $0x194] sm:$0xf] %v3239
  %3528 = vst [vmem:[%s3 + $0x198] sm:$0xf] %v3240
  %3529 = vst [vmem:[%s3 + $0x19c] sm:$0xf] %v3241
  %3530 = vst [vmem:[%s3 + $0x1a0] sm:$0xf] %v3242
  %3531 = vst [vmem:[%s3 + $0x1a4] sm:$0xf] %v3243
  %3532 = vst [vmem:[%s3 + $0x1a8] sm:$0xf] %v3244
  %3533 = vst [vmem:[%s3 + $0x1ac] sm:$0xf] %v3245
  %3534 = vst [vmem:[%s3 + $0x1b0] sm:$0xf] %v3246
  %3535 = vst [vmem:[%s3 + $0x1b4] sm:$0xf] %v3247
  %3536 = vst [vmem:[%s3 + $0x1b8] sm:$0xf] %v3248
  %3537 = vst [vmem:[%s3 + $0x1bc] sm:$0xf] %v3249
  %3538 = vst [vmem:[%s3 + $0x1c0] sm:$0xf] %v3250
  %3539 = vst [vmem:[%s3 + $0x1c4] sm:$0xf] %v3251
  %3540 = vst [vmem:[%s3 + $0x1c8] sm:$0xf] %v3252
  %3541 = vst [vmem:[%s3 + $0x1cc] sm:$0xf] %v3253
  %3542 = vst [vmem:[%s3 + $0x1d0] sm:$0xf] %v3254
  %3543 = vst [vmem:[%s3 + $0x1d4] sm:$0xf] %v3255
  %3544 = vst [vmem:[%s3 + $0x1d8] sm:$0xf] %v3256
  %3545 = vst [vmem:[%s3 + $0x1dc] sm:$0xf] %v3257
  %3546 = vst [vmem:[%s3 + $0x1e0] sm:$0xf] %v3258
  %3547 = vst [vmem:[%s3 + $0x1e4] sm:$0xf] %v3259
  %3548 = vst [vmem:[%s3 + $0x1e8] sm:$0xf] %v3260
  %3549 = vst [vmem:[%s3 + $0x1ec] sm:$0xf] %v3261
  %3550 = vst [vmem:[%s3 + $0x1f0] sm:$0xf] %v3262
  %3551 = vst [vmem:[%s3 + $0x1f4] sm:$0xf] %v3263
  %3552 = vst [vmem:[%s3 + $0x1f8] sm:$0xf] %v3264
  %3553 = vst [vmem:[%s3 + $0x1fc] sm:$0xf] %v3265
  %3554 = vst [vmem:[%s3 + $0x200] sm:$0xf] %v3266
  %3555 = vst [vmem:[%s3 + $0x204] sm:$0xf] %v3267
  %3556 = vst [vmem:[%s3 + $0x208] sm:$0xf] %v3268
  %3557 = vst [vmem:[%s3 + $0x20c] sm:$0xf] %v3269
  %3558 = vst [vmem:[%s3 + $0x210] sm:$0xf] %v3270
  %3559 = vst [vmem:[%s3 + $0x214] sm:$0xf] %v3271
  %3560 = vst [vmem:[%s3 + $0x218] sm:$0xf] %v3272
  %3561 = vst [vmem:[%s3 + $0x21c] sm:$0xf] %v3273
  %3562 = vst [vmem:[%s3 + $0x220] sm:$0xf] %v3274
  %3563 = vst [vmem:[%s3 + $0x224] sm:$0xf] %v3275
  %3564 = vst [vmem:[%s3 + $0x228] sm:$0xf] %v3276
  %3565 = vst [vmem:[%s3 + $0x22c] sm:$0xf] %v3277
  %3566 = vst [vmem:[%s3 + $0x230] sm:$0xf] %v3278
  %3567 = vst [vmem:[%s3 + $0x234] sm:$0xf] %v3279
  %3568 = vst [vmem:[%s3 + $0x238] sm:$0xf] %v3280
  %3569 = vst [vmem:[%s3 + $0x23c] sm:$0xf] %v3281
  // Predicated region
  $region14: #{encoder_rnn_forward.4} parent=0 // pred_check
    _
  $region15: #{encoder_rnn_forward.4} parent=0 // pred_check_branch
    %3571 = sbr.rel (0) target = $region17
  $region16: #{encoder_rnn_forward.4} parent=0 // pred_region
    _
  $region17: #{encoder_rnn_forward.4} parent=0 // pred_fallthru
    _
  // Predicated region
  $region18: #{encoder_rnn_forward.4} parent=0 // pred_check
    _
  $region19: #{encoder_rnn_forward.4} parent=0 // pred_check_branch
    %3573 = sbr.rel (0) target = $region21
  $region20: #{encoder_rnn_forward.4} parent=0 // pred_region
    _
  $region21: #{encoder_rnn_forward.4} parent=0 // pred_fallthru
    _

// kernel: encoder_rnn_forward.6
$region0: #{encoder_rnn_forward.6}
  #allocation0 [shape = 'u32[]', space=smem, size = 0x4, offset = 0x4, fixed_abs, tag = 'smem constant byte address 0x4 - core index']
  #allocation1 [shape = 'u32[144,128]{1,0:T(1,128)}', space=vmem, size = 0x12000, scoped, tag = 'internal scratch']
  %s0 = inlined_call_operand.vmem [shape: bf16[8,2048], index: 0, kind: input, shape index: {}]
  %s1 = inlined_call_operand.vmem [shape: bf16[2048,128], index: 1, kind: input, shape index: {}]
  %s2 = inlined_call_operand.vmem [shape: f32[1,128], index: 2, kind: input, shape index: {}]
  %s3 = inlined_call_operand.vmem [shape: bf16[128,384], index: 3, kind: input, shape index: {}]
  %s4 = inlined_call_operand.vmem [shape: f32[1,384], index: 4, kind: input, shape index: {}]
  %s5 = inlined_call_operand.vmem [shape: f32[8,384], index: 5, kind: output, shape index: {}]
  %s6 = sld [smem:[#allocation0]]
  $region30: #{encoder_rnn_forward.6} parent=0
    _
  %s8 = ssub.s32 1, %s6
  %s9 = scalar_select 0, %s8, %s6
  // Predicated region
  $region2: #{encoder_rnn_forward.6} parent=0 // pred_check
    _
  $region3: #{encoder_rnn_forward.6} parent=0 // pred_check_branch
    %11 = sbr.rel (0) target = $region5
  $region4: #{encoder_rnn_forward.6} parent=0 // pred_region
    _
  $region5: #{encoder_rnn_forward.6} parent=0 // pred_fallthru
    _
  // Predicated region
  $region6: #{encoder_rnn_forward.6} parent=0 // pred_check
    _
  $region7: #{encoder_rnn_forward.6} parent=0 // pred_check_branch
    %13 = sbr.rel (0) target = $region9
  $region8: #{encoder_rnn_forward.6} parent=0 // pred_region
    _
  $region9: #{encoder_rnn_forward.6} parent=0 // pred_fallthru
    _
  // Predicated region
  $region10: #{encoder_rnn_forward.6} parent=0 // pred_check
    _
  $region11: #{encoder_rnn_forward.6} parent=0 // pred_check_branch
    %15 = sbr.rel (0) target = $region13
  $region12: #{encoder_rnn_forward.6} parent=0 // pred_region
    _
  $region13: #{encoder_rnn_forward.6} parent=0 // pred_fallthru
    _
  // Predicated region
  $region14: #{encoder_rnn_forward.6} parent=0 // pred_check
    _
  $region15: #{encoder_rnn_forward.6} parent=0 // pred_check_branch
    %17 = sbr.rel (0) target = $region17
  $region16: #{encoder_rnn_forward.6} parent=0 // pred_region
    _
  $region17: #{encoder_rnn_forward.6} parent=0 // pred_fallthru
    _
  // Predicated region
  $region18: #{encoder_rnn_forward.6} parent=0 // pred_check
    _
  $region19: #{encoder_rnn_forward.6} parent=0 // pred_check_branch
    %19 = sbr.rel (0) target = $region21
  $region20: #{encoder_rnn_forward.6} parent=0 // pred_region
    _
  $region21: #{encoder_rnn_forward.6} parent=0 // pred_fallthru
    _
  %v21 = vld [vmem:[%s0] sm:$0xff]
  %v22 = vld [vmem:[%s0 + $0x8] sm:$0xff]
  %v23 = vld [vmem:[%s0 + $0x10] sm:$0xff]
  %v24 = vld [vmem:[%s0 + $0x18] sm:$0xff]
  %v25 = vld [vmem:[%s0 + $0x20] sm:$0xff]
  %v26 = vld [vmem:[%s0 + $0x28] sm:$0xff]
  %v27 = vld [vmem:[%s0 + $0x30] sm:$0xff]
  %v28 = vld [vmem:[%s0 + $0x38] sm:$0xff]
  %v29 = vld [vmem:[%s1] sm:$0xf]
  %v30 = vld [vmem:[%s1 + $0x4] sm:$0xf]
  %v31 = vld [vmem:[%s1 + $0x8] sm:$0xf]
  %v32 = vld [vmem:[%s1 + $0xc] sm:$0xf]
  %v33 = vld [vmem:[%s1 + $0x10] sm:$0xf]
  %v34 = vld [vmem:[%s1 + $0x14] sm:$0xf]
  %v35 = vld [vmem:[%s1 + $0x18] sm:$0xf]
  %v36 = vld [vmem:[%s1 + $0x1c] sm:$0xf]
  %v37 = vld [vmem:[%s1 + $0x20] sm:$0xf]
  %v38 = vld [vmem:[%s1 + $0x24] sm:$0xf]
  %v39 = vld [vmem:[%s1 + $0x28] sm:$0xf]
  %v40 = vld [vmem:[%s1 + $0x2c] sm:$0xf]
  %v41 = vld [vmem:[%s1 + $0x30] sm:$0xf]
  %v42 = vld [vmem:[%s1 + $0x34] sm:$0xf]
  %v43 = vld [vmem:[%s1 + $0x38] sm:$0xf]
  %v44 = vld [vmem:[%s1 + $0x3c] sm:$0xf]
  %v45 = vld [vmem:[%s1 + $0x40] sm:$0xf]
  %v46 = vld [vmem:[%s1 + $0x44] sm:$0xf]
  %v47 = vld [vmem:[%s1 + $0x48] sm:$0xf]
  %v48 = vld [vmem:[%s1 + $0x4c] sm:$0xf]
  %v49 = vld [vmem:[%s1 + $0x50] sm:$0xf]
  %v50 = vld [vmem:[%s1 + $0x54] sm:$0xf]
  %v51 = vld [vmem:[%s1 + $0x58] sm:$0xf]
  %v52 = vld [vmem:[%s1 + $0x5c] sm:$0xf]
  %v53 = vld [vmem:[%s1 + $0x60] sm:$0xf]
  %v54 = vld [vmem:[%s1 + $0x64] sm:$0xf]
  %v55 = vld [vmem:[%s1 + $0x68] sm:$0xf]
  %v56 = vld [vmem:[%s1 + $0x6c] sm:$0xf]
  %v57 = vld [vmem:[%s1 + $0x70] sm:$0xf]
  %v58 = vld [vmem:[%s1 + $0x74] sm:$0xf]
  %v59 = vld [vmem:[%s1 + $0x78] sm:$0xf]
  %v60 = vld [vmem:[%s1 + $0x7c] sm:$0xf]
  %v61 = vld [vmem:[%s1 + $0x80] sm:$0xf]
  %v62 = vld [vmem:[%s1 + $0x84] sm:$0xf]
  %v63 = vld [vmem:[%s1 + $0x88] sm:$0xf]
  %v64 = vld [vmem:[%s1 + $0x8c] sm:$0xf]
  %v65 = vld [vmem:[%s1 + $0x90] sm:$0xf]
  %v66 = vld [vmem:[%s1 + $0x94] sm:$0xf]
  %v67 = vld [vmem:[%s1 + $0x98] sm:$0xf]
  %v68 = vld [vmem:[%s1 + $0x9c] sm:$0xf]
  %v69 = vld [vmem:[%s1 + $0xa0] sm:$0xf]
  %v70 = vld [vmem:[%s1 + $0xa4] sm:$0xf]
  %v71 = vld [vmem:[%s1 + $0xa8] sm:$0xf]
  %v72 = vld [vmem:[%s1 + $0xac] sm:$0xf]
  %v73 = vld [vmem:[%s1 + $0xb0] sm:$0xf]
  %v74 = vld [vmem:[%s1 + $0xb4] sm:$0xf]
  %v75 = vld [vmem:[%s1 + $0xb8] sm:$0xf]
  %v76 = vld [vmem:[%s1 + $0xbc] sm:$0xf]
  %v77 = vld [vmem:[%s1 + $0xc0] sm:$0xf]
  %v78 = vld [vmem:[%s1 + $0xc4] sm:$0xf]
  %v79 = vld [vmem:[%s1 + $0xc8] sm:$0xf]
  %v80 = vld [vmem:[%s1 + $0xcc] sm:$0xf]
  %v81 = vld [vmem:[%s1 + $0xd0] sm:$0xf]
  %v82 = vld [vmem:[%s1 + $0xd4] sm:$0xf]
  %v83 = vld [vmem:[%s1 + $0xd8] sm:$0xf]
  %v84 = vld [vmem:[%s1 + $0xdc] sm:$0xf]
  %v85 = vld [vmem:[%s1 + $0xe0] sm:$0xf]
  %v86 = vld [vmem:[%s1 + $0xe4] sm:$0xf]
  %v87 = vld [vmem:[%s1 + $0xe8] sm:$0xf]
  %v88 = vld [vmem:[%s1 + $0xec] sm:$0xf]
  %v89 = vld [vmem:[%s1 + $0xf0] sm:$0xf]
  %v90 = vld [vmem:[%s1 + $0xf4] sm:$0xf]
  %v91 = vld [vmem:[%s1 + $0xf8] sm:$0xf]
  %v92 = vld [vmem:[%s1 + $0xfc] sm:$0xf]
  %v93 = vld [vmem:[%s1 + $0x100] sm:$0xf]
  %v94 = vld [vmem:[%s1 + $0x104] sm:$0xf]
  %v95 = vld [vmem:[%s1 + $0x108] sm:$0xf]
  %v96 = vld [vmem:[%s1 + $0x10c] sm:$0xf]
  %v97 = vld [vmem:[%s1 + $0x110] sm:$0xf]
  %v98 = vld [vmem:[%s1 + $0x114] sm:$0xf]
  %v99 = vld [vmem:[%s1 + $0x118] sm:$0xf]
  %v100 = vld [vmem:[%s1 + $0x11c] sm:$0xf]
  %v101 = vld [vmem:[%s1 + $0x120] sm:$0xf]
  %v102 = vld [vmem:[%s1 + $0x124] sm:$0xf]
  %v103 = vld [vmem:[%s1 + $0x128] sm:$0xf]
  %v104 = vld [vmem:[%s1 + $0x12c] sm:$0xf]
  %v105 = vld [vmem:[%s1 + $0x130] sm:$0xf]
  %v106 = vld [vmem:[%s1 + $0x134] sm:$0xf]
  %v107 = vld [vmem:[%s1 + $0x138] sm:$0xf]
  %v108 = vld [vmem:[%s1 + $0x13c] sm:$0xf]
  %v109 = vld [vmem:[%s1 + $0x140] sm:$0xf]
  %v110 = vld [vmem:[%s1 + $0x144] sm:$0xf]
  %v111 = vld [vmem:[%s1 + $0x148] sm:$0xf]
  %v112 = vld [vmem:[%s1 + $0x14c] sm:$0xf]
  %v113 = vld [vmem:[%s1 + $0x150] sm:$0xf]
  %v114 = vld [vmem:[%s1 + $0x154] sm:$0xf]
  %v115 = vld [vmem:[%s1 + $0x158] sm:$0xf]
  %v116 = vld [vmem:[%s1 + $0x15c] sm:$0xf]
  %v117 = vld [vmem:[%s1 + $0x160] sm:$0xf]
  %v118 = vld [vmem:[%s1 + $0x164] sm:$0xf]
  %v119 = vld [vmem:[%s1 + $0x168] sm:$0xf]
  %v120 = vld [vmem:[%s1 + $0x16c] sm:$0xf]
  %v121 = vld [vmem:[%s1 + $0x170] sm:$0xf]
  %v122 = vld [vmem:[%s1 + $0x174] sm:$0xf]
  %v123 = vld [vmem:[%s1 + $0x178] sm:$0xf]
  %v124 = vld [vmem:[%s1 + $0x17c] sm:$0xf]
  %v125 = vld [vmem:[%s1 + $0x180] sm:$0xf]
  %v126 = vld [vmem:[%s1 + $0x184] sm:$0xf]
  %v127 = vld [vmem:[%s1 + $0x188] sm:$0xf]
  %v128 = vld [vmem:[%s1 + $0x18c] sm:$0xf]
  %v129 = vld [vmem:[%s1 + $0x190] sm:$0xf]
  %v130 = vld [vmem:[%s1 + $0x194] sm:$0xf]
  %v131 = vld [vmem:[%s1 + $0x198] sm:$0xf]
  %v132 = vld [vmem:[%s1 + $0x19c] sm:$0xf]
  %v133 = vld [vmem:[%s1 + $0x1a0] sm:$0xf]
  %v134 = vld [vmem:[%s1 + $0x1a4] sm:$0xf]
  %v135 = vld [vmem:[%s1 + $0x1a8] sm:$0xf]
  %v136 = vld [vmem:[%s1 + $0x1ac] sm:$0xf]
  %v137 = vld [vmem:[%s1 + $0x1b0] sm:$0xf]
  %v138 = vld [vmem:[%s1 + $0x1b4] sm:$0xf]
  %v139 = vld [vmem:[%s1 + $0x1b8] sm:$0xf]
  %v140 = vld [vmem:[%s1 + $0x1bc] sm:$0xf]
  %v141 = vld [vmem:[%s1 + $0x1c0] sm:$0xf]
  %v142 = vld [vmem:[%s1 + $0x1c4] sm:$0xf]
  %v143 = vld [vmem:[%s1 + $0x1c8] sm:$0xf]
  %v144 = vld [vmem:[%s1 + $0x1cc] sm:$0xf]
  %v145 = vld [vmem:[%s1 + $0x1d0] sm:$0xf]
  %v146 = vld [vmem:[%s1 + $0x1d4] sm:$0xf]
  %v147 = vld [vmem:[%s1 + $0x1d8] sm:$0xf]
  %v148 = vld [vmem:[%s1 + $0x1dc] sm:$0xf]
  %v149 = vld [vmem:[%s1 + $0x1e0] sm:$0xf]
  %v150 = vld [vmem:[%s1 + $0x1e4] sm:$0xf]
  %v151 = vld [vmem:[%s1 + $0x1e8] sm:$0xf]
  %v152 = vld [vmem:[%s1 + $0x1ec] sm:$0xf]
  %v153 = vld [vmem:[%s1 + $0x1f0] sm:$0xf]
  %v154 = vld [vmem:[%s1 + $0x1f4] sm:$0xf]
  %v155 = vld [vmem:[%s1 + $0x1f8] sm:$0xf]
  %v156 = vld [vmem:[%s1 + $0x1fc] sm:$0xf]
  %v157 = vld [vmem:[%s1 + $0x200] sm:$0xf]
  %v158 = vld [vmem:[%s1 + $0x204] sm:$0xf]
  %v159 = vld [vmem:[%s1 + $0x208] sm:$0xf]
  %v160 = vld [vmem:[%s1 + $0x20c] sm:$0xf]
  %v161 = vld [vmem:[%s1 + $0x210] sm:$0xf]
  %v162 = vld [vmem:[%s1 + $0x214] sm:$0xf]
  %v163 = vld [vmem:[%s1 + $0x218] sm:$0xf]
  %v164 = vld [vmem:[%s1 + $0x21c] sm:$0xf]
  %v165 = vld [vmem:[%s1 + $0x220] sm:$0xf]
  %v166 = vld [vmem:[%s1 + $0x224] sm:$0xf]
  %v167 = vld [vmem:[%s1 + $0x228] sm:$0xf]
  %v168 = vld [vmem:[%s1 + $0x22c] sm:$0xf]
  %v169 = vld [vmem:[%s1 + $0x230] sm:$0xf]
  %v170 = vld [vmem:[%s1 + $0x234] sm:$0xf]
  %v171 = vld [vmem:[%s1 + $0x238] sm:$0xf]
  %v172 = vld [vmem:[%s1 + $0x23c] sm:$0xf]
  %v173 = vld [vmem:[%s1 + $0x240] sm:$0xf]
  %v174 = vld [vmem:[%s1 + $0x244] sm:$0xf]
  %v175 = vld [vmem:[%s1 + $0x248] sm:$0xf]
  %v176 = vld [vmem:[%s1 + $0x24c] sm:$0xf]
  %v177 = vld [vmem:[%s1 + $0x250] sm:$0xf]
  %v178 = vld [vmem:[%s1 + $0x254] sm:$0xf]
  %v179 = vld [vmem:[%s1 + $0x258] sm:$0xf]
  %v180 = vld [vmem:[%s1 + $0x25c] sm:$0xf]
  %v181 = vld [vmem:[%s1 + $0x260] sm:$0xf]
  %v182 = vld [vmem:[%s1 + $0x264] sm:$0xf]
  %v183 = vld [vmem:[%s1 + $0x268] sm:$0xf]
  %v184 = vld [vmem:[%s1 + $0x26c] sm:$0xf]
  %v185 = vld [vmem:[%s1 + $0x270] sm:$0xf]
  %v186 = vld [vmem:[%s1 + $0x274] sm:$0xf]
  %v187 = vld [vmem:[%s1 + $0x278] sm:$0xf]
  %v188 = vld [vmem:[%s1 + $0x27c] sm:$0xf]
  %v189 = vld [vmem:[%s1 + $0x280] sm:$0xf]
  %v190 = vld [vmem:[%s1 + $0x284] sm:$0xf]
  %v191 = vld [vmem:[%s1 + $0x288] sm:$0xf]
  %v192 = vld [vmem:[%s1 + $0x28c] sm:$0xf]
  %v193 = vld [vmem:[%s1 + $0x290] sm:$0xf]
  %v194 = vld [vmem:[%s1 + $0x294] sm:$0xf]
  %v195 = vld [vmem:[%s1 + $0x298] sm:$0xf]
  %v196 = vld [vmem:[%s1 + $0x29c] sm:$0xf]
  %v197 = vld [vmem:[%s1 + $0x2a0] sm:$0xf]
  %v198 = vld [vmem:[%s1 + $0x2a4] sm:$0xf]
  %v199 = vld [vmem:[%s1 + $0x2a8] sm:$0xf]
  %v200 = vld [vmem:[%s1 + $0x2ac] sm:$0xf]
  %v201 = vld [vmem:[%s1 + $0x2b0] sm:$0xf]
  %v202 = vld [vmem:[%s1 + $0x2b4] sm:$0xf]
  %v203 = vld [vmem:[%s1 + $0x2b8] sm:$0xf]
  %v204 = vld [vmem:[%s1 + $0x2bc] sm:$0xf]
  %v205 = vld [vmem:[%s1 + $0x2c0] sm:$0xf]
  %v206 = vld [vmem:[%s1 + $0x2c4] sm:$0xf]
  %v207 = vld [vmem:[%s1 + $0x2c8] sm:$0xf]
  %v208 = vld [vmem:[%s1 + $0x2cc] sm:$0xf]
  %v209 = vld [vmem:[%s1 + $0x2d0] sm:$0xf]
  %v210 = vld [vmem:[%s1 + $0x2d4] sm:$0xf]
  %v211 = vld [vmem:[%s1 + $0x2d8] sm:$0xf]
  %v212 = vld [vmem:[%s1 + $0x2dc] sm:$0xf]
  %v213 = vld [vmem:[%s1 + $0x2e0] sm:$0xf]
  %v214 = vld [vmem:[%s1 + $0x2e4] sm:$0xf]
  %v215 = vld [vmem:[%s1 + $0x2e8] sm:$0xf]
  %v216 = vld [vmem:[%s1 + $0x2ec] sm:$0xf]
  %v217 = vld [vmem:[%s1 + $0x2f0] sm:$0xf]
  %v218 = vld [vmem:[%s1 + $0x2f4] sm:$0xf]
  %v219 = vld [vmem:[%s1 + $0x2f8] sm:$0xf]
  %v220 = vld [vmem:[%s1 + $0x2fc] sm:$0xf]
  %v221 = vld [vmem:[%s1 + $0x300] sm:$0xf]
  %v222 = vld [vmem:[%s1 + $0x304] sm:$0xf]
  %v223 = vld [vmem:[%s1 + $0x308] sm:$0xf]
  %v224 = vld [vmem:[%s1 + $0x30c] sm:$0xf]
  %v225 = vld [vmem:[%s1 + $0x310] sm:$0xf]
  %v226 = vld [vmem:[%s1 + $0x314] sm:$0xf]
  %v227 = vld [vmem:[%s1 + $0x318] sm:$0xf]
  %v228 = vld [vmem:[%s1 + $0x31c] sm:$0xf]
  %v229 = vld [vmem:[%s1 + $0x320] sm:$0xf]
  %v230 = vld [vmem:[%s1 + $0x324] sm:$0xf]
  %v231 = vld [vmem:[%s1 + $0x328] sm:$0xf]
  %v232 = vld [vmem:[%s1 + $0x32c] sm:$0xf]
  %v233 = vld [vmem:[%s1 + $0x330] sm:$0xf]
  %v234 = vld [vmem:[%s1 + $0x334] sm:$0xf]
  %v235 = vld [vmem:[%s1 + $0x338] sm:$0xf]
  %v236 = vld [vmem:[%s1 + $0x33c] sm:$0xf]
  %v237 = vld [vmem:[%s1 + $0x340] sm:$0xf]
  %v238 = vld [vmem:[%s1 + $0x344] sm:$0xf]
  %v239 = vld [vmem:[%s1 + $0x348] sm:$0xf]
  %v240 = vld [vmem:[%s1 + $0x34c] sm:$0xf]
  %v241 = vld [vmem:[%s1 + $0x350] sm:$0xf]
  %v242 = vld [vmem:[%s1 + $0x354] sm:$0xf]
  %v243 = vld [vmem:[%s1 + $0x358] sm:$0xf]
  %v244 = vld [vmem:[%s1 + $0x35c] sm:$0xf]
  %v245 = vld [vmem:[%s1 + $0x360] sm:$0xf]
  %v246 = vld [vmem:[%s1 + $0x364] sm:$0xf]
  %v247 = vld [vmem:[%s1 + $0x368] sm:$0xf]
  %v248 = vld [vmem:[%s1 + $0x36c] sm:$0xf]
  %v249 = vld [vmem:[%s1 + $0x370] sm:$0xf]
  %v250 = vld [vmem:[%s1 + $0x374] sm:$0xf]
  %v251 = vld [vmem:[%s1 + $0x378] sm:$0xf]
  %v252 = vld [vmem:[%s1 + $0x37c] sm:$0xf]
  %v253 = vld [vmem:[%s1 + $0x380] sm:$0xf]
  %v254 = vld [vmem:[%s1 + $0x384] sm:$0xf]
  %v255 = vld [vmem:[%s1 + $0x388] sm:$0xf]
  %v256 = vld [vmem:[%s1 + $0x38c] sm:$0xf]
  %v257 = vld [vmem:[%s1 + $0x390] sm:$0xf]
  %v258 = vld [vmem:[%s1 + $0x394] sm:$0xf]
  %v259 = vld [vmem:[%s1 + $0x398] sm:$0xf]
  %v260 = vld [vmem:[%s1 + $0x39c] sm:$0xf]
  %v261 = vld [vmem:[%s1 + $0x3a0] sm:$0xf]
  %v262 = vld [vmem:[%s1 + $0x3a4] sm:$0xf]
  %v263 = vld [vmem:[%s1 + $0x3a8] sm:$0xf]
  %v264 = vld [vmem:[%s1 + $0x3ac] sm:$0xf]
  %v265 = vld [vmem:[%s1 + $0x3b0] sm:$0xf]
  %v266 = vld [vmem:[%s1 + $0x3b4] sm:$0xf]
  %v267 = vld [vmem:[%s1 + $0x3b8] sm:$0xf]
  %v268 = vld [vmem:[%s1 + $0x3bc] sm:$0xf]
  %v269 = vld [vmem:[%s1 + $0x3c0] sm:$0xf]
  %v270 = vld [vmem:[%s1 + $0x3c4] sm:$0xf]
  %v271 = vld [vmem:[%s1 + $0x3c8] sm:$0xf]
  %v272 = vld [vmem:[%s1 + $0x3cc] sm:$0xf]
  %v273 = vld [vmem:[%s1 + $0x3d0] sm:$0xf]
  %v274 = vld [vmem:[%s1 + $0x3d4] sm:$0xf]
  %v275 = vld [vmem:[%s1 + $0x3d8] sm:$0xf]
  %v276 = vld [vmem:[%s1 + $0x3dc] sm:$0xf]
  %v277 = vld [vmem:[%s1 + $0x3e0] sm:$0xf]
  %v278 = vld [vmem:[%s1 + $0x3e4] sm:$0xf]
  %v279 = vld [vmem:[%s1 + $0x3e8] sm:$0xf]
  %v280 = vld [vmem:[%s1 + $0x3ec] sm:$0xf]
  %v281 = vld [vmem:[%s1 + $0x3f0] sm:$0xf]
  %v282 = vld [vmem:[%s1 + $0x3f4] sm:$0xf]
  %v283 = vld [vmem:[%s1 + $0x3f8] sm:$0xf]
  %v284 = vld [vmem:[%s1 + $0x3fc] sm:$0xf]
  %v285 = vld [vmem:[%s2] sm:$0x1]
  %v287 = vlaneseq
  %v288 = vshrl.u32 %v287, 7
  %v289 = vsub.s32 0, %v288
  %v290 = vrot.slane %v285, %v289
  %v300 = vunpack.c.l.b16 %v21
  %v301 = vunpack.c.h.b16 %v21
  %v302 = vunpack.c.l.b16 %v22
  %v303 = vunpack.c.h.b16 %v22
  %v304 = vunpack.c.l.b16 %v23
  %v305 = vunpack.c.h.b16 %v23
  %v306 = vunpack.c.l.b16 %v24
  %v307 = vunpack.c.h.b16 %v24
  %v308 = vunpack.c.l.b16 %v25
  %v309 = vunpack.c.h.b16 %v25
  %v310 = vunpack.c.l.b16 %v26
  %v311 = vunpack.c.h.b16 %v26
  %v312 = vunpack.c.l.b16 %v27
  %v313 = vunpack.c.h.b16 %v27
  %v314 = vunpack.c.l.b16 %v28
  %v315 = vunpack.c.h.b16 %v28
  %v316 = vpack.c.b16 %v300, %v300
  %v317 = vpack.c.b16 %v301, %v301
  %v318 = vpack.c.b16 %v302, %v302
  %v319 = vpack.c.b16 %v303, %v303
  %v320 = vpack.c.b16 %v304, %v304
  %v321 = vpack.c.b16 %v305, %v305
  %v322 = vpack.c.b16 %v306, %v306
  %v323 = vpack.c.b16 %v307, %v307
  %v324 = vpack.c.b16 %v308, %v308
  %v325 = vpack.c.b16 %v309, %v309
  %v326 = vpack.c.b16 %v310, %v310
  %v327 = vpack.c.b16 %v311, %v311
  %v328 = vpack.c.b16 %v312, %v312
  %v329 = vpack.c.b16 %v313, %v313
  %v330 = vpack.c.b16 %v314, %v314
  %v331 = vpack.c.b16 %v315, %v315
  %v604 = vunpack.c.l.b16 %v29
  %v605 = vunpack.c.l.b16 %v30
  %v606 = vunpack.c.l.b16 %v31
  %v607 = vunpack.c.l.b16 %v32
  %v608 = vunpack.c.l.b16 %v33
  %v609 = vunpack.c.l.b16 %v34
  %v610 = vunpack.c.l.b16 %v35
  %v611 = vunpack.c.l.b16 %v36
  %v612 = vunpack.c.l.b16 %v37
  %v613 = vunpack.c.l.b16 %v38
  %v614 = vunpack.c.l.b16 %v39
  %v615 = vunpack.c.l.b16 %v40
  %v616 = vunpack.c.l.b16 %v41
  %v617 = vunpack.c.l.b16 %v42
  %v618 = vunpack.c.l.b16 %v43
  %v619 = vunpack.c.l.b16 %v44
  %v620 = vunpack.c.l.b16 %v45
  %v621 = vunpack.c.l.b16 %v46
  %v622 = vunpack.c.l.b16 %v47
  %v623 = vunpack.c.l.b16 %v48
  %v624 = vunpack.c.l.b16 %v49
  %v625 = vunpack.c.l.b16 %v50
  %v626 = vunpack.c.l.b16 %v51
  %v627 = vunpack.c.l.b16 %v52
  %v628 = vunpack.c.l.b16 %v53
  %v629 = vunpack.c.l.b16 %v54
  %v630 = vunpack.c.l.b16 %v55
  %v631 = vunpack.c.l.b16 %v56
  %v632 = vunpack.c.l.b16 %v57
  %v633 = vunpack.c.l.b16 %v58
  %v634 = vunpack.c.l.b16 %v59
  %v635 = vunpack.c.l.b16 %v60
  %v636 = vunpack.c.l.b16 %v61
  %v637 = vunpack.c.l.b16 %v62
  %v638 = vunpack.c.l.b16 %v63
  %v639 = vunpack.c.l.b16 %v64
  %v640 = vunpack.c.l.b16 %v65
  %v641 = vunpack.c.l.b16 %v66
  %v642 = vunpack.c.l.b16 %v67
  %v643 = vunpack.c.l.b16 %v68
  %v644 = vunpack.c.l.b16 %v69
  %v645 = vunpack.c.l.b16 %v70
  %v646 = vunpack.c.l.b16 %v71
  %v647 = vunpack.c.l.b16 %v72
  %v648 = vunpack.c.l.b16 %v73
  %v649 = vunpack.c.l.b16 %v74
  %v650 = vunpack.c.l.b16 %v75
  %v651 = vunpack.c.l.b16 %v76
  %v652 = vunpack.c.l.b16 %v77
  %v653 = vunpack.c.l.b16 %v78
  %v654 = vunpack.c.l.b16 %v79
  %v655 = vunpack.c.l.b16 %v80
  %v656 = vunpack.c.l.b16 %v81
  %v657 = vunpack.c.l.b16 %v82
  %v658 = vunpack.c.l.b16 %v83
  %v659 = vunpack.c.l.b16 %v84
  %v660 = vunpack.c.l.b16 %v85
  %v661 = vunpack.c.l.b16 %v86
  %v662 = vunpack.c.l.b16 %v87
  %v663 = vunpack.c.l.b16 %v88
  %v664 = vunpack.c.l.b16 %v89
  %v665 = vunpack.c.l.b16 %v90
  %v666 = vunpack.c.l.b16 %v91
  %v667 = vunpack.c.l.b16 %v92
  %v668 = vunpack.c.l.b16 %v93
  %v669 = vunpack.c.l.b16 %v94
  %v670 = vunpack.c.l.b16 %v95
  %v671 = vunpack.c.l.b16 %v96
  %v672 = vunpack.c.l.b16 %v97
  %v673 = vunpack.c.l.b16 %v98
  %v674 = vunpack.c.l.b16 %v99
  %v675 = vunpack.c.l.b16 %v100
  %v676 = vunpack.c.l.b16 %v101
  %v677 = vunpack.c.l.b16 %v102
  %v678 = vunpack.c.l.b16 %v103
  %v679 = vunpack.c.l.b16 %v104
  %v680 = vunpack.c.l.b16 %v105
  %v681 = vunpack.c.l.b16 %v106
  %v682 = vunpack.c.l.b16 %v107
  %v683 = vunpack.c.l.b16 %v108
  %v684 = vunpack.c.l.b16 %v109
  %v685 = vunpack.c.l.b16 %v110
  %v686 = vunpack.c.l.b16 %v111
  %v687 = vunpack.c.l.b16 %v112
  %v688 = vunpack.c.l.b16 %v113
  %v689 = vunpack.c.l.b16 %v114
  %v690 = vunpack.c.l.b16 %v115
  %v691 = vunpack.c.l.b16 %v116
  %v692 = vunpack.c.l.b16 %v117
  %v693 = vunpack.c.l.b16 %v118
  %v694 = vunpack.c.l.b16 %v119
  %v695 = vunpack.c.l.b16 %v120
  %v696 = vunpack.c.l.b16 %v121
  %v697 = vunpack.c.l.b16 %v122
  %v698 = vunpack.c.l.b16 %v123
  %v699 = vunpack.c.l.b16 %v124
  %v700 = vunpack.c.l.b16 %v125
  %v701 = vunpack.c.l.b16 %v126
  %v702 = vunpack.c.l.b16 %v127
  %v703 = vunpack.c.l.b16 %v128
  %v704 = vunpack.c.l.b16 %v129
  %v705 = vunpack.c.l.b16 %v130
  %v706 = vunpack.c.l.b16 %v131
  %v707 = vunpack.c.l.b16 %v132
  %v708 = vunpack.c.l.b16 %v133
  %v709 = vunpack.c.l.b16 %v134
  %v710 = vunpack.c.l.b16 %v135
  %v711 = vunpack.c.l.b16 %v136
  %v712 = vunpack.c.l.b16 %v137
  %v713 = vunpack.c.l.b16 %v138
  %v714 = vunpack.c.l.b16 %v139
  %v715 = vunpack.c.l.b16 %v140
  %v716 = vunpack.c.l.b16 %v141
  %v717 = vunpack.c.l.b16 %v142
  %v718 = vunpack.c.l.b16 %v143
  %v719 = vunpack.c.l.b16 %v144
  %v720 = vunpack.c.l.b16 %v145
  %v721 = vunpack.c.l.b16 %v146
  %v722 = vunpack.c.l.b16 %v147
  %v723 = vunpack.c.l.b16 %v148
  %v724 = vunpack.c.l.b16 %v149
  %v725 = vunpack.c.l.b16 %v150
  %v726 = vunpack.c.l.b16 %v151
  %v727 = vunpack.c.l.b16 %v152
  %v728 = vunpack.c.l.b16 %v153
  %v729 = vunpack.c.l.b16 %v154
  %v730 = vunpack.c.l.b16 %v155
  %v731 = vunpack.c.l.b16 %v156
  %v732 = vunpack.c.l.b16 %v157
  %v733 = vunpack.c.l.b16 %v158
  %v734 = vunpack.c.l.b16 %v159
  %v735 = vunpack.c.l.b16 %v160
  %v736 = vunpack.c.l.b16 %v161
  %v737 = vunpack.c.l.b16 %v162
  %v738 = vunpack.c.l.b16 %v163
  %v739 = vunpack.c.l.b16 %v164
  %v740 = vunpack.c.l.b16 %v165
  %v741 = vunpack.c.l.b16 %v166
  %v742 = vunpack.c.l.b16 %v167
  %v743 = vunpack.c.l.b16 %v168
  %v744 = vunpack.c.l.b16 %v169
  %v745 = vunpack.c.l.b16 %v170
  %v746 = vunpack.c.l.b16 %v171
  %v747 = vunpack.c.l.b16 %v172
  %v748 = vunpack.c.l.b16 %v173
  %v749 = vunpack.c.l.b16 %v174
  %v750 = vunpack.c.l.b16 %v175
  %v751 = vunpack.c.l.b16 %v176
  %v752 = vunpack.c.l.b16 %v177
  %v753 = vunpack.c.l.b16 %v178
  %v754 = vunpack.c.l.b16 %v179
  %v755 = vunpack.c.l.b16 %v180
  %v756 = vunpack.c.l.b16 %v181
  %v757 = vunpack.c.l.b16 %v182
  %v758 = vunpack.c.l.b16 %v183
  %v759 = vunpack.c.l.b16 %v184
  %v760 = vunpack.c.l.b16 %v185
  %v761 = vunpack.c.l.b16 %v186
  %v762 = vunpack.c.l.b16 %v187
  %v763 = vunpack.c.l.b16 %v188
  %v764 = vunpack.c.l.b16 %v189
  %v765 = vunpack.c.l.b16 %v190
  %v766 = vunpack.c.l.b16 %v191
  %v767 = vunpack.c.l.b16 %v192
  %v768 = vunpack.c.l.b16 %v193
  %v769 = vunpack.c.l.b16 %v194
  %v770 = vunpack.c.l.b16 %v195
  %v771 = vunpack.c.l.b16 %v196
  %v772 = vunpack.c.l.b16 %v197
  %v773 = vunpack.c.l.b16 %v198
  %v774 = vunpack.c.l.b16 %v199
  %v775 = vunpack.c.l.b16 %v200
  %v776 = vunpack.c.l.b16 %v201
  %v777 = vunpack.c.l.b16 %v202
  %v778 = vunpack.c.l.b16 %v203
  %v779 = vunpack.c.l.b16 %v204
  %v780 = vunpack.c.l.b16 %v205
  %v781 = vunpack.c.l.b16 %v206
  %v782 = vunpack.c.l.b16 %v207
  %v783 = vunpack.c.l.b16 %v208
  %v784 = vunpack.c.l.b16 %v209
  %v785 = vunpack.c.l.b16 %v210
  %v786 = vunpack.c.l.b16 %v211
  %v787 = vunpack.c.l.b16 %v212
  %v788 = vunpack.c.l.b16 %v213
  %v789 = vunpack.c.l.b16 %v214
  %v790 = vunpack.c.l.b16 %v215
  %v791 = vunpack.c.l.b16 %v216
  %v792 = vunpack.c.l.b16 %v217
  %v793 = vunpack.c.l.b16 %v218
  %v794 = vunpack.c.l.b16 %v219
  %v795 = vunpack.c.l.b16 %v220
  %v796 = vunpack.c.l.b16 %v221
  %v797 = vunpack.c.l.b16 %v222
  %v798 = vunpack.c.l.b16 %v223
  %v799 = vunpack.c.l.b16 %v224
  %v800 = vunpack.c.l.b16 %v225
  %v801 = vunpack.c.l.b16 %v226
  %v802 = vunpack.c.l.b16 %v227
  %v803 = vunpack.c.l.b16 %v228
  %v804 = vunpack.c.l.b16 %v229
  %v805 = vunpack.c.l.b16 %v230
  %v806 = vunpack.c.l.b16 %v231
  %v807 = vunpack.c.l.b16 %v232
  %v808 = vunpack.c.l.b16 %v233
  %v809 = vunpack.c.l.b16 %v234
  %v810 = vunpack.c.l.b16 %v235
  %v811 = vunpack.c.l.b16 %v236
  %v812 = vunpack.c.l.b16 %v237
  %v813 = vunpack.c.l.b16 %v238
  %v814 = vunpack.c.l.b16 %v239
  %v815 = vunpack.c.l.b16 %v240
  %v816 = vunpack.c.l.b16 %v241
  %v817 = vunpack.c.l.b16 %v242
  %v818 = vunpack.c.l.b16 %v243
  %v819 = vunpack.c.l.b16 %v244
  %v820 = vunpack.c.l.b16 %v245
  %v821 = vunpack.c.l.b16 %v246
  %v822 = vunpack.c.l.b16 %v247
  %v823 = vunpack.c.l.b16 %v248
  %v824 = vunpack.c.l.b16 %v249
  %v825 = vunpack.c.l.b16 %v250
  %v826 = vunpack.c.l.b16 %v251
  %v827 = vunpack.c.l.b16 %v252
  %v828 = vunpack.c.l.b16 %v253
  %v829 = vunpack.c.l.b16 %v254
  %v830 = vunpack.c.l.b16 %v255
  %v831 = vunpack.c.l.b16 %v256
  %v832 = vunpack.c.l.b16 %v257
  %v833 = vunpack.c.l.b16 %v258
  %v834 = vunpack.c.l.b16 %v259
  %v835 = vunpack.c.l.b16 %v260
  %v836 = vunpack.c.l.b16 %v261
  %v837 = vunpack.c.l.b16 %v262
  %v838 = vunpack.c.l.b16 %v263
  %v839 = vunpack.c.l.b16 %v264
  %v840 = vunpack.c.l.b16 %v265
  %v841 = vunpack.c.l.b16 %v266
  %v842 = vunpack.c.l.b16 %v267
  %v843 = vunpack.c.l.b16 %v268
  %v844 = vunpack.c.l.b16 %v269
  %v845 = vunpack.c.l.b16 %v270
  %v846 = vunpack.c.l.b16 %v271
  %v847 = vunpack.c.l.b16 %v272
  %v848 = vunpack.c.l.b16 %v273
  %v849 = vunpack.c.l.b16 %v274
  %v850 = vunpack.c.l.b16 %v275
  %v851 = vunpack.c.l.b16 %v276
  %v852 = vunpack.c.l.b16 %v277
  %v853 = vunpack.c.l.b16 %v278
  %v854 = vunpack.c.l.b16 %v279
  %v855 = vunpack.c.l.b16 %v280
  %v856 = vunpack.c.l.b16 %v281
  %v857 = vunpack.c.l.b16 %v282
  %v858 = vunpack.c.l.b16 %v283
  %v859 = vunpack.c.l.b16 %v284
  %v860 = vpack.c.b16 %v605, %v604
  %v861 = vpack.c.b16 %v607, %v606
  %v862 = vpack.c.b16 %v609, %v608
  %v863 = vpack.c.b16 %v611, %v610
  %v864 = vpack.c.b16 %v613, %v612
  %v865 = vpack.c.b16 %v615, %v614
  %v866 = vpack.c.b16 %v617, %v616
  %v867 = vpack.c.b16 %v619, %v618
  %v868 = vpack.c.b16 %v621, %v620
  %v869 = vpack.c.b16 %v623, %v622
  %v870 = vpack.c.b16 %v625, %v624
  %v871 = vpack.c.b16 %v627, %v626
  %v872 = vpack.c.b16 %v629, %v628
  %v873 = vpack.c.b16 %v631, %v630
  %v874 = vpack.c.b16 %v633, %v632
  %v875 = vpack.c.b16 %v635, %v634
  %v876 = vpack.c.b16 %v637, %v636
  %v877 = vpack.c.b16 %v639, %v638
  %v878 = vpack.c.b16 %v641, %v640
  %v879 = vpack.c.b16 %v643, %v642
  %v880 = vpack.c.b16 %v645, %v644
  %v881 = vpack.c.b16 %v647, %v646
  %v882 = vpack.c.b16 %v649, %v648
  %v883 = vpack.c.b16 %v651, %v650
  %v884 = vpack.c.b16 %v653, %v652
  %v885 = vpack.c.b16 %v655, %v654
  %v886 = vpack.c.b16 %v657, %v656
  %v887 = vpack.c.b16 %v659, %v658
  %v888 = vpack.c.b16 %v661, %v660
  %v889 = vpack.c.b16 %v663, %v662
  %v890 = vpack.c.b16 %v665, %v664
  %v891 = vpack.c.b16 %v667, %v666
  %v892 = vpack.c.b16 %v669, %v668
  %v893 = vpack.c.b16 %v671, %v670
  %v894 = vpack.c.b16 %v673, %v672
  %v895 = vpack.c.b16 %v675, %v674
  %v896 = vpack.c.b16 %v677, %v676
  %v897 = vpack.c.b16 %v679, %v678
  %v898 = vpack.c.b16 %v681, %v680
  %v899 = vpack.c.b16 %v683, %v682
  %v900 = vpack.c.b16 %v685, %v684
  %v901 = vpack.c.b16 %v687, %v686
  %v902 = vpack.c.b16 %v689, %v688
  %v903 = vpack.c.b16 %v691, %v690
  %v904 = vpack.c.b16 %v693, %v692
  %v905 = vpack.c.b16 %v695, %v694
  %v906 = vpack.c.b16 %v697, %v696
  %v907 = vpack.c.b16 %v699, %v698
  %v908 = vpack.c.b16 %v701, %v700
  %v909 = vpack.c.b16 %v703, %v702
  %v910 = vpack.c.b16 %v705, %v704
  %v911 = vpack.c.b16 %v707, %v706
  %v912 = vpack.c.b16 %v709, %v708
  %v913 = vpack.c.b16 %v711, %v710
  %v914 = vpack.c.b16 %v713, %v712
  %v915 = vpack.c.b16 %v715, %v714
  %v916 = vpack.c.b16 %v717, %v716
  %v917 = vpack.c.b16 %v719, %v718
  %v918 = vpack.c.b16 %v721, %v720
  %v919 = vpack.c.b16 %v723, %v722
  %v920 = vpack.c.b16 %v725, %v724
  %v921 = vpack.c.b16 %v727, %v726
  %v922 = vpack.c.b16 %v729, %v728
  %v923 = vpack.c.b16 %v731, %v730
  %v924 = vpack.c.b16 %v733, %v732
  %v925 = vpack.c.b16 %v735, %v734
  %v926 = vpack.c.b16 %v737, %v736
  %v927 = vpack.c.b16 %v739, %v738
  %v928 = vpack.c.b16 %v741, %v740
  %v929 = vpack.c.b16 %v743, %v742
  %v930 = vpack.c.b16 %v745, %v744
  %v931 = vpack.c.b16 %v747, %v746
  %v932 = vpack.c.b16 %v749, %v748
  %v933 = vpack.c.b16 %v751, %v750
  %v934 = vpack.c.b16 %v753, %v752
  %v935 = vpack.c.b16 %v755, %v754
  %v936 = vpack.c.b16 %v757, %v756
  %v937 = vpack.c.b16 %v759, %v758
  %v938 = vpack.c.b16 %v761, %v760
  %v939 = vpack.c.b16 %v763, %v762
  %v940 = vpack.c.b16 %v765, %v764
  %v941 = vpack.c.b16 %v767, %v766
  %v942 = vpack.c.b16 %v769, %v768
  %v943 = vpack.c.b16 %v771, %v770
  %v944 = vpack.c.b16 %v773, %v772
  %v945 = vpack.c.b16 %v775, %v774
  %v946 = vpack.c.b16 %v777, %v776
  %v947 = vpack.c.b16 %v779, %v778
  %v948 = vpack.c.b16 %v781, %v780
  %v949 = vpack.c.b16 %v783, %v782
  %v950 = vpack.c.b16 %v785, %v784
  %v951 = vpack.c.b16 %v787, %v786
  %v952 = vpack.c.b16 %v789, %v788
  %v953 = vpack.c.b16 %v791, %v790
  %v954 = vpack.c.b16 %v793, %v792
  %v955 = vpack.c.b16 %v795, %v794
  %v956 = vpack.c.b16 %v797, %v796
  %v957 = vpack.c.b16 %v799, %v798
  %v958 = vpack.c.b16 %v801, %v800
  %v959 = vpack.c.b16 %v803, %v802
  %v960 = vpack.c.b16 %v805, %v804
  %v961 = vpack.c.b16 %v807, %v806
  %v962 = vpack.c.b16 %v809, %v808
  %v963 = vpack.c.b16 %v811, %v810
  %v964 = vpack.c.b16 %v813, %v812
  %v965 = vpack.c.b16 %v815, %v814
  %v966 = vpack.c.b16 %v817, %v816
  %v967 = vpack.c.b16 %v819, %v818
  %v968 = vpack.c.b16 %v821, %v820
  %v969 = vpack.c.b16 %v823, %v822
  %v970 = vpack.c.b16 %v825, %v824
  %v971 = vpack.c.b16 %v827, %v826
  %v972 = vpack.c.b16 %v829, %v828
  %v973 = vpack.c.b16 %v831, %v830
  %v974 = vpack.c.b16 %v833, %v832
  %v975 = vpack.c.b16 %v835, %v834
  %v976 = vpack.c.b16 %v837, %v836
  %v977 = vpack.c.b16 %v839, %v838
  %v978 = vpack.c.b16 %v841, %v840
  %v979 = vpack.c.b16 %v843, %v842
  %v980 = vpack.c.b16 %v845, %v844
  %v981 = vpack.c.b16 %v847, %v846
  %v982 = vpack.c.b16 %v849, %v848
  %v983 = vpack.c.b16 %v851, %v850
  %v984 = vpack.c.b16 %v853, %v852
  %v985 = vpack.c.b16 %v855, %v854
  %v986 = vpack.c.b16 %v857, %v856
  %v987 = vpack.c.b16 %v859, %v858
  %1116 = vmatprep.subr.bf16.mxu0 0
  %1117 = vmatpush1.bf16.msra.mxu0 %v860
  %1118 = vmatprep.subr.bf16.mxu0 0
  %1119 = vmatpush1.bf16.msra.mxu0 %v861
  %1120 = vmatprep.subr.bf16.mxu0 0
  %1121 = vmatpush1.bf16.msra.mxu0 %v862
  %1122 = vmatprep.subr.bf16.mxu0 0
  %1123 = vmatpush1.bf16.msra.mxu0 %v863
  %1124 = vmatprep.subr.bf16.mxu0 0
  %1125 = vmatpush1.bf16.msra.mxu0 %v864
  %1126 = vmatprep.subr.bf16.mxu0 0
  %1127 = vmatpush1.bf16.msra.mxu0 %v865
  %1128 = vmatprep.subr.bf16.mxu0 0
  %1129 = vmatpush1.bf16.msra.mxu0 %v866
  %1130 = vmatprep.subr.bf16.mxu0 0
  %1131 = vmatpush1.bf16.msra.mxu0 %v867
  %1132 = vmatprep.subr.bf16.mxu0 0
  %1133 = vmatpush1.bf16.msra.mxu0 %v868
  %1134 = vmatprep.subr.bf16.mxu0 0
  %1135 = vmatpush1.bf16.msra.mxu0 %v869
  %1136 = vmatprep.subr.bf16.mxu0 0
  %1137 = vmatpush1.bf16.msra.mxu0 %v870
  %1138 = vmatprep.subr.bf16.mxu0 0
  %1139 = vmatpush1.bf16.msra.mxu0 %v871
  %1140 = vmatprep.subr.bf16.mxu0 0
  %1141 = vmatpush1.bf16.msra.mxu0 %v872
  %1142 = vmatprep.subr.bf16.mxu0 0
  %1143 = vmatpush1.bf16.msra.mxu0 %v873
  %1144 = vmatprep.subr.bf16.mxu0 0
  %1145 = vmatpush1.bf16.msra.mxu0 %v874
  %1146 = vmatprep.subr.bf16.mxu0 0
  %1147 = vmatpush1.bf16.msra.mxu0 %v875
  %1148 = vmatprep.mubr.bf16.mxu0 %v317
  %1149 = vmatmul.mubr.bf16.gmra.mrb[0].mxu0 %v316
  %v1150 = vpop.f32.mrb[0].mxu0
  %v1151 = vadd.f32 %v290, %v1150
  %v1152 = vpop.f32.mrb[0].mxu0
  %v1153 = vpop.f32.mrb[0].mxu0
  %v1154 = vpop.f32.mrb[0].mxu0
  %1155 = vdwg.mxu0
  %1156 = vmatprep.subr.bf16.mxu0 0
  %1157 = vmatpush1.bf16.msra.mxu0 %v876
  %1158 = vmatprep.subr.bf16.mxu0 0
  %1159 = vmatpush1.bf16.msra.mxu0 %v877
  %1160 = vmatprep.subr.bf16.mxu0 0
  %1161 = vmatpush1.bf16.msra.mxu0 %v878
  %1162 = vmatprep.subr.bf16.mxu0 0
  %1163 = vmatpush1.bf16.msra.mxu0 %v879
  %1164 = vmatprep.subr.bf16.mxu0 0
  %1165 = vmatpush1.bf16.msra.mxu0 %v880
  %1166 = vmatprep.subr.bf16.mxu0 0
  %1167 = vmatpush1.bf16.msra.mxu0 %v881
  %1168 = vmatprep.subr.bf16.mxu0 0
  %1169 = vmatpush1.bf16.msra.mxu0 %v882
  %1170 = vmatprep.subr.bf16.mxu0 0
  %1171 = vmatpush1.bf16.msra.mxu0 %v883
  %1172 = vmatprep.subr.bf16.mxu0 0
  %1173 = vmatpush1.bf16.msra.mxu0 %v884
  %1174 = vmatprep.subr.bf16.mxu0 0
  %1175 = vmatpush1.bf16.msra.mxu0 %v885
  %1176 = vmatprep.subr.bf16.mxu0 0
  %1177 = vmatpush1.bf16.msra.mxu0 %v886
  %1178 = vmatprep.subr.bf16.mxu0 0
  %1179 = vmatpush1.bf16.msra.mxu0 %v887
  %1180 = vmatprep.subr.bf16.mxu0 0
  %1181 = vmatpush1.bf16.msra.mxu0 %v888
  %1182 = vmatprep.subr.bf16.mxu0 0
  %1183 = vmatpush1.bf16.msra.mxu0 %v889
  %1184 = vmatprep.subr.bf16.mxu0 0
  %1185 = vmatpush1.bf16.msra.mxu0 %v890
  %1186 = vmatprep.subr.bf16.mxu0 0
  %1187 = vmatpush1.bf16.msra.mxu0 %v891
  %1188 = vmatprep.mubr.bf16.mxu0 %v319
  %1189 = vmatmul.mubr.bf16.gmra.mrb[0].mxu0 %v318
  %v1190 = vpop.f32.mrb[0].mxu0
  %v1191 = vadd.f32 %v1151, %v1190
  %v1192 = vpop.f32.mrb[0].mxu0
  %v1193 = vpop.f32.mrb[0].mxu0
  %v1194 = vpop.f32.mrb[0].mxu0
  %1195 = vdwg.mxu0
  %1196 = vmatprep.subr.bf16.mxu0 0
  %1197 = vmatpush1.bf16.msra.mxu0 %v892
  %1198 = vmatprep.subr.bf16.mxu0 0
  %1199 = vmatpush1.bf16.msra.mxu0 %v893
  %1200 = vmatprep.subr.bf16.mxu0 0
  %1201 = vmatpush1.bf16.msra.mxu0 %v894
  %1202 = vmatprep.subr.bf16.mxu0 0
  %1203 = vmatpush1.bf16.msra.mxu0 %v895
  %1204 = vmatprep.subr.bf16.mxu0 0
  %1205 = vmatpush1.bf16.msra.mxu0 %v896
  %1206 = vmatprep.subr.bf16.mxu0 0
  %1207 = vmatpush1.bf16.msra.mxu0 %v897
  %1208 = vmatprep.subr.bf16.mxu0 0
  %1209 = vmatpush1.bf16.msra.mxu0 %v898
  %1210 = vmatprep.subr.bf16.mxu0 0
  %1211 = vmatpush1.bf16.msra.mxu0 %v899
  %1212 = vmatprep.subr.bf16.mxu0 0
  %1213 = vmatpush1.bf16.msra.mxu0 %v900
  %1214 = vmatprep.subr.bf16.mxu0 0
  %1215 = vmatpush1.bf16.msra.mxu0 %v901
  %1216 = vmatprep.subr.bf16.mxu0 0
  %1217 = vmatpush1.bf16.msra.mxu0 %v902
  %1218 = vmatprep.subr.bf16.mxu0 0
  %1219 = vmatpush1.bf16.msra.mxu0 %v903
  %1220 = vmatprep.subr.bf16.mxu0 0
  %1221 = vmatpush1.bf16.msra.mxu0 %v904
  %1222 = vmatprep.subr.bf16.mxu0 0
  %1223 = vmatpush1.bf16.msra.mxu0 %v905
  %1224 = vmatprep.subr.bf16.mxu0 0
  %1225 = vmatpush1.bf16.msra.mxu0 %v906
  %1226 = vmatprep.subr.bf16.mxu0 0
  %1227 = vmatpush1.bf16.msra.mxu0 %v907
  %1228 = vmatprep.mubr.bf16.mxu0 %v321
  %1229 = vmatmul.mubr.bf16.gmra.mrb[0].mxu0 %v320
  %v1230 = vpop.f32.mrb[0].mxu0
  %v1231 = vadd.f32 %v1191, %v1230
  %v1232 = vpop.f32.mrb[0].mxu0
  %v1233 = vpop.f32.mrb[0].mxu0
  %v1234 = vpop.f32.mrb[0].mxu0
  %1235 = vdwg.mxu0
  %1236 = vmatprep.subr.bf16.mxu0 0
  %1237 = vmatpush1.bf16.msra.mxu0 %v908
  %1238 = vmatprep.subr.bf16.mxu0 0
  %1239 = vmatpush1.bf16.msra.mxu0 %v909
  %1240 = vmatprep.subr.bf16.mxu0 0
  %1241 = vmatpush1.bf16.msra.mxu0 %v910
  %1242 = vmatprep.subr.bf16.mxu0 0
  %1243 = vmatpush1.bf16.msra.mxu0 %v911
  %1244 = vmatprep.subr.bf16.mxu0 0
  %1245 = vmatpush1.bf16.msra.mxu0 %v912
  %1246 = vmatprep.subr.bf16.mxu0 0
  %1247 = vmatpush1.bf16.msra.mxu0 %v913
  %1248 = vmatprep.subr.bf16.mxu0 0
  %1249 = vmatpush1.bf16.msra.mxu0 %v914
  %1250 = vmatprep.subr.bf16.mxu0 0
  %1251 = vmatpush1.bf16.msra.mxu0 %v915
  %1252 = vmatprep.subr.bf16.mxu0 0
  %1253 = vmatpush1.bf16.msra.mxu0 %v916
  %1254 = vmatprep.subr.bf16.mxu0 0
  %1255 = vmatpush1.bf16.msra.mxu0 %v917
  %1256 = vmatprep.subr.bf16.mxu0 0
  %1257 = vmatpush1.bf16.msra.mxu0 %v918
  %1258 = vmatprep.subr.bf16.mxu0 0
  %1259 = vmatpush1.bf16.msra.mxu0 %v919
  %1260 = vmatprep.subr.bf16.mxu0 0
  %1261 = vmatpush1.bf16.msra.mxu0 %v920
  %1262 = vmatprep.subr.bf16.mxu0 0
  %1263 = vmatpush1.bf16.msra.mxu0 %v921
  %1264 = vmatprep.subr.bf16.mxu0 0
  %1265 = vmatpush1.bf16.msra.mxu0 %v922
  %1266 = vmatprep.subr.bf16.mxu0 0
  %1267 = vmatpush1.bf16.msra.mxu0 %v923
  %1268 = vmatprep.mubr.bf16.mxu0 %v323
  %1269 = vmatmul.mubr.bf16.gmra.mrb[0].mxu0 %v322
  %v1270 = vpop.f32.mrb[0].mxu0
  %v1271 = vadd.f32 %v1231, %v1270
  %v1272 = vpop.f32.mrb[0].mxu0
  %v1273 = vpop.f32.mrb[0].mxu0
  %v1274 = vpop.f32.mrb[0].mxu0
  %1275 = vdwg.mxu0
  %1276 = vmatprep.subr.bf16.mxu0 0
  %1277 = vmatpush1.bf16.msra.mxu0 %v924
  %1278 = vmatprep.subr.bf16.mxu0 0
  %1279 = vmatpush1.bf16.msra.mxu0 %v925
  %1280 = vmatprep.subr.bf16.mxu0 0
  %1281 = vmatpush1.bf16.msra.mxu0 %v926
  %1282 = vmatprep.subr.bf16.mxu0 0
  %1283 = vmatpush1.bf16.msra.mxu0 %v927
  %1284 = vmatprep.subr.bf16.mxu0 0
  %1285 = vmatpush1.bf16.msra.mxu0 %v928
  %1286 = vmatprep.subr.bf16.mxu0 0
  %1287 = vmatpush1.bf16.msra.mxu0 %v929
  %1288 = vmatprep.subr.bf16.mxu0 0
  %1289 = vmatpush1.bf16.msra.mxu0 %v930
  %1290 = vmatprep.subr.bf16.mxu0 0
  %1291 = vmatpush1.bf16.msra.mxu0 %v931
  %1292 = vmatprep.subr.bf16.mxu0 0
  %1293 = vmatpush1.bf16.msra.mxu0 %v932
  %1294 = vmatprep.subr.bf16.mxu0 0
  %1295 = vmatpush1.bf16.msra.mxu0 %v933
  %1296 = vmatprep.subr.bf16.mxu0 0
  %1297 = vmatpush1.bf16.msra.mxu0 %v934
  %1298 = vmatprep.subr.bf16.mxu0 0
  %1299 = vmatpush1.bf16.msra.mxu0 %v935
  %1300 = vmatprep.subr.bf16.mxu0 0
  %1301 = vmatpush1.bf16.msra.mxu0 %v936
  %1302 = vmatprep.subr.bf16.mxu0 0
  %1303 = vmatpush1.bf16.msra.mxu0 %v937
  %1304 = vmatprep.subr.bf16.mxu0 0
  %1305 = vmatpush1.bf16.msra.mxu0 %v938
  %1306 = vmatprep.subr.bf16.mxu0 0
  %1307 = vmatpush1.bf16.msra.mxu0 %v939
  %1308 = vmatprep.mubr.bf16.mxu0 %v325
  %1309 = vmatmul.mubr.bf16.gmra.mrb[0].mxu0 %v324
  %v1310 = vpop.f32.mrb[0].mxu0
  %v1311 = vadd.f32 %v1271, %v1310
  %v1312 = vpop.f32.mrb[0].mxu0
  %v1313 = vpop.f32.mrb[0].mxu0
  %v1314 = vpop.f32.mrb[0].mxu0
  %1315 = vdwg.mxu0
  %1316 = vmatprep.subr.bf16.mxu0 0
  %1317 = vmatpush1.bf16.msra.mxu0 %v940
  %1318 = vmatprep.subr.bf16.mxu0 0
  %1319 = vmatpush1.bf16.msra.mxu0 %v941
  %1320 = vmatprep.subr.bf16.mxu0 0
  %1321 = vmatpush1.bf16.msra.mxu0 %v942
  %1322 = vmatprep.subr.bf16.mxu0 0
  %1323 = vmatpush1.bf16.msra.mxu0 %v943
  %1324 = vmatprep.subr.bf16.mxu0 0
  %1325 = vmatpush1.bf16.msra.mxu0 %v944
  %1326 = vmatprep.subr.bf16.mxu0 0
  %1327 = vmatpush1.bf16.msra.mxu0 %v945
  %1328 = vmatprep.subr.bf16.mxu0 0
  %1329 = vmatpush1.bf16.msra.mxu0 %v946
  %1330 = vmatprep.subr.bf16.mxu0 0
  %1331 = vmatpush1.bf16.msra.mxu0 %v947
  %1332 = vmatprep.subr.bf16.mxu0 0
  %1333 = vmatpush1.bf16.msra.mxu0 %v948
  %1334 = vmatprep.subr.bf16.mxu0 0
  %1335 = vmatpush1.bf16.msra.mxu0 %v949
  %1336 = vmatprep.subr.bf16.mxu0 0
  %1337 = vmatpush1.bf16.msra.mxu0 %v950
  %1338 = vmatprep.subr.bf16.mxu0 0
  %1339 = vmatpush1.bf16.msra.mxu0 %v951
  %1340 = vmatprep.subr.bf16.mxu0 0
  %1341 = vmatpush1.bf16.msra.mxu0 %v952
  %1342 = vmatprep.subr.bf16.mxu0 0
  %1343 = vmatpush1.bf16.msra.mxu0 %v953
  %1344 = vmatprep.subr.bf16.mxu0 0
  %1345 = vmatpush1.bf16.msra.mxu0 %v954
  %1346 = vmatprep.subr.bf16.mxu0 0
  %1347 = vmatpush1.bf16.msra.mxu0 %v955
  %1348 = vmatprep.mubr.bf16.mxu0 %v327
  %1349 = vmatmul.mubr.bf16.gmra.mrb[0].mxu0 %v326
  %v1350 = vpop.f32.mrb[0].mxu0
  %v1351 = vadd.f32 %v1311, %v1350
  %v1352 = vpop.f32.mrb[0].mxu0
  %v1353 = vpop.f32.mrb[0].mxu0
  %v1354 = vpop.f32.mrb[0].mxu0
  %1355 = vdwg.mxu0
  %1356 = vmatprep.subr.bf16.mxu0 0
  %1357 = vmatpush1.bf16.msra.mxu0 %v956
  %1358 = vmatprep.subr.bf16.mxu0 0
  %1359 = vmatpush1.bf16.msra.mxu0 %v957
  %1360 = vmatprep.subr.bf16.mxu0 0
  %1361 = vmatpush1.bf16.msra.mxu0 %v958
  %1362 = vmatprep.subr.bf16.mxu0 0
  %1363 = vmatpush1.bf16.msra.mxu0 %v959
  %1364 = vmatprep.subr.bf16.mxu0 0
  %1365 = vmatpush1.bf16.msra.mxu0 %v960
  %1366 = vmatprep.subr.bf16.mxu0 0
  %1367 = vmatpush1.bf16.msra.mxu0 %v961
  %1368 = vmatprep.subr.bf16.mxu0 0
  %1369 = vmatpush1.bf16.msra.mxu0 %v962
  %1370 = vmatprep.subr.bf16.mxu0 0
  %1371 = vmatpush1.bf16.msra.mxu0 %v963
  %1372 = vmatprep.subr.bf16.mxu0 0
  %1373 = vmatpush1.bf16.msra.mxu0 %v964
  %1374 = vmatprep.subr.bf16.mxu0 0
  %1375 = vmatpush1.bf16.msra.mxu0 %v965
  %1376 = vmatprep.subr.bf16.mxu0 0
  %1377 = vmatpush1.bf16.msra.mxu0 %v966
  %1378 = vmatprep.subr.bf16.mxu0 0
  %1379 = vmatpush1.bf16.msra.mxu0 %v967
  %1380 = vmatprep.subr.bf16.mxu0 0
  %1381 = vmatpush1.bf16.msra.mxu0 %v968
  %1382 = vmatprep.subr.bf16.mxu0 0
  %1383 = vmatpush1.bf16.msra.mxu0 %v969
  %1384 = vmatprep.subr.bf16.mxu0 0
  %1385 = vmatpush1.bf16.msra.mxu0 %v970
  %1386 = vmatprep.subr.bf16.mxu0 0
  %1387 = vmatpush1.bf16.msra.mxu0 %v971
  %1388 = vmatprep.mubr.bf16.mxu0 %v329
  %1389 = vmatmul.mubr.bf16.gmra.mrb[0].mxu0 %v328
  %v1390 = vpop.f32.mrb[0].mxu0
  %v1391 = vadd.f32 %v1351, %v1390
  %v1392 = vpop.f32.mrb[0].mxu0
  %v1393 = vpop.f32.mrb[0].mxu0
  %v1394 = vpop.f32.mrb[0].mxu0
  %1395 = vdwg.mxu0
  %1396 = vmatprep.subr.bf16.mxu0 0
  %1397 = vmatpush1.bf16.msra.mxu0 %v972
  %1398 = vmatprep.subr.bf16.mxu0 0
  %1399 = vmatpush1.bf16.msra.mxu0 %v973
  %1400 = vmatprep.subr.bf16.mxu0 0
  %1401 = vmatpush1.bf16.msra.mxu0 %v974
  %1402 = vmatprep.subr.bf16.mxu0 0
  %1403 = vmatpush1.bf16.msra.mxu0 %v975
  %1404 = vmatprep.subr.bf16.mxu0 0
  %1405 = vmatpush1.bf16.msra.mxu0 %v976
  %1406 = vmatprep.subr.bf16.mxu0 0
  %1407 = vmatpush1.bf16.msra.mxu0 %v977
  %1408 = vmatprep.subr.bf16.mxu0 0
  %1409 = vmatpush1.bf16.msra.mxu0 %v978
  %1410 = vmatprep.subr.bf16.mxu0 0
  %1411 = vmatpush1.bf16.msra.mxu0 %v979
  %1412 = vmatprep.subr.bf16.mxu0 0
  %1413 = vmatpush1.bf16.msra.mxu0 %v980
  %1414 = vmatprep.subr.bf16.mxu0 0
  %1415 = vmatpush1.bf16.msra.mxu0 %v981
  %1416 = vmatprep.subr.bf16.mxu0 0
  %1417 = vmatpush1.bf16.msra.mxu0 %v982
  %1418 = vmatprep.subr.bf16.mxu0 0
  %1419 = vmatpush1.bf16.msra.mxu0 %v983
  %1420 = vmatprep.subr.bf16.mxu0 0
  %1421 = vmatpush1.bf16.msra.mxu0 %v984
  %1422 = vmatprep.subr.bf16.mxu0 0
  %1423 = vmatpush1.bf16.msra.mxu0 %v985
  %1424 = vmatprep.subr.bf16.mxu0 0
  %1425 = vmatpush1.bf16.msra.mxu0 %v986
  %1426 = vmatprep.subr.bf16.mxu0 0
  %1427 = vmatpush1.bf16.msra.mxu0 %v987
  %1428 = vmatprep.mubr.bf16.mxu0 %v331
  %1429 = vmatmul.mubr.bf16.gmra.mrb[0].mxu0 %v330
  %v1430 = vpop.f32.mrb[0].mxu0
  %v1431 = vadd.f32 %v1391, %v1430
  %v1432 = vpop.f32.mrb[0].mxu0
  %v1433 = vpop.f32.mrb[0].mxu0
  %v1434 = vpop.f32.mrb[0].mxu0
  %1435 = vdwg.mxu0
  %v1436 = vmax.f32 %v1431, 0.0
  %v1437 = vpack.c.bf16 %v1436, %v1436
  %v1438 = vld [vmem:[%s3] sm:$0xff]
  %v1439 = vld [vmem:[%s3 + $0x8] sm:$0xf]
  %v1440 = vld [vmem:[%s3 + $0xc] sm:$0xff]
  %v1441 = vld [vmem:[%s3 + $0x14] sm:$0xf]
  %v1442 = vld [vmem:[%s3 + $0x18] sm:$0xff]
  %v1443 = vld [vmem:[%s3 + $0x20] sm:$0xf]
  %v1444 = vld [vmem:[%s3 + $0x24] sm:$0xff]
  %v1445 = vld [vmem:[%s3 + $0x2c] sm:$0xf]
  %v1446 = vld [vmem:[%s3 + $0x30] sm:$0xff]
  %v1447 = vld [vmem:[%s3 + $0x38] sm:$0xf]
  %v1448 = vld [vmem:[%s3 + $0x3c] sm:$0xff]
  %v1449 = vld [vmem:[%s3 + $0x44] sm:$0xf]
  %v1450 = vld [vmem:[%s3 + $0x48] sm:$0xff]
  %v1451 = vld [vmem:[%s3 + $0x50] sm:$0xf]
  %v1452 = vld [vmem:[%s3 + $0x54] sm:$0xff]
  %v1453 = vld [vmem:[%s3 + $0x5c] sm:$0xf]
  %v1454 = vld [vmem:[%s3 + $0x60] sm:$0xff]
  %v1455 = vld [vmem:[%s3 + $0x68] sm:$0xf]
  %v1456 = vld [vmem:[%s3 + $0x6c] sm:$0xff]
  %v1457 = vld [vmem:[%s3 + $0x74] sm:$0xf]
  %v1458 = vld [vmem:[%s3 + $0x78] sm:$0xff]
  %v1459 = vld [vmem:[%s3 + $0x80] sm:$0xf]
  %v1460 = vld [vmem:[%s3 + $0x84] sm:$0xff]
  %v1461 = vld [vmem:[%s3 + $0x8c] sm:$0xf]
  %v1462 = vld [vmem:[%s3 + $0x90] sm:$0xff]
  %v1463 = vld [vmem:[%s3 + $0x98] sm:$0xf]
  %v1464 = vld [vmem:[%s3 + $0x9c] sm:$0xff]
  %v1465 = vld [vmem:[%s3 + $0xa4] sm:$0xf]
  %v1466 = vld [vmem:[%s3 + $0xa8] sm:$0xff]
  %v1467 = vld [vmem:[%s3 + $0xb0] sm:$0xf]
  %v1468 = vld [vmem:[%s3 + $0xb4] sm:$0xff]
  %v1469 = vld [vmem:[%s3 + $0xbc] sm:$0xf]
  %v1470 = vld [vmem:[%s4] sm:$0x7]
  %v1472 = vlaneseq
  %v1473 = vshrl.u32 %v1472, 7
  %v1474 = vsub.s32 0, %v1473
  %v1475 = vrot.slane %v1470, %v1474
  %v1476 = vlaneseq
  %v1477 = vshrl.u32 %v1476, 7
  %v1478 = vsub.s32 1, %v1477
  %v1479 = vrot.slane %v1470, %v1478
  %v1480 = vlaneseq
  %v1481 = vshrl.u32 %v1480, 7
  %v1482 = vsub.s32 2, %v1481
  %v1483 = vrot.slane %v1470, %v1482
  %v1519 = vunpack.c.l.b16 %v1438
  %v1520 = vunpack.c.h.b16 %v1438
  %v1521 = vunpack.c.l.b16 %v1439
  %v1522 = vunpack.c.l.b16 %v1440
  %v1523 = vunpack.c.h.b16 %v1440
  %v1524 = vunpack.c.l.b16 %v1441
  %v1525 = vunpack.c.l.b16 %v1442
  %v1526 = vunpack.c.h.b16 %v1442
  %v1527 = vunpack.c.l.b16 %v1443
  %v1528 = vunpack.c.l.b16 %v1444
  %v1529 = vunpack.c.h.b16 %v1444
  %v1530 = vunpack.c.l.b16 %v1445
  %v1531 = vunpack.c.l.b16 %v1446
  %v1532 = vunpack.c.h.b16 %v1446
  %v1533 = vunpack.c.l.b16 %v1447
  %v1534 = vunpack.c.l.b16 %v1448
  %v1535 = vunpack.c.h.b16 %v1448
  %v1536 = vunpack.c.l.b16 %v1449
  %v1537 = vunpack.c.l.b16 %v1450
  %v1538 = vunpack.c.h.b16 %v1450
  %v1539 = vunpack.c.l.b16 %v1451
  %v1540 = vunpack.c.l.b16 %v1452
  %v1541 = vunpack.c.h.b16 %v1452
  %v1542 = vunpack.c.l.b16 %v1453
  %v1543 = vunpack.c.l.b16 %v1454
  %v1544 = vunpack.c.h.b16 %v1454
  %v1545 = vunpack.c.l.b16 %v1455
  %v1546 = vunpack.c.l.b16 %v1456
  %v1547 = vunpack.c.h.b16 %v1456
  %v1548 = vunpack.c.l.b16 %v1457
  %v1549 = vunpack.c.l.b16 %v1458
  %v1550 = vunpack.c.h.b16 %v1458
  %v1551 = vunpack.c.l.b16 %v1459
  %v1552 = vunpack.c.l.b16 %v1460
  %v1553 = vunpack.c.h.b16 %v1460
  %v1554 = vunpack.c.l.b16 %v1461
  %v1555 = vunpack.c.l.b16 %v1462
  %v1556 = vunpack.c.h.b16 %v1462
  %v1557 = vunpack.c.l.b16 %v1463
  %v1558 = vunpack.c.l.b16 %v1464
  %v1559 = vunpack.c.h.b16 %v1464
  %v1560 = vunpack.c.l.b16 %v1465
  %v1561 = vunpack.c.l.b16 %v1466
  %v1562 = vunpack.c.h.b16 %v1466
  %v1563 = vunpack.c.l.b16 %v1467
  %v1564 = vunpack.c.l.b16 %v1468
  %v1565 = vunpack.c.h.b16 %v1468
  %v1566 = vunpack.c.l.b16 %v1469
  %v1567 = vpack.c.b16 %v1522, %v1519
  %v1568 = vpack.c.b16 %v1523, %v1520
  %v1569 = vpack.c.b16 %v1524, %v1521
  %v1570 = vpack.c.b16 %v1528, %v1525
  %v1571 = vpack.c.b16 %v1529, %v1526
  %v1572 = vpack.c.b16 %v1530, %v1527
  %v1573 = vpack.c.b16 %v1534, %v1531
  %v1574 = vpack.c.b16 %v1535, %v1532
  %v1575 = vpack.c.b16 %v1536, %v1533
  %v1576 = vpack.c.b16 %v1540, %v1537
  %v1577 = vpack.c.b16 %v1541, %v1538
  %v1578 = vpack.c.b16 %v1542, %v1539
  %v1579 = vpack.c.b16 %v1546, %v1543
  %v1580 = vpack.c.b16 %v1547, %v1544
  %v1581 = vpack.c.b16 %v1548, %v1545
  %v1582 = vpack.c.b16 %v1552, %v1549
  %v1583 = vpack.c.b16 %v1553, %v1550
  %v1584 = vpack.c.b16 %v1554, %v1551
  %v1585 = vpack.c.b16 %v1558, %v1555
  %v1586 = vpack.c.b16 %v1559, %v1556
  %v1587 = vpack.c.b16 %v1560, %v1557
  %v1588 = vpack.c.b16 %v1564, %v1561
  %v1589 = vpack.c.b16 %v1565, %v1562
  %v1590 = vpack.c.b16 %v1566, %v1563
  %1615 = vmatprep.subr.bf16.mxu0 %v1568
  %1616 = vmatpush1.bf16.msra.mxu0 %v1567
  %1617 = vmatprep.subr.bf16.mxu0 %v1571
  %1618 = vmatpush1.bf16.msra.mxu0 %v1570
  %1619 = vmatprep.subr.bf16.mxu0 %v1574
  %1620 = vmatpush1.bf16.msra.mxu0 %v1573
  %1621 = vmatprep.subr.bf16.mxu0 %v1577
  %1622 = vmatpush1.bf16.msra.mxu0 %v1576
  %1623 = vmatprep.subr.bf16.mxu0 %v1580
  %1624 = vmatpush1.bf16.msra.mxu0 %v1579
  %1625 = vmatprep.subr.bf16.mxu0 %v1583
  %1626 = vmatpush1.bf16.msra.mxu0 %v1582
  %1627 = vmatprep.subr.bf16.mxu0 %v1586
  %1628 = vmatpush1.bf16.msra.mxu0 %v1585
  %1629 = vmatprep.subr.bf16.mxu0 %v1589
  %1630 = vmatpush1.bf16.msra.mxu0 %v1588
  %1631 = vmatprep.subr.bf16.mxu0 0
  %1632 = vmatpush1.bf16.msra.mxu0 0
  %1633 = vmatprep.subr.bf16.mxu0 0
  %1634 = vmatpush1.bf16.msra.mxu0 0
  %1635 = vmatprep.subr.bf16.mxu0 0
  %1636 = vmatpush1.bf16.msra.mxu0 0
  %1637 = vmatprep.subr.bf16.mxu0 0
  %1638 = vmatpush1.bf16.msra.mxu0 0
  %1639 = vmatprep.subr.bf16.mxu0 0
  %1640 = vmatpush1.bf16.msra.mxu0 0
  %1641 = vmatprep.subr.bf16.mxu0 0
  %1642 = vmatpush1.bf16.msra.mxu0 0
  %1643 = vmatprep.subr.bf16.mxu0 0
  %1644 = vmatpush1.bf16.msra.mxu0 0
  %1645 = vmatprep.subr.bf16.mxu0 0
  %1646 = vmatpush1.bf16.msra.mxu0 0
  %1647 = vmatprep.mubr.bf16.mxu0 0
  %1648 = vmatmul.mubr.bf16.gmra.mrb[0].mxu0 %v1437
  %v1649 = vpop.f32.mrb[0].mxu0
  %v1650 = vadd.f32 %v1475, %v1649
  %v1651 = vpop.f32.mrb[0].mxu0
  %v1652 = vadd.f32 %v1479, %v1651
  %v1653 = vpop.f32.mrb[0].mxu0
  %v1654 = vpop.f32.mrb[0].mxu0
  %1655 = vdwg.mxu0
  %1656 = vmatprep.subr.bf16.mxu0 0
  %1657 = vmatpush1.bf16.msra.mxu0 %v1569
  %1658 = vmatprep.subr.bf16.mxu0 0
  %1659 = vmatpush1.bf16.msra.mxu0 %v1572
  %1660 = vmatprep.subr.bf16.mxu0 0
  %1661 = vmatpush1.bf16.msra.mxu0 %v1575
  %1662 = vmatprep.subr.bf16.mxu0 0
  %1663 = vmatpush1.bf16.msra.mxu0 %v1578
  %1664 = vmatprep.subr.bf16.mxu0 0
  %1665 = vmatpush1.bf16.msra.mxu0 %v1581
  %1666 = vmatprep.subr.bf16.mxu0 0
  %1667 = vmatpush1.bf16.msra.mxu0 %v1584
  %1668 = vmatprep.subr.bf16.mxu0 0
  %1669 = vmatpush1.bf16.msra.mxu0 %v1587
  %1670 = vmatprep.subr.bf16.mxu0 0
  %1671 = vmatpush1.bf16.msra.mxu0 %v1590
  %1672 = vmatprep.subr.bf16.mxu0 0
  %1673 = vmatpush1.bf16.msra.mxu0 0
  %1674 = vmatprep.subr.bf16.mxu0 0
  %1675 = vmatpush1.bf16.msra.mxu0 0
  %1676 = vmatprep.subr.bf16.mxu0 0
  %1677 = vmatpush1.bf16.msra.mxu0 0
  %1678 = vmatprep.subr.bf16.mxu0 0
  %1679 = vmatpush1.bf16.msra.mxu0 0
  %1680 = vmatprep.subr.bf16.mxu0 0
  %1681 = vmatpush1.bf16.msra.mxu0 0
  %1682 = vmatprep.subr.bf16.mxu0 0
  %1683 = vmatpush1.bf16.msra.mxu0 0
  %1684 = vmatprep.subr.bf16.mxu0 0
  %1685 = vmatpush1.bf16.msra.mxu0 0
  %1686 = vmatprep.subr.bf16.mxu0 0
  %1687 = vmatpush1.bf16.msra.mxu0 0
  %1688 = vmatprep.mubr.bf16.mxu0 0
  %1689 = vmatmul.mubr.bf16.gmra.mrb[0].mxu0 %v1437
  %v1690 = vpop.f32.mrb[0].mxu0
  %v1691 = vadd.f32 %v1483, %v1690
  %v1692 = vpop.f32.mrb[0].mxu0
  %v1693 = vpop.f32.mrb[0].mxu0
  %v1694 = vpop.f32.mrb[0].mxu0
  %1695 = vdwg.mxu0
  %1696 = vst [vmem:[%s5] sm:$0xff] %v1650
  %1697 = vst [vmem:[%s5 + $0x8] sm:$0xff] %v1652
  %1698 = vst [vmem:[%s5 + $0x10] sm:$0xff] %v1691
  // Predicated region
  $region22: #{encoder_rnn_forward.6} parent=0 // pred_check
    _
  $region23: #{encoder_rnn_forward.6} parent=0 // pred_check_branch
    %1700 = sbr.rel (0) target = $region25
  $region24: #{encoder_rnn_forward.6} parent=0 // pred_region
    _
  $region25: #{encoder_rnn_forward.6} parent=0 // pred_fallthru
    _
  // Predicated region
  $region26: #{encoder_rnn_forward.6} parent=0 // pred_check
    _
  $region27: #{encoder_rnn_forward.6} parent=0 // pred_check_branch
    %1702 = sbr.rel (0) target = $region29
  $region28: #{encoder_rnn_forward.6} parent=0 // pred_region
    _
  $region29: #{encoder_rnn_forward.6} parent=0 // pred_fallthru
    _

// kernel: encoder_rnn_forward.5
$region0: #{encoder_rnn_forward.5}
  #allocation0 [shape = 'u32[]', space=smem, size = 0x4, offset = 0x4, fixed_abs, tag = 'smem constant byte address 0x4 - core index']
  #allocation1 [shape = 'u32[144,128]{1,0:T(1,128)}', space=vmem, size = 0x12000, scoped, tag = 'internal scratch']
  %s0 = inlined_call_operand.vmem [shape: bf16[128,2000], index: 0, kind: input, shape index: {}]
  %s1 = inlined_call_operand.vmem [shape: bf16[2000,512], index: 1, kind: input, shape index: {}]
  %s2 = inlined_call_operand.vmem [shape: f32[1,128], index: 2, kind: input, shape index: {}]
  %s3 = inlined_call_operand.vmem [shape: bf16[128,128], index: 3, kind: output, shape index: {}]
  %s4 = sld [smem:[#allocation0]]
  $region22: #{encoder_rnn_forward.5} parent=0
    _
  %s6 = ssub.s32 1, %s4
  %s7 = scalar_select 0, %s6, %s4
  // Predicated region
  $region2: #{encoder_rnn_forward.5} parent=0 // pred_check
    _
  $region3: #{encoder_rnn_forward.5} parent=0 // pred_check_branch
    %9 = sbr.rel (0) target = $region5
  $region4: #{encoder_rnn_forward.5} parent=0 // pred_region
    _
  $region5: #{encoder_rnn_forward.5} parent=0 // pred_fallthru
    _
  // Predicated region
  $region6: #{encoder_rnn_forward.5} parent=0 // pred_check
    _
  $region7: #{encoder_rnn_forward.5} parent=0 // pred_check_branch
    %11 = sbr.rel (0) target = $region9
  $region8: #{encoder_rnn_forward.5} parent=0 // pred_region
    _
  $region9: #{encoder_rnn_forward.5} parent=0 // pred_fallthru
    _
  // Predicated region
  $region10: #{encoder_rnn_forward.5} parent=0 // pred_check
    _
  $region11: #{encoder_rnn_forward.5} parent=0 // pred_check_branch
    %13 = sbr.rel (0) target = $region13
  $region12: #{encoder_rnn_forward.5} parent=0 // pred_region
    _
  $region13: #{encoder_rnn_forward.5} parent=0 // pred_fallthru
    _
  %v15 = vld [vmem:[%s0] sm:$0xff]
  %v16 = vld [vmem:[%s0 + $0x8] sm:$0xff]
  %v17 = vld [vmem:[%s0 + $0x10] sm:$0xff]
  %v18 = vld [vmem:[%s0 + $0x18] sm:$0xff]
  %v19 = vld [vmem:[%s0 + $0x20] sm:$0xff]
  %v20 = vld [vmem:[%s0 + $0x28] sm:$0xff]
  %v21 = vld [vmem:[%s0 + $0x30] sm:$0xff]
  %v22 = vld [vmem:[%s0 + $0x38] sm:$0xff]
  %v23 = vld [vmem:[%s0 + $0x40] sm:$0xff]
  %v24 = vld [vmem:[%s0 + $0x48] sm:$0xff]
  %v25 = vld [vmem:[%s0 + $0x50] sm:$0xff]
  %v26 = vld [vmem:[%s0 + $0x58] sm:$0xff]
  %v27 = vld [vmem:[%s0 + $0x60] sm:$0xff]
  %v28 = vld [vmem:[%s0 + $0x68] sm:$0xff]
  %v29 = vld [vmem:[%s0 + $0x70] sm:$0xff]
  %v30 = vld [vmem:[%s0 + $0x78] sm:$0xff]
  %v31 = vld [vmem:[%s0 + $0x80] sm:$0xff]
  %v32 = vld [vmem:[%s0 + $0x88] sm:$0xff]
  %v33 = vld [vmem:[%s0 + $0x90] sm:$0xff]
  %v34 = vld [vmem:[%s0 + $0x98] sm:$0xff]
  %v35 = vld [vmem:[%s0 + $0xa0] sm:$0xff]
  %v36 = vld [vmem:[%s0 + $0xa8] sm:$0xff]
  %v37 = vld [vmem:[%s0 + $0xb0] sm:$0xff]
  %v38 = vld [vmem:[%s0 + $0xb8] sm:$0xff]
  %v39 = vld [vmem:[%s0 + $0xc0] sm:$0xff]
  %v40 = vld [vmem:[%s0 + $0xc8] sm:$0xff]
  %v41 = vld [vmem:[%s0 + $0xd0] sm:$0xff]
  %v42 = vld [vmem:[%s0 + $0xd8] sm:$0xff]
  %v43 = vld [vmem:[%s0 + $0xe0] sm:$0xff]
  %v44 = vld [vmem:[%s0 + $0xe8] sm:$0xff]
  %v45 = vld [vmem:[%s0 + $0xf0] sm:$0xff]
  %v46 = vld [vmem:[%s0 + $0xf8] sm:$0xff]
  %v47 = vld [vmem:[%s0 + $0x100] sm:$0xff]
  %v48 = vld [vmem:[%s0 + $0x108] sm:$0xff]
  %v49 = vld [vmem:[%s0 + $0x110] sm:$0xff]
  %v50 = vld [vmem:[%s0 + $0x118] sm:$0xff]
  %v51 = vld [vmem:[%s0 + $0x120] sm:$0xff]
  %v52 = vld [vmem:[%s0 + $0x128] sm:$0xff]
  %v53 = vld [vmem:[%s0 + $0x130] sm:$0xff]
  %v54 = vld [vmem:[%s0 + $0x138] sm:$0xff]
  %v55 = vld [vmem:[%s0 + $0x140] sm:$0xff]
  %v56 = vld [vmem:[%s0 + $0x148] sm:$0xff]
  %v57 = vld [vmem:[%s0 + $0x150] sm:$0xff]
  %v58 = vld [vmem:[%s0 + $0x158] sm:$0xff]
  %v59 = vld [vmem:[%s0 + $0x160] sm:$0xff]
  %v60 = vld [vmem:[%s0 + $0x168] sm:$0xff]
  %v61 = vld [vmem:[%s0 + $0x170] sm:$0xff]
  %v62 = vld [vmem:[%s0 + $0x178] sm:$0xff]
  %v63 = vld [vmem:[%s0 + $0x180] sm:$0xff]
  %v64 = vld [vmem:[%s0 + $0x188] sm:$0xff]
  %v65 = vld [vmem:[%s0 + $0x190] sm:$0xff]
  %v66 = vld [vmem:[%s0 + $0x198] sm:$0xff]
  %v67 = vld [vmem:[%s0 + $0x1a0] sm:$0xff]
  %v68 = vld [vmem:[%s0 + $0x1a8] sm:$0xff]
  %v69 = vld [vmem:[%s0 + $0x1b0] sm:$0xff]
  %v70 = vld [vmem:[%s0 + $0x1b8] sm:$0xff]
  %v71 = vld [vmem:[%s0 + $0x1c0] sm:$0xff]
  %v72 = vld [vmem:[%s0 + $0x1c8] sm:$0xff]
  %v73 = vld [vmem:[%s0 + $0x1d0] sm:$0xff]
  %v74 = vld [vmem:[%s0 + $0x1d8] sm:$0xff]
  %v75 = vld [vmem:[%s0 + $0x1e0] sm:$0xff]
  %v76 = vld [vmem:[%s0 + $0x1e8] sm:$0xff]
  %v77 = vld [vmem:[%s0 + $0x1f0] sm:$0xff]
  %v78 = vld [vmem:[%s0 + $0x1f8] sm:$0xff]
  %v79 = vld [vmem:[%s0 + $0x200] sm:$0xff]
  %v80 = vld [vmem:[%s0 + $0x208] sm:$0xff]
  %v81 = vld [vmem:[%s0 + $0x210] sm:$0xff]
  %v82 = vld [vmem:[%s0 + $0x218] sm:$0xff]
  %v83 = vld [vmem:[%s0 + $0x220] sm:$0xff]
  %v84 = vld [vmem:[%s0 + $0x228] sm:$0xff]
  %v85 = vld [vmem:[%s0 + $0x230] sm:$0xff]
  %v86 = vld [vmem:[%s0 + $0x238] sm:$0xff]
  %v87 = vld [vmem:[%s0 + $0x240] sm:$0xff]
  %v88 = vld [vmem:[%s0 + $0x248] sm:$0xff]
  %v89 = vld [vmem:[%s0 + $0x250] sm:$0xff]
  %v90 = vld [vmem:[%s0 + $0x258] sm:$0xff]
  %v91 = vld [vmem:[%s0 + $0x260] sm:$0xff]
  %v92 = vld [vmem:[%s0 + $0x268] sm:$0xff]
  %v93 = vld [vmem:[%s0 + $0x270] sm:$0xff]
  %v94 = vld [vmem:[%s0 + $0x278] sm:$0xff]
  %v95 = vld [vmem:[%s0 + $0x280] sm:$0xff]
  %v96 = vld [vmem:[%s0 + $0x288] sm:$0xff]
  %v97 = vld [vmem:[%s0 + $0x290] sm:$0xff]
  %v98 = vld [vmem:[%s0 + $0x298] sm:$0xff]
  %v99 = vld [vmem:[%s0 + $0x2a0] sm:$0xff]
  %v100 = vld [vmem:[%s0 + $0x2a8] sm:$0xff]
  %v101 = vld [vmem:[%s0 + $0x2b0] sm:$0xff]
  %v102 = vld [vmem:[%s0 + $0x2b8] sm:$0xff]
  %v103 = vld [vmem:[%s0 + $0x2c0] sm:$0xff]
  %v104 = vld [vmem:[%s0 + $0x2c8] sm:$0xff]
  %v105 = vld [vmem:[%s0 + $0x2d0] sm:$0xff]
  %v106 = vld [vmem:[%s0 + $0x2d8] sm:$0xff]
  %v107 = vld [vmem:[%s0 + $0x2e0] sm:$0xff]
  %v108 = vld [vmem:[%s0 + $0x2e8] sm:$0xff]
  %v109 = vld [vmem:[%s0 + $0x2f0] sm:$0xff]
  %v110 = vld [vmem:[%s0 + $0x2f8] sm:$0xff]
  %v111 = vld [vmem:[%s0 + $0x300] sm:$0xff]
  %v112 = vld [vmem:[%s0 + $0x308] sm:$0xff]
  %v113 = vld [vmem:[%s0 + $0x310] sm:$0xff]
  %v114 = vld [vmem:[%s0 + $0x318] sm:$0xff]
  %v115 = vld [vmem:[%s0 + $0x320] sm:$0xff]
  %v116 = vld [vmem:[%s0 + $0x328] sm:$0xff]
  %v117 = vld [vmem:[%s0 + $0x330] sm:$0xff]
  %v118 = vld [vmem:[%s0 + $0x338] sm:$0xff]
  %v119 = vld [vmem:[%s0 + $0x340] sm:$0xff]
  %v120 = vld [vmem:[%s0 + $0x348] sm:$0xff]
  %v121 = vld [vmem:[%s0 + $0x350] sm:$0xff]
  %v122 = vld [vmem:[%s0 + $0x358] sm:$0xff]
  %v123 = vld [vmem:[%s0 + $0x360] sm:$0xff]
  %v124 = vld [vmem:[%s0 + $0x368] sm:$0xff]
  %v125 = vld [vmem:[%s0 + $0x370] sm:$0xff]
  %v126 = vld [vmem:[%s0 + $0x378] sm:$0xff]
  %v127 = vld [vmem:[%s0 + $0x380] sm:$0xff]
  %v128 = vld [vmem:[%s0 + $0x388] sm:$0xff]
  %v129 = vld [vmem:[%s0 + $0x390] sm:$0xff]
  %v130 = vld [vmem:[%s0 + $0x398] sm:$0xff]
  %v131 = vld [vmem:[%s0 + $0x3a0] sm:$0xff]
  %v132 = vld [vmem:[%s0 + $0x3a8] sm:$0xff]
  %v133 = vld [vmem:[%s0 + $0x3b0] sm:$0xff]
  %v134 = vld [vmem:[%s0 + $0x3b8] sm:$0xff]
  %v135 = vld [vmem:[%s0 + $0x3c0] sm:$0xff]
  %v136 = vld [vmem:[%s0 + $0x3c8] sm:$0xff]
  %v137 = vld [vmem:[%s0 + $0x3d0] sm:$0xff]
  %v138 = vld [vmem:[%s0 + $0x3d8] sm:$0xff]
  %v139 = vld [vmem:[%s0 + $0x3e0] sm:$0xff]
  %v140 = vld [vmem:[%s0 + $0x3e8] sm:$0xff]
  %v141 = vld [vmem:[%s0 + $0x3f0] sm:$0xff]
  %v142 = vld [vmem:[%s0 + $0x3f8] sm:$0xff]
  %v143 = vld [vmem:[%s1] sm:$0xff]
  %v144 = vld [vmem:[%s1 + $0x8] sm:$0xff]
  %v145 = vld [vmem:[%s1 + $0x10] sm:$0xff]
  %v146 = vld [vmem:[%s1 + $0x18] sm:$0xff]
  %v147 = vld [vmem:[%s1 + $0x20] sm:$0xff]
  %v148 = vld [vmem:[%s1 + $0x28] sm:$0xff]
  %v149 = vld [vmem:[%s1 + $0x30] sm:$0xff]
  %v150 = vld [vmem:[%s1 + $0x38] sm:$0xff]
  %v151 = vld [vmem:[%s1 + $0x40] sm:$0xff]
  %v152 = vld [vmem:[%s1 + $0x48] sm:$0xff]
  %v153 = vld [vmem:[%s1 + $0x50] sm:$0xff]
  %v154 = vld [vmem:[%s1 + $0x58] sm:$0xff]
  %v155 = vld [vmem:[%s1 + $0x60] sm:$0xff]
  %v156 = vld [vmem:[%s1 + $0x68] sm:$0xff]
  %v157 = vld [vmem:[%s1 + $0x70] sm:$0xff]
  %v158 = vld [vmem:[%s1 + $0x78] sm:$0xff]
  %v159 = vld [vmem:[%s1 + $0x80] sm:$0xff]
  %v160 = vld [vmem:[%s1 + $0x88] sm:$0xff]
  %v161 = vld [vmem:[%s1 + $0x90] sm:$0xff]
  %v162 = vld [vmem:[%s1 + $0x98] sm:$0xff]
  %v163 = vld [vmem:[%s1 + $0xa0] sm:$0xff]
  %v164 = vld [vmem:[%s1 + $0xa8] sm:$0xff]
  %v165 = vld [vmem:[%s1 + $0xb0] sm:$0xff]
  %v166 = vld [vmem:[%s1 + $0xb8] sm:$0xff]
  %v167 = vld [vmem:[%s1 + $0xc0] sm:$0xff]
  %v168 = vld [vmem:[%s1 + $0xc8] sm:$0xff]
  %v169 = vld [vmem:[%s1 + $0xd0] sm:$0xff]
  %v170 = vld [vmem:[%s1 + $0xd8] sm:$0xff]
  %v171 = vld [vmem:[%s1 + $0xe0] sm:$0xff]
  %v172 = vld [vmem:[%s1 + $0xe8] sm:$0xff]
  %v173 = vld [vmem:[%s1 + $0xf0] sm:$0xff]
  %v174 = vld [vmem:[%s1 + $0xf8] sm:$0xff]
  %v175 = vld [vmem:[%s1 + $0x100] sm:$0xff]
  %v176 = vld [vmem:[%s1 + $0x108] sm:$0xff]
  %v177 = vld [vmem:[%s1 + $0x110] sm:$0xff]
  %v178 = vld [vmem:[%s1 + $0x118] sm:$0xff]
  %v179 = vld [vmem:[%s1 + $0x120] sm:$0xff]
  %v180 = vld [vmem:[%s1 + $0x128] sm:$0xff]
  %v181 = vld [vmem:[%s1 + $0x130] sm:$0xff]
  %v182 = vld [vmem:[%s1 + $0x138] sm:$0xff]
  %v183 = vld [vmem:[%s1 + $0x140] sm:$0xff]
  %v184 = vld [vmem:[%s1 + $0x148] sm:$0xff]
  %v185 = vld [vmem:[%s1 + $0x150] sm:$0xff]
  %v186 = vld [vmem:[%s1 + $0x158] sm:$0xff]
  %v187 = vld [vmem:[%s1 + $0x160] sm:$0xff]
  %v188 = vld [vmem:[%s1 + $0x168] sm:$0xff]
  %v189 = vld [vmem:[%s1 + $0x170] sm:$0xff]
  %v190 = vld [vmem:[%s1 + $0x178] sm:$0xff]
  %v191 = vld [vmem:[%s1 + $0x180] sm:$0xff]
  %v192 = vld [vmem:[%s1 + $0x188] sm:$0xff]
  %v193 = vld [vmem:[%s1 + $0x190] sm:$0xff]
  %v194 = vld [vmem:[%s1 + $0x198] sm:$0xff]
  %v195 = vld [vmem:[%s1 + $0x1a0] sm:$0xff]
  %v196 = vld [vmem:[%s1 + $0x1a8] sm:$0xff]
  %v197 = vld [vmem:[%s1 + $0x1b0] sm:$0xff]
  %v198 = vld [vmem:[%s1 + $0x1b8] sm:$0xff]
  %v199 = vld [vmem:[%s1 + $0x1c0] sm:$0xff]
  %v200 = vld [vmem:[%s1 + $0x1c8] sm:$0xff]
  %v201 = vld [vmem:[%s1 + $0x1d0] sm:$0xff]
  %v202 = vld [vmem:[%s1 + $0x1d8] sm:$0xff]
  %v203 = vld [vmem:[%s1 + $0x1e0] sm:$0xff]
  %v204 = vld [vmem:[%s1 + $0x1e8] sm:$0xff]
  %v205 = vld [vmem:[%s1 + $0x1f0] sm:$0xff]
  %v206 = vld [vmem:[%s1 + $0x1f8] sm:$0xff]
  %v207 = vld [vmem:[%s1 + $0x200] sm:$0xff]
  %v208 = vld [vmem:[%s1 + $0x208] sm:$0xff]
  %v209 = vld [vmem:[%s1 + $0x210] sm:$0xff]
  %v210 = vld [vmem:[%s1 + $0x218] sm:$0xff]
  %v211 = vld [vmem:[%s1 + $0x220] sm:$0xff]
  %v212 = vld [vmem:[%s1 + $0x228] sm:$0xff]
  %v213 = vld [vmem:[%s1 + $0x230] sm:$0xff]
  %v214 = vld [vmem:[%s1 + $0x238] sm:$0xff]
  %v215 = vld [vmem:[%s1 + $0x240] sm:$0xff]
  %v216 = vld [vmem:[%s1 + $0x248] sm:$0xff]
  %v217 = vld [vmem:[%s1 + $0x250] sm:$0xff]
  %v218 = vld [vmem:[%s1 + $0x258] sm:$0xff]
  %v219 = vld [vmem:[%s1 + $0x260] sm:$0xff]
  %v220 = vld [vmem:[%s1 + $0x268] sm:$0xff]
  %v221 = vld [vmem:[%s1 + $0x270] sm:$0xff]
  %v222 = vld [vmem:[%s1 + $0x278] sm:$0xff]
  %v223 = vld [vmem:[%s1 + $0x280] sm:$0xff]
  %v224 = vld [vmem:[%s1 + $0x288] sm:$0xff]
  %v225 = vld [vmem:[%s1 + $0x290] sm:$0xff]
  %v226 = vld [vmem:[%s1 + $0x298] sm:$0xff]
  %v227 = vld [vmem:[%s1 + $0x2a0] sm:$0xff]
  %v228 = vld [vmem:[%s1 + $0x2a8] sm:$0xff]
  %v229 = vld [vmem:[%s1 + $0x2b0] sm:$0xff]
  %v230 = vld [vmem:[%s1 + $0x2b8] sm:$0xff]
  %v231 = vld [vmem:[%s1 + $0x2c0] sm:$0xff]
  %v232 = vld [vmem:[%s1 + $0x2c8] sm:$0xff]
  %v233 = vld [vmem:[%s1 + $0x2d0] sm:$0xff]
  %v234 = vld [vmem:[%s1 + $0x2d8] sm:$0xff]
  %v235 = vld [vmem:[%s1 + $0x2e0] sm:$0xff]
  %v236 = vld [vmem:[%s1 + $0x2e8] sm:$0xff]
  %v237 = vld [vmem:[%s1 + $0x2f0] sm:$0xff]
  %v238 = vld [vmem:[%s1 + $0x2f8] sm:$0xff]
  %v239 = vld [vmem:[%s1 + $0x300] sm:$0xff]
  %v240 = vld [vmem:[%s1 + $0x308] sm:$0xff]
  %v241 = vld [vmem:[%s1 + $0x310] sm:$0xff]
  %v242 = vld [vmem:[%s1 + $0x318] sm:$0xff]
  %v243 = vld [vmem:[%s1 + $0x320] sm:$0xff]
  %v244 = vld [vmem:[%s1 + $0x328] sm:$0xff]
  %v245 = vld [vmem:[%s1 + $0x330] sm:$0xff]
  %v246 = vld [vmem:[%s1 + $0x338] sm:$0xff]
  %v247 = vld [vmem:[%s1 + $0x340] sm:$0xff]
  %v248 = vld [vmem:[%s1 + $0x348] sm:$0xff]
  %v249 = vld [vmem:[%s1 + $0x350] sm:$0xff]
  %v250 = vld [vmem:[%s1 + $0x358] sm:$0xff]
  %v251 = vld [vmem:[%s1 + $0x360] sm:$0xff]
  %v252 = vld [vmem:[%s1 + $0x368] sm:$0xff]
  %v253 = vld [vmem:[%s1 + $0x370] sm:$0xff]
  %v254 = vld [vmem:[%s1 + $0x378] sm:$0xff]
  %v255 = vld [vmem:[%s1 + $0x380] sm:$0xff]
  %v256 = vld [vmem:[%s1 + $0x388] sm:$0xff]
  %v257 = vld [vmem:[%s1 + $0x390] sm:$0xff]
  %v258 = vld [vmem:[%s1 + $0x398] sm:$0xff]
  %v259 = vld [vmem:[%s1 + $0x3a0] sm:$0xff]
  %v260 = vld [vmem:[%s1 + $0x3a8] sm:$0xff]
  %v261 = vld [vmem:[%s1 + $0x3b0] sm:$0xff]
  %v262 = vld [vmem:[%s1 + $0x3b8] sm:$0xff]
  %v263 = vld [vmem:[%s1 + $0x3c0] sm:$0xff]
  %v264 = vld [vmem:[%s1 + $0x3c8] sm:$0xff]
  %v265 = vld [vmem:[%s1 + $0x3d0] sm:$0xff]
  %v266 = vld [vmem:[%s1 + $0x3d8] sm:$0xff]
  %v267 = vld [vmem:[%s1 + $0x3e0] sm:$0xff]
  %v268 = vld [vmem:[%s1 + $0x3e8] sm:$0xff]
  %v269 = vld [vmem:[%s1 + $0x3f0] sm:$0xff]
  %v270 = vld [vmem:[%s1 + $0x3f8] sm:$0xff]
  %v271 = vld [vmem:[%s1 + $0x400] sm:$0xff]
  %v272 = vld [vmem:[%s1 + $0x408] sm:$0xff]
  %v273 = vld [vmem:[%s1 + $0x410] sm:$0xff]
  %v274 = vld [vmem:[%s1 + $0x418] sm:$0xff]
  %v275 = vld [vmem:[%s1 + $0x420] sm:$0xff]
  %v276 = vld [vmem:[%s1 + $0x428] sm:$0xff]
  %v277 = vld [vmem:[%s1 + $0x430] sm:$0xff]
  %v278 = vld [vmem:[%s1 + $0x438] sm:$0xff]
  %v279 = vld [vmem:[%s1 + $0x440] sm:$0xff]
  %v280 = vld [vmem:[%s1 + $0x448] sm:$0xff]
  %v281 = vld [vmem:[%s1 + $0x450] sm:$0xff]
  %v282 = vld [vmem:[%s1 + $0x458] sm:$0xff]
  %v283 = vld [vmem:[%s1 + $0x460] sm:$0xff]
  %v284 = vld [vmem:[%s1 + $0x468] sm:$0xff]
  %v285 = vld [vmem:[%s1 + $0x470] sm:$0xff]
  %v286 = vld [vmem:[%s1 + $0x478] sm:$0xff]
  %v287 = vld [vmem:[%s1 + $0x480] sm:$0xff]
  %v288 = vld [vmem:[%s1 + $0x488] sm:$0xff]
  %v289 = vld [vmem:[%s1 + $0x490] sm:$0xff]
  %v290 = vld [vmem:[%s1 + $0x498] sm:$0xff]
  %v291 = vld [vmem:[%s1 + $0x4a0] sm:$0xff]
  %v292 = vld [vmem:[%s1 + $0x4a8] sm:$0xff]
  %v293 = vld [vmem:[%s1 + $0x4b0] sm:$0xff]
  %v294 = vld [vmem:[%s1 + $0x4b8] sm:$0xff]
  %v295 = vld [vmem:[%s1 + $0x4c0] sm:$0xff]
  %v296 = vld [vmem:[%s1 + $0x4c8] sm:$0xff]
  %v297 = vld [vmem:[%s1 + $0x4d0] sm:$0xff]
  %v298 = vld [vmem:[%s1 + $0x4d8] sm:$0xff]
  %v299 = vld [vmem:[%s1 + $0x4e0] sm:$0xff]
  %v300 = vld [vmem:[%s1 + $0x4e8] sm:$0xff]
  %v301 = vld [vmem:[%s1 + $0x4f0] sm:$0xff]
  %v302 = vld [vmem:[%s1 + $0x4f8] sm:$0xff]
  %v303 = vld [vmem:[%s1 + $0x500] sm:$0xff]
  %v304 = vld [vmem:[%s1 + $0x508] sm:$0xff]
  %v305 = vld [vmem:[%s1 + $0x510] sm:$0xff]
  %v306 = vld [vmem:[%s1 + $0x518] sm:$0xff]
  %v307 = vld [vmem:[%s1 + $0x520] sm:$0xff]
  %v308 = vld [vmem:[%s1 + $0x528] sm:$0xff]
  %v309 = vld [vmem:[%s1 + $0x530] sm:$0xff]
  %v310 = vld [vmem:[%s1 + $0x538] sm:$0xff]
  %v311 = vld [vmem:[%s1 + $0x540] sm:$0xff]
  %v312 = vld [vmem:[%s1 + $0x548] sm:$0xff]
  %v313 = vld [vmem:[%s1 + $0x550] sm:$0xff]
  %v314 = vld [vmem:[%s1 + $0x558] sm:$0xff]
  %v315 = vld [vmem:[%s1 + $0x560] sm:$0xff]
  %v316 = vld [vmem:[%s1 + $0x568] sm:$0xff]
  %v317 = vld [vmem:[%s1 + $0x570] sm:$0xff]
  %v318 = vld [vmem:[%s1 + $0x578] sm:$0xff]
  %v319 = vld [vmem:[%s1 + $0x580] sm:$0xff]
  %v320 = vld [vmem:[%s1 + $0x588] sm:$0xff]
  %v321 = vld [vmem:[%s1 + $0x590] sm:$0xff]
  %v322 = vld [vmem:[%s1 + $0x598] sm:$0xff]
  %v323 = vld [vmem:[%s1 + $0x5a0] sm:$0xff]
  %v324 = vld [vmem:[%s1 + $0x5a8] sm:$0xff]
  %v325 = vld [vmem:[%s1 + $0x5b0] sm:$0xff]
  %v326 = vld [vmem:[%s1 + $0x5b8] sm:$0xff]
  %v327 = vld [vmem:[%s1 + $0x5c0] sm:$0xff]
  %v328 = vld [vmem:[%s1 + $0x5c8] sm:$0xff]
  %v329 = vld [vmem:[%s1 + $0x5d0] sm:$0xff]
  %v330 = vld [vmem:[%s1 + $0x5d8] sm:$0xff]
  %v331 = vld [vmem:[%s1 + $0x5e0] sm:$0xff]
  %v332 = vld [vmem:[%s1 + $0x5e8] sm:$0xff]
  %v333 = vld [vmem:[%s1 + $0x5f0] sm:$0xff]
  %v334 = vld [vmem:[%s1 + $0x5f8] sm:$0xff]
  %v335 = vld [vmem:[%s1 + $0x600] sm:$0xff]
  %v336 = vld [vmem:[%s1 + $0x608] sm:$0xff]
  %v337 = vld [vmem:[%s1 + $0x610] sm:$0xff]
  %v338 = vld [vmem:[%s1 + $0x618] sm:$0xff]
  %v339 = vld [vmem:[%s1 + $0x620] sm:$0xff]
  %v340 = vld [vmem:[%s1 + $0x628] sm:$0xff]
  %v341 = vld [vmem:[%s1 + $0x630] sm:$0xff]
  %v342 = vld [vmem:[%s1 + $0x638] sm:$0xff]
  %v343 = vld [vmem:[%s1 + $0x640] sm:$0xff]
  %v344 = vld [vmem:[%s1 + $0x648] sm:$0xff]
  %v345 = vld [vmem:[%s1 + $0x650] sm:$0xff]
  %v346 = vld [vmem:[%s1 + $0x658] sm:$0xff]
  %v347 = vld [vmem:[%s1 + $0x660] sm:$0xff]
  %v348 = vld [vmem:[%s1 + $0x668] sm:$0xff]
  %v349 = vld [vmem:[%s1 + $0x670] sm:$0xff]
  %v350 = vld [vmem:[%s1 + $0x678] sm:$0xff]
  %v351 = vld [vmem:[%s1 + $0x680] sm:$0xff]
  %v352 = vld [vmem:[%s1 + $0x688] sm:$0xff]
  %v353 = vld [vmem:[%s1 + $0x690] sm:$0xff]
  %v354 = vld [vmem:[%s1 + $0x698] sm:$0xff]
  %v355 = vld [vmem:[%s1 + $0x6a0] sm:$0xff]
  %v356 = vld [vmem:[%s1 + $0x6a8] sm:$0xff]
  %v357 = vld [vmem:[%s1 + $0x6b0] sm:$0xff]
  %v358 = vld [vmem:[%s1 + $0x6b8] sm:$0xff]
  %v359 = vld [vmem:[%s1 + $0x6c0] sm:$0xff]
  %v360 = vld [vmem:[%s1 + $0x6c8] sm:$0xff]
  %v361 = vld [vmem:[%s1 + $0x6d0] sm:$0xff]
  %v362 = vld [vmem:[%s1 + $0x6d8] sm:$0xff]
  %v363 = vld [vmem:[%s1 + $0x6e0] sm:$0xff]
  %v364 = vld [vmem:[%s1 + $0x6e8] sm:$0xff]
  %v365 = vld [vmem:[%s1 + $0x6f0] sm:$0xff]
  %v366 = vld [vmem:[%s1 + $0x6f8] sm:$0xff]
  %v367 = vld [vmem:[%s1 + $0x700] sm:$0xff]
  %v368 = vld [vmem:[%s1 + $0x708] sm:$0xff]
  %v369 = vld [vmem:[%s1 + $0x710] sm:$0xff]
  %v370 = vld [vmem:[%s1 + $0x718] sm:$0xff]
  %v371 = vld [vmem:[%s1 + $0x720] sm:$0xff]
  %v372 = vld [vmem:[%s1 + $0x728] sm:$0xff]
  %v373 = vld [vmem:[%s1 + $0x730] sm:$0xff]
  %v374 = vld [vmem:[%s1 + $0x738] sm:$0xff]
  %v375 = vld [vmem:[%s1 + $0x740] sm:$0xff]
  %v376 = vld [vmem:[%s1 + $0x748] sm:$0xff]
  %v377 = vld [vmem:[%s1 + $0x750] sm:$0xff]
  %v378 = vld [vmem:[%s1 + $0x758] sm:$0xff]
  %v379 = vld [vmem:[%s1 + $0x760] sm:$0xff]
  %v380 = vld [vmem:[%s1 + $0x768] sm:$0xff]
  %v381 = vld [vmem:[%s1 + $0x770] sm:$0xff]
  %v382 = vld [vmem:[%s1 + $0x778] sm:$0xff]
  %v383 = vld [vmem:[%s1 + $0x780] sm:$0xff]
  %v384 = vld [vmem:[%s1 + $0x788] sm:$0xff]
  %v385 = vld [vmem:[%s1 + $0x790] sm:$0xff]
  %v386 = vld [vmem:[%s1 + $0x798] sm:$0xff]
  %v387 = vld [vmem:[%s1 + $0x7a0] sm:$0xff]
  %v388 = vld [vmem:[%s1 + $0x7a8] sm:$0xff]
  %v389 = vld [vmem:[%s1 + $0x7b0] sm:$0xff]
  %v390 = vld [vmem:[%s1 + $0x7b8] sm:$0xff]
  %v391 = vld [vmem:[%s1 + $0x7c0] sm:$0xff]
  %v392 = vld [vmem:[%s1 + $0x7c8] sm:$0xff]
  %v393 = vld [vmem:[%s1 + $0x7d0] sm:$0xff]
  %v394 = vld [vmem:[%s1 + $0x7d8] sm:$0xff]
  %v395 = vld [vmem:[%s1 + $0x7e0] sm:$0xff]
  %v396 = vld [vmem:[%s1 + $0x7e8] sm:$0xff]
  %v397 = vld [vmem:[%s1 + $0x7f0] sm:$0xff]
  %v398 = vld [vmem:[%s1 + $0x7f8] sm:$0xff]
  %v399 = vld [vmem:[%s1 + $0x800] sm:$0xff]
  %v400 = vld [vmem:[%s1 + $0x808] sm:$0xff]
  %v401 = vld [vmem:[%s1 + $0x810] sm:$0xff]
  %v402 = vld [vmem:[%s1 + $0x818] sm:$0xff]
  %v403 = vld [vmem:[%s1 + $0x820] sm:$0xff]
  %v404 = vld [vmem:[%s1 + $0x828] sm:$0xff]
  %v405 = vld [vmem:[%s1 + $0x830] sm:$0xff]
  %v406 = vld [vmem:[%s1 + $0x838] sm:$0xff]
  %v407 = vld [vmem:[%s1 + $0x840] sm:$0xff]
  %v408 = vld [vmem:[%s1 + $0x848] sm:$0xff]
  %v409 = vld [vmem:[%s1 + $0x850] sm:$0xff]
  %v410 = vld [vmem:[%s1 + $0x858] sm:$0xff]
  %v411 = vld [vmem:[%s1 + $0x860] sm:$0xff]
  %v412 = vld [vmem:[%s1 + $0x868] sm:$0xff]
  %v413 = vld [vmem:[%s1 + $0x870] sm:$0xff]
  %v414 = vld [vmem:[%s1 + $0x878] sm:$0xff]
  %v415 = vld [vmem:[%s1 + $0x880] sm:$0xff]
  %v416 = vld [vmem:[%s1 + $0x888] sm:$0xff]
  %v417 = vld [vmem:[%s1 + $0x890] sm:$0xff]
  %v418 = vld [vmem:[%s1 + $0x898] sm:$0xff]
  %v419 = vld [vmem:[%s1 + $0x8a0] sm:$0xff]
  %v420 = vld [vmem:[%s1 + $0x8a8] sm:$0xff]
  %v421 = vld [vmem:[%s1 + $0x8b0] sm:$0xff]
  %v422 = vld [vmem:[%s1 + $0x8b8] sm:$0xff]
  %v423 = vld [vmem:[%s1 + $0x8c0] sm:$0xff]
  %v424 = vld [vmem:[%s1 + $0x8c8] sm:$0xff]
  %v425 = vld [vmem:[%s1 + $0x8d0] sm:$0xff]
  %v426 = vld [vmem:[%s1 + $0x8d8] sm:$0xff]
  %v427 = vld [vmem:[%s1 + $0x8e0] sm:$0xff]
  %v428 = vld [vmem:[%s1 + $0x8e8] sm:$0xff]
  %v429 = vld [vmem:[%s1 + $0x8f0] sm:$0xff]
  %v430 = vld [vmem:[%s1 + $0x8f8] sm:$0xff]
  %v431 = vld [vmem:[%s1 + $0x900] sm:$0xff]
  %v432 = vld [vmem:[%s1 + $0x908] sm:$0xff]
  %v433 = vld [vmem:[%s1 + $0x910] sm:$0xff]
  %v434 = vld [vmem:[%s1 + $0x918] sm:$0xff]
  %v435 = vld [vmem:[%s1 + $0x920] sm:$0xff]
  %v436 = vld [vmem:[%s1 + $0x928] sm:$0xff]
  %v437 = vld [vmem:[%s1 + $0x930] sm:$0xff]
  %v438 = vld [vmem:[%s1 + $0x938] sm:$0xff]
  %v439 = vld [vmem:[%s1 + $0x940] sm:$0xff]
  %v440 = vld [vmem:[%s1 + $0x948] sm:$0xff]
  %v441 = vld [vmem:[%s1 + $0x950] sm:$0xff]
  %v442 = vld [vmem:[%s1 + $0x958] sm:$0xff]
  %v443 = vld [vmem:[%s1 + $0x960] sm:$0xff]
  %v444 = vld [vmem:[%s1 + $0x968] sm:$0xff]
  %v445 = vld [vmem:[%s1 + $0x970] sm:$0xff]
  %v446 = vld [vmem:[%s1 + $0x978] sm:$0xff]
  %v447 = vld [vmem:[%s1 + $0x980] sm:$0xff]
  %v448 = vld [vmem:[%s1 + $0x988] sm:$0xff]
  %v449 = vld [vmem:[%s1 + $0x990] sm:$0xff]
  %v450 = vld [vmem:[%s1 + $0x998] sm:$0xff]
  %v451 = vld [vmem:[%s1 + $0x9a0] sm:$0xff]
  %v452 = vld [vmem:[%s1 + $0x9a8] sm:$0xff]
  %v453 = vld [vmem:[%s1 + $0x9b0] sm:$0xff]
  %v454 = vld [vmem:[%s1 + $0x9b8] sm:$0xff]
  %v455 = vld [vmem:[%s1 + $0x9c0] sm:$0xff]
  %v456 = vld [vmem:[%s1 + $0x9c8] sm:$0xff]
  %v457 = vld [vmem:[%s1 + $0x9d0] sm:$0xff]
  %v458 = vld [vmem:[%s1 + $0x9d8] sm:$0xff]
  %v459 = vld [vmem:[%s1 + $0x9e0] sm:$0xff]
  %v460 = vld [vmem:[%s1 + $0x9e8] sm:$0xff]
  %v461 = vld [vmem:[%s1 + $0x9f0] sm:$0xff]
  %v462 = vld [vmem:[%s1 + $0x9f8] sm:$0xff]
  %v463 = vld [vmem:[%s1 + $0xa00] sm:$0xff]
  %v464 = vld [vmem:[%s1 + $0xa08] sm:$0xff]
  %v465 = vld [vmem:[%s1 + $0xa10] sm:$0xff]
  %v466 = vld [vmem:[%s1 + $0xa18] sm:$0xff]
  %v467 = vld [vmem:[%s1 + $0xa20] sm:$0xff]
  %v468 = vld [vmem:[%s1 + $0xa28] sm:$0xff]
  %v469 = vld [vmem:[%s1 + $0xa30] sm:$0xff]
  %v470 = vld [vmem:[%s1 + $0xa38] sm:$0xff]
  %v471 = vld [vmem:[%s1 + $0xa40] sm:$0xff]
  %v472 = vld [vmem:[%s1 + $0xa48] sm:$0xff]
  %v473 = vld [vmem:[%s1 + $0xa50] sm:$0xff]
  %v474 = vld [vmem:[%s1 + $0xa58] sm:$0xff]
  %v475 = vld [vmem:[%s1 + $0xa60] sm:$0xff]
  %v476 = vld [vmem:[%s1 + $0xa68] sm:$0xff]
  %v477 = vld [vmem:[%s1 + $0xa70] sm:$0xff]
  %v478 = vld [vmem:[%s1 + $0xa78] sm:$0xff]
  %v479 = vld [vmem:[%s1 + $0xa80] sm:$0xff]
  %v480 = vld [vmem:[%s1 + $0xa88] sm:$0xff]
  %v481 = vld [vmem:[%s1 + $0xa90] sm:$0xff]
  %v482 = vld [vmem:[%s1 + $0xa98] sm:$0xff]
  %v483 = vld [vmem:[%s1 + $0xaa0] sm:$0xff]
  %v484 = vld [vmem:[%s1 + $0xaa8] sm:$0xff]
  %v485 = vld [vmem:[%s1 + $0xab0] sm:$0xff]
  %v486 = vld [vmem:[%s1 + $0xab8] sm:$0xff]
  %v487 = vld [vmem:[%s1 + $0xac0] sm:$0xff]
  %v488 = vld [vmem:[%s1 + $0xac8] sm:$0xff]
  %v489 = vld [vmem:[%s1 + $0xad0] sm:$0xff]
  %v490 = vld [vmem:[%s1 + $0xad8] sm:$0xff]
  %v491 = vld [vmem:[%s1 + $0xae0] sm:$0xff]
  %v492 = vld [vmem:[%s1 + $0xae8] sm:$0xff]
  %v493 = vld [vmem:[%s1 + $0xaf0] sm:$0xff]
  %v494 = vld [vmem:[%s1 + $0xaf8] sm:$0xff]
  %v495 = vld [vmem:[%s1 + $0xb00] sm:$0xff]
  %v496 = vld [vmem:[%s1 + $0xb08] sm:$0xff]
  %v497 = vld [vmem:[%s1 + $0xb10] sm:$0xff]
  %v498 = vld [vmem:[%s1 + $0xb18] sm:$0xff]
  %v499 = vld [vmem:[%s1 + $0xb20] sm:$0xff]
  %v500 = vld [vmem:[%s1 + $0xb28] sm:$0xff]
  %v501 = vld [vmem:[%s1 + $0xb30] sm:$0xff]
  %v502 = vld [vmem:[%s1 + $0xb38] sm:$0xff]
  %v503 = vld [vmem:[%s1 + $0xb40] sm:$0xff]
  %v504 = vld [vmem:[%s1 + $0xb48] sm:$0xff]
  %v505 = vld [vmem:[%s1 + $0xb50] sm:$0xff]
  %v506 = vld [vmem:[%s1 + $0xb58] sm:$0xff]
  %v507 = vld [vmem:[%s1 + $0xb60] sm:$0xff]
  %v508 = vld [vmem:[%s1 + $0xb68] sm:$0xff]
  %v509 = vld [vmem:[%s1 + $0xb70] sm:$0xff]
  %v510 = vld [vmem:[%s1 + $0xb78] sm:$0xff]
  %v511 = vld [vmem:[%s1 + $0xb80] sm:$0xff]
  %v512 = vld [vmem:[%s1 + $0xb88] sm:$0xff]
  %v513 = vld [vmem:[%s1 + $0xb90] sm:$0xff]
  %v514 = vld [vmem:[%s1 + $0xb98] sm:$0xff]
  %v515 = vld [vmem:[%s1 + $0xba0] sm:$0xff]
  %v516 = vld [vmem:[%s1 + $0xba8] sm:$0xff]
  %v517 = vld [vmem:[%s1 + $0xbb0] sm:$0xff]
  %v518 = vld [vmem:[%s1 + $0xbb8] sm:$0xff]
  %v519 = vld [vmem:[%s1 + $0xbc0] sm:$0xff]
  %v520 = vld [vmem:[%s1 + $0xbc8] sm:$0xff]
  %v521 = vld [vmem:[%s1 + $0xbd0] sm:$0xff]
  %v522 = vld [vmem:[%s1 + $0xbd8] sm:$0xff]
  %v523 = vld [vmem:[%s1 + $0xbe0] sm:$0xff]
  %v524 = vld [vmem:[%s1 + $0xbe8] sm:$0xff]
  %v525 = vld [vmem:[%s1 + $0xbf0] sm:$0xff]
  %v526 = vld [vmem:[%s1 + $0xbf8] sm:$0xff]
  %v527 = vld [vmem:[%s1 + $0xc00] sm:$0xff]
  %v528 = vld [vmem:[%s1 + $0xc08] sm:$0xff]
  %v529 = vld [vmem:[%s1 + $0xc10] sm:$0xff]
  %v530 = vld [vmem:[%s1 + $0xc18] sm:$0xff]
  %v531 = vld [vmem:[%s1 + $0xc20] sm:$0xff]
  %v532 = vld [vmem:[%s1 + $0xc28] sm:$0xff]
  %v533 = vld [vmem:[%s1 + $0xc30] sm:$0xff]
  %v534 = vld [vmem:[%s1 + $0xc38] sm:$0xff]
  %v535 = vld [vmem:[%s1 + $0xc40] sm:$0xff]
  %v536 = vld [vmem:[%s1 + $0xc48] sm:$0xff]
  %v537 = vld [vmem:[%s1 + $0xc50] sm:$0xff]
  %v538 = vld [vmem:[%s1 + $0xc58] sm:$0xff]
  %v539 = vld [vmem:[%s1 + $0xc60] sm:$0xff]
  %v540 = vld [vmem:[%s1 + $0xc68] sm:$0xff]
  %v541 = vld [vmem:[%s1 + $0xc70] sm:$0xff]
  %v542 = vld [vmem:[%s1 + $0xc78] sm:$0xff]
  %v543 = vld [vmem:[%s1 + $0xc80] sm:$0xff]
  %v544 = vld [vmem:[%s1 + $0xc88] sm:$0xff]
  %v545 = vld [vmem:[%s1 + $0xc90] sm:$0xff]
  %v546 = vld [vmem:[%s1 + $0xc98] sm:$0xff]
  %v547 = vld [vmem:[%s1 + $0xca0] sm:$0xff]
  %v548 = vld [vmem:[%s1 + $0xca8] sm:$0xff]
  %v549 = vld [vmem:[%s1 + $0xcb0] sm:$0xff]
  %v550 = vld [vmem:[%s1 + $0xcb8] sm:$0xff]
  %v551 = vld [vmem:[%s1 + $0xcc0] sm:$0xff]
  %v552 = vld [vmem:[%s1 + $0xcc8] sm:$0xff]
  %v553 = vld [vmem:[%s1 + $0xcd0] sm:$0xff]
  %v554 = vld [vmem:[%s1 + $0xcd8] sm:$0xff]
  %v555 = vld [vmem:[%s1 + $0xce0] sm:$0xff]
  %v556 = vld [vmem:[%s1 + $0xce8] sm:$0xff]
  %v557 = vld [vmem:[%s1 + $0xcf0] sm:$0xff]
  %v558 = vld [vmem:[%s1 + $0xcf8] sm:$0xff]
  %v559 = vld [vmem:[%s1 + $0xd00] sm:$0xff]
  %v560 = vld [vmem:[%s1 + $0xd08] sm:$0xff]
  %v561 = vld [vmem:[%s1 + $0xd10] sm:$0xff]
  %v562 = vld [vmem:[%s1 + $0xd18] sm:$0xff]
  %v563 = vld [vmem:[%s1 + $0xd20] sm:$0xff]
  %v564 = vld [vmem:[%s1 + $0xd28] sm:$0xff]
  %v565 = vld [vmem:[%s1 + $0xd30] sm:$0xff]
  %v566 = vld [vmem:[%s1 + $0xd38] sm:$0xff]
  %v567 = vld [vmem:[%s1 + $0xd40] sm:$0xff]
  %v568 = vld [vmem:[%s1 + $0xd48] sm:$0xff]
  %v569 = vld [vmem:[%s1 + $0xd50] sm:$0xff]
  %v570 = vld [vmem:[%s1 + $0xd58] sm:$0xff]
  %v571 = vld [vmem:[%s1 + $0xd60] sm:$0xff]
  %v572 = vld [vmem:[%s1 + $0xd68] sm:$0xff]
  %v573 = vld [vmem:[%s1 + $0xd70] sm:$0xff]
  %v574 = vld [vmem:[%s1 + $0xd78] sm:$0xff]
  %v575 = vld [vmem:[%s1 + $0xd80] sm:$0xff]
  %v576 = vld [vmem:[%s1 + $0xd88] sm:$0xff]
  %v577 = vld [vmem:[%s1 + $0xd90] sm:$0xff]
  %v578 = vld [vmem:[%s1 + $0xd98] sm:$0xff]
  %v579 = vld [vmem:[%s1 + $0xda0] sm:$0xff]
  %v580 = vld [vmem:[%s1 + $0xda8] sm:$0xff]
  %v581 = vld [vmem:[%s1 + $0xdb0] sm:$0xff]
  %v582 = vld [vmem:[%s1 + $0xdb8] sm:$0xff]
  %v583 = vld [vmem:[%s1 + $0xdc0] sm:$0xff]
  %v584 = vld [vmem:[%s1 + $0xdc8] sm:$0xff]
  %v585 = vld [vmem:[%s1 + $0xdd0] sm:$0xff]
  %v586 = vld [vmem:[%s1 + $0xdd8] sm:$0xff]
  %v587 = vld [vmem:[%s1 + $0xde0] sm:$0xff]
  %v588 = vld [vmem:[%s1 + $0xde8] sm:$0xff]
  %v589 = vld [vmem:[%s1 + $0xdf0] sm:$0xff]
  %v590 = vld [vmem:[%s1 + $0xdf8] sm:$0xff]
  %v591 = vld [vmem:[%s1 + $0xe00] sm:$0xff]
  %v592 = vld [vmem:[%s1 + $0xe08] sm:$0xff]
  %v593 = vld [vmem:[%s1 + $0xe10] sm:$0xff]
  %v594 = vld [vmem:[%s1 + $0xe18] sm:$0xff]
  %v595 = vld [vmem:[%s1 + $0xe20] sm:$0xff]
  %v596 = vld [vmem:[%s1 + $0xe28] sm:$0xff]
  %v597 = vld [vmem:[%s1 + $0xe30] sm:$0xff]
  %v598 = vld [vmem:[%s1 + $0xe38] sm:$0xff]
  %v599 = vld [vmem:[%s1 + $0xe40] sm:$0xff]
  %v600 = vld [vmem:[%s1 + $0xe48] sm:$0xff]
  %v601 = vld [vmem:[%s1 + $0xe50] sm:$0xff]
  %v602 = vld [vmem:[%s1 + $0xe58] sm:$0xff]
  %v603 = vld [vmem:[%s1 + $0xe60] sm:$0xff]
  %v604 = vld [vmem:[%s1 + $0xe68] sm:$0xff]
  %v605 = vld [vmem:[%s1 + $0xe70] sm:$0xff]
  %v606 = vld [vmem:[%s1 + $0xe78] sm:$0xff]
  %v607 = vld [vmem:[%s1 + $0xe80] sm:$0xff]
  %v608 = vld [vmem:[%s1 + $0xe88] sm:$0xff]
  %v609 = vld [vmem:[%s1 + $0xe90] sm:$0xff]
  %v610 = vld [vmem:[%s1 + $0xe98] sm:$0xff]
  %v611 = vld [vmem:[%s1 + $0xea0] sm:$0xff]
  %v612 = vld [vmem:[%s1 + $0xea8] sm:$0xff]
  %v613 = vld [vmem:[%s1 + $0xeb0] sm:$0xff]
  %v614 = vld [vmem:[%s1 + $0xeb8] sm:$0xff]
  %v615 = vld [vmem:[%s1 + $0xec0] sm:$0xff]
  %v616 = vld [vmem:[%s1 + $0xec8] sm:$0xff]
  %v617 = vld [vmem:[%s1 + $0xed0] sm:$0xff]
  %v618 = vld [vmem:[%s1 + $0xed8] sm:$0xff]
  %v619 = vld [vmem:[%s1 + $0xee0] sm:$0xff]
  %v620 = vld [vmem:[%s1 + $0xee8] sm:$0xff]
  %v621 = vld [vmem:[%s1 + $0xef0] sm:$0xff]
  %v622 = vld [vmem:[%s1 + $0xef8] sm:$0xff]
  %v623 = vld [vmem:[%s1 + $0xf00] sm:$0xff]
  %v624 = vld [vmem:[%s1 + $0xf08] sm:$0xff]
  %v625 = vld [vmem:[%s1 + $0xf10] sm:$0xff]
  %v626 = vld [vmem:[%s1 + $0xf18] sm:$0xff]
  %v627 = vld [vmem:[%s1 + $0xf20] sm:$0xff]
  %v628 = vld [vmem:[%s1 + $0xf28] sm:$0xff]
  %v629 = vld [vmem:[%s1 + $0xf30] sm:$0xff]
  %v630 = vld [vmem:[%s1 + $0xf38] sm:$0xff]
  %v631 = vld [vmem:[%s1 + $0xf40] sm:$0xff]
  %v632 = vld [vmem:[%s1 + $0xf48] sm:$0xff]
  %v633 = vld [vmem:[%s1 + $0xf50] sm:$0xff]
  %v634 = vld [vmem:[%s1 + $0xf58] sm:$0xff]
  %v635 = vld [vmem:[%s1 + $0xf60] sm:$0xff]
  %v636 = vld [vmem:[%s1 + $0xf68] sm:$0xff]
  %v637 = vld [vmem:[%s1 + $0xf70] sm:$0xff]
  %v638 = vld [vmem:[%s1 + $0xf78] sm:$0xff]
  %v639 = vld [vmem:[%s1 + $0xf80] sm:$0xff]
  %v640 = vld [vmem:[%s1 + $0xf88] sm:$0xff]
  %v641 = vld [vmem:[%s1 + $0xf90] sm:$0xff]
  %v642 = vld [vmem:[%s1 + $0xf98] sm:$0xff]
  %v771 = vunpack.c.l.b16 %v15
  %v772 = vunpack.c.h.b16 %v15
  %v773 = vunpack.c.l.b16 %v16
  %v774 = vunpack.c.h.b16 %v16
  %v775 = vunpack.c.l.b16 %v17
  %v776 = vunpack.c.h.b16 %v17
  %v777 = vunpack.c.l.b16 %v18
  %v778 = vunpack.c.h.b16 %v18
  %v779 = vunpack.c.l.b16 %v19
  %v780 = vunpack.c.h.b16 %v19
  %v781 = vunpack.c.l.b16 %v20
  %v782 = vunpack.c.h.b16 %v20
  %v783 = vunpack.c.l.b16 %v21
  %v784 = vunpack.c.h.b16 %v21
  %v785 = vunpack.c.l.b16 %v22
  %v786 = vunpack.c.h.b16 %v22
  %v787 = vunpack.c.l.b16 %v23
  %v788 = vunpack.c.h.b16 %v23
  %v789 = vunpack.c.l.b16 %v24
  %v790 = vunpack.c.h.b16 %v24
  %v791 = vunpack.c.l.b16 %v25
  %v792 = vunpack.c.h.b16 %v25
  %v793 = vunpack.c.l.b16 %v26
  %v794 = vunpack.c.h.b16 %v26
  %v795 = vunpack.c.l.b16 %v27
  %v796 = vunpack.c.h.b16 %v27
  %v797 = vunpack.c.l.b16 %v28
  %v798 = vunpack.c.h.b16 %v28
  %v799 = vunpack.c.l.b16 %v29
  %v800 = vunpack.c.h.b16 %v29
  %v801 = vunpack.c.l.b16 %v30
  %v802 = vunpack.c.h.b16 %v30
  %v803 = vunpack.c.l.b16 %v31
  %v804 = vunpack.c.h.b16 %v31
  %v805 = vunpack.c.l.b16 %v32
  %v806 = vunpack.c.h.b16 %v32
  %v807 = vunpack.c.l.b16 %v33
  %v808 = vunpack.c.h.b16 %v33
  %v809 = vunpack.c.l.b16 %v34
  %v810 = vunpack.c.h.b16 %v34
  %v811 = vunpack.c.l.b16 %v35
  %v812 = vunpack.c.h.b16 %v35
  %v813 = vunpack.c.l.b16 %v36
  %v814 = vunpack.c.h.b16 %v36
  %v815 = vunpack.c.l.b16 %v37
  %v816 = vunpack.c.h.b16 %v37
  %v817 = vunpack.c.l.b16 %v38
  %v818 = vunpack.c.h.b16 %v38
  %v819 = vunpack.c.l.b16 %v39
  %v820 = vunpack.c.h.b16 %v39
  %v821 = vunpack.c.l.b16 %v40
  %v822 = vunpack.c.h.b16 %v40
  %v823 = vunpack.c.l.b16 %v41
  %v824 = vunpack.c.h.b16 %v41
  %v825 = vunpack.c.l.b16 %v42
  %v826 = vunpack.c.h.b16 %v42
  %v827 = vunpack.c.l.b16 %v43
  %v828 = vunpack.c.h.b16 %v43
  %v829 = vunpack.c.l.b16 %v44
  %v830 = vunpack.c.h.b16 %v44
  %v831 = vunpack.c.l.b16 %v45
  %v832 = vunpack.c.h.b16 %v45
  %v833 = vunpack.c.l.b16 %v46
  %v834 = vunpack.c.h.b16 %v46
  %v835 = vunpack.c.l.b16 %v47
  %v836 = vunpack.c.h.b16 %v47
  %v837 = vunpack.c.l.b16 %v48
  %v838 = vunpack.c.h.b16 %v48
  %v839 = vunpack.c.l.b16 %v49
  %v840 = vunpack.c.h.b16 %v49
  %v841 = vunpack.c.l.b16 %v50
  %v842 = vunpack.c.h.b16 %v50
  %v843 = vunpack.c.l.b16 %v51
  %v844 = vunpack.c.h.b16 %v51
  %v845 = vunpack.c.l.b16 %v52
  %v846 = vunpack.c.h.b16 %v52
  %v847 = vunpack.c.l.b16 %v53
  %v848 = vunpack.c.h.b16 %v53
  %v849 = vunpack.c.l.b16 %v54
  %v850 = vunpack.c.h.b16 %v54
  %v851 = vunpack.c.l.b16 %v55
  %v852 = vunpack.c.h.b16 %v55
  %v853 = vunpack.c.l.b16 %v56
  %v854 = vunpack.c.h.b16 %v56
  %v855 = vunpack.c.l.b16 %v57
  %v856 = vunpack.c.h.b16 %v57
  %v857 = vunpack.c.l.b16 %v58
  %v858 = vunpack.c.h.b16 %v58
  %v859 = vunpack.c.l.b16 %v59
  %v860 = vunpack.c.h.b16 %v59
  %v861 = vunpack.c.l.b16 %v60
  %v862 = vunpack.c.h.b16 %v60
  %v863 = vunpack.c.l.b16 %v61
  %v864 = vunpack.c.h.b16 %v61
  %v865 = vunpack.c.l.b16 %v62
  %v866 = vunpack.c.h.b16 %v62
  %v867 = vunpack.c.l.b16 %v63
  %v868 = vunpack.c.h.b16 %v63
  %v869 = vunpack.c.l.b16 %v64
  %v870 = vunpack.c.h.b16 %v64
  %v871 = vunpack.c.l.b16 %v65
  %v872 = vunpack.c.h.b16 %v65
  %v873 = vunpack.c.l.b16 %v66
  %v874 = vunpack.c.h.b16 %v66
  %v875 = vunpack.c.l.b16 %v67
  %v876 = vunpack.c.h.b16 %v67
  %v877 = vunpack.c.l.b16 %v68
  %v878 = vunpack.c.h.b16 %v68
  %v879 = vunpack.c.l.b16 %v69
  %v880 = vunpack.c.h.b16 %v69
  %v881 = vunpack.c.l.b16 %v70
  %v882 = vunpack.c.h.b16 %v70
  %v883 = vunpack.c.l.b16 %v71
  %v884 = vunpack.c.h.b16 %v71
  %v885 = vunpack.c.l.b16 %v72
  %v886 = vunpack.c.h.b16 %v72
  %v887 = vunpack.c.l.b16 %v73
  %v888 = vunpack.c.h.b16 %v73
  %v889 = vunpack.c.l.b16 %v74
  %v890 = vunpack.c.h.b16 %v74
  %v891 = vunpack.c.l.b16 %v75
  %v892 = vunpack.c.h.b16 %v75
  %v893 = vunpack.c.l.b16 %v76
  %v894 = vunpack.c.h.b16 %v76
  %v895 = vunpack.c.l.b16 %v77
  %v896 = vunpack.c.h.b16 %v77
  %v897 = vunpack.c.l.b16 %v78
  %v898 = vunpack.c.h.b16 %v78
  %v899 = vunpack.c.l.b16 %v79
  %v900 = vunpack.c.h.b16 %v79
  %v901 = vunpack.c.l.b16 %v80
  %v902 = vunpack.c.h.b16 %v80
  %v903 = vunpack.c.l.b16 %v81
  %v904 = vunpack.c.h.b16 %v81
  %v905 = vunpack.c.l.b16 %v82
  %v906 = vunpack.c.h.b16 %v82
  %v907 = vunpack.c.l.b16 %v83
  %v908 = vunpack.c.h.b16 %v83
  %v909 = vunpack.c.l.b16 %v84
  %v910 = vunpack.c.h.b16 %v84
  %v911 = vunpack.c.l.b16 %v85
  %v912 = vunpack.c.h.b16 %v85
  %v913 = vunpack.c.l.b16 %v86
  %v914 = vunpack.c.h.b16 %v86
  %v915 = vunpack.c.l.b16 %v87
  %v916 = vunpack.c.h.b16 %v87
  %v917 = vunpack.c.l.b16 %v88
  %v918 = vunpack.c.h.b16 %v88
  %v919 = vunpack.c.l.b16 %v89
  %v920 = vunpack.c.h.b16 %v89
  %v921 = vunpack.c.l.b16 %v90
  %v922 = vunpack.c.h.b16 %v90
  %v923 = vunpack.c.l.b16 %v91
  %v924 = vunpack.c.h.b16 %v91
  %v925 = vunpack.c.l.b16 %v92
  %v926 = vunpack.c.h.b16 %v92
  %v927 = vunpack.c.l.b16 %v93
  %v928 = vunpack.c.h.b16 %v93
  %v929 = vunpack.c.l.b16 %v94
  %v930 = vunpack.c.h.b16 %v94
  %v931 = vunpack.c.l.b16 %v95
  %v932 = vunpack.c.h.b16 %v95
  %v933 = vunpack.c.l.b16 %v96
  %v934 = vunpack.c.h.b16 %v96
  %v935 = vunpack.c.l.b16 %v97
  %v936 = vunpack.c.h.b16 %v97
  %v937 = vunpack.c.l.b16 %v98
  %v938 = vunpack.c.h.b16 %v98
  %v939 = vunpack.c.l.b16 %v99
  %v940 = vunpack.c.h.b16 %v99
  %v941 = vunpack.c.l.b16 %v100
  %v942 = vunpack.c.h.b16 %v100
  %v943 = vunpack.c.l.b16 %v101
  %v944 = vunpack.c.h.b16 %v101
  %v945 = vunpack.c.l.b16 %v102
  %v946 = vunpack.c.h.b16 %v102
  %v947 = vunpack.c.l.b16 %v103
  %v948 = vunpack.c.h.b16 %v103
  %v949 = vunpack.c.l.b16 %v104
  %v950 = vunpack.c.h.b16 %v104
  %v951 = vunpack.c.l.b16 %v105
  %v952 = vunpack.c.h.b16 %v105
  %v953 = vunpack.c.l.b16 %v106
  %v954 = vunpack.c.h.b16 %v106
  %v955 = vunpack.c.l.b16 %v107
  %v956 = vunpack.c.h.b16 %v107
  %v957 = vunpack.c.l.b16 %v108
  %v958 = vunpack.c.h.b16 %v108
  %v959 = vunpack.c.l.b16 %v109
  %v960 = vunpack.c.h.b16 %v109
  %v961 = vunpack.c.l.b16 %v110
  %v962 = vunpack.c.h.b16 %v110
  %v963 = vunpack.c.l.b16 %v111
  %v964 = vunpack.c.h.b16 %v111
  %v965 = vunpack.c.l.b16 %v112
  %v966 = vunpack.c.h.b16 %v112
  %v967 = vunpack.c.l.b16 %v113
  %v968 = vunpack.c.h.b16 %v113
  %v969 = vunpack.c.l.b16 %v114
  %v970 = vunpack.c.h.b16 %v114
  %v971 = vunpack.c.l.b16 %v115
  %v972 = vunpack.c.h.b16 %v115
  %v973 = vunpack.c.l.b16 %v116
  %v974 = vunpack.c.h.b16 %v116
  %v975 = vunpack.c.l.b16 %v117
  %v976 = vunpack.c.h.b16 %v117
  %v977 = vunpack.c.l.b16 %v118
  %v978 = vunpack.c.h.b16 %v118
  %v979 = vunpack.c.l.b16 %v119
  %v980 = vunpack.c.h.b16 %v119
  %v981 = vunpack.c.l.b16 %v120
  %v982 = vunpack.c.h.b16 %v120
  %v983 = vunpack.c.l.b16 %v121
  %v984 = vunpack.c.h.b16 %v121
  %v985 = vunpack.c.l.b16 %v122
  %v986 = vunpack.c.h.b16 %v122
  %v987 = vunpack.c.l.b16 %v123
  %v988 = vunpack.c.h.b16 %v123
  %v989 = vunpack.c.l.b16 %v124
  %v990 = vunpack.c.h.b16 %v124
  %v991 = vunpack.c.l.b16 %v125
  %v992 = vunpack.c.h.b16 %v125
  %v993 = vunpack.c.l.b16 %v126
  %v994 = vunpack.c.h.b16 %v126
  %v995 = vunpack.c.l.b16 %v127
  %v996 = vunpack.c.h.b16 %v127
  %v997 = vunpack.c.l.b16 %v128
  %v998 = vunpack.c.h.b16 %v128
  %v999 = vunpack.c.l.b16 %v129
  %v1000 = vunpack.c.h.b16 %v129
  %v1001 = vunpack.c.l.b16 %v130
  %v1002 = vunpack.c.h.b16 %v130
  %v1003 = vunpack.c.l.b16 %v131
  %v1004 = vunpack.c.h.b16 %v131
  %v1005 = vunpack.c.l.b16 %v132
  %v1006 = vunpack.c.h.b16 %v132
  %v1007 = vunpack.c.l.b16 %v133
  %v1008 = vunpack.c.h.b16 %v133
  %v1009 = vunpack.c.l.b16 %v134
  %v1010 = vunpack.c.h.b16 %v134
  %v1011 = vunpack.c.l.b16 %v135
  %v1012 = vunpack.c.h.b16 %v135
  %v1013 = vunpack.c.l.b16 %v136
  %v1014 = vunpack.c.h.b16 %v136
  %v1015 = vunpack.c.l.b16 %v137
  %v1016 = vunpack.c.h.b16 %v137
  %v1017 = vunpack.c.l.b16 %v138
  %v1018 = vunpack.c.h.b16 %v138
  %v1019 = vunpack.c.l.b16 %v139
  %v1020 = vunpack.c.h.b16 %v139
  %v1021 = vunpack.c.l.b16 %v140
  %v1022 = vunpack.c.h.b16 %v140
  %v1023 = vunpack.c.l.b16 %v141
  %v1024 = vunpack.c.h.b16 %v141
  %v1025 = vunpack.c.l.b16 %v142
  %v1026 = vunpack.c.h.b16 %v142
  %v1027 = vpack.c.b16 %v787, %v771
  %v1028 = vpack.c.b16 %v788, %v772
  %v1029 = vpack.c.b16 %v789, %v773
  %v1030 = vpack.c.b16 %v790, %v774
  %v1031 = vpack.c.b16 %v791, %v775
  %v1032 = vpack.c.b16 %v792, %v776
  %v1033 = vpack.c.b16 %v793, %v777
  %v1034 = vpack.c.b16 %v794, %v778
  %v1035 = vpack.c.b16 %v795, %v779
  %v1036 = vpack.c.b16 %v796, %v780
  %v1037 = vpack.c.b16 %v797, %v781
  %v1038 = vpack.c.b16 %v798, %v782
  %v1039 = vpack.c.b16 %v799, %v783
  %v1040 = vpack.c.b16 %v800, %v784
  %v1041 = vpack.c.b16 %v801, %v785
  %v1042 = vpack.c.b16 %v802, %v786
  %v1043 = vpack.c.b16 %v819, %v803
  %v1044 = vpack.c.b16 %v820, %v804
  %v1045 = vpack.c.b16 %v821, %v805
  %v1046 = vpack.c.b16 %v822, %v806
  %v1047 = vpack.c.b16 %v823, %v807
  %v1048 = vpack.c.b16 %v824, %v808
  %v1049 = vpack.c.b16 %v825, %v809
  %v1050 = vpack.c.b16 %v826, %v810
  %v1051 = vpack.c.b16 %v827, %v811
  %v1052 = vpack.c.b16 %v828, %v812
  %v1053 = vpack.c.b16 %v829, %v813
  %v1054 = vpack.c.b16 %v830, %v814
  %v1055 = vpack.c.b16 %v831, %v815
  %v1056 = vpack.c.b16 %v832, %v816
  %v1057 = vpack.c.b16 %v833, %v817
  %v1058 = vpack.c.b16 %v834, %v818
  %v1059 = vpack.c.b16 %v851, %v835
  %v1060 = vpack.c.b16 %v852, %v836
  %v1061 = vpack.c.b16 %v853, %v837
  %v1062 = vpack.c.b16 %v854, %v838
  %v1063 = vpack.c.b16 %v855, %v839
  %v1064 = vpack.c.b16 %v856, %v840
  %v1065 = vpack.c.b16 %v857, %v841
  %v1066 = vpack.c.b16 %v858, %v842
  %v1067 = vpack.c.b16 %v859, %v843
  %v1068 = vpack.c.b16 %v860, %v844
  %v1069 = vpack.c.b16 %v861, %v845
  %v1070 = vpack.c.b16 %v862, %v846
  %v1071 = vpack.c.b16 %v863, %v847
  %v1072 = vpack.c.b16 %v864, %v848
  %v1073 = vpack.c.b16 %v865, %v849
  %v1074 = vpack.c.b16 %v866, %v850
  %v1075 = vpack.c.b16 %v883, %v867
  %v1076 = vpack.c.b16 %v884, %v868
  %v1077 = vpack.c.b16 %v885, %v869
  %v1078 = vpack.c.b16 %v886, %v870
  %v1079 = vpack.c.b16 %v887, %v871
  %v1080 = vpack.c.b16 %v888, %v872
  %v1081 = vpack.c.b16 %v889, %v873
  %v1082 = vpack.c.b16 %v890, %v874
  %v1083 = vpack.c.b16 %v891, %v875
  %v1084 = vpack.c.b16 %v892, %v876
  %v1085 = vpack.c.b16 %v893, %v877
  %v1086 = vpack.c.b16 %v894, %v878
  %v1087 = vpack.c.b16 %v895, %v879
  %v1088 = vpack.c.b16 %v896, %v880
  %v1089 = vpack.c.b16 %v897, %v881
  %v1090 = vpack.c.b16 %v898, %v882
  %v1091 = vpack.c.b16 %v915, %v899
  %v1092 = vpack.c.b16 %v916, %v900
  %v1093 = vpack.c.b16 %v917, %v901
  %v1094 = vpack.c.b16 %v918, %v902
  %v1095 = vpack.c.b16 %v919, %v903
  %v1096 = vpack.c.b16 %v920, %v904
  %v1097 = vpack.c.b16 %v921, %v905
  %v1098 = vpack.c.b16 %v922, %v906
  %v1099 = vpack.c.b16 %v923, %v907
  %v1100 = vpack.c.b16 %v924, %v908
  %v1101 = vpack.c.b16 %v925, %v909
  %v1102 = vpack.c.b16 %v926, %v910
  %v1103 = vpack.c.b16 %v927, %v911
  %v1104 = vpack.c.b16 %v928, %v912
  %v1105 = vpack.c.b16 %v929, %v913
  %v1106 = vpack.c.b16 %v930, %v914
  %v1107 = vpack.c.b16 %v947, %v931
  %v1108 = vpack.c.b16 %v948, %v932
  %v1109 = vpack.c.b16 %v949, %v933
  %v1110 = vpack.c.b16 %v950, %v934
  %v1111 = vpack.c.b16 %v951, %v935
  %v1112 = vpack.c.b16 %v952, %v936
  %v1113 = vpack.c.b16 %v953, %v937
  %v1114 = vpack.c.b16 %v954, %v938
  %v1115 = vpack.c.b16 %v955, %v939
  %v1116 = vpack.c.b16 %v956, %v940
  %v1117 = vpack.c.b16 %v957, %v941
  %v1118 = vpack.c.b16 %v958, %v942
  %v1119 = vpack.c.b16 %v959, %v943
  %v1120 = vpack.c.b16 %v960, %v944
  %v1121 = vpack.c.b16 %v961, %v945
  %v1122 = vpack.c.b16 %v962, %v946
  %v1123 = vpack.c.b16 %v979, %v963
  %v1124 = vpack.c.b16 %v980, %v964
  %v1125 = vpack.c.b16 %v981, %v965
  %v1126 = vpack.c.b16 %v982, %v966
  %v1127 = vpack.c.b16 %v983, %v967
  %v1128 = vpack.c.b16 %v984, %v968
  %v1129 = vpack.c.b16 %v985, %v969
  %v1130 = vpack.c.b16 %v986, %v970
  %v1131 = vpack.c.b16 %v987, %v971
  %v1132 = vpack.c.b16 %v988, %v972
  %v1133 = vpack.c.b16 %v989, %v973
  %v1134 = vpack.c.b16 %v990, %v974
  %v1135 = vpack.c.b16 %v991, %v975
  %v1136 = vpack.c.b16 %v992, %v976
  %v1137 = vpack.c.b16 %v993, %v977
  %v1138 = vpack.c.b16 %v994, %v978
  %v1139 = vpack.c.b16 %v1011, %v995
  %v1140 = vpack.c.b16 %v1012, %v996
  %v1141 = vpack.c.b16 %v1013, %v997
  %v1142 = vpack.c.b16 %v1014, %v998
  %v1143 = vpack.c.b16 %v1015, %v999
  %v1144 = vpack.c.b16 %v1016, %v1000
  %v1145 = vpack.c.b16 %v1017, %v1001
  %v1146 = vpack.c.b16 %v1018, %v1002
  %v1147 = vpack.c.b16 %v1019, %v1003
  %v1148 = vpack.c.b16 %v1020, %v1004
  %v1149 = vpack.c.b16 %v1021, %v1005
  %v1150 = vpack.c.b16 %v1022, %v1006
  %v1151 = vpack.c.b16 %v1023, %v1007
  %v1152 = vpack.c.b16 %v1024, %v1008
  %v1153 = vpack.c.b16 %v1025, %v1009
  %v1154 = vpack.c.b16 %v1026, %v1010
  %v1775 = vunpack.c.l.b16 %v143
  %v1776 = vunpack.c.h.b16 %v143
  %v1777 = vunpack.c.l.b16 %v144
  %v1778 = vunpack.c.h.b16 %v144
  %v1779 = vunpack.c.l.b16 %v145
  %v1780 = vunpack.c.h.b16 %v145
  %v1781 = vunpack.c.l.b16 %v146
  %v1782 = vunpack.c.h.b16 %v146
  %v1783 = vunpack.c.l.b16 %v147
  %v1784 = vunpack.c.h.b16 %v147
  %v1785 = vunpack.c.l.b16 %v148
  %v1786 = vunpack.c.h.b16 %v148
  %v1787 = vunpack.c.l.b16 %v149
  %v1788 = vunpack.c.h.b16 %v149
  %v1789 = vunpack.c.l.b16 %v150
  %v1790 = vunpack.c.h.b16 %v150
  %v1791 = vunpack.c.l.b16 %v151
  %v1792 = vunpack.c.h.b16 %v151
  %v1793 = vunpack.c.l.b16 %v152
  %v1794 = vunpack.c.h.b16 %v152
  %v1795 = vunpack.c.l.b16 %v153
  %v1796 = vunpack.c.h.b16 %v153
  %v1797 = vunpack.c.l.b16 %v154
  %v1798 = vunpack.c.h.b16 %v154
  %v1799 = vunpack.c.l.b16 %v155
  %v1800 = vunpack.c.h.b16 %v155
  %v1801 = vunpack.c.l.b16 %v156
  %v1802 = vunpack.c.h.b16 %v156
  %v1803 = vunpack.c.l.b16 %v157
  %v1804 = vunpack.c.h.b16 %v157
  %v1805 = vunpack.c.l.b16 %v158
  %v1806 = vunpack.c.h.b16 %v158
  %v1807 = vunpack.c.l.b16 %v159
  %v1808 = vunpack.c.h.b16 %v159
  %v1809 = vunpack.c.l.b16 %v160
  %v1810 = vunpack.c.h.b16 %v160
  %v1811 = vunpack.c.l.b16 %v161
  %v1812 = vunpack.c.h.b16 %v161
  %v1813 = vunpack.c.l.b16 %v162
  %v1814 = vunpack.c.h.b16 %v162
  %v1815 = vunpack.c.l.b16 %v163
  %v1816 = vunpack.c.h.b16 %v163
  %v1817 = vunpack.c.l.b16 %v164
  %v1818 = vunpack.c.h.b16 %v164
  %v1819 = vunpack.c.l.b16 %v165
  %v1820 = vunpack.c.h.b16 %v165
  %v1821 = vunpack.c.l.b16 %v166
  %v1822 = vunpack.c.h.b16 %v166
  %v1823 = vunpack.c.l.b16 %v167
  %v1824 = vunpack.c.h.b16 %v167
  %v1825 = vunpack.c.l.b16 %v168
  %v1826 = vunpack.c.h.b16 %v168
  %v1827 = vunpack.c.l.b16 %v169
  %v1828 = vunpack.c.h.b16 %v169
  %v1829 = vunpack.c.l.b16 %v170
  %v1830 = vunpack.c.h.b16 %v170
  %v1831 = vunpack.c.l.b16 %v171
  %v1832 = vunpack.c.h.b16 %v171
  %v1833 = vunpack.c.l.b16 %v172
  %v1834 = vunpack.c.h.b16 %v172
  %v1835 = vunpack.c.l.b16 %v173
  %v1836 = vunpack.c.h.b16 %v173
  %v1837 = vunpack.c.l.b16 %v174
  %v1838 = vunpack.c.h.b16 %v174
  %v1839 = vunpack.c.l.b16 %v175
  %v1840 = vunpack.c.h.b16 %v175
  %v1841 = vunpack.c.l.b16 %v176
  %v1842 = vunpack.c.h.b16 %v176
  %v1843 = vunpack.c.l.b16 %v177
  %v1844 = vunpack.c.h.b16 %v177
  %v1845 = vunpack.c.l.b16 %v178
  %v1846 = vunpack.c.h.b16 %v178
  %v1847 = vunpack.c.l.b16 %v179
  %v1848 = vunpack.c.h.b16 %v179
  %v1849 = vunpack.c.l.b16 %v180
  %v1850 = vunpack.c.h.b16 %v180
  %v1851 = vunpack.c.l.b16 %v181
  %v1852 = vunpack.c.h.b16 %v181
  %v1853 = vunpack.c.l.b16 %v182
  %v1854 = vunpack.c.h.b16 %v182
  %v1855 = vunpack.c.l.b16 %v183
  %v1856 = vunpack.c.h.b16 %v183
  %v1857 = vunpack.c.l.b16 %v184
  %v1858 = vunpack.c.h.b16 %v184
  %v1859 = vunpack.c.l.b16 %v185
  %v1860 = vunpack.c.h.b16 %v185
  %v1861 = vunpack.c.l.b16 %v186
  %v1862 = vunpack.c.h.b16 %v186
  %v1863 = vunpack.c.l.b16 %v187
  %v1864 = vunpack.c.h.b16 %v187
  %v1865 = vunpack.c.l.b16 %v188
  %v1866 = vunpack.c.h.b16 %v188
  %v1867 = vunpack.c.l.b16 %v189
  %v1868 = vunpack.c.h.b16 %v189
  %v1869 = vunpack.c.l.b16 %v190
  %v1870 = vunpack.c.h.b16 %v190
  %v1871 = vunpack.c.l.b16 %v191
  %v1872 = vunpack.c.h.b16 %v191
  %v1873 = vunpack.c.l.b16 %v192
  %v1874 = vunpack.c.h.b16 %v192
  %v1875 = vunpack.c.l.b16 %v193
  %v1876 = vunpack.c.h.b16 %v193
  %v1877 = vunpack.c.l.b16 %v194
  %v1878 = vunpack.c.h.b16 %v194
  %v1879 = vunpack.c.l.b16 %v195
  %v1880 = vunpack.c.h.b16 %v195
  %v1881 = vunpack.c.l.b16 %v196
  %v1882 = vunpack.c.h.b16 %v196
  %v1883 = vunpack.c.l.b16 %v197
  %v1884 = vunpack.c.h.b16 %v197
  %v1885 = vunpack.c.l.b16 %v198
  %v1886 = vunpack.c.h.b16 %v198
  %v1887 = vunpack.c.l.b16 %v199
  %v1888 = vunpack.c.h.b16 %v199
  %v1889 = vunpack.c.l.b16 %v200
  %v1890 = vunpack.c.h.b16 %v200
  %v1891 = vunpack.c.l.b16 %v201
  %v1892 = vunpack.c.h.b16 %v201
  %v1893 = vunpack.c.l.b16 %v202
  %v1894 = vunpack.c.h.b16 %v202
  %v1895 = vunpack.c.l.b16 %v203
  %v1896 = vunpack.c.h.b16 %v203
  %v1897 = vunpack.c.l.b16 %v204
  %v1898 = vunpack.c.h.b16 %v204
  %v1899 = vunpack.c.l.b16 %v205
  %v1900 = vunpack.c.h.b16 %v205
  %v1901 = vunpack.c.l.b16 %v206
  %v1902 = vunpack.c.h.b16 %v206
  %v1903 = vunpack.c.l.b16 %v207
  %v1904 = vunpack.c.h.b16 %v207
  %v1905 = vunpack.c.l.b16 %v208
  %v1906 = vunpack.c.h.b16 %v208
  %v1907 = vunpack.c.l.b16 %v209
  %v1908 = vunpack.c.h.b16 %v209
  %v1909 = vunpack.c.l.b16 %v210
  %v1910 = vunpack.c.h.b16 %v210
  %v1911 = vunpack.c.l.b16 %v211
  %v1912 = vunpack.c.h.b16 %v211
  %v1913 = vunpack.c.l.b16 %v212
  %v1914 = vunpack.c.h.b16 %v212
  %v1915 = vunpack.c.l.b16 %v213
  %v1916 = vunpack.c.h.b16 %v213
  %v1917 = vunpack.c.l.b16 %v214
  %v1918 = vunpack.c.h.b16 %v214
  %v1919 = vunpack.c.l.b16 %v215
  %v1920 = vunpack.c.h.b16 %v215
  %v1921 = vunpack.c.l.b16 %v216
  %v1922 = vunpack.c.h.b16 %v216
  %v1923 = vunpack.c.l.b16 %v217
  %v1924 = vunpack.c.h.b16 %v217
  %v1925 = vunpack.c.l.b16 %v218
  %v1926 = vunpack.c.h.b16 %v218
  %v1927 = vunpack.c.l.b16 %v219
  %v1928 = vunpack.c.h.b16 %v219
  %v1929 = vunpack.c.l.b16 %v220
  %v1930 = vunpack.c.h.b16 %v220
  %v1931 = vunpack.c.l.b16 %v221
  %v1932 = vunpack.c.h.b16 %v221
  %v1933 = vunpack.c.l.b16 %v222
  %v1934 = vunpack.c.h.b16 %v222
  %v1935 = vunpack.c.l.b16 %v223
  %v1936 = vunpack.c.h.b16 %v223
  %v1937 = vunpack.c.l.b16 %v224
  %v1938 = vunpack.c.h.b16 %v224
  %v1939 = vunpack.c.l.b16 %v225
  %v1940 = vunpack.c.h.b16 %v225
  %v1941 = vunpack.c.l.b16 %v226
  %v1942 = vunpack.c.h.b16 %v226
  %v1943 = vunpack.c.l.b16 %v227
  %v1944 = vunpack.c.h.b16 %v227
  %v1945 = vunpack.c.l.b16 %v228
  %v1946 = vunpack.c.h.b16 %v228
  %v1947 = vunpack.c.l.b16 %v229
  %v1948 = vunpack.c.h.b16 %v229
  %v1949 = vunpack.c.l.b16 %v230
  %v1950 = vunpack.c.h.b16 %v230
  %v1951 = vunpack.c.l.b16 %v231
  %v1952 = vunpack.c.h.b16 %v231
  %v1953 = vunpack.c.l.b16 %v232
  %v1954 = vunpack.c.h.b16 %v232
  %v1955 = vunpack.c.l.b16 %v233
  %v1956 = vunpack.c.h.b16 %v233
  %v1957 = vunpack.c.l.b16 %v234
  %v1958 = vunpack.c.h.b16 %v234
  %v1959 = vunpack.c.l.b16 %v235
  %v1960 = vunpack.c.h.b16 %v235
  %v1961 = vunpack.c.l.b16 %v236
  %v1962 = vunpack.c.h.b16 %v236
  %v1963 = vunpack.c.l.b16 %v237
  %v1964 = vunpack.c.h.b16 %v237
  %v1965 = vunpack.c.l.b16 %v238
  %v1966 = vunpack.c.h.b16 %v238
  %v1967 = vunpack.c.l.b16 %v239
  %v1968 = vunpack.c.h.b16 %v239
  %v1969 = vunpack.c.l.b16 %v240
  %v1970 = vunpack.c.h.b16 %v240
  %v1971 = vunpack.c.l.b16 %v241
  %v1972 = vunpack.c.h.b16 %v241
  %v1973 = vunpack.c.l.b16 %v242
  %v1974 = vunpack.c.h.b16 %v242
  %v1975 = vunpack.c.l.b16 %v243
  %v1976 = vunpack.c.h.b16 %v243
  %v1977 = vunpack.c.l.b16 %v244
  %v1978 = vunpack.c.h.b16 %v244
  %v1979 = vunpack.c.l.b16 %v245
  %v1980 = vunpack.c.h.b16 %v245
  %v1981 = vunpack.c.l.b16 %v246
  %v1982 = vunpack.c.h.b16 %v246
  %v1983 = vunpack.c.l.b16 %v247
  %v1984 = vunpack.c.h.b16 %v247
  %v1985 = vunpack.c.l.b16 %v248
  %v1986 = vunpack.c.h.b16 %v248
  %v1987 = vunpack.c.l.b16 %v249
  %v1988 = vunpack.c.h.b16 %v249
  %v1989 = vunpack.c.l.b16 %v250
  %v1990 = vunpack.c.h.b16 %v250
  %v1991 = vunpack.c.l.b16 %v251
  %v1992 = vunpack.c.h.b16 %v251
  %v1993 = vunpack.c.l.b16 %v252
  %v1994 = vunpack.c.h.b16 %v252
  %v1995 = vunpack.c.l.b16 %v253
  %v1996 = vunpack.c.h.b16 %v253
  %v1997 = vunpack.c.l.b16 %v254
  %v1998 = vunpack.c.h.b16 %v254
  %v1999 = vunpack.c.l.b16 %v255
  %v2000 = vunpack.c.h.b16 %v255
  %v2001 = vunpack.c.l.b16 %v256
  %v2002 = vunpack.c.h.b16 %v256
  %v2003 = vunpack.c.l.b16 %v257
  %v2004 = vunpack.c.h.b16 %v257
  %v2005 = vunpack.c.l.b16 %v258
  %v2006 = vunpack.c.h.b16 %v258
  %v2007 = vunpack.c.l.b16 %v259
  %v2008 = vunpack.c.h.b16 %v259
  %v2009 = vunpack.c.l.b16 %v260
  %v2010 = vunpack.c.h.b16 %v260
  %v2011 = vunpack.c.l.b16 %v261
  %v2012 = vunpack.c.h.b16 %v261
  %v2013 = vunpack.c.l.b16 %v262
  %v2014 = vunpack.c.h.b16 %v262
  %v2015 = vunpack.c.l.b16 %v263
  %v2016 = vunpack.c.h.b16 %v263
  %v2017 = vunpack.c.l.b16 %v264
  %v2018 = vunpack.c.h.b16 %v264
  %v2019 = vunpack.c.l.b16 %v265
  %v2020 = vunpack.c.h.b16 %v265
  %v2021 = vunpack.c.l.b16 %v266
  %v2022 = vunpack.c.h.b16 %v266
  %v2023 = vunpack.c.l.b16 %v267
  %v2024 = vunpack.c.h.b16 %v267
  %v2025 = vunpack.c.l.b16 %v268
  %v2026 = vunpack.c.h.b16 %v268
  %v2027 = vunpack.c.l.b16 %v269
  %v2028 = vunpack.c.h.b16 %v269
  %v2029 = vunpack.c.l.b16 %v270
  %v2030 = vunpack.c.h.b16 %v270
  %v2031 = vunpack.c.l.b16 %v271
  %v2032 = vunpack.c.h.b16 %v271
  %v2033 = vunpack.c.l.b16 %v272
  %v2034 = vunpack.c.h.b16 %v272
  %v2035 = vunpack.c.l.b16 %v273
  %v2036 = vunpack.c.h.b16 %v273
  %v2037 = vunpack.c.l.b16 %v274
  %v2038 = vunpack.c.h.b16 %v274
  %v2039 = vunpack.c.l.b16 %v275
  %v2040 = vunpack.c.h.b16 %v275
  %v2041 = vunpack.c.l.b16 %v276
  %v2042 = vunpack.c.h.b16 %v276
  %v2043 = vunpack.c.l.b16 %v277
  %v2044 = vunpack.c.h.b16 %v277
  %v2045 = vunpack.c.l.b16 %v278
  %v2046 = vunpack.c.h.b16 %v278
  %v2047 = vunpack.c.l.b16 %v279
  %v2048 = vunpack.c.h.b16 %v279
  %v2049 = vunpack.c.l.b16 %v280
  %v2050 = vunpack.c.h.b16 %v280
  %v2051 = vunpack.c.l.b16 %v281
  %v2052 = vunpack.c.h.b16 %v281
  %v2053 = vunpack.c.l.b16 %v282
  %v2054 = vunpack.c.h.b16 %v282
  %v2055 = vunpack.c.l.b16 %v283
  %v2056 = vunpack.c.h.b16 %v283
  %v2057 = vunpack.c.l.b16 %v284
  %v2058 = vunpack.c.h.b16 %v284
  %v2059 = vunpack.c.l.b16 %v285
  %v2060 = vunpack.c.h.b16 %v285
  %v2061 = vunpack.c.l.b16 %v286
  %v2062 = vunpack.c.h.b16 %v286
  %v2063 = vunpack.c.l.b16 %v287
  %v2064 = vunpack.c.h.b16 %v287
  %v2065 = vunpack.c.l.b16 %v288
  %v2066 = vunpack.c.h.b16 %v288
  %v2067 = vunpack.c.l.b16 %v289
  %v2068 = vunpack.c.h.b16 %v289
  %v2069 = vunpack.c.l.b16 %v290
  %v2070 = vunpack.c.h.b16 %v290
  %v2071 = vunpack.c.l.b16 %v291
  %v2072 = vunpack.c.h.b16 %v291
  %v2073 = vunpack.c.l.b16 %v292
  %v2074 = vunpack.c.h.b16 %v292
  %v2075 = vunpack.c.l.b16 %v293
  %v2076 = vunpack.c.h.b16 %v293
  %v2077 = vunpack.c.l.b16 %v294
  %v2078 = vunpack.c.h.b16 %v294
  %v2079 = vunpack.c.l.b16 %v295
  %v2080 = vunpack.c.h.b16 %v295
  %v2081 = vunpack.c.l.b16 %v296
  %v2082 = vunpack.c.h.b16 %v296
  %v2083 = vunpack.c.l.b16 %v297
  %v2084 = vunpack.c.h.b16 %v297
  %v2085 = vunpack.c.l.b16 %v298
  %v2086 = vunpack.c.h.b16 %v298
  %v2087 = vunpack.c.l.b16 %v299
  %v2088 = vunpack.c.h.b16 %v299
  %v2089 = vunpack.c.l.b16 %v300
  %v2090 = vunpack.c.h.b16 %v300
  %v2091 = vunpack.c.l.b16 %v301
  %v2092 = vunpack.c.h.b16 %v301
  %v2093 = vunpack.c.l.b16 %v302
  %v2094 = vunpack.c.h.b16 %v302
  %v2095 = vunpack.c.l.b16 %v303
  %v2096 = vunpack.c.h.b16 %v303
  %v2097 = vunpack.c.l.b16 %v304
  %v2098 = vunpack.c.h.b16 %v304
  %v2099 = vunpack.c.l.b16 %v305
  %v2100 = vunpack.c.h.b16 %v305
  %v2101 = vunpack.c.l.b16 %v306
  %v2102 = vunpack.c.h.b16 %v306
  %v2103 = vunpack.c.l.b16 %v307
  %v2104 = vunpack.c.h.b16 %v307
  %v2105 = vunpack.c.l.b16 %v308
  %v2106 = vunpack.c.h.b16 %v308
  %v2107 = vunpack.c.l.b16 %v309
  %v2108 = vunpack.c.h.b16 %v309
  %v2109 = vunpack.c.l.b16 %v310
  %v2110 = vunpack.c.h.b16 %v310
  %v2111 = vunpack.c.l.b16 %v311
  %v2112 = vunpack.c.h.b16 %v311
  %v2113 = vunpack.c.l.b16 %v312
  %v2114 = vunpack.c.h.b16 %v312
  %v2115 = vunpack.c.l.b16 %v313
  %v2116 = vunpack.c.h.b16 %v313
  %v2117 = vunpack.c.l.b16 %v314
  %v2118 = vunpack.c.h.b16 %v314
  %v2119 = vunpack.c.l.b16 %v315
  %v2120 = vunpack.c.h.b16 %v315
  %v2121 = vunpack.c.l.b16 %v316
  %v2122 = vunpack.c.h.b16 %v316
  %v2123 = vunpack.c.l.b16 %v317
  %v2124 = vunpack.c.h.b16 %v317
  %v2125 = vunpack.c.l.b16 %v318
  %v2126 = vunpack.c.h.b16 %v318
  %v2127 = vunpack.c.l.b16 %v319
  %v2128 = vunpack.c.h.b16 %v319
  %v2129 = vunpack.c.l.b16 %v320
  %v2130 = vunpack.c.h.b16 %v320
  %v2131 = vunpack.c.l.b16 %v321
  %v2132 = vunpack.c.h.b16 %v321
  %v2133 = vunpack.c.l.b16 %v322
  %v2134 = vunpack.c.h.b16 %v322
  %v2135 = vunpack.c.l.b16 %v323
  %v2136 = vunpack.c.h.b16 %v323
  %v2137 = vunpack.c.l.b16 %v324
  %v2138 = vunpack.c.h.b16 %v324
  %v2139 = vunpack.c.l.b16 %v325
  %v2140 = vunpack.c.h.b16 %v325
  %v2141 = vunpack.c.l.b16 %v326
  %v2142 = vunpack.c.h.b16 %v326
  %v2143 = vunpack.c.l.b16 %v327
  %v2144 = vunpack.c.h.b16 %v327
  %v2145 = vunpack.c.l.b16 %v328
  %v2146 = vunpack.c.h.b16 %v328
  %v2147 = vunpack.c.l.b16 %v329
  %v2148 = vunpack.c.h.b16 %v329
  %v2149 = vunpack.c.l.b16 %v330
  %v2150 = vunpack.c.h.b16 %v330
  %v2151 = vunpack.c.l.b16 %v331
  %v2152 = vunpack.c.h.b16 %v331
  %v2153 = vunpack.c.l.b16 %v332
  %v2154 = vunpack.c.h.b16 %v332
  %v2155 = vunpack.c.l.b16 %v333
  %v2156 = vunpack.c.h.b16 %v333
  %v2157 = vunpack.c.l.b16 %v334
  %v2158 = vunpack.c.h.b16 %v334
  %v2159 = vunpack.c.l.b16 %v335
  %v2160 = vunpack.c.h.b16 %v335
  %v2161 = vunpack.c.l.b16 %v336
  %v2162 = vunpack.c.h.b16 %v336
  %v2163 = vunpack.c.l.b16 %v337
  %v2164 = vunpack.c.h.b16 %v337
  %v2165 = vunpack.c.l.b16 %v338
  %v2166 = vunpack.c.h.b16 %v338
  %v2167 = vunpack.c.l.b16 %v339
  %v2168 = vunpack.c.h.b16 %v339
  %v2169 = vunpack.c.l.b16 %v340
  %v2170 = vunpack.c.h.b16 %v340
  %v2171 = vunpack.c.l.b16 %v341
  %v2172 = vunpack.c.h.b16 %v341
  %v2173 = vunpack.c.l.b16 %v342
  %v2174 = vunpack.c.h.b16 %v342
  %v2175 = vunpack.c.l.b16 %v343
  %v2176 = vunpack.c.h.b16 %v343
  %v2177 = vunpack.c.l.b16 %v344
  %v2178 = vunpack.c.h.b16 %v344
  %v2179 = vunpack.c.l.b16 %v345
  %v2180 = vunpack.c.h.b16 %v345
  %v2181 = vunpack.c.l.b16 %v346
  %v2182 = vunpack.c.h.b16 %v346
  %v2183 = vunpack.c.l.b16 %v347
  %v2184 = vunpack.c.h.b16 %v347
  %v2185 = vunpack.c.l.b16 %v348
  %v2186 = vunpack.c.h.b16 %v348
  %v2187 = vunpack.c.l.b16 %v349
  %v2188 = vunpack.c.h.b16 %v349
  %v2189 = vunpack.c.l.b16 %v350
  %v2190 = vunpack.c.h.b16 %v350
  %v2191 = vunpack.c.l.b16 %v351
  %v2192 = vunpack.c.h.b16 %v351
  %v2193 = vunpack.c.l.b16 %v352
  %v2194 = vunpack.c.h.b16 %v352
  %v2195 = vunpack.c.l.b16 %v353
  %v2196 = vunpack.c.h.b16 %v353
  %v2197 = vunpack.c.l.b16 %v354
  %v2198 = vunpack.c.h.b16 %v354
  %v2199 = vunpack.c.l.b16 %v355
  %v2200 = vunpack.c.h.b16 %v355
  %v2201 = vunpack.c.l.b16 %v356
  %v2202 = vunpack.c.h.b16 %v356
  %v2203 = vunpack.c.l.b16 %v357
  %v2204 = vunpack.c.h.b16 %v357
  %v2205 = vunpack.c.l.b16 %v358
  %v2206 = vunpack.c.h.b16 %v358
  %v2207 = vunpack.c.l.b16 %v359
  %v2208 = vunpack.c.h.b16 %v359
  %v2209 = vunpack.c.l.b16 %v360
  %v2210 = vunpack.c.h.b16 %v360
  %v2211 = vunpack.c.l.b16 %v361
  %v2212 = vunpack.c.h.b16 %v361
  %v2213 = vunpack.c.l.b16 %v362
  %v2214 = vunpack.c.h.b16 %v362
  %v2215 = vunpack.c.l.b16 %v363
  %v2216 = vunpack.c.h.b16 %v363
  %v2217 = vunpack.c.l.b16 %v364
  %v2218 = vunpack.c.h.b16 %v364
  %v2219 = vunpack.c.l.b16 %v365
  %v2220 = vunpack.c.h.b16 %v365
  %v2221 = vunpack.c.l.b16 %v366
  %v2222 = vunpack.c.h.b16 %v366
  %v2223 = vunpack.c.l.b16 %v367
  %v2224 = vunpack.c.h.b16 %v367
  %v2225 = vunpack.c.l.b16 %v368
  %v2226 = vunpack.c.h.b16 %v368
  %v2227 = vunpack.c.l.b16 %v369
  %v2228 = vunpack.c.h.b16 %v369
  %v2229 = vunpack.c.l.b16 %v370
  %v2230 = vunpack.c.h.b16 %v370
  %v2231 = vunpack.c.l.b16 %v371
  %v2232 = vunpack.c.h.b16 %v371
  %v2233 = vunpack.c.l.b16 %v372
  %v2234 = vunpack.c.h.b16 %v372
  %v2235 = vunpack.c.l.b16 %v373
  %v2236 = vunpack.c.h.b16 %v373
  %v2237 = vunpack.c.l.b16 %v374
  %v2238 = vunpack.c.h.b16 %v374
  %v2239 = vunpack.c.l.b16 %v375
  %v2240 = vunpack.c.h.b16 %v375
  %v2241 = vunpack.c.l.b16 %v376
  %v2242 = vunpack.c.h.b16 %v376
  %v2243 = vunpack.c.l.b16 %v377
  %v2244 = vunpack.c.h.b16 %v377
  %v2245 = vunpack.c.l.b16 %v378
  %v2246 = vunpack.c.h.b16 %v378
  %v2247 = vunpack.c.l.b16 %v379
  %v2248 = vunpack.c.h.b16 %v379
  %v2249 = vunpack.c.l.b16 %v380
  %v2250 = vunpack.c.h.b16 %v380
  %v2251 = vunpack.c.l.b16 %v381
  %v2252 = vunpack.c.h.b16 %v381
  %v2253 = vunpack.c.l.b16 %v382
  %v2254 = vunpack.c.h.b16 %v382
  %v2255 = vunpack.c.l.b16 %v383
  %v2256 = vunpack.c.h.b16 %v383
  %v2257 = vunpack.c.l.b16 %v384
  %v2258 = vunpack.c.h.b16 %v384
  %v2259 = vunpack.c.l.b16 %v385
  %v2260 = vunpack.c.h.b16 %v385
  %v2261 = vunpack.c.l.b16 %v386
  %v2262 = vunpack.c.h.b16 %v386
  %v2263 = vunpack.c.l.b16 %v387
  %v2264 = vunpack.c.h.b16 %v387
  %v2265 = vunpack.c.l.b16 %v388
  %v2266 = vunpack.c.h.b16 %v388
  %v2267 = vunpack.c.l.b16 %v389
  %v2268 = vunpack.c.h.b16 %v389
  %v2269 = vunpack.c.l.b16 %v390
  %v2270 = vunpack.c.h.b16 %v390
  %v2271 = vunpack.c.l.b16 %v391
  %v2272 = vunpack.c.h.b16 %v391
  %v2273 = vunpack.c.l.b16 %v392
  %v2274 = vunpack.c.h.b16 %v392
  %v2275 = vunpack.c.l.b16 %v393
  %v2276 = vunpack.c.h.b16 %v393
  %v2277 = vunpack.c.l.b16 %v394
  %v2278 = vunpack.c.h.b16 %v394
  %v2279 = vunpack.c.l.b16 %v395
  %v2280 = vunpack.c.h.b16 %v395
  %v2281 = vunpack.c.l.b16 %v396
  %v2282 = vunpack.c.h.b16 %v396
  %v2283 = vunpack.c.l.b16 %v397
  %v2284 = vunpack.c.h.b16 %v397
  %v2285 = vunpack.c.l.b16 %v398
  %v2286 = vunpack.c.h.b16 %v398
  %v2287 = vunpack.c.l.b16 %v399
  %v2288 = vunpack.c.h.b16 %v399
  %v2289 = vunpack.c.l.b16 %v400
  %v2290 = vunpack.c.h.b16 %v400
  %v2291 = vunpack.c.l.b16 %v401
  %v2292 = vunpack.c.h.b16 %v401
  %v2293 = vunpack.c.l.b16 %v402
  %v2294 = vunpack.c.h.b16 %v402
  %v2295 = vunpack.c.l.b16 %v403
  %v2296 = vunpack.c.h.b16 %v403
  %v2297 = vunpack.c.l.b16 %v404
  %v2298 = vunpack.c.h.b16 %v404
  %v2299 = vunpack.c.l.b16 %v405
  %v2300 = vunpack.c.h.b16 %v405
  %v2301 = vunpack.c.l.b16 %v406
  %v2302 = vunpack.c.h.b16 %v406
  %v2303 = vunpack.c.l.b16 %v407
  %v2304 = vunpack.c.h.b16 %v407
  %v2305 = vunpack.c.l.b16 %v408
  %v2306 = vunpack.c.h.b16 %v408
  %v2307 = vunpack.c.l.b16 %v409
  %v2308 = vunpack.c.h.b16 %v409
  %v2309 = vunpack.c.l.b16 %v410
  %v2310 = vunpack.c.h.b16 %v410
  %v2311 = vunpack.c.l.b16 %v411
  %v2312 = vunpack.c.h.b16 %v411
  %v2313 = vunpack.c.l.b16 %v412
  %v2314 = vunpack.c.h.b16 %v412
  %v2315 = vunpack.c.l.b16 %v413
  %v2316 = vunpack.c.h.b16 %v413
  %v2317 = vunpack.c.l.b16 %v414
  %v2318 = vunpack.c.h.b16 %v414
  %v2319 = vunpack.c.l.b16 %v415
  %v2320 = vunpack.c.h.b16 %v415
  %v2321 = vunpack.c.l.b16 %v416
  %v2322 = vunpack.c.h.b16 %v416
  %v2323 = vunpack.c.l.b16 %v417
  %v2324 = vunpack.c.h.b16 %v417
  %v2325 = vunpack.c.l.b16 %v418
  %v2326 = vunpack.c.h.b16 %v418
  %v2327 = vunpack.c.l.b16 %v419
  %v2328 = vunpack.c.h.b16 %v419
  %v2329 = vunpack.c.l.b16 %v420
  %v2330 = vunpack.c.h.b16 %v420
  %v2331 = vunpack.c.l.b16 %v421
  %v2332 = vunpack.c.h.b16 %v421
  %v2333 = vunpack.c.l.b16 %v422
  %v2334 = vunpack.c.h.b16 %v422
  %v2335 = vunpack.c.l.b16 %v423
  %v2336 = vunpack.c.h.b16 %v423
  %v2337 = vunpack.c.l.b16 %v424
  %v2338 = vunpack.c.h.b16 %v424
  %v2339 = vunpack.c.l.b16 %v425
  %v2340 = vunpack.c.h.b16 %v425
  %v2341 = vunpack.c.l.b16 %v426
  %v2342 = vunpack.c.h.b16 %v426
  %v2343 = vunpack.c.l.b16 %v427
  %v2344 = vunpack.c.h.b16 %v427
  %v2345 = vunpack.c.l.b16 %v428
  %v2346 = vunpack.c.h.b16 %v428
  %v2347 = vunpack.c.l.b16 %v429
  %v2348 = vunpack.c.h.b16 %v429
  %v2349 = vunpack.c.l.b16 %v430
  %v2350 = vunpack.c.h.b16 %v430
  %v2351 = vunpack.c.l.b16 %v431
  %v2352 = vunpack.c.h.b16 %v431
  %v2353 = vunpack.c.l.b16 %v432
  %v2354 = vunpack.c.h.b16 %v432
  %v2355 = vunpack.c.l.b16 %v433
  %v2356 = vunpack.c.h.b16 %v433
  %v2357 = vunpack.c.l.b16 %v434
  %v2358 = vunpack.c.h.b16 %v434
  %v2359 = vunpack.c.l.b16 %v435
  %v2360 = vunpack.c.h.b16 %v435
  %v2361 = vunpack.c.l.b16 %v436
  %v2362 = vunpack.c.h.b16 %v436
  %v2363 = vunpack.c.l.b16 %v437
  %v2364 = vunpack.c.h.b16 %v437
  %v2365 = vunpack.c.l.b16 %v438
  %v2366 = vunpack.c.h.b16 %v438
  %v2367 = vunpack.c.l.b16 %v439
  %v2368 = vunpack.c.h.b16 %v439
  %v2369 = vunpack.c.l.b16 %v440
  %v2370 = vunpack.c.h.b16 %v440
  %v2371 = vunpack.c.l.b16 %v441
  %v2372 = vunpack.c.h.b16 %v441
  %v2373 = vunpack.c.l.b16 %v442
  %v2374 = vunpack.c.h.b16 %v442
  %v2375 = vunpack.c.l.b16 %v443
  %v2376 = vunpack.c.h.b16 %v443
  %v2377 = vunpack.c.l.b16 %v444
  %v2378 = vunpack.c.h.b16 %v444
  %v2379 = vunpack.c.l.b16 %v445
  %v2380 = vunpack.c.h.b16 %v445
  %v2381 = vunpack.c.l.b16 %v446
  %v2382 = vunpack.c.h.b16 %v446
  %v2383 = vunpack.c.l.b16 %v447
  %v2384 = vunpack.c.h.b16 %v447
  %v2385 = vunpack.c.l.b16 %v448
  %v2386 = vunpack.c.h.b16 %v448
  %v2387 = vunpack.c.l.b16 %v449
  %v2388 = vunpack.c.h.b16 %v449
  %v2389 = vunpack.c.l.b16 %v450
  %v2390 = vunpack.c.h.b16 %v450
  %v2391 = vunpack.c.l.b16 %v451
  %v2392 = vunpack.c.h.b16 %v451
  %v2393 = vunpack.c.l.b16 %v452
  %v2394 = vunpack.c.h.b16 %v452
  %v2395 = vunpack.c.l.b16 %v453
  %v2396 = vunpack.c.h.b16 %v453
  %v2397 = vunpack.c.l.b16 %v454
  %v2398 = vunpack.c.h.b16 %v454
  %v2399 = vunpack.c.l.b16 %v455
  %v2400 = vunpack.c.h.b16 %v455
  %v2401 = vunpack.c.l.b16 %v456
  %v2402 = vunpack.c.h.b16 %v456
  %v2403 = vunpack.c.l.b16 %v457
  %v2404 = vunpack.c.h.b16 %v457
  %v2405 = vunpack.c.l.b16 %v458
  %v2406 = vunpack.c.h.b16 %v458
  %v2407 = vunpack.c.l.b16 %v459
  %v2408 = vunpack.c.h.b16 %v459
  %v2409 = vunpack.c.l.b16 %v460
  %v2410 = vunpack.c.h.b16 %v460
  %v2411 = vunpack.c.l.b16 %v461
  %v2412 = vunpack.c.h.b16 %v461
  %v2413 = vunpack.c.l.b16 %v462
  %v2414 = vunpack.c.h.b16 %v462
  %v2415 = vunpack.c.l.b16 %v463
  %v2416 = vunpack.c.h.b16 %v463
  %v2417 = vunpack.c.l.b16 %v464
  %v2418 = vunpack.c.h.b16 %v464
  %v2419 = vunpack.c.l.b16 %v465
  %v2420 = vunpack.c.h.b16 %v465
  %v2421 = vunpack.c.l.b16 %v466
  %v2422 = vunpack.c.h.b16 %v466
  %v2423 = vunpack.c.l.b16 %v467
  %v2424 = vunpack.c.h.b16 %v467
  %v2425 = vunpack.c.l.b16 %v468
  %v2426 = vunpack.c.h.b16 %v468
  %v2427 = vunpack.c.l.b16 %v469
  %v2428 = vunpack.c.h.b16 %v469
  %v2429 = vunpack.c.l.b16 %v470
  %v2430 = vunpack.c.h.b16 %v470
  %v2431 = vunpack.c.l.b16 %v471
  %v2432 = vunpack.c.h.b16 %v471
  %v2433 = vunpack.c.l.b16 %v472
  %v2434 = vunpack.c.h.b16 %v472
  %v2435 = vunpack.c.l.b16 %v473
  %v2436 = vunpack.c.h.b16 %v473
  %v2437 = vunpack.c.l.b16 %v474
  %v2438 = vunpack.c.h.b16 %v474
  %v2439 = vunpack.c.l.b16 %v475
  %v2440 = vunpack.c.h.b16 %v475
  %v2441 = vunpack.c.l.b16 %v476
  %v2442 = vunpack.c.h.b16 %v476
  %v2443 = vunpack.c.l.b16 %v477
  %v2444 = vunpack.c.h.b16 %v477
  %v2445 = vunpack.c.l.b16 %v478
  %v2446 = vunpack.c.h.b16 %v478
  %v2447 = vunpack.c.l.b16 %v479
  %v2448 = vunpack.c.h.b16 %v479
  %v2449 = vunpack.c.l.b16 %v480
  %v2450 = vunpack.c.h.b16 %v480
  %v2451 = vunpack.c.l.b16 %v481
  %v2452 = vunpack.c.h.b16 %v481
  %v2453 = vunpack.c.l.b16 %v482
  %v2454 = vunpack.c.h.b16 %v482
  %v2455 = vunpack.c.l.b16 %v483
  %v2456 = vunpack.c.h.b16 %v483
  %v2457 = vunpack.c.l.b16 %v484
  %v2458 = vunpack.c.h.b16 %v484
  %v2459 = vunpack.c.l.b16 %v485
  %v2460 = vunpack.c.h.b16 %v485
  %v2461 = vunpack.c.l.b16 %v486
  %v2462 = vunpack.c.h.b16 %v486
  %v2463 = vunpack.c.l.b16 %v487
  %v2464 = vunpack.c.h.b16 %v487
  %v2465 = vunpack.c.l.b16 %v488
  %v2466 = vunpack.c.h.b16 %v488
  %v2467 = vunpack.c.l.b16 %v489
  %v2468 = vunpack.c.h.b16 %v489
  %v2469 = vunpack.c.l.b16 %v490
  %v2470 = vunpack.c.h.b16 %v490
  %v2471 = vunpack.c.l.b16 %v491
  %v2472 = vunpack.c.h.b16 %v491
  %v2473 = vunpack.c.l.b16 %v492
  %v2474 = vunpack.c.h.b16 %v492
  %v2475 = vunpack.c.l.b16 %v493
  %v2476 = vunpack.c.h.b16 %v493
  %v2477 = vunpack.c.l.b16 %v494
  %v2478 = vunpack.c.h.b16 %v494
  %v2479 = vunpack.c.l.b16 %v495
  %v2480 = vunpack.c.h.b16 %v495
  %v2481 = vunpack.c.l.b16 %v496
  %v2482 = vunpack.c.h.b16 %v496
  %v2483 = vunpack.c.l.b16 %v497
  %v2484 = vunpack.c.h.b16 %v497
  %v2485 = vunpack.c.l.b16 %v498
  %v2486 = vunpack.c.h.b16 %v498
  %v2487 = vunpack.c.l.b16 %v499
  %v2488 = vunpack.c.h.b16 %v499
  %v2489 = vunpack.c.l.b16 %v500
  %v2490 = vunpack.c.h.b16 %v500
  %v2491 = vunpack.c.l.b16 %v501
  %v2492 = vunpack.c.h.b16 %v501
  %v2493 = vunpack.c.l.b16 %v502
  %v2494 = vunpack.c.h.b16 %v502
  %v2495 = vunpack.c.l.b16 %v503
  %v2496 = vunpack.c.h.b16 %v503
  %v2497 = vunpack.c.l.b16 %v504
  %v2498 = vunpack.c.h.b16 %v504
  %v2499 = vunpack.c.l.b16 %v505
  %v2500 = vunpack.c.h.b16 %v505
  %v2501 = vunpack.c.l.b16 %v506
  %v2502 = vunpack.c.h.b16 %v506
  %v2503 = vunpack.c.l.b16 %v507
  %v2504 = vunpack.c.h.b16 %v507
  %v2505 = vunpack.c.l.b16 %v508
  %v2506 = vunpack.c.h.b16 %v508
  %v2507 = vunpack.c.l.b16 %v509
  %v2508 = vunpack.c.h.b16 %v509
  %v2509 = vunpack.c.l.b16 %v510
  %v2510 = vunpack.c.h.b16 %v510
  %v2511 = vunpack.c.l.b16 %v511
  %v2512 = vunpack.c.h.b16 %v511
  %v2513 = vunpack.c.l.b16 %v512
  %v2514 = vunpack.c.h.b16 %v512
  %v2515 = vunpack.c.l.b16 %v513
  %v2516 = vunpack.c.h.b16 %v513
  %v2517 = vunpack.c.l.b16 %v514
  %v2518 = vunpack.c.h.b16 %v514
  %v2519 = vunpack.c.l.b16 %v515
  %v2520 = vunpack.c.h.b16 %v515
  %v2521 = vunpack.c.l.b16 %v516
  %v2522 = vunpack.c.h.b16 %v516
  %v2523 = vunpack.c.l.b16 %v517
  %v2524 = vunpack.c.h.b16 %v517
  %v2525 = vunpack.c.l.b16 %v518
  %v2526 = vunpack.c.h.b16 %v518
  %v2527 = vunpack.c.l.b16 %v519
  %v2528 = vunpack.c.h.b16 %v519
  %v2529 = vunpack.c.l.b16 %v520
  %v2530 = vunpack.c.h.b16 %v520
  %v2531 = vunpack.c.l.b16 %v521
  %v2532 = vunpack.c.h.b16 %v521
  %v2533 = vunpack.c.l.b16 %v522
  %v2534 = vunpack.c.h.b16 %v522
  %v2535 = vunpack.c.l.b16 %v523
  %v2536 = vunpack.c.h.b16 %v523
  %v2537 = vunpack.c.l.b16 %v524
  %v2538 = vunpack.c.h.b16 %v524
  %v2539 = vunpack.c.l.b16 %v525
  %v2540 = vunpack.c.h.b16 %v525
  %v2541 = vunpack.c.l.b16 %v526
  %v2542 = vunpack.c.h.b16 %v526
  %v2543 = vunpack.c.l.b16 %v527
  %v2544 = vunpack.c.h.b16 %v527
  %v2545 = vunpack.c.l.b16 %v528
  %v2546 = vunpack.c.h.b16 %v528
  %v2547 = vunpack.c.l.b16 %v529
  %v2548 = vunpack.c.h.b16 %v529
  %v2549 = vunpack.c.l.b16 %v530
  %v2550 = vunpack.c.h.b16 %v530
  %v2551 = vunpack.c.l.b16 %v531
  %v2552 = vunpack.c.h.b16 %v531
  %v2553 = vunpack.c.l.b16 %v532
  %v2554 = vunpack.c.h.b16 %v532
  %v2555 = vunpack.c.l.b16 %v533
  %v2556 = vunpack.c.h.b16 %v533
  %v2557 = vunpack.c.l.b16 %v534
  %v2558 = vunpack.c.h.b16 %v534
  %v2559 = vunpack.c.l.b16 %v535
  %v2560 = vunpack.c.h.b16 %v535
  %v2561 = vunpack.c.l.b16 %v536
  %v2562 = vunpack.c.h.b16 %v536
  %v2563 = vunpack.c.l.b16 %v537
  %v2564 = vunpack.c.h.b16 %v537
  %v2565 = vunpack.c.l.b16 %v538
  %v2566 = vunpack.c.h.b16 %v538
  %v2567 = vunpack.c.l.b16 %v539
  %v2568 = vunpack.c.h.b16 %v539
  %v2569 = vunpack.c.l.b16 %v540
  %v2570 = vunpack.c.h.b16 %v540
  %v2571 = vunpack.c.l.b16 %v541
  %v2572 = vunpack.c.h.b16 %v541
  %v2573 = vunpack.c.l.b16 %v542
  %v2574 = vunpack.c.h.b16 %v542
  %v2575 = vunpack.c.l.b16 %v543
  %v2576 = vunpack.c.h.b16 %v543
  %v2577 = vunpack.c.l.b16 %v544
  %v2578 = vunpack.c.h.b16 %v544
  %v2579 = vunpack.c.l.b16 %v545
  %v2580 = vunpack.c.h.b16 %v545
  %v2581 = vunpack.c.l.b16 %v546
  %v2582 = vunpack.c.h.b16 %v546
  %v2583 = vunpack.c.l.b16 %v547
  %v2584 = vunpack.c.h.b16 %v547
  %v2585 = vunpack.c.l.b16 %v548
  %v2586 = vunpack.c.h.b16 %v548
  %v2587 = vunpack.c.l.b16 %v549
  %v2588 = vunpack.c.h.b16 %v549
  %v2589 = vunpack.c.l.b16 %v550
  %v2590 = vunpack.c.h.b16 %v550
  %v2591 = vunpack.c.l.b16 %v551
  %v2592 = vunpack.c.h.b16 %v551
  %v2593 = vunpack.c.l.b16 %v552
  %v2594 = vunpack.c.h.b16 %v552
  %v2595 = vunpack.c.l.b16 %v553
  %v2596 = vunpack.c.h.b16 %v553
  %v2597 = vunpack.c.l.b16 %v554
  %v2598 = vunpack.c.h.b16 %v554
  %v2599 = vunpack.c.l.b16 %v555
  %v2600 = vunpack.c.h.b16 %v555
  %v2601 = vunpack.c.l.b16 %v556
  %v2602 = vunpack.c.h.b16 %v556
  %v2603 = vunpack.c.l.b16 %v557
  %v2604 = vunpack.c.h.b16 %v557
  %v2605 = vunpack.c.l.b16 %v558
  %v2606 = vunpack.c.h.b16 %v558
  %v2607 = vunpack.c.l.b16 %v559
  %v2608 = vunpack.c.h.b16 %v559
  %v2609 = vunpack.c.l.b16 %v560
  %v2610 = vunpack.c.h.b16 %v560
  %v2611 = vunpack.c.l.b16 %v561
  %v2612 = vunpack.c.h.b16 %v561
  %v2613 = vunpack.c.l.b16 %v562
  %v2614 = vunpack.c.h.b16 %v562
  %v2615 = vunpack.c.l.b16 %v563
  %v2616 = vunpack.c.h.b16 %v563
  %v2617 = vunpack.c.l.b16 %v564
  %v2618 = vunpack.c.h.b16 %v564
  %v2619 = vunpack.c.l.b16 %v565
  %v2620 = vunpack.c.h.b16 %v565
  %v2621 = vunpack.c.l.b16 %v566
  %v2622 = vunpack.c.h.b16 %v566
  %v2623 = vunpack.c.l.b16 %v567
  %v2624 = vunpack.c.h.b16 %v567
  %v2625 = vunpack.c.l.b16 %v568
  %v2626 = vunpack.c.h.b16 %v568
  %v2627 = vunpack.c.l.b16 %v569
  %v2628 = vunpack.c.h.b16 %v569
  %v2629 = vunpack.c.l.b16 %v570
  %v2630 = vunpack.c.h.b16 %v570
  %v2631 = vunpack.c.l.b16 %v571
  %v2632 = vunpack.c.h.b16 %v571
  %v2633 = vunpack.c.l.b16 %v572
  %v2634 = vunpack.c.h.b16 %v572
  %v2635 = vunpack.c.l.b16 %v573
  %v2636 = vunpack.c.h.b16 %v573
  %v2637 = vunpack.c.l.b16 %v574
  %v2638 = vunpack.c.h.b16 %v574
  %v2639 = vunpack.c.l.b16 %v575
  %v2640 = vunpack.c.h.b16 %v575
  %v2641 = vunpack.c.l.b16 %v576
  %v2642 = vunpack.c.h.b16 %v576
  %v2643 = vunpack.c.l.b16 %v577
  %v2644 = vunpack.c.h.b16 %v577
  %v2645 = vunpack.c.l.b16 %v578
  %v2646 = vunpack.c.h.b16 %v578
  %v2647 = vunpack.c.l.b16 %v579
  %v2648 = vunpack.c.h.b16 %v579
  %v2649 = vunpack.c.l.b16 %v580
  %v2650 = vunpack.c.h.b16 %v580
  %v2651 = vunpack.c.l.b16 %v581
  %v2652 = vunpack.c.h.b16 %v581
  %v2653 = vunpack.c.l.b16 %v582
  %v2654 = vunpack.c.h.b16 %v582
  %v2655 = vunpack.c.l.b16 %v583
  %v2656 = vunpack.c.h.b16 %v583
  %v2657 = vunpack.c.l.b16 %v584
  %v2658 = vunpack.c.h.b16 %v584
  %v2659 = vunpack.c.l.b16 %v585
  %v2660 = vunpack.c.h.b16 %v585
  %v2661 = vunpack.c.l.b16 %v586
  %v2662 = vunpack.c.h.b16 %v586
  %v2663 = vunpack.c.l.b16 %v587
  %v2664 = vunpack.c.h.b16 %v587
  %v2665 = vunpack.c.l.b16 %v588
  %v2666 = vunpack.c.h.b16 %v588
  %v2667 = vunpack.c.l.b16 %v589
  %v2668 = vunpack.c.h.b16 %v589
  %v2669 = vunpack.c.l.b16 %v590
  %v2670 = vunpack.c.h.b16 %v590
  %v2671 = vunpack.c.l.b16 %v591
  %v2672 = vunpack.c.h.b16 %v591
  %v2673 = vunpack.c.l.b16 %v592
  %v2674 = vunpack.c.h.b16 %v592
  %v2675 = vunpack.c.l.b16 %v593
  %v2676 = vunpack.c.h.b16 %v593
  %v2677 = vunpack.c.l.b16 %v594
  %v2678 = vunpack.c.h.b16 %v594
  %v2679 = vunpack.c.l.b16 %v595
  %v2680 = vunpack.c.h.b16 %v595
  %v2681 = vunpack.c.l.b16 %v596
  %v2682 = vunpack.c.h.b16 %v596
  %v2683 = vunpack.c.l.b16 %v597
  %v2684 = vunpack.c.h.b16 %v597
  %v2685 = vunpack.c.l.b16 %v598
  %v2686 = vunpack.c.h.b16 %v598
  %v2687 = vunpack.c.l.b16 %v599
  %v2688 = vunpack.c.h.b16 %v599
  %v2689 = vunpack.c.l.b16 %v600
  %v2690 = vunpack.c.h.b16 %v600
  %v2691 = vunpack.c.l.b16 %v601
  %v2692 = vunpack.c.h.b16 %v601
  %v2693 = vunpack.c.l.b16 %v602
  %v2694 = vunpack.c.h.b16 %v602
  %v2695 = vunpack.c.l.b16 %v603
  %v2696 = vunpack.c.h.b16 %v603
  %v2697 = vunpack.c.l.b16 %v604
  %v2698 = vunpack.c.h.b16 %v604
  %v2699 = vunpack.c.l.b16 %v605
  %v2700 = vunpack.c.h.b16 %v605
  %v2701 = vunpack.c.l.b16 %v606
  %v2702 = vunpack.c.h.b16 %v606
  %v2703 = vunpack.c.l.b16 %v607
  %v2704 = vunpack.c.h.b16 %v607
  %v2705 = vunpack.c.l.b16 %v608
  %v2706 = vunpack.c.h.b16 %v608
  %v2707 = vunpack.c.l.b16 %v609
  %v2708 = vunpack.c.h.b16 %v609
  %v2709 = vunpack.c.l.b16 %v610
  %v2710 = vunpack.c.h.b16 %v610
  %v2711 = vunpack.c.l.b16 %v611
  %v2712 = vunpack.c.h.b16 %v611
  %v2713 = vunpack.c.l.b16 %v612
  %v2714 = vunpack.c.h.b16 %v612
  %v2715 = vunpack.c.l.b16 %v613
  %v2716 = vunpack.c.h.b16 %v613
  %v2717 = vunpack.c.l.b16 %v614
  %v2718 = vunpack.c.h.b16 %v614
  %v2719 = vunpack.c.l.b16 %v615
  %v2720 = vunpack.c.h.b16 %v615
  %v2721 = vunpack.c.l.b16 %v616
  %v2722 = vunpack.c.h.b16 %v616
  %v2723 = vunpack.c.l.b16 %v617
  %v2724 = vunpack.c.h.b16 %v617
  %v2725 = vunpack.c.l.b16 %v618
  %v2726 = vunpack.c.h.b16 %v618
  %v2727 = vunpack.c.l.b16 %v619
  %v2728 = vunpack.c.h.b16 %v619
  %v2729 = vunpack.c.l.b16 %v620
  %v2730 = vunpack.c.h.b16 %v620
  %v2731 = vunpack.c.l.b16 %v621
  %v2732 = vunpack.c.h.b16 %v621
  %v2733 = vunpack.c.l.b16 %v622
  %v2734 = vunpack.c.h.b16 %v622
  %v2735 = vunpack.c.l.b16 %v623
  %v2736 = vunpack.c.h.b16 %v623
  %v2737 = vunpack.c.l.b16 %v624
  %v2738 = vunpack.c.h.b16 %v624
  %v2739 = vunpack.c.l.b16 %v625
  %v2740 = vunpack.c.h.b16 %v625
  %v2741 = vunpack.c.l.b16 %v626
  %v2742 = vunpack.c.h.b16 %v626
  %v2743 = vunpack.c.l.b16 %v627
  %v2744 = vunpack.c.h.b16 %v627
  %v2745 = vunpack.c.l.b16 %v628
  %v2746 = vunpack.c.h.b16 %v628
  %v2747 = vunpack.c.l.b16 %v629
  %v2748 = vunpack.c.h.b16 %v629
  %v2749 = vunpack.c.l.b16 %v630
  %v2750 = vunpack.c.h.b16 %v630
  %v2751 = vunpack.c.l.b16 %v631
  %v2752 = vunpack.c.h.b16 %v631
  %v2753 = vunpack.c.l.b16 %v632
  %v2754 = vunpack.c.h.b16 %v632
  %v2755 = vunpack.c.l.b16 %v633
  %v2756 = vunpack.c.h.b16 %v633
  %v2757 = vunpack.c.l.b16 %v634
  %v2758 = vunpack.c.h.b16 %v634
  %v2759 = vunpack.c.l.b16 %v635
  %v2760 = vunpack.c.h.b16 %v635
  %v2761 = vunpack.c.l.b16 %v636
  %v2762 = vunpack.c.h.b16 %v636
  %v2763 = vunpack.c.l.b16 %v637
  %v2764 = vunpack.c.h.b16 %v637
  %v2765 = vunpack.c.l.b16 %v638
  %v2766 = vunpack.c.h.b16 %v638
  %v2767 = vunpack.c.l.b16 %v639
  %v2768 = vunpack.c.h.b16 %v639
  %v2769 = vunpack.c.l.b16 %v640
  %v2770 = vunpack.c.h.b16 %v640
  %v2771 = vunpack.c.l.b16 %v641
  %v2772 = vunpack.c.h.b16 %v641
  %v2773 = vunpack.c.l.b16 %v642
  %v2774 = vunpack.c.h.b16 %v642
  %v2775 = vpack.c.b16 %v1779, %v1775
  %v2776 = vpack.c.b16 %v1780, %v1776
  %v2777 = vpack.c.b16 %v1781, %v1777
  %v2778 = vpack.c.b16 %v1782, %v1778
  %v2779 = vpack.c.b16 %v1787, %v1783
  %v2780 = vpack.c.b16 %v1788, %v1784
  %v2781 = vpack.c.b16 %v1789, %v1785
  %v2782 = vpack.c.b16 %v1790, %v1786
  %v2783 = vpack.c.b16 %v1795, %v1791
  %v2784 = vpack.c.b16 %v1796, %v1792
  %v2785 = vpack.c.b16 %v1797, %v1793
  %v2786 = vpack.c.b16 %v1798, %v1794
  %v2787 = vpack.c.b16 %v1803, %v1799
  %v2788 = vpack.c.b16 %v1804, %v1800
  %v2789 = vpack.c.b16 %v1805, %v1801
  %v2790 = vpack.c.b16 %v1806, %v1802
  %v2791 = vpack.c.b16 %v1811, %v1807
  %v2792 = vpack.c.b16 %v1812, %v1808
  %v2793 = vpack.c.b16 %v1813, %v1809
  %v2794 = vpack.c.b16 %v1814, %v1810
  %v2795 = vpack.c.b16 %v1819, %v1815
  %v2796 = vpack.c.b16 %v1820, %v1816
  %v2797 = vpack.c.b16 %v1821, %v1817
  %v2798 = vpack.c.b16 %v1822, %v1818
  %v2799 = vpack.c.b16 %v1827, %v1823
  %v2800 = vpack.c.b16 %v1828, %v1824
  %v2801 = vpack.c.b16 %v1829, %v1825
  %v2802 = vpack.c.b16 %v1830, %v1826
  %v2803 = vpack.c.b16 %v1835, %v1831
  %v2804 = vpack.c.b16 %v1836, %v1832
  %v2805 = vpack.c.b16 %v1837, %v1833
  %v2806 = vpack.c.b16 %v1838, %v1834
  %v2807 = vpack.c.b16 %v1843, %v1839
  %v2808 = vpack.c.b16 %v1844, %v1840
  %v2809 = vpack.c.b16 %v1845, %v1841
  %v2810 = vpack.c.b16 %v1846, %v1842
  %v2811 = vpack.c.b16 %v1851, %v1847
  %v2812 = vpack.c.b16 %v1852, %v1848
  %v2813 = vpack.c.b16 %v1853, %v1849
  %v2814 = vpack.c.b16 %v1854, %v1850
  %v2815 = vpack.c.b16 %v1859, %v1855
  %v2816 = vpack.c.b16 %v1860, %v1856
  %v2817 = vpack.c.b16 %v1861, %v1857
  %v2818 = vpack.c.b16 %v1862, %v1858
  %v2819 = vpack.c.b16 %v1867, %v1863
  %v2820 = vpack.c.b16 %v1868, %v1864
  %v2821 = vpack.c.b16 %v1869, %v1865
  %v2822 = vpack.c.b16 %v1870, %v1866
  %v2823 = vpack.c.b16 %v1875, %v1871
  %v2824 = vpack.c.b16 %v1876, %v1872
  %v2825 = vpack.c.b16 %v1877, %v1873
  %v2826 = vpack.c.b16 %v1878, %v1874
  %v2827 = vpack.c.b16 %v1883, %v1879
  %v2828 = vpack.c.b16 %v1884, %v1880
  %v2829 = vpack.c.b16 %v1885, %v1881
  %v2830 = vpack.c.b16 %v1886, %v1882
  %v2831 = vpack.c.b16 %v1891, %v1887
  %v2832 = vpack.c.b16 %v1892, %v1888
  %v2833 = vpack.c.b16 %v1893, %v1889
  %v2834 = vpack.c.b16 %v1894, %v1890
  %v2835 = vpack.c.b16 %v1899, %v1895
  %v2836 = vpack.c.b16 %v1900, %v1896
  %v2837 = vpack.c.b16 %v1901, %v1897
  %v2838 = vpack.c.b16 %v1902, %v1898
  %v2839 = vpack.c.b16 %v1907, %v1903
  %v2840 = vpack.c.b16 %v1908, %v1904
  %v2841 = vpack.c.b16 %v1909, %v1905
  %v2842 = vpack.c.b16 %v1910, %v1906
  %v2843 = vpack.c.b16 %v1915, %v1911
  %v2844 = vpack.c.b16 %v1916, %v1912
  %v2845 = vpack.c.b16 %v1917, %v1913
  %v2846 = vpack.c.b16 %v1918, %v1914
  %v2847 = vpack.c.b16 %v1923, %v1919
  %v2848 = vpack.c.b16 %v1924, %v1920
  %v2849 = vpack.c.b16 %v1925, %v1921
  %v2850 = vpack.c.b16 %v1926, %v1922
  %v2851 = vpack.c.b16 %v1931, %v1927
  %v2852 = vpack.c.b16 %v1932, %v1928
  %v2853 = vpack.c.b16 %v1933, %v1929
  %v2854 = vpack.c.b16 %v1934, %v1930
  %v2855 = vpack.c.b16 %v1939, %v1935
  %v2856 = vpack.c.b16 %v1940, %v1936
  %v2857 = vpack.c.b16 %v1941, %v1937
  %v2858 = vpack.c.b16 %v1942, %v1938
  %v2859 = vpack.c.b16 %v1947, %v1943
  %v2860 = vpack.c.b16 %v1948, %v1944
  %v2861 = vpack.c.b16 %v1949, %v1945
  %v2862 = vpack.c.b16 %v1950, %v1946
  %v2863 = vpack.c.b16 %v1955, %v1951
  %v2864 = vpack.c.b16 %v1956, %v1952
  %v2865 = vpack.c.b16 %v1957, %v1953
  %v2866 = vpack.c.b16 %v1958, %v1954
  %v2867 = vpack.c.b16 %v1963, %v1959
  %v2868 = vpack.c.b16 %v1964, %v1960
  %v2869 = vpack.c.b16 %v1965, %v1961
  %v2870 = vpack.c.b16 %v1966, %v1962
  %v2871 = vpack.c.b16 %v1971, %v1967
  %v2872 = vpack.c.b16 %v1972, %v1968
  %v2873 = vpack.c.b16 %v1973, %v1969
  %v2874 = vpack.c.b16 %v1974, %v1970
  %v2875 = vpack.c.b16 %v1979, %v1975
  %v2876 = vpack.c.b16 %v1980, %v1976
  %v2877 = vpack.c.b16 %v1981, %v1977
  %v2878 = vpack.c.b16 %v1982, %v1978
  %v2879 = vpack.c.b16 %v1987, %v1983
  %v2880 = vpack.c.b16 %v1988, %v1984
  %v2881 = vpack.c.b16 %v1989, %v1985
  %v2882 = vpack.c.b16 %v1990, %v1986
  %v2883 = vpack.c.b16 %v1995, %v1991
  %v2884 = vpack.c.b16 %v1996, %v1992
  %v2885 = vpack.c.b16 %v1997, %v1993
  %v2886 = vpack.c.b16 %v1998, %v1994
  %v2887 = vpack.c.b16 %v2003, %v1999
  %v2888 = vpack.c.b16 %v2004, %v2000
  %v2889 = vpack.c.b16 %v2005, %v2001
  %v2890 = vpack.c.b16 %v2006, %v2002
  %v2891 = vpack.c.b16 %v2011, %v2007
  %v2892 = vpack.c.b16 %v2012, %v2008
  %v2893 = vpack.c.b16 %v2013, %v2009
  %v2894 = vpack.c.b16 %v2014, %v2010
  %v2895 = vpack.c.b16 %v2019, %v2015
  %v2896 = vpack.c.b16 %v2020, %v2016
  %v2897 = vpack.c.b16 %v2021, %v2017
  %v2898 = vpack.c.b16 %v2022, %v2018
  %v2899 = vpack.c.b16 %v2027, %v2023
  %v2900 = vpack.c.b16 %v2028, %v2024
  %v2901 = vpack.c.b16 %v2029, %v2025
  %v2902 = vpack.c.b16 %v2030, %v2026
  %v2903 = vpack.c.b16 %v2035, %v2031
  %v2904 = vpack.c.b16 %v2036, %v2032
  %v2905 = vpack.c.b16 %v2037, %v2033
  %v2906 = vpack.c.b16 %v2038, %v2034
  %v2907 = vpack.c.b16 %v2043, %v2039
  %v2908 = vpack.c.b16 %v2044, %v2040
  %v2909 = vpack.c.b16 %v2045, %v2041
  %v2910 = vpack.c.b16 %v2046, %v2042
  %v2911 = vpack.c.b16 %v2051, %v2047
  %v2912 = vpack.c.b16 %v2052, %v2048
  %v2913 = vpack.c.b16 %v2053, %v2049
  %v2914 = vpack.c.b16 %v2054, %v2050
  %v2915 = vpack.c.b16 %v2059, %v2055
  %v2916 = vpack.c.b16 %v2060, %v2056
  %v2917 = vpack.c.b16 %v2061, %v2057
  %v2918 = vpack.c.b16 %v2062, %v2058
  %v2919 = vpack.c.b16 %v2067, %v2063
  %v2920 = vpack.c.b16 %v2068, %v2064
  %v2921 = vpack.c.b16 %v2069, %v2065
  %v2922 = vpack.c.b16 %v2070, %v2066
  %v2923 = vpack.c.b16 %v2075, %v2071
  %v2924 = vpack.c.b16 %v2076, %v2072
  %v2925 = vpack.c.b16 %v2077, %v2073
  %v2926 = vpack.c.b16 %v2078, %v2074
  %v2927 = vpack.c.b16 %v2083, %v2079
  %v2928 = vpack.c.b16 %v2084, %v2080
  %v2929 = vpack.c.b16 %v2085, %v2081
  %v2930 = vpack.c.b16 %v2086, %v2082
  %v2931 = vpack.c.b16 %v2091, %v2087
  %v2932 = vpack.c.b16 %v2092, %v2088
  %v2933 = vpack.c.b16 %v2093, %v2089
  %v2934 = vpack.c.b16 %v2094, %v2090
  %v2935 = vpack.c.b16 %v2099, %v2095
  %v2936 = vpack.c.b16 %v2100, %v2096
  %v2937 = vpack.c.b16 %v2101, %v2097
  %v2938 = vpack.c.b16 %v2102, %v2098
  %v2939 = vpack.c.b16 %v2107, %v2103
  %v2940 = vpack.c.b16 %v2108, %v2104
  %v2941 = vpack.c.b16 %v2109, %v2105
  %v2942 = vpack.c.b16 %v2110, %v2106
  %v2943 = vpack.c.b16 %v2115, %v2111
  %v2944 = vpack.c.b16 %v2116, %v2112
  %v2945 = vpack.c.b16 %v2117, %v2113
  %v2946 = vpack.c.b16 %v2118, %v2114
  %v2947 = vpack.c.b16 %v2123, %v2119
  %v2948 = vpack.c.b16 %v2124, %v2120
  %v2949 = vpack.c.b16 %v2125, %v2121
  %v2950 = vpack.c.b16 %v2126, %v2122
  %v2951 = vpack.c.b16 %v2131, %v2127
  %v2952 = vpack.c.b16 %v2132, %v2128
  %v2953 = vpack.c.b16 %v2133, %v2129
  %v2954 = vpack.c.b16 %v2134, %v2130
  %v2955 = vpack.c.b16 %v2139, %v2135
  %v2956 = vpack.c.b16 %v2140, %v2136
  %v2957 = vpack.c.b16 %v2141, %v2137
  %v2958 = vpack.c.b16 %v2142, %v2138
  %v2959 = vpack.c.b16 %v2147, %v2143
  %v2960 = vpack.c.b16 %v2148, %v2144
  %v2961 = vpack.c.b16 %v2149, %v2145
  %v2962 = vpack.c.b16 %v2150, %v2146
  %v2963 = vpack.c.b16 %v2155, %v2151
  %v2964 = vpack.c.b16 %v2156, %v2152
  %v2965 = vpack.c.b16 %v2157, %v2153
  %v2966 = vpack.c.b16 %v2158, %v2154
  %v2967 = vpack.c.b16 %v2163, %v2159
  %v2968 = vpack.c.b16 %v2164, %v2160
  %v2969 = vpack.c.b16 %v2165, %v2161
  %v2970 = vpack.c.b16 %v2166, %v2162
  %v2971 = vpack.c.b16 %v2171, %v2167
  %v2972 = vpack.c.b16 %v2172, %v2168
  %v2973 = vpack.c.b16 %v2173, %v2169
  %v2974 = vpack.c.b16 %v2174, %v2170
  %v2975 = vpack.c.b16 %v2179, %v2175
  %v2976 = vpack.c.b16 %v2180, %v2176
  %v2977 = vpack.c.b16 %v2181, %v2177
  %v2978 = vpack.c.b16 %v2182, %v2178
  %v2979 = vpack.c.b16 %v2187, %v2183
  %v2980 = vpack.c.b16 %v2188, %v2184
  %v2981 = vpack.c.b16 %v2189, %v2185
  %v2982 = vpack.c.b16 %v2190, %v2186
  %v2983 = vpack.c.b16 %v2195, %v2191
  %v2984 = vpack.c.b16 %v2196, %v2192
  %v2985 = vpack.c.b16 %v2197, %v2193
  %v2986 = vpack.c.b16 %v2198, %v2194
  %v2987 = vpack.c.b16 %v2203, %v2199
  %v2988 = vpack.c.b16 %v2204, %v2200
  %v2989 = vpack.c.b16 %v2205, %v2201
  %v2990 = vpack.c.b16 %v2206, %v2202
  %v2991 = vpack.c.b16 %v2211, %v2207
  %v2992 = vpack.c.b16 %v2212, %v2208
  %v2993 = vpack.c.b16 %v2213, %v2209
  %v2994 = vpack.c.b16 %v2214, %v2210
  %v2995 = vpack.c.b16 %v2219, %v2215
  %v2996 = vpack.c.b16 %v2220, %v2216
  %v2997 = vpack.c.b16 %v2221, %v2217
  %v2998 = vpack.c.b16 %v2222, %v2218
  %v2999 = vpack.c.b16 %v2227, %v2223
  %v3000 = vpack.c.b16 %v2228, %v2224
  %v3001 = vpack.c.b16 %v2229, %v2225
  %v3002 = vpack.c.b16 %v2230, %v2226
  %v3003 = vpack.c.b16 %v2235, %v2231
  %v3004 = vpack.c.b16 %v2236, %v2232
  %v3005 = vpack.c.b16 %v2237, %v2233
  %v3006 = vpack.c.b16 %v2238, %v2234
  %v3007 = vpack.c.b16 %v2243, %v2239
  %v3008 = vpack.c.b16 %v2244, %v2240
  %v3009 = vpack.c.b16 %v2245, %v2241
  %v3010 = vpack.c.b16 %v2246, %v2242
  %v3011 = vpack.c.b16 %v2251, %v2247
  %v3012 = vpack.c.b16 %v2252, %v2248
  %v3013 = vpack.c.b16 %v2253, %v2249
  %v3014 = vpack.c.b16 %v2254, %v2250
  %v3015 = vpack.c.b16 %v2259, %v2255
  %v3016 = vpack.c.b16 %v2260, %v2256
  %v3017 = vpack.c.b16 %v2261, %v2257
  %v3018 = vpack.c.b16 %v2262, %v2258
  %v3019 = vpack.c.b16 %v2267, %v2263
  %v3020 = vpack.c.b16 %v2268, %v2264
  %v3021 = vpack.c.b16 %v2269, %v2265
  %v3022 = vpack.c.b16 %v2270, %v2266
  %v3023 = vpack.c.b16 %v2275, %v2271
  %v3024 = vpack.c.b16 %v2276, %v2272
  %v3025 = vpack.c.b16 %v2277, %v2273
  %v3026 = vpack.c.b16 %v2278, %v2274
  %v3027 = vpack.c.b16 %v2283, %v2279
  %v3028 = vpack.c.b16 %v2284, %v2280
  %v3029 = vpack.c.b16 %v2285, %v2281
  %v3030 = vpack.c.b16 %v2286, %v2282
  %v3031 = vpack.c.b16 %v2291, %v2287
  %v3032 = vpack.c.b16 %v2292, %v2288
  %v3033 = vpack.c.b16 %v2293, %v2289
  %v3034 = vpack.c.b16 %v2294, %v2290
  %v3035 = vpack.c.b16 %v2299, %v2295
  %v3036 = vpack.c.b16 %v2300, %v2296
  %v3037 = vpack.c.b16 %v2301, %v2297
  %v3038 = vpack.c.b16 %v2302, %v2298
  %v3039 = vpack.c.b16 %v2307, %v2303
  %v3040 = vpack.c.b16 %v2308, %v2304
  %v3041 = vpack.c.b16 %v2309, %v2305
  %v3042 = vpack.c.b16 %v2310, %v2306
  %v3043 = vpack.c.b16 %v2315, %v2311
  %v3044 = vpack.c.b16 %v2316, %v2312
  %v3045 = vpack.c.b16 %v2317, %v2313
  %v3046 = vpack.c.b16 %v2318, %v2314
  %v3047 = vpack.c.b16 %v2323, %v2319
  %v3048 = vpack.c.b16 %v2324, %v2320
  %v3049 = vpack.c.b16 %v2325, %v2321
  %v3050 = vpack.c.b16 %v2326, %v2322
  %v3051 = vpack.c.b16 %v2331, %v2327
  %v3052 = vpack.c.b16 %v2332, %v2328
  %v3053 = vpack.c.b16 %v2333, %v2329
  %v3054 = vpack.c.b16 %v2334, %v2330
  %v3055 = vpack.c.b16 %v2339, %v2335
  %v3056 = vpack.c.b16 %v2340, %v2336
  %v3057 = vpack.c.b16 %v2341, %v2337
  %v3058 = vpack.c.b16 %v2342, %v2338
  %v3059 = vpack.c.b16 %v2347, %v2343
  %v3060 = vpack.c.b16 %v2348, %v2344
  %v3061 = vpack.c.b16 %v2349, %v2345
  %v3062 = vpack.c.b16 %v2350, %v2346
  %v3063 = vpack.c.b16 %v2355, %v2351
  %v3064 = vpack.c.b16 %v2356, %v2352
  %v3065 = vpack.c.b16 %v2357, %v2353
  %v3066 = vpack.c.b16 %v2358, %v2354
  %v3067 = vpack.c.b16 %v2363, %v2359
  %v3068 = vpack.c.b16 %v2364, %v2360
  %v3069 = vpack.c.b16 %v2365, %v2361
  %v3070 = vpack.c.b16 %v2366, %v2362
  %v3071 = vpack.c.b16 %v2371, %v2367
  %v3072 = vpack.c.b16 %v2372, %v2368
  %v3073 = vpack.c.b16 %v2373, %v2369
  %v3074 = vpack.c.b16 %v2374, %v2370
  %v3075 = vpack.c.b16 %v2379, %v2375
  %v3076 = vpack.c.b16 %v2380, %v2376
  %v3077 = vpack.c.b16 %v2381, %v2377
  %v3078 = vpack.c.b16 %v2382, %v2378
  %v3079 = vpack.c.b16 %v2387, %v2383
  %v3080 = vpack.c.b16 %v2388, %v2384
  %v3081 = vpack.c.b16 %v2389, %v2385
  %v3082 = vpack.c.b16 %v2390, %v2386
  %v3083 = vpack.c.b16 %v2395, %v2391
  %v3084 = vpack.c.b16 %v2396, %v2392
  %v3085 = vpack.c.b16 %v2397, %v2393
  %v3086 = vpack.c.b16 %v2398, %v2394
  %v3087 = vpack.c.b16 %v2403, %v2399
  %v3088 = vpack.c.b16 %v2404, %v2400
  %v3089 = vpack.c.b16 %v2405, %v2401
  %v3090 = vpack.c.b16 %v2406, %v2402
  %v3091 = vpack.c.b16 %v2411, %v2407
  %v3092 = vpack.c.b16 %v2412, %v2408
  %v3093 = vpack.c.b16 %v2413, %v2409
  %v3094 = vpack.c.b16 %v2414, %v2410
  %v3095 = vpack.c.b16 %v2419, %v2415
  %v3096 = vpack.c.b16 %v2420, %v2416
  %v3097 = vpack.c.b16 %v2421, %v2417
  %v3098 = vpack.c.b16 %v2422, %v2418
  %v3099 = vpack.c.b16 %v2427, %v2423
  %v3100 = vpack.c.b16 %v2428, %v2424
  %v3101 = vpack.c.b16 %v2429, %v2425
  %v3102 = vpack.c.b16 %v2430, %v2426
  %v3103 = vpack.c.b16 %v2435, %v2431
  %v3104 = vpack.c.b16 %v2436, %v2432
  %v3105 = vpack.c.b16 %v2437, %v2433
  %v3106 = vpack.c.b16 %v2438, %v2434
  %v3107 = vpack.c.b16 %v2443, %v2439
  %v3108 = vpack.c.b16 %v2444, %v2440
  %v3109 = vpack.c.b16 %v2445, %v2441
  %v3110 = vpack.c.b16 %v2446, %v2442
  %v3111 = vpack.c.b16 %v2451, %v2447
  %v3112 = vpack.c.b16 %v2452, %v2448
  %v3113 = vpack.c.b16 %v2453, %v2449
  %v3114 = vpack.c.b16 %v2454, %v2450
  %v3115 = vpack.c.b16 %v2459, %v2455
  %v3116 = vpack.c.b16 %v2460, %v2456
  %v3117 = vpack.c.b16 %v2461, %v2457
  %v3118 = vpack.c.b16 %v2462, %v2458
  %v3119 = vpack.c.b16 %v2467, %v2463
  %v3120 = vpack.c.b16 %v2468, %v2464
  %v3121 = vpack.c.b16 %v2469, %v2465
  %v3122 = vpack.c.b16 %v2470, %v2466
  %v3123 = vpack.c.b16 %v2475, %v2471
  %v3124 = vpack.c.b16 %v2476, %v2472
  %v3125 = vpack.c.b16 %v2477, %v2473
  %v3126 = vpack.c.b16 %v2478, %v2474
  %v3127 = vpack.c.b16 %v2483, %v2479
  %v3128 = vpack.c.b16 %v2484, %v2480
  %v3129 = vpack.c.b16 %v2485, %v2481
  %v3130 = vpack.c.b16 %v2486, %v2482
  %v3131 = vpack.c.b16 %v2491, %v2487
  %v3132 = vpack.c.b16 %v2492, %v2488
  %v3133 = vpack.c.b16 %v2493, %v2489
  %v3134 = vpack.c.b16 %v2494, %v2490
  %v3135 = vpack.c.b16 %v2499, %v2495
  %v3136 = vpack.c.b16 %v2500, %v2496
  %v3137 = vpack.c.b16 %v2501, %v2497
  %v3138 = vpack.c.b16 %v2502, %v2498
  %v3139 = vpack.c.b16 %v2507, %v2503
  %v3140 = vpack.c.b16 %v2508, %v2504
  %v3141 = vpack.c.b16 %v2509, %v2505
  %v3142 = vpack.c.b16 %v2510, %v2506
  %v3143 = vpack.c.b16 %v2515, %v2511
  %v3144 = vpack.c.b16 %v2516, %v2512
  %v3145 = vpack.c.b16 %v2517, %v2513
  %v3146 = vpack.c.b16 %v2518, %v2514
  %v3147 = vpack.c.b16 %v2523, %v2519
  %v3148 = vpack.c.b16 %v2524, %v2520
  %v3149 = vpack.c.b16 %v2525, %v2521
  %v3150 = vpack.c.b16 %v2526, %v2522
  %v3151 = vpack.c.b16 %v2531, %v2527
  %v3152 = vpack.c.b16 %v2532, %v2528
  %v3153 = vpack.c.b16 %v2533, %v2529
  %v3154 = vpack.c.b16 %v2534, %v2530
  %v3155 = vpack.c.b16 %v2539, %v2535
  %v3156 = vpack.c.b16 %v2540, %v2536
  %v3157 = vpack.c.b16 %v2541, %v2537
  %v3158 = vpack.c.b16 %v2542, %v2538
  %v3159 = vpack.c.b16 %v2547, %v2543
  %v3160 = vpack.c.b16 %v2548, %v2544
  %v3161 = vpack.c.b16 %v2549, %v2545
  %v3162 = vpack.c.b16 %v2550, %v2546
  %v3163 = vpack.c.b16 %v2555, %v2551
  %v3164 = vpack.c.b16 %v2556, %v2552
  %v3165 = vpack.c.b16 %v2557, %v2553
  %v3166 = vpack.c.b16 %v2558, %v2554
  %v3167 = vpack.c.b16 %v2563, %v2559
  %v3168 = vpack.c.b16 %v2564, %v2560
  %v3169 = vpack.c.b16 %v2565, %v2561
  %v3170 = vpack.c.b16 %v2566, %v2562
  %v3171 = vpack.c.b16 %v2571, %v2567
  %v3172 = vpack.c.b16 %v2572, %v2568
  %v3173 = vpack.c.b16 %v2573, %v2569
  %v3174 = vpack.c.b16 %v2574, %v2570
  %v3175 = vpack.c.b16 %v2579, %v2575
  %v3176 = vpack.c.b16 %v2580, %v2576
  %v3177 = vpack.c.b16 %v2581, %v2577
  %v3178 = vpack.c.b16 %v2582, %v2578
  %v3179 = vpack.c.b16 %v2587, %v2583
  %v3180 = vpack.c.b16 %v2588, %v2584
  %v3181 = vpack.c.b16 %v2589, %v2585
  %v3182 = vpack.c.b16 %v2590, %v2586
  %v3183 = vpack.c.b16 %v2595, %v2591
  %v3184 = vpack.c.b16 %v2596, %v2592
  %v3185 = vpack.c.b16 %v2597, %v2593
  %v3186 = vpack.c.b16 %v2598, %v2594
  %v3187 = vpack.c.b16 %v2603, %v2599
  %v3188 = vpack.c.b16 %v2604, %v2600
  %v3189 = vpack.c.b16 %v2605, %v2601
  %v3190 = vpack.c.b16 %v2606, %v2602
  %v3191 = vpack.c.b16 %v2611, %v2607
  %v3192 = vpack.c.b16 %v2612, %v2608
  %v3193 = vpack.c.b16 %v2613, %v2609
  %v3194 = vpack.c.b16 %v2614, %v2610
  %v3195 = vpack.c.b16 %v2619, %v2615
  %v3196 = vpack.c.b16 %v2620, %v2616
  %v3197 = vpack.c.b16 %v2621, %v2617
  %v3198 = vpack.c.b16 %v2622, %v2618
  %v3199 = vpack.c.b16 %v2627, %v2623
  %v3200 = vpack.c.b16 %v2628, %v2624
  %v3201 = vpack.c.b16 %v2629, %v2625
  %v3202 = vpack.c.b16 %v2630, %v2626
  %v3203 = vpack.c.b16 %v2635, %v2631
  %v3204 = vpack.c.b16 %v2636, %v2632
  %v3205 = vpack.c.b16 %v2637, %v2633
  %v3206 = vpack.c.b16 %v2638, %v2634
  %v3207 = vpack.c.b16 %v2643, %v2639
  %v3208 = vpack.c.b16 %v2644, %v2640
  %v3209 = vpack.c.b16 %v2645, %v2641
  %v3210 = vpack.c.b16 %v2646, %v2642
  %v3211 = vpack.c.b16 %v2651, %v2647
  %v3212 = vpack.c.b16 %v2652, %v2648
  %v3213 = vpack.c.b16 %v2653, %v2649
  %v3214 = vpack.c.b16 %v2654, %v2650
  %v3215 = vpack.c.b16 %v2659, %v2655
  %v3216 = vpack.c.b16 %v2660, %v2656
  %v3217 = vpack.c.b16 %v2661, %v2657
  %v3218 = vpack.c.b16 %v2662, %v2658
  %v3219 = vpack.c.b16 %v2667, %v2663
  %v3220 = vpack.c.b16 %v2668, %v2664
  %v3221 = vpack.c.b16 %v2669, %v2665
  %v3222 = vpack.c.b16 %v2670, %v2666
  %v3223 = vpack.c.b16 %v2675, %v2671
  %v3224 = vpack.c.b16 %v2676, %v2672
  %v3225 = vpack.c.b16 %v2677, %v2673
  %v3226 = vpack.c.b16 %v2678, %v2674
  %v3227 = vpack.c.b16 %v2683, %v2679
  %v3228 = vpack.c.b16 %v2684, %v2680
  %v3229 = vpack.c.b16 %v2685, %v2681
  %v3230 = vpack.c.b16 %v2686, %v2682
  %v3231 = vpack.c.b16 %v2691, %v2687
  %v3232 = vpack.c.b16 %v2692, %v2688
  %v3233 = vpack.c.b16 %v2693, %v2689
  %v3234 = vpack.c.b16 %v2694, %v2690
  %v3235 = vpack.c.b16 %v2699, %v2695
  %v3236 = vpack.c.b16 %v2700, %v2696
  %v3237 = vpack.c.b16 %v2701, %v2697
  %v3238 = vpack.c.b16 %v2702, %v2698
  %v3239 = vpack.c.b16 %v2707, %v2703
  %v3240 = vpack.c.b16 %v2708, %v2704
  %v3241 = vpack.c.b16 %v2709, %v2705
  %v3242 = vpack.c.b16 %v2710, %v2706
  %v3243 = vpack.c.b16 %v2715, %v2711
  %v3244 = vpack.c.b16 %v2716, %v2712
  %v3245 = vpack.c.b16 %v2717, %v2713
  %v3246 = vpack.c.b16 %v2718, %v2714
  %v3247 = vpack.c.b16 %v2723, %v2719
  %v3248 = vpack.c.b16 %v2724, %v2720
  %v3249 = vpack.c.b16 %v2725, %v2721
  %v3250 = vpack.c.b16 %v2726, %v2722
  %v3251 = vpack.c.b16 %v2731, %v2727
  %v3252 = vpack.c.b16 %v2732, %v2728
  %v3253 = vpack.c.b16 %v2733, %v2729
  %v3254 = vpack.c.b16 %v2734, %v2730
  %v3255 = vpack.c.b16 %v2739, %v2735
  %v3256 = vpack.c.b16 %v2740, %v2736
  %v3257 = vpack.c.b16 %v2741, %v2737
  %v3258 = vpack.c.b16 %v2742, %v2738
  %v3259 = vpack.c.b16 %v2747, %v2743
  %v3260 = vpack.c.b16 %v2748, %v2744
  %v3261 = vpack.c.b16 %v2749, %v2745
  %v3262 = vpack.c.b16 %v2750, %v2746
  %v3263 = vpack.c.b16 %v2755, %v2751
  %v3264 = vpack.c.b16 %v2756, %v2752
  %v3265 = vpack.c.b16 %v2757, %v2753
  %v3266 = vpack.c.b16 %v2758, %v2754
  %v3267 = vpack.c.b16 %v2763, %v2759
  %v3268 = vpack.c.b16 %v2764, %v2760
  %v3269 = vpack.c.b16 %v2765, %v2761
  %v3270 = vpack.c.b16 %v2766, %v2762
  %v3271 = vpack.c.b16 %v2771, %v2767
  %v3272 = vpack.c.b16 %v2772, %v2768
  %v3273 = vpack.c.b16 %v2773, %v2769
  %v3274 = vpack.c.b16 %v2774, %v2770
  %vm3775 = vcmask 654336
  %v3777 = vsel %vm3775, %v1042, 0
  %v3780 = vsel %vm3775, %v1058, 0
  %v3783 = vsel %vm3775, %v1074, 0
  %v3786 = vsel %vm3775, %v1090, 0
  %v3789 = vsel %vm3775, %v1106, 0
  %v3792 = vsel %vm3775, %v1122, 0
  %v3795 = vsel %vm3775, %v1138, 0
  %v3798 = vsel %vm3775, %v1154, 0
  %3800 = vmatprep.subr.bf16.mxu0 %v2776
  %3801 = vmatpush1.bf16.msra.mxu0 %v2775
  %3802 = vmatprep.subr.bf16.mxu0 %v2780
  %3803 = vmatpush1.bf16.msra.mxu0 %v2779
  %3804 = vmatprep.subr.bf16.mxu0 %v2784
  %3805 = vmatpush1.bf16.msra.mxu0 %v2783
  %3806 = vmatprep.subr.bf16.mxu0 %v2788
  %3807 = vmatpush1.bf16.msra.mxu0 %v2787
  %3808 = vmatprep.subr.bf16.mxu0 %v2792
  %3809 = vmatpush1.bf16.msra.mxu0 %v2791
  %3810 = vmatprep.subr.bf16.mxu0 %v2796
  %3811 = vmatpush1.bf16.msra.mxu0 %v2795
  %3812 = vmatprep.subr.bf16.mxu0 %v2800
  %3813 = vmatpush1.bf16.msra.mxu0 %v2799
  %3814 = vmatprep.subr.bf16.mxu0 %v2804
  %3815 = vmatpush1.bf16.msra.mxu0 %v2803
  %3816 = vmatprep.subr.bf16.mxu0 %v2808
  %3817 = vmatpush1.bf16.msra.mxu0 %v2807
  %3818 = vmatprep.subr.bf16.mxu0 %v2812
  %3819 = vmatpush1.bf16.msra.mxu0 %v2811
  %3820 = vmatprep.subr.bf16.mxu0 %v2816
  %3821 = vmatpush1.bf16.msra.mxu0 %v2815
  %3822 = vmatprep.subr.bf16.mxu0 %v2820
  %3823 = vmatpush1.bf16.msra.mxu0 %v2819
  %3824 = vmatprep.subr.bf16.mxu0 %v2824
  %3825 = vmatpush1.bf16.msra.mxu0 %v2823
  %3826 = vmatprep.subr.bf16.mxu0 %v2828
  %3827 = vmatpush1.bf16.msra.mxu0 %v2827
  %3828 = vmatprep.subr.bf16.mxu0 %v2832
  %3829 = vmatpush1.bf16.msra.mxu0 %v2831
  %3830 = vmatprep.subr.bf16.mxu0 %v2836
  %3831 = vmatpush1.bf16.msra.mxu0 %v2835
  %3832 = vmatprep.mubr.bf16.mxu0 %v1028
  %3833 = vmatmul.mubr.bf16.gmra.mrb[0].mxu0 %v1027
  %v3834 = vpop.f32.mrb[0].mxu0
  %v3835 = vadd.f32 0.0, %v3834
  %v3836 = vpop.f32.mrb[0].mxu0
  %v3837 = vadd.f32 0.0, %v3836
  %v3838 = vpop.f32.mrb[0].mxu0
  %v3839 = vadd.f32 0.0, %v3838
  %v3840 = vpop.f32.mrb[0].mxu0
  %v3841 = vadd.f32 0.0, %v3840
  %3842 = vmatprep.mubr.bf16.mxu0 %v1044
  %3843 = vmatmul.mubr.bf16.gmra.mrb[0].mxu0 %v1043
  %v3844 = vpop.f32.mrb[0].mxu0
  %v3845 = vadd.f32 0.0, %v3844
  %v3846 = vpop.f32.mrb[0].mxu0
  %v3847 = vadd.f32 0.0, %v3846
  %v3848 = vpop.f32.mrb[0].mxu0
  %v3849 = vadd.f32 0.0, %v3848
  %v3850 = vpop.f32.mrb[0].mxu0
  %v3851 = vadd.f32 0.0, %v3850
  %3852 = vmatprep.mubr.bf16.mxu0 %v1060
  %3853 = vmatmul.mubr.bf16.gmra.mrb[0].mxu0 %v1059
  %v3854 = vpop.f32.mrb[0].mxu0
  %v3855 = vadd.f32 0.0, %v3854
  %v3856 = vpop.f32.mrb[0].mxu0
  %v3857 = vadd.f32 0.0, %v3856
  %v3858 = vpop.f32.mrb[0].mxu0
  %v3859 = vadd.f32 0.0, %v3858
  %v3860 = vpop.f32.mrb[0].mxu0
  %v3861 = vadd.f32 0.0, %v3860
  %3862 = vmatprep.mubr.bf16.mxu0 %v1076
  %3863 = vmatmul.mubr.bf16.gmra.mrb[0].mxu0 %v1075
  %v3864 = vpop.f32.mrb[0].mxu0
  %v3865 = vadd.f32 0.0, %v3864
  %v3866 = vpop.f32.mrb[0].mxu0
  %v3867 = vadd.f32 0.0, %v3866
  %v3868 = vpop.f32.mrb[0].mxu0
  %v3869 = vadd.f32 0.0, %v3868
  %v3870 = vpop.f32.mrb[0].mxu0
  %v3871 = vadd.f32 0.0, %v3870
  %3872 = vmatprep.mubr.bf16.mxu0 %v1092
  %3873 = vmatmul.mubr.bf16.gmra.mrb[0].mxu0 %v1091
  %v3874 = vpop.f32.mrb[0].mxu0
  %v3875 = vadd.f32 0.0, %v3874
  %v3876 = vpop.f32.mrb[0].mxu0
  %v3877 = vadd.f32 0.0, %v3876
  %v3878 = vpop.f32.mrb[0].mxu0
  %v3879 = vadd.f32 0.0, %v3878
  %v3880 = vpop.f32.mrb[0].mxu0
  %v3881 = vadd.f32 0.0, %v3880
  %3882 = vmatprep.mubr.bf16.mxu0 %v1108
  %3883 = vmatmul.mubr.bf16.gmra.mrb[0].mxu0 %v1107
  %v3884 = vpop.f32.mrb[0].mxu0
  %v3885 = vadd.f32 0.0, %v3884
  %v3886 = vpop.f32.mrb[0].mxu0
  %v3887 = vadd.f32 0.0, %v3886
  %v3888 = vpop.f32.mrb[0].mxu0
  %v3889 = vadd.f32 0.0, %v3888
  %v3890 = vpop.f32.mrb[0].mxu0
  %v3891 = vadd.f32 0.0, %v3890
  %3892 = vmatprep.mubr.bf16.mxu0 %v1124
  %3893 = vmatmul.mubr.bf16.gmra.mrb[0].mxu0 %v1123
  %v3894 = vpop.f32.mrb[0].mxu0
  %v3895 = vadd.f32 0.0, %v3894
  %v3896 = vpop.f32.mrb[0].mxu0
  %v3897 = vadd.f32 0.0, %v3896
  %v3898 = vpop.f32.mrb[0].mxu0
  %v3899 = vadd.f32 0.0, %v3898
  %v3900 = vpop.f32.mrb[0].mxu0
  %v3901 = vadd.f32 0.0, %v3900
  %3902 = vmatprep.mubr.bf16.mxu0 %v1140
  %3903 = vmatmul.mubr.bf16.gmra.mrb[0].mxu0 %v1139
  %v3904 = vpop.f32.mrb[0].mxu0
  %v3905 = vadd.f32 0.0, %v3904
  %v3906 = vpop.f32.mrb[0].mxu0
  %v3907 = vadd.f32 0.0, %v3906
  %v3908 = vpop.f32.mrb[0].mxu0
  %v3909 = vadd.f32 0.0, %v3908
  %v3910 = vpop.f32.mrb[0].mxu0
  %v3911 = vadd.f32 0.0, %v3910
  %3912 = vdwg.mxu0
  %3913 = vmatprep.subr.bf16.mxu0 %v2840
  %3914 = vmatpush1.bf16.msra.mxu0 %v2839
  %3915 = vmatprep.subr.bf16.mxu0 %v2844
  %3916 = vmatpush1.bf16.msra.mxu0 %v2843
  %3917 = vmatprep.subr.bf16.mxu0 %v2848
  %3918 = vmatpush1.bf16.msra.mxu0 %v2847
  %3919 = vmatprep.subr.bf16.mxu0 %v2852
  %3920 = vmatpush1.bf16.msra.mxu0 %v2851
  %3921 = vmatprep.subr.bf16.mxu0 %v2856
  %3922 = vmatpush1.bf16.msra.mxu0 %v2855
  %3923 = vmatprep.subr.bf16.mxu0 %v2860
  %3924 = vmatpush1.bf16.msra.mxu0 %v2859
  %3925 = vmatprep.subr.bf16.mxu0 %v2864
  %3926 = vmatpush1.bf16.msra.mxu0 %v2863
  %3927 = vmatprep.subr.bf16.mxu0 %v2868
  %3928 = vmatpush1.bf16.msra.mxu0 %v2867
  %3929 = vmatprep.subr.bf16.mxu0 %v2872
  %3930 = vmatpush1.bf16.msra.mxu0 %v2871
  %3931 = vmatprep.subr.bf16.mxu0 %v2876
  %3932 = vmatpush1.bf16.msra.mxu0 %v2875
  %3933 = vmatprep.subr.bf16.mxu0 %v2880
  %3934 = vmatpush1.bf16.msra.mxu0 %v2879
  %3935 = vmatprep.subr.bf16.mxu0 %v2884
  %3936 = vmatpush1.bf16.msra.mxu0 %v2883
  %3937 = vmatprep.subr.bf16.mxu0 %v2888
  %3938 = vmatpush1.bf16.msra.mxu0 %v2887
  %3939 = vmatprep.subr.bf16.mxu0 %v2892
  %3940 = vmatpush1.bf16.msra.mxu0 %v2891
  %3941 = vmatprep.subr.bf16.mxu0 %v2896
  %3942 = vmatpush1.bf16.msra.mxu0 %v2895
  %3943 = vmatprep.subr.bf16.mxu0 %v2900
  %3944 = vmatpush1.bf16.msra.mxu0 %v2899
  %3945 = vmatprep.mubr.bf16.mxu0 %v1030
  %3946 = vmatmul.mubr.bf16.gmra.mrb[0].mxu0 %v1029
  %v3947 = vpop.f32.mrb[0].mxu0
  %v3948 = vadd.f32 %v3835, %v3947
  %v3949 = vpop.f32.mrb[0].mxu0
  %v3950 = vadd.f32 %v3837, %v3949
  %v3951 = vpop.f32.mrb[0].mxu0
  %v3952 = vadd.f32 %v3839, %v3951
  %v3953 = vpop.f32.mrb[0].mxu0
  %v3954 = vadd.f32 %v3841, %v3953
  %3955 = vmatprep.mubr.bf16.mxu0 %v1046
  %3956 = vmatmul.mubr.bf16.gmra.mrb[0].mxu0 %v1045
  %v3957 = vpop.f32.mrb[0].mxu0
  %v3958 = vadd.f32 %v3845, %v3957
  %v3959 = vpop.f32.mrb[0].mxu0
  %v3960 = vadd.f32 %v3847, %v3959
  %v3961 = vpop.f32.mrb[0].mxu0
  %v3962 = vadd.f32 %v3849, %v3961
  %v3963 = vpop.f32.mrb[0].mxu0
  %v3964 = vadd.f32 %v3851, %v3963
  %3965 = vmatprep.mubr.bf16.mxu0 %v1062
  %3966 = vmatmul.mubr.bf16.gmra.mrb[0].mxu0 %v1061
  %v3967 = vpop.f32.mrb[0].mxu0
  %v3968 = vadd.f32 %v3855, %v3967
  %v3969 = vpop.f32.mrb[0].mxu0
  %v3970 = vadd.f32 %v3857, %v3969
  %v3971 = vpop.f32.mrb[0].mxu0
  %v3972 = vadd.f32 %v3859, %v3971
  %v3973 = vpop.f32.mrb[0].mxu0
  %v3974 = vadd.f32 %v3861, %v3973
  %3975 = vmatprep.mubr.bf16.mxu0 %v1078
  %3976 = vmatmul.mubr.bf16.gmra.mrb[0].mxu0 %v1077
  %v3977 = vpop.f32.mrb[0].mxu0
  %v3978 = vadd.f32 %v3865, %v3977
  %v3979 = vpop.f32.mrb[0].mxu0
  %v3980 = vadd.f32 %v3867, %v3979
  %v3981 = vpop.f32.mrb[0].mxu0
  %v3982 = vadd.f32 %v3869, %v3981
  %v3983 = vpop.f32.mrb[0].mxu0
  %v3984 = vadd.f32 %v3871, %v3983
  %3985 = vmatprep.mubr.bf16.mxu0 %v1094
  %3986 = vmatmul.mubr.bf16.gmra.mrb[0].mxu0 %v1093
  %v3987 = vpop.f32.mrb[0].mxu0
  %v3988 = vadd.f32 %v3875, %v3987
  %v3989 = vpop.f32.mrb[0].mxu0
  %v3990 = vadd.f32 %v3877, %v3989
  %v3991 = vpop.f32.mrb[0].mxu0
  %v3992 = vadd.f32 %v3879, %v3991
  %v3993 = vpop.f32.mrb[0].mxu0
  %v3994 = vadd.f32 %v3881, %v3993
  %3995 = vmatprep.mubr.bf16.mxu0 %v1110
  %3996 = vmatmul.mubr.bf16.gmra.mrb[0].mxu0 %v1109
  %v3997 = vpop.f32.mrb[0].mxu0
  %v3998 = vadd.f32 %v3885, %v3997
  %v3999 = vpop.f32.mrb[0].mxu0
  %v4000 = vadd.f32 %v3887, %v3999
  %v4001 = vpop.f32.mrb[0].mxu0
  %v4002 = vadd.f32 %v3889, %v4001
  %v4003 = vpop.f32.mrb[0].mxu0
  %v4004 = vadd.f32 %v3891, %v4003
  %4005 = vmatprep.mubr.bf16.mxu0 %v1126
  %4006 = vmatmul.mubr.bf16.gmra.mrb[0].mxu0 %v1125
  %v4007 = vpop.f32.mrb[0].mxu0
  %v4008 = vadd.f32 %v3895, %v4007
  %v4009 = vpop.f32.mrb[0].mxu0
  %v4010 = vadd.f32 %v3897, %v4009
  %v4011 = vpop.f32.mrb[0].mxu0
  %v4012 = vadd.f32 %v3899, %v4011
  %v4013 = vpop.f32.mrb[0].mxu0
  %v4014 = vadd.f32 %v3901, %v4013
  %4015 = vmatprep.mubr.bf16.mxu0 %v1142
  %4016 = vmatmul.mubr.bf16.gmra.mrb[0].mxu0 %v1141
  %v4017 = vpop.f32.mrb[0].mxu0
  %v4018 = vadd.f32 %v3905, %v4017
  %v4019 = vpop.f32.mrb[0].mxu0
  %v4020 = vadd.f32 %v3907, %v4019
  %v4021 = vpop.f32.mrb[0].mxu0
  %v4022 = vadd.f32 %v3909, %v4021
  %v4023 = vpop.f32.mrb[0].mxu0
  %v4024 = vadd.f32 %v3911, %v4023
  %4025 = vdwg.mxu0
  %4026 = vmatprep.subr.bf16.mxu0 %v2904
  %4027 = vmatpush1.bf16.msra.mxu0 %v2903
  %4028 = vmatprep.subr.bf16.mxu0 %v2908
  %4029 = vmatpush1.bf16.msra.mxu0 %v2907
  %4030 = vmatprep.subr.bf16.mxu0 %v2912
  %4031 = vmatpush1.bf16.msra.mxu0 %v2911
  %4032 = vmatprep.subr.bf16.mxu0 %v2916
  %4033 = vmatpush1.bf16.msra.mxu0 %v2915
  %4034 = vmatprep.subr.bf16.mxu0 %v2920
  %4035 = vmatpush1.bf16.msra.mxu0 %v2919
  %4036 = vmatprep.subr.bf16.mxu0 %v2924
  %4037 = vmatpush1.bf16.msra.mxu0 %v2923
  %4038 = vmatprep.subr.bf16.mxu0 %v2928
  %4039 = vmatpush1.bf16.msra.mxu0 %v2927
  %4040 = vmatprep.subr.bf16.mxu0 %v2932
  %4041 = vmatpush1.bf16.msra.mxu0 %v2931
  %4042 = vmatprep.subr.bf16.mxu0 %v2936
  %4043 = vmatpush1.bf16.msra.mxu0 %v2935
  %4044 = vmatprep.subr.bf16.mxu0 %v2940
  %4045 = vmatpush1.bf16.msra.mxu0 %v2939
  %4046 = vmatprep.subr.bf16.mxu0 %v2944
  %4047 = vmatpush1.bf16.msra.mxu0 %v2943
  %4048 = vmatprep.subr.bf16.mxu0 %v2948
  %4049 = vmatpush1.bf16.msra.mxu0 %v2947
  %4050 = vmatprep.subr.bf16.mxu0 %v2952
  %4051 = vmatpush1.bf16.msra.mxu0 %v2951
  %4052 = vmatprep.subr.bf16.mxu0 %v2956
  %4053 = vmatpush1.bf16.msra.mxu0 %v2955
  %4054 = vmatprep.subr.bf16.mxu0 %v2960
  %4055 = vmatpush1.bf16.msra.mxu0 %v2959
  %4056 = vmatprep.subr.bf16.mxu0 %v2964
  %4057 = vmatpush1.bf16.msra.mxu0 %v2963
  %4058 = vmatprep.mubr.bf16.mxu0 %v1032
  %4059 = vmatmul.mubr.bf16.gmra.mrb[0].mxu0 %v1031
  %v4060 = vpop.f32.mrb[0].mxu0
  %v4061 = vadd.f32 %v3948, %v4060
  %v4062 = vpop.f32.mrb[0].mxu0
  %v4063 = vadd.f32 %v3950, %v4062
  %v4064 = vpop.f32.mrb[0].mxu0
  %v4065 = vadd.f32 %v3952, %v4064
  %v4066 = vpop.f32.mrb[0].mxu0
  %v4067 = vadd.f32 %v3954, %v4066
  %4068 = vmatprep.mubr.bf16.mxu0 %v1048
  %4069 = vmatmul.mubr.bf16.gmra.mrb[0].mxu0 %v1047
  %v4070 = vpop.f32.mrb[0].mxu0
  %v4071 = vadd.f32 %v3958, %v4070
  %v4072 = vpop.f32.mrb[0].mxu0
  %v4073 = vadd.f32 %v3960, %v4072
  %v4074 = vpop.f32.mrb[0].mxu0
  %v4075 = vadd.f32 %v3962, %v4074
  %v4076 = vpop.f32.mrb[0].mxu0
  %v4077 = vadd.f32 %v3964, %v4076
  %4078 = vmatprep.mubr.bf16.mxu0 %v1064
  %4079 = vmatmul.mubr.bf16.gmra.mrb[0].mxu0 %v1063
  %v4080 = vpop.f32.mrb[0].mxu0
  %v4081 = vadd.f32 %v3968, %v4080
  %v4082 = vpop.f32.mrb[0].mxu0
  %v4083 = vadd.f32 %v3970, %v4082
  %v4084 = vpop.f32.mrb[0].mxu0
  %v4085 = vadd.f32 %v3972, %v4084
  %v4086 = vpop.f32.mrb[0].mxu0
  %v4087 = vadd.f32 %v3974, %v4086
  %4088 = vmatprep.mubr.bf16.mxu0 %v1080
  %4089 = vmatmul.mubr.bf16.gmra.mrb[0].mxu0 %v1079
  %v4090 = vpop.f32.mrb[0].mxu0
  %v4091 = vadd.f32 %v3978, %v4090
  %v4092 = vpop.f32.mrb[0].mxu0
  %v4093 = vadd.f32 %v3980, %v4092
  %v4094 = vpop.f32.mrb[0].mxu0
  %v4095 = vadd.f32 %v3982, %v4094
  %v4096 = vpop.f32.mrb[0].mxu0
  %v4097 = vadd.f32 %v3984, %v4096
  %4098 = vmatprep.mubr.bf16.mxu0 %v1096
  %4099 = vmatmul.mubr.bf16.gmra.mrb[0].mxu0 %v1095
  %v4100 = vpop.f32.mrb[0].mxu0
  %v4101 = vadd.f32 %v3988, %v4100
  %v4102 = vpop.f32.mrb[0].mxu0
  %v4103 = vadd.f32 %v3990, %v4102
  %v4104 = vpop.f32.mrb[0].mxu0
  %v4105 = vadd.f32 %v3992, %v4104
  %v4106 = vpop.f32.mrb[0].mxu0
  %v4107 = vadd.f32 %v3994, %v4106
  %4108 = vmatprep.mubr.bf16.mxu0 %v1112
  %4109 = vmatmul.mubr.bf16.gmra.mrb[0].mxu0 %v1111
  %v4110 = vpop.f32.mrb[0].mxu0
  %v4111 = vadd.f32 %v3998, %v4110
  %v4112 = vpop.f32.mrb[0].mxu0
  %v4113 = vadd.f32 %v4000, %v4112
  %v4114 = vpop.f32.mrb[0].mxu0
  %v4115 = vadd.f32 %v4002, %v4114
  %v4116 = vpop.f32.mrb[0].mxu0
  %v4117 = vadd.f32 %v4004, %v4116
  %4118 = vmatprep.mubr.bf16.mxu0 %v1128
  %4119 = vmatmul.mubr.bf16.gmra.mrb[0].mxu0 %v1127
  %v4120 = vpop.f32.mrb[0].mxu0
  %v4121 = vadd.f32 %v4008, %v4120
  %v4122 = vpop.f32.mrb[0].mxu0
  %v4123 = vadd.f32 %v4010, %v4122
  %v4124 = vpop.f32.mrb[0].mxu0
  %v4125 = vadd.f32 %v4012, %v4124
  %v4126 = vpop.f32.mrb[0].mxu0
  %v4127 = vadd.f32 %v4014, %v4126
  %4128 = vmatprep.mubr.bf16.mxu0 %v1144
  %4129 = vmatmul.mubr.bf16.gmra.mrb[0].mxu0 %v1143
  %v4130 = vpop.f32.mrb[0].mxu0
  %v4131 = vadd.f32 %v4018, %v4130
  %v4132 = vpop.f32.mrb[0].mxu0
  %v4133 = vadd.f32 %v4020, %v4132
  %v4134 = vpop.f32.mrb[0].mxu0
  %v4135 = vadd.f32 %v4022, %v4134
  %v4136 = vpop.f32.mrb[0].mxu0
  %v4137 = vadd.f32 %v4024, %v4136
  %4138 = vdwg.mxu0
  %4139 = vmatprep.subr.bf16.mxu0 %v2968
  %4140 = vmatpush1.bf16.msra.mxu0 %v2967
  %4141 = vmatprep.subr.bf16.mxu0 %v2972
  %4142 = vmatpush1.bf16.msra.mxu0 %v2971
  %4143 = vmatprep.subr.bf16.mxu0 %v2976
  %4144 = vmatpush1.bf16.msra.mxu0 %v2975
  %4145 = vmatprep.subr.bf16.mxu0 %v2980
  %4146 = vmatpush1.bf16.msra.mxu0 %v2979
  %4147 = vmatprep.subr.bf16.mxu0 %v2984
  %4148 = vmatpush1.bf16.msra.mxu0 %v2983
  %4149 = vmatprep.subr.bf16.mxu0 %v2988
  %4150 = vmatpush1.bf16.msra.mxu0 %v2987
  %4151 = vmatprep.subr.bf16.mxu0 %v2992
  %4152 = vmatpush1.bf16.msra.mxu0 %v2991
  %4153 = vmatprep.subr.bf16.mxu0 %v2996
  %4154 = vmatpush1.bf16.msra.mxu0 %v2995
  %4155 = vmatprep.subr.bf16.mxu0 %v3000
  %4156 = vmatpush1.bf16.msra.mxu0 %v2999
  %4157 = vmatprep.subr.bf16.mxu0 %v3004
  %4158 = vmatpush1.bf16.msra.mxu0 %v3003
  %4159 = vmatprep.subr.bf16.mxu0 %v3008
  %4160 = vmatpush1.bf16.msra.mxu0 %v3007
  %4161 = vmatprep.subr.bf16.mxu0 %v3012
  %4162 = vmatpush1.bf16.msra.mxu0 %v3011
  %4163 = vmatprep.subr.bf16.mxu0 %v3016
  %4164 = vmatpush1.bf16.msra.mxu0 %v3015
  %4165 = vmatprep.subr.bf16.mxu0 %v3020
  %4166 = vmatpush1.bf16.msra.mxu0 %v3019
  %4167 = vmatprep.subr.bf16.mxu0 %v3024
  %4168 = vmatpush1.bf16.msra.mxu0 %v3023
  %4169 = vmatprep.subr.bf16.mxu0 %v3028
  %4170 = vmatpush1.bf16.msra.mxu0 %v3027
  %4171 = vmatprep.mubr.bf16.mxu0 %v1034
  %4172 = vmatmul.mubr.bf16.gmra.mrb[0].mxu0 %v1033
  %v4173 = vpop.f32.mrb[0].mxu0
  %v4174 = vadd.f32 %v4061, %v4173
  %v4175 = vpop.f32.mrb[0].mxu0
  %v4176 = vadd.f32 %v4063, %v4175
  %v4177 = vpop.f32.mrb[0].mxu0
  %v4178 = vadd.f32 %v4065, %v4177
  %v4179 = vpop.f32.mrb[0].mxu0
  %v4180 = vadd.f32 %v4067, %v4179
  %4181 = vmatprep.mubr.bf16.mxu0 %v1050
  %4182 = vmatmul.mubr.bf16.gmra.mrb[0].mxu0 %v1049
  %v4183 = vpop.f32.mrb[0].mxu0
  %v4184 = vadd.f32 %v4071, %v4183
  %v4185 = vpop.f32.mrb[0].mxu0
  %v4186 = vadd.f32 %v4073, %v4185
  %v4187 = vpop.f32.mrb[0].mxu0
  %v4188 = vadd.f32 %v4075, %v4187
  %v4189 = vpop.f32.mrb[0].mxu0
  %v4190 = vadd.f32 %v4077, %v4189
  %4191 = vmatprep.mubr.bf16.mxu0 %v1066
  %4192 = vmatmul.mubr.bf16.gmra.mrb[0].mxu0 %v1065
  %v4193 = vpop.f32.mrb[0].mxu0
  %v4194 = vadd.f32 %v4081, %v4193
  %v4195 = vpop.f32.mrb[0].mxu0
  %v4196 = vadd.f32 %v4083, %v4195
  %v4197 = vpop.f32.mrb[0].mxu0
  %v4198 = vadd.f32 %v4085, %v4197
  %v4199 = vpop.f32.mrb[0].mxu0
  %v4200 = vadd.f32 %v4087, %v4199
  %4201 = vmatprep.mubr.bf16.mxu0 %v1082
  %4202 = vmatmul.mubr.bf16.gmra.mrb[0].mxu0 %v1081
  %v4203 = vpop.f32.mrb[0].mxu0
  %v4204 = vadd.f32 %v4091, %v4203
  %v4205 = vpop.f32.mrb[0].mxu0
  %v4206 = vadd.f32 %v4093, %v4205
  %v4207 = vpop.f32.mrb[0].mxu0
  %v4208 = vadd.f32 %v4095, %v4207
  %v4209 = vpop.f32.mrb[0].mxu0
  %v4210 = vadd.f32 %v4097, %v4209
  %4211 = vmatprep.mubr.bf16.mxu0 %v1098
  %4212 = vmatmul.mubr.bf16.gmra.mrb[0].mxu0 %v1097
  %v4213 = vpop.f32.mrb[0].mxu0
  %v4214 = vadd.f32 %v4101, %v4213
  %v4215 = vpop.f32.mrb[0].mxu0
  %v4216 = vadd.f32 %v4103, %v4215
  %v4217 = vpop.f32.mrb[0].mxu0
  %v4218 = vadd.f32 %v4105, %v4217
  %v4219 = vpop.f32.mrb[0].mxu0
  %v4220 = vadd.f32 %v4107, %v4219
  %4221 = vmatprep.mubr.bf16.mxu0 %v1114
  %4222 = vmatmul.mubr.bf16.gmra.mrb[0].mxu0 %v1113
  %v4223 = vpop.f32.mrb[0].mxu0
  %v4224 = vadd.f32 %v4111, %v4223
  %v4225 = vpop.f32.mrb[0].mxu0
  %v4226 = vadd.f32 %v4113, %v4225
  %v4227 = vpop.f32.mrb[0].mxu0
  %v4228 = vadd.f32 %v4115, %v4227
  %v4229 = vpop.f32.mrb[0].mxu0
  %v4230 = vadd.f32 %v4117, %v4229
  %4231 = vmatprep.mubr.bf16.mxu0 %v1130
  %4232 = vmatmul.mubr.bf16.gmra.mrb[0].mxu0 %v1129
  %v4233 = vpop.f32.mrb[0].mxu0
  %v4234 = vadd.f32 %v4121, %v4233
  %v4235 = vpop.f32.mrb[0].mxu0
  %v4236 = vadd.f32 %v4123, %v4235
  %v4237 = vpop.f32.mrb[0].mxu0
  %v4238 = vadd.f32 %v4125, %v4237
  %v4239 = vpop.f32.mrb[0].mxu0
  %v4240 = vadd.f32 %v4127, %v4239
  %4241 = vmatprep.mubr.bf16.mxu0 %v1146
  %4242 = vmatmul.mubr.bf16.gmra.mrb[0].mxu0 %v1145
  %v4243 = vpop.f32.mrb[0].mxu0
  %v4244 = vadd.f32 %v4131, %v4243
  %v4245 = vpop.f32.mrb[0].mxu0
  %v4246 = vadd.f32 %v4133, %v4245
  %v4247 = vpop.f32.mrb[0].mxu0
  %v4248 = vadd.f32 %v4135, %v4247
  %v4249 = vpop.f32.mrb[0].mxu0
  %v4250 = vadd.f32 %v4137, %v4249
  %4251 = vdwg.mxu0
  %4252 = vmatprep.subr.bf16.mxu0 %v3032
  %4253 = vmatpush1.bf16.msra.mxu0 %v3031
  %4254 = vmatprep.subr.bf16.mxu0 %v3036
  %4255 = vmatpush1.bf16.msra.mxu0 %v3035
  %4256 = vmatprep.subr.bf16.mxu0 %v3040
  %4257 = vmatpush1.bf16.msra.mxu0 %v3039
  %4258 = vmatprep.subr.bf16.mxu0 %v3044
  %4259 = vmatpush1.bf16.msra.mxu0 %v3043
  %4260 = vmatprep.subr.bf16.mxu0 %v3048
  %4261 = vmatpush1.bf16.msra.mxu0 %v3047
  %4262 = vmatprep.subr.bf16.mxu0 %v3052
  %4263 = vmatpush1.bf16.msra.mxu0 %v3051
  %4264 = vmatprep.subr.bf16.mxu0 %v3056
  %4265 = vmatpush1.bf16.msra.mxu0 %v3055
  %4266 = vmatprep.subr.bf16.mxu0 %v3060
  %4267 = vmatpush1.bf16.msra.mxu0 %v3059
  %4268 = vmatprep.subr.bf16.mxu0 %v3064
  %4269 = vmatpush1.bf16.msra.mxu0 %v3063
  %4270 = vmatprep.subr.bf16.mxu0 %v3068
  %4271 = vmatpush1.bf16.msra.mxu0 %v3067
  %4272 = vmatprep.subr.bf16.mxu0 %v3072
  %4273 = vmatpush1.bf16.msra.mxu0 %v3071
  %4274 = vmatprep.subr.bf16.mxu0 %v3076
  %4275 = vmatpush1.bf16.msra.mxu0 %v3075
  %4276 = vmatprep.subr.bf16.mxu0 %v3080
  %4277 = vmatpush1.bf16.msra.mxu0 %v3079
  %4278 = vmatprep.subr.bf16.mxu0 %v3084
  %4279 = vmatpush1.bf16.msra.mxu0 %v3083
  %4280 = vmatprep.subr.bf16.mxu0 %v3088
  %4281 = vmatpush1.bf16.msra.mxu0 %v3087
  %4282 = vmatprep.subr.bf16.mxu0 %v3092
  %4283 = vmatpush1.bf16.msra.mxu0 %v3091
  %4284 = vmatprep.mubr.bf16.mxu0 %v1036
  %4285 = vmatmul.mubr.bf16.gmra.mrb[0].mxu0 %v1035
  %v4286 = vpop.f32.mrb[0].mxu0
  %v4287 = vadd.f32 %v4174, %v4286
  %v4288 = vpop.f32.mrb[0].mxu0
  %v4289 = vadd.f32 %v4176, %v4288
  %v4290 = vpop.f32.mrb[0].mxu0
  %v4291 = vadd.f32 %v4178, %v4290
  %v4292 = vpop.f32.mrb[0].mxu0
  %v4293 = vadd.f32 %v4180, %v4292
  %4294 = vmatprep.mubr.bf16.mxu0 %v1052
  %4295 = vmatmul.mubr.bf16.gmra.mrb[0].mxu0 %v1051
  %v4296 = vpop.f32.mrb[0].mxu0
  %v4297 = vadd.f32 %v4184, %v4296
  %v4298 = vpop.f32.mrb[0].mxu0
  %v4299 = vadd.f32 %v4186, %v4298
  %v4300 = vpop.f32.mrb[0].mxu0
  %v4301 = vadd.f32 %v4188, %v4300
  %v4302 = vpop.f32.mrb[0].mxu0
  %v4303 = vadd.f32 %v4190, %v4302
  %4304 = vmatprep.mubr.bf16.mxu0 %v1068
  %4305 = vmatmul.mubr.bf16.gmra.mrb[0].mxu0 %v1067
  %v4306 = vpop.f32.mrb[0].mxu0
  %v4307 = vadd.f32 %v4194, %v4306
  %v4308 = vpop.f32.mrb[0].mxu0
  %v4309 = vadd.f32 %v4196, %v4308
  %v4310 = vpop.f32.mrb[0].mxu0
  %v4311 = vadd.f32 %v4198, %v4310
  %v4312 = vpop.f32.mrb[0].mxu0
  %v4313 = vadd.f32 %v4200, %v4312
  %4314 = vmatprep.mubr.bf16.mxu0 %v1084
  %4315 = vmatmul.mubr.bf16.gmra.mrb[0].mxu0 %v1083
  %v4316 = vpop.f32.mrb[0].mxu0
  %v4317 = vadd.f32 %v4204, %v4316
  %v4318 = vpop.f32.mrb[0].mxu0
  %v4319 = vadd.f32 %v4206, %v4318
  %v4320 = vpop.f32.mrb[0].mxu0
  %v4321 = vadd.f32 %v4208, %v4320
  %v4322 = vpop.f32.mrb[0].mxu0
  %v4323 = vadd.f32 %v4210, %v4322
  %4324 = vmatprep.mubr.bf16.mxu0 %v1100
  %4325 = vmatmul.mubr.bf16.gmra.mrb[0].mxu0 %v1099
  %v4326 = vpop.f32.mrb[0].mxu0
  %v4327 = vadd.f32 %v4214, %v4326
  %v4328 = vpop.f32.mrb[0].mxu0
  %v4329 = vadd.f32 %v4216, %v4328
  %v4330 = vpop.f32.mrb[0].mxu0
  %v4331 = vadd.f32 %v4218, %v4330
  %v4332 = vpop.f32.mrb[0].mxu0
  %v4333 = vadd.f32 %v4220, %v4332
  %4334 = vmatprep.mubr.bf16.mxu0 %v1116
  %4335 = vmatmul.mubr.bf16.gmra.mrb[0].mxu0 %v1115
  %v4336 = vpop.f32.mrb[0].mxu0
  %v4337 = vadd.f32 %v4224, %v4336
  %v4338 = vpop.f32.mrb[0].mxu0
  %v4339 = vadd.f32 %v4226, %v4338
  %v4340 = vpop.f32.mrb[0].mxu0
  %v4341 = vadd.f32 %v4228, %v4340
  %v4342 = vpop.f32.mrb[0].mxu0
  %v4343 = vadd.f32 %v4230, %v4342
  %4344 = vmatprep.mubr.bf16.mxu0 %v1132
  %4345 = vmatmul.mubr.bf16.gmra.mrb[0].mxu0 %v1131
  %v4346 = vpop.f32.mrb[0].mxu0
  %v4347 = vadd.f32 %v4234, %v4346
  %v4348 = vpop.f32.mrb[0].mxu0
  %v4349 = vadd.f32 %v4236, %v4348
  %v4350 = vpop.f32.mrb[0].mxu0
  %v4351 = vadd.f32 %v4238, %v4350
  %v4352 = vpop.f32.mrb[0].mxu0
  %v4353 = vadd.f32 %v4240, %v4352
  %4354 = vmatprep.mubr.bf16.mxu0 %v1148
  %4355 = vmatmul.mubr.bf16.gmra.mrb[0].mxu0 %v1147
  %v4356 = vpop.f32.mrb[0].mxu0
  %v4357 = vadd.f32 %v4244, %v4356
  %v4358 = vpop.f32.mrb[0].mxu0
  %v4359 = vadd.f32 %v4246, %v4358
  %v4360 = vpop.f32.mrb[0].mxu0
  %v4361 = vadd.f32 %v4248, %v4360
  %v4362 = vpop.f32.mrb[0].mxu0
  %v4363 = vadd.f32 %v4250, %v4362
  %4364 = vdwg.mxu0
  %4365 = vmatprep.subr.bf16.mxu0 %v3096
  %4366 = vmatpush1.bf16.msra.mxu0 %v3095
  %4367 = vmatprep.subr.bf16.mxu0 %v3100
  %4368 = vmatpush1.bf16.msra.mxu0 %v3099
  %4369 = vmatprep.subr.bf16.mxu0 %v3104
  %4370 = vmatpush1.bf16.msra.mxu0 %v3103
  %4371 = vmatprep.subr.bf16.mxu0 %v3108
  %4372 = vmatpush1.bf16.msra.mxu0 %v3107
  %4373 = vmatprep.subr.bf16.mxu0 %v3112
  %4374 = vmatpush1.bf16.msra.mxu0 %v3111
  %4375 = vmatprep.subr.bf16.mxu0 %v3116
  %4376 = vmatpush1.bf16.msra.mxu0 %v3115
  %4377 = vmatprep.subr.bf16.mxu0 %v3120
  %4378 = vmatpush1.bf16.msra.mxu0 %v3119
  %4379 = vmatprep.subr.bf16.mxu0 %v3124
  %4380 = vmatpush1.bf16.msra.mxu0 %v3123
  %4381 = vmatprep.subr.bf16.mxu0 %v3128
  %4382 = vmatpush1.bf16.msra.mxu0 %v3127
  %4383 = vmatprep.subr.bf16.mxu0 %v3132
  %4384 = vmatpush1.bf16.msra.mxu0 %v3131
  %4385 = vmatprep.subr.bf16.mxu0 %v3136
  %4386 = vmatpush1.bf16.msra.mxu0 %v3135
  %4387 = vmatprep.subr.bf16.mxu0 %v3140
  %4388 = vmatpush1.bf16.msra.mxu0 %v3139
  %4389 = vmatprep.subr.bf16.mxu0 %v3144
  %4390 = vmatpush1.bf16.msra.mxu0 %v3143
  %4391 = vmatprep.subr.bf16.mxu0 %v3148
  %4392 = vmatpush1.bf16.msra.mxu0 %v3147
  %4393 = vmatprep.subr.bf16.mxu0 %v3152
  %4394 = vmatpush1.bf16.msra.mxu0 %v3151
  %4395 = vmatprep.subr.bf16.mxu0 %v3156
  %4396 = vmatpush1.bf16.msra.mxu0 %v3155
  %4397 = vmatprep.mubr.bf16.mxu0 %v1038
  %4398 = vmatmul.mubr.bf16.gmra.mrb[0].mxu0 %v1037
  %v4399 = vpop.f32.mrb[0].mxu0
  %v4400 = vadd.f32 %v4287, %v4399
  %v4401 = vpop.f32.mrb[0].mxu0
  %v4402 = vadd.f32 %v4289, %v4401
  %v4403 = vpop.f32.mrb[0].mxu0
  %v4404 = vadd.f32 %v4291, %v4403
  %v4405 = vpop.f32.mrb[0].mxu0
  %v4406 = vadd.f32 %v4293, %v4405
  %4407 = vmatprep.mubr.bf16.mxu0 %v1054
  %4408 = vmatmul.mubr.bf16.gmra.mrb[0].mxu0 %v1053
  %v4409 = vpop.f32.mrb[0].mxu0
  %v4410 = vadd.f32 %v4297, %v4409
  %v4411 = vpop.f32.mrb[0].mxu0
  %v4412 = vadd.f32 %v4299, %v4411
  %v4413 = vpop.f32.mrb[0].mxu0
  %v4414 = vadd.f32 %v4301, %v4413
  %v4415 = vpop.f32.mrb[0].mxu0
  %v4416 = vadd.f32 %v4303, %v4415
  %4417 = vmatprep.mubr.bf16.mxu0 %v1070
  %4418 = vmatmul.mubr.bf16.gmra.mrb[0].mxu0 %v1069
  %v4419 = vpop.f32.mrb[0].mxu0
  %v4420 = vadd.f32 %v4307, %v4419
  %v4421 = vpop.f32.mrb[0].mxu0
  %v4422 = vadd.f32 %v4309, %v4421
  %v4423 = vpop.f32.mrb[0].mxu0
  %v4424 = vadd.f32 %v4311, %v4423
  %v4425 = vpop.f32.mrb[0].mxu0
  %v4426 = vadd.f32 %v4313, %v4425
  %4427 = vmatprep.mubr.bf16.mxu0 %v1086
  %4428 = vmatmul.mubr.bf16.gmra.mrb[0].mxu0 %v1085
  %v4429 = vpop.f32.mrb[0].mxu0
  %v4430 = vadd.f32 %v4317, %v4429
  %v4431 = vpop.f32.mrb[0].mxu0
  %v4432 = vadd.f32 %v4319, %v4431
  %v4433 = vpop.f32.mrb[0].mxu0
  %v4434 = vadd.f32 %v4321, %v4433
  %v4435 = vpop.f32.mrb[0].mxu0
  %v4436 = vadd.f32 %v4323, %v4435
  %4437 = vmatprep.mubr.bf16.mxu0 %v1102
  %4438 = vmatmul.mubr.bf16.gmra.mrb[0].mxu0 %v1101
  %v4439 = vpop.f32.mrb[0].mxu0
  %v4440 = vadd.f32 %v4327, %v4439
  %v4441 = vpop.f32.mrb[0].mxu0
  %v4442 = vadd.f32 %v4329, %v4441
  %v4443 = vpop.f32.mrb[0].mxu0
  %v4444 = vadd.f32 %v4331, %v4443
  %v4445 = vpop.f32.mrb[0].mxu0
  %v4446 = vadd.f32 %v4333, %v4445
  %4447 = vmatprep.mubr.bf16.mxu0 %v1118
  %4448 = vmatmul.mubr.bf16.gmra.mrb[0].mxu0 %v1117
  %v4449 = vpop.f32.mrb[0].mxu0
  %v4450 = vadd.f32 %v4337, %v4449
  %v4451 = vpop.f32.mrb[0].mxu0
  %v4452 = vadd.f32 %v4339, %v4451
  %v4453 = vpop.f32.mrb[0].mxu0
  %v4454 = vadd.f32 %v4341, %v4453
  %v4455 = vpop.f32.mrb[0].mxu0
  %v4456 = vadd.f32 %v4343, %v4455
  %4457 = vmatprep.mubr.bf16.mxu0 %v1134
  %4458 = vmatmul.mubr.bf16.gmra.mrb[0].mxu0 %v1133
  %v4459 = vpop.f32.mrb[0].mxu0
  %v4460 = vadd.f32 %v4347, %v4459
  %v4461 = vpop.f32.mrb[0].mxu0
  %v4462 = vadd.f32 %v4349, %v4461
  %v4463 = vpop.f32.mrb[0].mxu0
  %v4464 = vadd.f32 %v4351, %v4463
  %v4465 = vpop.f32.mrb[0].mxu0
  %v4466 = vadd.f32 %v4353, %v4465
  %4467 = vmatprep.mubr.bf16.mxu0 %v1150
  %4468 = vmatmul.mubr.bf16.gmra.mrb[0].mxu0 %v1149
  %v4469 = vpop.f32.mrb[0].mxu0
  %v4470 = vadd.f32 %v4357, %v4469
  %v4471 = vpop.f32.mrb[0].mxu0
  %v4472 = vadd.f32 %v4359, %v4471
  %v4473 = vpop.f32.mrb[0].mxu0
  %v4474 = vadd.f32 %v4361, %v4473
  %v4475 = vpop.f32.mrb[0].mxu0
  %v4476 = vadd.f32 %v4363, %v4475
  %4477 = vdwg.mxu0
  %4478 = vmatprep.subr.bf16.mxu0 %v3160
  %4479 = vmatpush1.bf16.msra.mxu0 %v3159
  %4480 = vmatprep.subr.bf16.mxu0 %v3164
  %4481 = vmatpush1.bf16.msra.mxu0 %v3163
  %4482 = vmatprep.subr.bf16.mxu0 %v3168
  %4483 = vmatpush1.bf16.msra.mxu0 %v3167
  %4484 = vmatprep.subr.bf16.mxu0 %v3172
  %4485 = vmatpush1.bf16.msra.mxu0 %v3171
  %4486 = vmatprep.subr.bf16.mxu0 %v3176
  %4487 = vmatpush1.bf16.msra.mxu0 %v3175
  %4488 = vmatprep.subr.bf16.mxu0 %v3180
  %4489 = vmatpush1.bf16.msra.mxu0 %v3179
  %4490 = vmatprep.subr.bf16.mxu0 %v3184
  %4491 = vmatpush1.bf16.msra.mxu0 %v3183
  %4492 = vmatprep.subr.bf16.mxu0 %v3188
  %4493 = vmatpush1.bf16.msra.mxu0 %v3187
  %4494 = vmatprep.subr.bf16.mxu0 %v3192
  %4495 = vmatpush1.bf16.msra.mxu0 %v3191
  %4496 = vmatprep.subr.bf16.mxu0 %v3196
  %4497 = vmatpush1.bf16.msra.mxu0 %v3195
  %4498 = vmatprep.subr.bf16.mxu0 %v3200
  %4499 = vmatpush1.bf16.msra.mxu0 %v3199
  %4500 = vmatprep.subr.bf16.mxu0 %v3204
  %4501 = vmatpush1.bf16.msra.mxu0 %v3203
  %4502 = vmatprep.subr.bf16.mxu0 %v3208
  %4503 = vmatpush1.bf16.msra.mxu0 %v3207
  %4504 = vmatprep.subr.bf16.mxu0 %v3212
  %4505 = vmatpush1.bf16.msra.mxu0 %v3211
  %4506 = vmatprep.subr.bf16.mxu0 %v3216
  %4507 = vmatpush1.bf16.msra.mxu0 %v3215
  %4508 = vmatprep.subr.bf16.mxu0 %v3220
  %4509 = vmatpush1.bf16.msra.mxu0 %v3219
  %4510 = vmatprep.mubr.bf16.mxu0 %v1040
  %4511 = vmatmul.mubr.bf16.gmra.mrb[0].mxu0 %v1039
  %v4512 = vpop.f32.mrb[0].mxu0
  %v4513 = vadd.f32 %v4400, %v4512
  %v4514 = vpop.f32.mrb[0].mxu0
  %v4515 = vadd.f32 %v4402, %v4514
  %v4516 = vpop.f32.mrb[0].mxu0
  %v4517 = vadd.f32 %v4404, %v4516
  %v4518 = vpop.f32.mrb[0].mxu0
  %v4519 = vadd.f32 %v4406, %v4518
  %4520 = vmatprep.mubr.bf16.mxu0 %v1056
  %4521 = vmatmul.mubr.bf16.gmra.mrb[0].mxu0 %v1055
  %v4522 = vpop.f32.mrb[0].mxu0
  %v4523 = vadd.f32 %v4410, %v4522
  %v4524 = vpop.f32.mrb[0].mxu0
  %v4525 = vadd.f32 %v4412, %v4524
  %v4526 = vpop.f32.mrb[0].mxu0
  %v4527 = vadd.f32 %v4414, %v4526
  %v4528 = vpop.f32.mrb[0].mxu0
  %v4529 = vadd.f32 %v4416, %v4528
  %4530 = vmatprep.mubr.bf16.mxu0 %v1072
  %4531 = vmatmul.mubr.bf16.gmra.mrb[0].mxu0 %v1071
  %v4532 = vpop.f32.mrb[0].mxu0
  %v4533 = vadd.f32 %v4420, %v4532
  %v4534 = vpop.f32.mrb[0].mxu0
  %v4535 = vadd.f32 %v4422, %v4534
  %v4536 = vpop.f32.mrb[0].mxu0
  %v4537 = vadd.f32 %v4424, %v4536
  %v4538 = vpop.f32.mrb[0].mxu0
  %v4539 = vadd.f32 %v4426, %v4538
  %4540 = vmatprep.mubr.bf16.mxu0 %v1088
  %4541 = vmatmul.mubr.bf16.gmra.mrb[0].mxu0 %v1087
  %v4542 = vpop.f32.mrb[0].mxu0
  %v4543 = vadd.f32 %v4430, %v4542
  %v4544 = vpop.f32.mrb[0].mxu0
  %v4545 = vadd.f32 %v4432, %v4544
  %v4546 = vpop.f32.mrb[0].mxu0
  %v4547 = vadd.f32 %v4434, %v4546
  %v4548 = vpop.f32.mrb[0].mxu0
  %v4549 = vadd.f32 %v4436, %v4548
  %4550 = vmatprep.mubr.bf16.mxu0 %v1104
  %4551 = vmatmul.mubr.bf16.gmra.mrb[0].mxu0 %v1103
  %v4552 = vpop.f32.mrb[0].mxu0
  %v4553 = vadd.f32 %v4440, %v4552
  %v4554 = vpop.f32.mrb[0].mxu0
  %v4555 = vadd.f32 %v4442, %v4554
  %v4556 = vpop.f32.mrb[0].mxu0
  %v4557 = vadd.f32 %v4444, %v4556
  %v4558 = vpop.f32.mrb[0].mxu0
  %v4559 = vadd.f32 %v4446, %v4558
  %4560 = vmatprep.mubr.bf16.mxu0 %v1120
  %4561 = vmatmul.mubr.bf16.gmra.mrb[0].mxu0 %v1119
  %v4562 = vpop.f32.mrb[0].mxu0
  %v4563 = vadd.f32 %v4450, %v4562
  %v4564 = vpop.f32.mrb[0].mxu0
  %v4565 = vadd.f32 %v4452, %v4564
  %v4566 = vpop.f32.mrb[0].mxu0
  %v4567 = vadd.f32 %v4454, %v4566
  %v4568 = vpop.f32.mrb[0].mxu0
  %v4569 = vadd.f32 %v4456, %v4568
  %4570 = vmatprep.mubr.bf16.mxu0 %v1136
  %4571 = vmatmul.mubr.bf16.gmra.mrb[0].mxu0 %v1135
  %v4572 = vpop.f32.mrb[0].mxu0
  %v4573 = vadd.f32 %v4460, %v4572
  %v4574 = vpop.f32.mrb[0].mxu0
  %v4575 = vadd.f32 %v4462, %v4574
  %v4576 = vpop.f32.mrb[0].mxu0
  %v4577 = vadd.f32 %v4464, %v4576
  %v4578 = vpop.f32.mrb[0].mxu0
  %v4579 = vadd.f32 %v4466, %v4578
  %4580 = vmatprep.mubr.bf16.mxu0 %v1152
  %4581 = vmatmul.mubr.bf16.gmra.mrb[0].mxu0 %v1151
  %v4582 = vpop.f32.mrb[0].mxu0
  %v4583 = vadd.f32 %v4470, %v4582
  %v4584 = vpop.f32.mrb[0].mxu0
  %v4585 = vadd.f32 %v4472, %v4584
  %v4586 = vpop.f32.mrb[0].mxu0
  %v4587 = vadd.f32 %v4474, %v4586
  %v4588 = vpop.f32.mrb[0].mxu0
  %v4589 = vadd.f32 %v4476, %v4588
  %4590 = vdwg.mxu0
  %4591 = vmatprep.subr.bf16.mxu0 %v3224
  %4592 = vmatpush1.bf16.msra.mxu0 %v3223
  %4593 = vmatprep.subr.bf16.mxu0 %v3228
  %4594 = vmatpush1.bf16.msra.mxu0 %v3227
  %4595 = vmatprep.subr.bf16.mxu0 %v3232
  %4596 = vmatpush1.bf16.msra.mxu0 %v3231
  %4597 = vmatprep.subr.bf16.mxu0 %v3236
  %4598 = vmatpush1.bf16.msra.mxu0 %v3235
  %4599 = vmatprep.subr.bf16.mxu0 %v3240
  %4600 = vmatpush1.bf16.msra.mxu0 %v3239
  %4601 = vmatprep.subr.bf16.mxu0 %v3244
  %4602 = vmatpush1.bf16.msra.mxu0 %v3243
  %4603 = vmatprep.subr.bf16.mxu0 %v3248
  %4604 = vmatpush1.bf16.msra.mxu0 %v3247
  %4605 = vmatprep.subr.bf16.mxu0 %v3252
  %4606 = vmatpush1.bf16.msra.mxu0 %v3251
  %4607 = vmatprep.subr.bf16.mxu0 %v3256
  %4608 = vmatpush1.bf16.msra.mxu0 %v3255
  %4609 = vmatprep.subr.bf16.mxu0 %v3260
  %4610 = vmatpush1.bf16.msra.mxu0 %v3259
  %4611 = vmatprep.subr.bf16.mxu0 %v3264
  %4612 = vmatpush1.bf16.msra.mxu0 %v3263
  %4613 = vmatprep.subr.bf16.mxu0 %v3268
  %4614 = vmatpush1.bf16.msra.mxu0 %v3267
  %4615 = vmatprep.subr.bf16.mxu0 %v3272
  %4616 = vmatpush1.bf16.msra.mxu0 %v3271
  %4617 = vmatprep.subr.bf16.mxu0 0
  %4618 = vmatpush1.bf16.msra.mxu0 0
  %4619 = vmatprep.subr.bf16.mxu0 0
  %4620 = vmatpush1.bf16.msra.mxu0 0
  %4621 = vmatprep.subr.bf16.mxu0 0
  %4622 = vmatpush1.bf16.msra.mxu0 0
  %4623 = vmatprep.mubr.bf16.mxu0 %v3777
  %4624 = vmatmul.mubr.bf16.gmra.mrb[0].mxu0 %v1041
  %v4625 = vpop.f32.mrb[0].mxu0
  %v4626 = vadd.f32 %v4513, %v4625
  %v4627 = vpop.f32.mrb[0].mxu0
  %v4628 = vadd.f32 %v4515, %v4627
  %v4629 = vpop.f32.mrb[0].mxu0
  %v4630 = vadd.f32 %v4517, %v4629
  %v4631 = vpop.f32.mrb[0].mxu0
  %v4632 = vadd.f32 %v4519, %v4631
  %4633 = vmatprep.mubr.bf16.mxu0 %v3780
  %4634 = vmatmul.mubr.bf16.gmra.mrb[0].mxu0 %v1057
  %v4635 = vpop.f32.mrb[0].mxu0
  %v4636 = vadd.f32 %v4523, %v4635
  %v4637 = vpop.f32.mrb[0].mxu0
  %v4638 = vadd.f32 %v4525, %v4637
  %v4639 = vpop.f32.mrb[0].mxu0
  %v4640 = vadd.f32 %v4527, %v4639
  %v4641 = vpop.f32.mrb[0].mxu0
  %v4642 = vadd.f32 %v4529, %v4641
  %4643 = vmatprep.mubr.bf16.mxu0 %v3783
  %4644 = vmatmul.mubr.bf16.gmra.mrb[0].mxu0 %v1073
  %v4645 = vpop.f32.mrb[0].mxu0
  %v4646 = vadd.f32 %v4533, %v4645
  %v4647 = vpop.f32.mrb[0].mxu0
  %v4648 = vadd.f32 %v4535, %v4647
  %v4649 = vpop.f32.mrb[0].mxu0
  %v4650 = vadd.f32 %v4537, %v4649
  %v4651 = vpop.f32.mrb[0].mxu0
  %v4652 = vadd.f32 %v4539, %v4651
  %4653 = vmatprep.mubr.bf16.mxu0 %v3786
  %4654 = vmatmul.mubr.bf16.gmra.mrb[0].mxu0 %v1089
  %v4655 = vpop.f32.mrb[0].mxu0
  %v4656 = vadd.f32 %v4543, %v4655
  %v4657 = vpop.f32.mrb[0].mxu0
  %v4658 = vadd.f32 %v4545, %v4657
  %v4659 = vpop.f32.mrb[0].mxu0
  %v4660 = vadd.f32 %v4547, %v4659
  %v4661 = vpop.f32.mrb[0].mxu0
  %v4662 = vadd.f32 %v4549, %v4661
  %4663 = vmatprep.mubr.bf16.mxu0 %v3789
  %4664 = vmatmul.mubr.bf16.gmra.mrb[0].mxu0 %v1105
  %v4665 = vpop.f32.mrb[0].mxu0
  %v4666 = vadd.f32 %v4553, %v4665
  %v4667 = vpop.f32.mrb[0].mxu0
  %v4668 = vadd.f32 %v4555, %v4667
  %v4669 = vpop.f32.mrb[0].mxu0
  %v4670 = vadd.f32 %v4557, %v4669
  %v4671 = vpop.f32.mrb[0].mxu0
  %v4672 = vadd.f32 %v4559, %v4671
  %4673 = vmatprep.mubr.bf16.mxu0 %v3792
  %4674 = vmatmul.mubr.bf16.gmra.mrb[0].mxu0 %v1121
  %v4675 = vpop.f32.mrb[0].mxu0
  %v4676 = vadd.f32 %v4563, %v4675
  %v4677 = vpop.f32.mrb[0].mxu0
  %v4678 = vadd.f32 %v4565, %v4677
  %v4679 = vpop.f32.mrb[0].mxu0
  %v4680 = vadd.f32 %v4567, %v4679
  %v4681 = vpop.f32.mrb[0].mxu0
  %v4682 = vadd.f32 %v4569, %v4681
  %4683 = vmatprep.mubr.bf16.mxu0 %v3795
  %4684 = vmatmul.mubr.bf16.gmra.mrb[0].mxu0 %v1137
  %v4685 = vpop.f32.mrb[0].mxu0
  %v4686 = vadd.f32 %v4573, %v4685
  %v4687 = vpop.f32.mrb[0].mxu0
  %v4688 = vadd.f32 %v4575, %v4687
  %v4689 = vpop.f32.mrb[0].mxu0
  %v4690 = vadd.f32 %v4577, %v4689
  %v4691 = vpop.f32.mrb[0].mxu0
  %v4692 = vadd.f32 %v4579, %v4691
  %4693 = vmatprep.mubr.bf16.mxu0 %v3798
  %4694 = vmatmul.mubr.bf16.gmra.mrb[0].mxu0 %v1153
  %v4695 = vpop.f32.mrb[0].mxu0
  %v4696 = vadd.f32 %v4583, %v4695
  %v4697 = vpop.f32.mrb[0].mxu0
  %v4698 = vadd.f32 %v4585, %v4697
  %v4699 = vpop.f32.mrb[0].mxu0
  %v4700 = vadd.f32 %v4587, %v4699
  %v4701 = vpop.f32.mrb[0].mxu0
  %v4702 = vadd.f32 %v4589, %v4701
  %4703 = vdwg.mxu0
  %4704 = vmatprep.subr.bf16.mxu0 %v2778
  %4705 = vmatpush1.bf16.msra.mxu0 %v2777
  %4706 = vmatprep.subr.bf16.mxu0 %v2782
  %4707 = vmatpush1.bf16.msra.mxu0 %v2781
  %4708 = vmatprep.subr.bf16.mxu0 %v2786
  %4709 = vmatpush1.bf16.msra.mxu0 %v2785
  %4710 = vmatprep.subr.bf16.mxu0 %v2790
  %4711 = vmatpush1.bf16.msra.mxu0 %v2789
  %4712 = vmatprep.subr.bf16.mxu0 %v2794
  %4713 = vmatpush1.bf16.msra.mxu0 %v2793
  %4714 = vmatprep.subr.bf16.mxu0 %v2798
  %4715 = vmatpush1.bf16.msra.mxu0 %v2797
  %4716 = vmatprep.subr.bf16.mxu0 %v2802
  %4717 = vmatpush1.bf16.msra.mxu0 %v2801
  %4718 = vmatprep.subr.bf16.mxu0 %v2806
  %4719 = vmatpush1.bf16.msra.mxu0 %v2805
  %4720 = vmatprep.subr.bf16.mxu0 %v2810
  %4721 = vmatpush1.bf16.msra.mxu0 %v2809
  %4722 = vmatprep.subr.bf16.mxu0 %v2814
  %4723 = vmatpush1.bf16.msra.mxu0 %v2813
  %4724 = vmatprep.subr.bf16.mxu0 %v2818
  %4725 = vmatpush1.bf16.msra.mxu0 %v2817
  %4726 = vmatprep.subr.bf16.mxu0 %v2822
  %4727 = vmatpush1.bf16.msra.mxu0 %v2821
  %4728 = vmatprep.subr.bf16.mxu0 %v2826
  %4729 = vmatpush1.bf16.msra.mxu0 %v2825
  %4730 = vmatprep.subr.bf16.mxu0 %v2830
  %4731 = vmatpush1.bf16.msra.mxu0 %v2829
  %4732 = vmatprep.subr.bf16.mxu0 %v2834
  %4733 = vmatpush1.bf16.msra.mxu0 %v2833
  %4734 = vmatprep.subr.bf16.mxu0 %v2838
  %4735 = vmatpush1.bf16.msra.mxu0 %v2837
  %4736 = vmatprep.mubr.bf16.mxu0 %v1028
  %4737 = vmatmul.mubr.bf16.gmra.mrb[0].mxu0 %v1027
  %v4738 = vpop.f32.mrb[0].mxu0
  %v4739 = vadd.f32 0.0, %v4738
  %v4740 = vpop.f32.mrb[0].mxu0
  %v4741 = vadd.f32 0.0, %v4740
  %v4742 = vpop.f32.mrb[0].mxu0
  %v4743 = vadd.f32 0.0, %v4742
  %v4744 = vpop.f32.mrb[0].mxu0
  %v4745 = vadd.f32 0.0, %v4744
  %4746 = vmatprep.mubr.bf16.mxu0 %v1044
  %4747 = vmatmul.mubr.bf16.gmra.mrb[0].mxu0 %v1043
  %v4748 = vpop.f32.mrb[0].mxu0
  %v4749 = vadd.f32 0.0, %v4748
  %v4750 = vpop.f32.mrb[0].mxu0
  %v4751 = vadd.f32 0.0, %v4750
  %v4752 = vpop.f32.mrb[0].mxu0
  %v4753 = vadd.f32 0.0, %v4752
  %v4754 = vpop.f32.mrb[0].mxu0
  %v4755 = vadd.f32 0.0, %v4754
  %4756 = vmatprep.mubr.bf16.mxu0 %v1060
  %4757 = vmatmul.mubr.bf16.gmra.mrb[0].mxu0 %v1059
  %v4758 = vpop.f32.mrb[0].mxu0
  %v4759 = vadd.f32 0.0, %v4758
  %v4760 = vpop.f32.mrb[0].mxu0
  %v4761 = vadd.f32 0.0, %v4760
  %v4762 = vpop.f32.mrb[0].mxu0
  %v4763 = vadd.f32 0.0, %v4762
  %v4764 = vpop.f32.mrb[0].mxu0
  %v4765 = vadd.f32 0.0, %v4764
  %4766 = vmatprep.mubr.bf16.mxu0 %v1076
  %4767 = vmatmul.mubr.bf16.gmra.mrb[0].mxu0 %v1075
  %v4768 = vpop.f32.mrb[0].mxu0
  %v4769 = vadd.f32 0.0, %v4768
  %v4770 = vpop.f32.mrb[0].mxu0
  %v4771 = vadd.f32 0.0, %v4770
  %v4772 = vpop.f32.mrb[0].mxu0
  %v4773 = vadd.f32 0.0, %v4772
  %v4774 = vpop.f32.mrb[0].mxu0
  %v4775 = vadd.f32 0.0, %v4774
  %4776 = vmatprep.mubr.bf16.mxu0 %v1092
  %4777 = vmatmul.mubr.bf16.gmra.mrb[0].mxu0 %v1091
  %v4778 = vpop.f32.mrb[0].mxu0
  %v4779 = vadd.f32 0.0, %v4778
  %v4780 = vpop.f32.mrb[0].mxu0
  %v4781 = vadd.f32 0.0, %v4780
  %v4782 = vpop.f32.mrb[0].mxu0
  %v4783 = vadd.f32 0.0, %v4782
  %v4784 = vpop.f32.mrb[0].mxu0
  %v4785 = vadd.f32 0.0, %v4784
  %4786 = vmatprep.mubr.bf16.mxu0 %v1108
  %4787 = vmatmul.mubr.bf16.gmra.mrb[0].mxu0 %v1107
  %v4788 = vpop.f32.mrb[0].mxu0
  %v4789 = vadd.f32 0.0, %v4788
  %v4790 = vpop.f32.mrb[0].mxu0
  %v4791 = vadd.f32 0.0, %v4790
  %v4792 = vpop.f32.mrb[0].mxu0
  %v4793 = vadd.f32 0.0, %v4792
  %v4794 = vpop.f32.mrb[0].mxu0
  %v4795 = vadd.f32 0.0, %v4794
  %4796 = vmatprep.mubr.bf16.mxu0 %v1124
  %4797 = vmatmul.mubr.bf16.gmra.mrb[0].mxu0 %v1123
  %v4798 = vpop.f32.mrb[0].mxu0
  %v4799 = vadd.f32 0.0, %v4798
  %v4800 = vpop.f32.mrb[0].mxu0
  %v4801 = vadd.f32 0.0, %v4800
  %v4802 = vpop.f32.mrb[0].mxu0
  %v4803 = vadd.f32 0.0, %v4802
  %v4804 = vpop.f32.mrb[0].mxu0
  %v4805 = vadd.f32 0.0, %v4804
  %4806 = vmatprep.mubr.bf16.mxu0 %v1140
  %4807 = vmatmul.mubr.bf16.gmra.mrb[0].mxu0 %v1139
  %v4808 = vpop.f32.mrb[0].mxu0
  %v4809 = vadd.f32 0.0, %v4808
  %v4810 = vpop.f32.mrb[0].mxu0
  %v4811 = vadd.f32 0.0, %v4810
  %v4812 = vpop.f32.mrb[0].mxu0
  %v4813 = vadd.f32 0.0, %v4812
  %v4814 = vpop.f32.mrb[0].mxu0
  %v4815 = vadd.f32 0.0, %v4814
  %4816 = vdwg.mxu0
  %4817 = vmatprep.subr.bf16.mxu0 %v2842
  %4818 = vmatpush1.bf16.msra.mxu0 %v2841
  %4819 = vmatprep.subr.bf16.mxu0 %v2846
  %4820 = vmatpush1.bf16.msra.mxu0 %v2845
  %4821 = vmatprep.subr.bf16.mxu0 %v2850
  %4822 = vmatpush1.bf16.msra.mxu0 %v2849
  %4823 = vmatprep.subr.bf16.mxu0 %v2854
  %4824 = vmatpush1.bf16.msra.mxu0 %v2853
  %4825 = vmatprep.subr.bf16.mxu0 %v2858
  %4826 = vmatpush1.bf16.msra.mxu0 %v2857
  %4827 = vmatprep.subr.bf16.mxu0 %v2862
  %4828 = vmatpush1.bf16.msra.mxu0 %v2861
  %4829 = vmatprep.subr.bf16.mxu0 %v2866
  %4830 = vmatpush1.bf16.msra.mxu0 %v2865
  %4831 = vmatprep.subr.bf16.mxu0 %v2870
  %4832 = vmatpush1.bf16.msra.mxu0 %v2869
  %4833 = vmatprep.subr.bf16.mxu0 %v2874
  %4834 = vmatpush1.bf16.msra.mxu0 %v2873
  %4835 = vmatprep.subr.bf16.mxu0 %v2878
  %4836 = vmatpush1.bf16.msra.mxu0 %v2877
  %4837 = vmatprep.subr.bf16.mxu0 %v2882
  %4838 = vmatpush1.bf16.msra.mxu0 %v2881
  %4839 = vmatprep.subr.bf16.mxu0 %v2886
  %4840 = vmatpush1.bf16.msra.mxu0 %v2885
  %4841 = vmatprep.subr.bf16.mxu0 %v2890
  %4842 = vmatpush1.bf16.msra.mxu0 %v2889
  %4843 = vmatprep.subr.bf16.mxu0 %v2894
  %4844 = vmatpush1.bf16.msra.mxu0 %v2893
  %4845 = vmatprep.subr.bf16.mxu0 %v2898
  %4846 = vmatpush1.bf16.msra.mxu0 %v2897
  %4847 = vmatprep.subr.bf16.mxu0 %v2902
  %4848 = vmatpush1.bf16.msra.mxu0 %v2901
  %4849 = vmatprep.mubr.bf16.mxu0 %v1030
  %4850 = vmatmul.mubr.bf16.gmra.mrb[0].mxu0 %v1029
  %v4851 = vpop.f32.mrb[0].mxu0
  %v4852 = vadd.f32 %v4739, %v4851
  %v4853 = vpop.f32.mrb[0].mxu0
  %v4854 = vadd.f32 %v4741, %v4853
  %v4855 = vpop.f32.mrb[0].mxu0
  %v4856 = vadd.f32 %v4743, %v4855
  %v4857 = vpop.f32.mrb[0].mxu0
  %v4858 = vadd.f32 %v4745, %v4857
  %4859 = vmatprep.mubr.bf16.mxu0 %v1046
  %4860 = vmatmul.mubr.bf16.gmra.mrb[0].mxu0 %v1045
  %v4861 = vpop.f32.mrb[0].mxu0
  %v4862 = vadd.f32 %v4749, %v4861
  %v4863 = vpop.f32.mrb[0].mxu0
  %v4864 = vadd.f32 %v4751, %v4863
  %v4865 = vpop.f32.mrb[0].mxu0
  %v4866 = vadd.f32 %v4753, %v4865
  %v4867 = vpop.f32.mrb[0].mxu0
  %v4868 = vadd.f32 %v4755, %v4867
  %4869 = vmatprep.mubr.bf16.mxu0 %v1062
  %4870 = vmatmul.mubr.bf16.gmra.mrb[0].mxu0 %v1061
  %v4871 = vpop.f32.mrb[0].mxu0
  %v4872 = vadd.f32 %v4759, %v4871
  %v4873 = vpop.f32.mrb[0].mxu0
  %v4874 = vadd.f32 %v4761, %v4873
  %v4875 = vpop.f32.mrb[0].mxu0
  %v4876 = vadd.f32 %v4763, %v4875
  %v4877 = vpop.f32.mrb[0].mxu0
  %v4878 = vadd.f32 %v4765, %v4877
  %4879 = vmatprep.mubr.bf16.mxu0 %v1078
  %4880 = vmatmul.mubr.bf16.gmra.mrb[0].mxu0 %v1077
  %v4881 = vpop.f32.mrb[0].mxu0
  %v4882 = vadd.f32 %v4769, %v4881
  %v4883 = vpop.f32.mrb[0].mxu0
  %v4884 = vadd.f32 %v4771, %v4883
  %v4885 = vpop.f32.mrb[0].mxu0
  %v4886 = vadd.f32 %v4773, %v4885
  %v4887 = vpop.f32.mrb[0].mxu0
  %v4888 = vadd.f32 %v4775, %v4887
  %4889 = vmatprep.mubr.bf16.mxu0 %v1094
  %4890 = vmatmul.mubr.bf16.gmra.mrb[0].mxu0 %v1093
  %v4891 = vpop.f32.mrb[0].mxu0
  %v4892 = vadd.f32 %v4779, %v4891
  %v4893 = vpop.f32.mrb[0].mxu0
  %v4894 = vadd.f32 %v4781, %v4893
  %v4895 = vpop.f32.mrb[0].mxu0
  %v4896 = vadd.f32 %v4783, %v4895
  %v4897 = vpop.f32.mrb[0].mxu0
  %v4898 = vadd.f32 %v4785, %v4897
  %4899 = vmatprep.mubr.bf16.mxu0 %v1110
  %4900 = vmatmul.mubr.bf16.gmra.mrb[0].mxu0 %v1109
  %v4901 = vpop.f32.mrb[0].mxu0
  %v4902 = vadd.f32 %v4789, %v4901
  %v4903 = vpop.f32.mrb[0].mxu0
  %v4904 = vadd.f32 %v4791, %v4903
  %v4905 = vpop.f32.mrb[0].mxu0
  %v4906 = vadd.f32 %v4793, %v4905
  %v4907 = vpop.f32.mrb[0].mxu0
  %v4908 = vadd.f32 %v4795, %v4907
  %4909 = vmatprep.mubr.bf16.mxu0 %v1126
  %4910 = vmatmul.mubr.bf16.gmra.mrb[0].mxu0 %v1125
  %v4911 = vpop.f32.mrb[0].mxu0
  %v4912 = vadd.f32 %v4799, %v4911
  %v4913 = vpop.f32.mrb[0].mxu0
  %v4914 = vadd.f32 %v4801, %v4913
  %v4915 = vpop.f32.mrb[0].mxu0
  %v4916 = vadd.f32 %v4803, %v4915
  %v4917 = vpop.f32.mrb[0].mxu0
  %v4918 = vadd.f32 %v4805, %v4917
  %4919 = vmatprep.mubr.bf16.mxu0 %v1142
  %4920 = vmatmul.mubr.bf16.gmra.mrb[0].mxu0 %v1141
  %v4921 = vpop.f32.mrb[0].mxu0
  %v4922 = vadd.f32 %v4809, %v4921
  %v4923 = vpop.f32.mrb[0].mxu0
  %v4924 = vadd.f32 %v4811, %v4923
  %v4925 = vpop.f32.mrb[0].mxu0
  %v4926 = vadd.f32 %v4813, %v4925
  %v4927 = vpop.f32.mrb[0].mxu0
  %v4928 = vadd.f32 %v4815, %v4927
  %4929 = vdwg.mxu0
  %4930 = vmatprep.subr.bf16.mxu0 %v2906
  %4931 = vmatpush1.bf16.msra.mxu0 %v2905
  %4932 = vmatprep.subr.bf16.mxu0 %v2910
  %4933 = vmatpush1.bf16.msra.mxu0 %v2909
  %4934 = vmatprep.subr.bf16.mxu0 %v2914
  %4935 = vmatpush1.bf16.msra.mxu0 %v2913
  %4936 = vmatprep.subr.bf16.mxu0 %v2918
  %4937 = vmatpush1.bf16.msra.mxu0 %v2917
  %4938 = vmatprep.subr.bf16.mxu0 %v2922
  %4939 = vmatpush1.bf16.msra.mxu0 %v2921
  %4940 = vmatprep.subr.bf16.mxu0 %v2926
  %4941 = vmatpush1.bf16.msra.mxu0 %v2925
  %4942 = vmatprep.subr.bf16.mxu0 %v2930
  %4943 = vmatpush1.bf16.msra.mxu0 %v2929
  %4944 = vmatprep.subr.bf16.mxu0 %v2934
  %4945 = vmatpush1.bf16.msra.mxu0 %v2933
  %4946 = vmatprep.subr.bf16.mxu0 %v2938
  %4947 = vmatpush1.bf16.msra.mxu0 %v2937
  %4948 = vmatprep.subr.bf16.mxu0 %v2942
  %4949 = vmatpush1.bf16.msra.mxu0 %v2941
  %4950 = vmatprep.subr.bf16.mxu0 %v2946
  %4951 = vmatpush1.bf16.msra.mxu0 %v2945
  %4952 = vmatprep.subr.bf16.mxu0 %v2950
  %4953 = vmatpush1.bf16.msra.mxu0 %v2949
  %4954 = vmatprep.subr.bf16.mxu0 %v2954
  %4955 = vmatpush1.bf16.msra.mxu0 %v2953
  %4956 = vmatprep.subr.bf16.mxu0 %v2958
  %4957 = vmatpush1.bf16.msra.mxu0 %v2957
  %4958 = vmatprep.subr.bf16.mxu0 %v2962
  %4959 = vmatpush1.bf16.msra.mxu0 %v2961
  %4960 = vmatprep.subr.bf16.mxu0 %v2966
  %4961 = vmatpush1.bf16.msra.mxu0 %v2965
  %4962 = vmatprep.mubr.bf16.mxu0 %v1032
  %4963 = vmatmul.mubr.bf16.gmra.mrb[0].mxu0 %v1031
  %v4964 = vpop.f32.mrb[0].mxu0
  %v4965 = vadd.f32 %v4852, %v4964
  %v4966 = vpop.f32.mrb[0].mxu0
  %v4967 = vadd.f32 %v4854, %v4966
  %v4968 = vpop.f32.mrb[0].mxu0
  %v4969 = vadd.f32 %v4856, %v4968
  %v4970 = vpop.f32.mrb[0].mxu0
  %v4971 = vadd.f32 %v4858, %v4970
  %4972 = vmatprep.mubr.bf16.mxu0 %v1048
  %4973 = vmatmul.mubr.bf16.gmra.mrb[0].mxu0 %v1047
  %v4974 = vpop.f32.mrb[0].mxu0
  %v4975 = vadd.f32 %v4862, %v4974
  %v4976 = vpop.f32.mrb[0].mxu0
  %v4977 = vadd.f32 %v4864, %v4976
  %v4978 = vpop.f32.mrb[0].mxu0
  %v4979 = vadd.f32 %v4866, %v4978
  %v4980 = vpop.f32.mrb[0].mxu0
  %v4981 = vadd.f32 %v4868, %v4980
  %4982 = vmatprep.mubr.bf16.mxu0 %v1064
  %4983 = vmatmul.mubr.bf16.gmra.mrb[0].mxu0 %v1063
  %v4984 = vpop.f32.mrb[0].mxu0
  %v4985 = vadd.f32 %v4872, %v4984
  %v4986 = vpop.f32.mrb[0].mxu0
  %v4987 = vadd.f32 %v4874, %v4986
  %v4988 = vpop.f32.mrb[0].mxu0
  %v4989 = vadd.f32 %v4876, %v4988
  %v4990 = vpop.f32.mrb[0].mxu0
  %v4991 = vadd.f32 %v4878, %v4990
  %4992 = vmatprep.mubr.bf16.mxu0 %v1080
  %4993 = vmatmul.mubr.bf16.gmra.mrb[0].mxu0 %v1079
  %v4994 = vpop.f32.mrb[0].mxu0
  %v4995 = vadd.f32 %v4882, %v4994
  %v4996 = vpop.f32.mrb[0].mxu0
  %v4997 = vadd.f32 %v4884, %v4996
  %v4998 = vpop.f32.mrb[0].mxu0
  %v4999 = vadd.f32 %v4886, %v4998
  %v5000 = vpop.f32.mrb[0].mxu0
  %v5001 = vadd.f32 %v4888, %v5000
  %5002 = vmatprep.mubr.bf16.mxu0 %v1096
  %5003 = vmatmul.mubr.bf16.gmra.mrb[0].mxu0 %v1095
  %v5004 = vpop.f32.mrb[0].mxu0
  %v5005 = vadd.f32 %v4892, %v5004
  %v5006 = vpop.f32.mrb[0].mxu0
  %v5007 = vadd.f32 %v4894, %v5006
  %v5008 = vpop.f32.mrb[0].mxu0
  %v5009 = vadd.f32 %v4896, %v5008
  %v5010 = vpop.f32.mrb[0].mxu0
  %v5011 = vadd.f32 %v4898, %v5010
  %5012 = vmatprep.mubr.bf16.mxu0 %v1112
  %5013 = vmatmul.mubr.bf16.gmra.mrb[0].mxu0 %v1111
  %v5014 = vpop.f32.mrb[0].mxu0
  %v5015 = vadd.f32 %v4902, %v5014
  %v5016 = vpop.f32.mrb[0].mxu0
  %v5017 = vadd.f32 %v4904, %v5016
  %v5018 = vpop.f32.mrb[0].mxu0
  %v5019 = vadd.f32 %v4906, %v5018
  %v5020 = vpop.f32.mrb[0].mxu0
  %v5021 = vadd.f32 %v4908, %v5020
  %5022 = vmatprep.mubr.bf16.mxu0 %v1128
  %5023 = vmatmul.mubr.bf16.gmra.mrb[0].mxu0 %v1127
  %v5024 = vpop.f32.mrb[0].mxu0
  %v5025 = vadd.f32 %v4912, %v5024
  %v5026 = vpop.f32.mrb[0].mxu0
  %v5027 = vadd.f32 %v4914, %v5026
  %v5028 = vpop.f32.mrb[0].mxu0
  %v5029 = vadd.f32 %v4916, %v5028
  %v5030 = vpop.f32.mrb[0].mxu0
  %v5031 = vadd.f32 %v4918, %v5030
  %5032 = vmatprep.mubr.bf16.mxu0 %v1144
  %5033 = vmatmul.mubr.bf16.gmra.mrb[0].mxu0 %v1143
  %v5034 = vpop.f32.mrb[0].mxu0
  %v5035 = vadd.f32 %v4922, %v5034
  %v5036 = vpop.f32.mrb[0].mxu0
  %v5037 = vadd.f32 %v4924, %v5036
  %v5038 = vpop.f32.mrb[0].mxu0
  %v5039 = vadd.f32 %v4926, %v5038
  %v5040 = vpop.f32.mrb[0].mxu0
  %v5041 = vadd.f32 %v4928, %v5040
  %5042 = vdwg.mxu0
  %5043 = vmatprep.subr.bf16.mxu0 %v2970
  %5044 = vmatpush1.bf16.msra.mxu0 %v2969
  %5045 = vmatprep.subr.bf16.mxu0 %v2974
  %5046 = vmatpush1.bf16.msra.mxu0 %v2973
  %5047 = vmatprep.subr.bf16.mxu0 %v2978
  %5048 = vmatpush1.bf16.msra.mxu0 %v2977
  %5049 = vmatprep.subr.bf16.mxu0 %v2982
  %5050 = vmatpush1.bf16.msra.mxu0 %v2981
  %5051 = vmatprep.subr.bf16.mxu0 %v2986
  %5052 = vmatpush1.bf16.msra.mxu0 %v2985
  %5053 = vmatprep.subr.bf16.mxu0 %v2990
  %5054 = vmatpush1.bf16.msra.mxu0 %v2989
  %5055 = vmatprep.subr.bf16.mxu0 %v2994
  %5056 = vmatpush1.bf16.msra.mxu0 %v2993
  %5057 = vmatprep.subr.bf16.mxu0 %v2998
  %5058 = vmatpush1.bf16.msra.mxu0 %v2997
  %5059 = vmatprep.subr.bf16.mxu0 %v3002
  %5060 = vmatpush1.bf16.msra.mxu0 %v3001
  %5061 = vmatprep.subr.bf16.mxu0 %v3006
  %5062 = vmatpush1.bf16.msra.mxu0 %v3005
  %5063 = vmatprep.subr.bf16.mxu0 %v3010
  %5064 = vmatpush1.bf16.msra.mxu0 %v3009
  %5065 = vmatprep.subr.bf16.mxu0 %v3014
  %5066 = vmatpush1.bf16.msra.mxu0 %v3013
  %5067 = vmatprep.subr.bf16.mxu0 %v3018
  %5068 = vmatpush1.bf16.msra.mxu0 %v3017
  %5069 = vmatprep.subr.bf16.mxu0 %v3022
  %5070 = vmatpush1.bf16.msra.mxu0 %v3021
  %5071 = vmatprep.subr.bf16.mxu0 %v3026
  %5072 = vmatpush1.bf16.msra.mxu0 %v3025
  %5073 = vmatprep.subr.bf16.mxu0 %v3030
  %5074 = vmatpush1.bf16.msra.mxu0 %v3029
  %5075 = vmatprep.mubr.bf16.mxu0 %v1034
  %5076 = vmatmul.mubr.bf16.gmra.mrb[0].mxu0 %v1033
  %v5077 = vpop.f32.mrb[0].mxu0
  %v5078 = vadd.f32 %v4965, %v5077
  %v5079 = vpop.f32.mrb[0].mxu0
  %v5080 = vadd.f32 %v4967, %v5079
  %v5081 = vpop.f32.mrb[0].mxu0
  %v5082 = vadd.f32 %v4969, %v5081
  %v5083 = vpop.f32.mrb[0].mxu0
  %v5084 = vadd.f32 %v4971, %v5083
  %5085 = vmatprep.mubr.bf16.mxu0 %v1050
  %5086 = vmatmul.mubr.bf16.gmra.mrb[0].mxu0 %v1049
  %v5087 = vpop.f32.mrb[0].mxu0
  %v5088 = vadd.f32 %v4975, %v5087
  %v5089 = vpop.f32.mrb[0].mxu0
  %v5090 = vadd.f32 %v4977, %v5089
  %v5091 = vpop.f32.mrb[0].mxu0
  %v5092 = vadd.f32 %v4979, %v5091
  %v5093 = vpop.f32.mrb[0].mxu0
  %v5094 = vadd.f32 %v4981, %v5093
  %5095 = vmatprep.mubr.bf16.mxu0 %v1066
  %5096 = vmatmul.mubr.bf16.gmra.mrb[0].mxu0 %v1065
  %v5097 = vpop.f32.mrb[0].mxu0
  %v5098 = vadd.f32 %v4985, %v5097
  %v5099 = vpop.f32.mrb[0].mxu0
  %v5100 = vadd.f32 %v4987, %v5099
  %v5101 = vpop.f32.mrb[0].mxu0
  %v5102 = vadd.f32 %v4989, %v5101
  %v5103 = vpop.f32.mrb[0].mxu0
  %v5104 = vadd.f32 %v4991, %v5103
  %5105 = vmatprep.mubr.bf16.mxu0 %v1082
  %5106 = vmatmul.mubr.bf16.gmra.mrb[0].mxu0 %v1081
  %v5107 = vpop.f32.mrb[0].mxu0
  %v5108 = vadd.f32 %v4995, %v5107
  %v5109 = vpop.f32.mrb[0].mxu0
  %v5110 = vadd.f32 %v4997, %v5109
  %v5111 = vpop.f32.mrb[0].mxu0
  %v5112 = vadd.f32 %v4999, %v5111
  %v5113 = vpop.f32.mrb[0].mxu0
  %v5114 = vadd.f32 %v5001, %v5113
  %5115 = vmatprep.mubr.bf16.mxu0 %v1098
  %5116 = vmatmul.mubr.bf16.gmra.mrb[0].mxu0 %v1097
  %v5117 = vpop.f32.mrb[0].mxu0
  %v5118 = vadd.f32 %v5005, %v5117
  %v5119 = vpop.f32.mrb[0].mxu0
  %v5120 = vadd.f32 %v5007, %v5119
  %v5121 = vpop.f32.mrb[0].mxu0
  %v5122 = vadd.f32 %v5009, %v5121
  %v5123 = vpop.f32.mrb[0].mxu0
  %v5124 = vadd.f32 %v5011, %v5123
  %5125 = vmatprep.mubr.bf16.mxu0 %v1114
  %5126 = vmatmul.mubr.bf16.gmra.mrb[0].mxu0 %v1113
  %v5127 = vpop.f32.mrb[0].mxu0
  %v5128 = vadd.f32 %v5015, %v5127
  %v5129 = vpop.f32.mrb[0].mxu0
  %v5130 = vadd.f32 %v5017, %v5129
  %v5131 = vpop.f32.mrb[0].mxu0
  %v5132 = vadd.f32 %v5019, %v5131
  %v5133 = vpop.f32.mrb[0].mxu0
  %v5134 = vadd.f32 %v5021, %v5133
  %5135 = vmatprep.mubr.bf16.mxu0 %v1130
  %5136 = vmatmul.mubr.bf16.gmra.mrb[0].mxu0 %v1129
  %v5137 = vpop.f32.mrb[0].mxu0
  %v5138 = vadd.f32 %v5025, %v5137
  %v5139 = vpop.f32.mrb[0].mxu0
  %v5140 = vadd.f32 %v5027, %v5139
  %v5141 = vpop.f32.mrb[0].mxu0
  %v5142 = vadd.f32 %v5029, %v5141
  %v5143 = vpop.f32.mrb[0].mxu0
  %v5144 = vadd.f32 %v5031, %v5143
  %5145 = vmatprep.mubr.bf16.mxu0 %v1146
  %5146 = vmatmul.mubr.bf16.gmra.mrb[0].mxu0 %v1145
  %v5147 = vpop.f32.mrb[0].mxu0
  %v5148 = vadd.f32 %v5035, %v5147
  %v5149 = vpop.f32.mrb[0].mxu0
  %v5150 = vadd.f32 %v5037, %v5149
  %v5151 = vpop.f32.mrb[0].mxu0
  %v5152 = vadd.f32 %v5039, %v5151
  %v5153 = vpop.f32.mrb[0].mxu0
  %v5154 = vadd.f32 %v5041, %v5153
  %5155 = vdwg.mxu0
  %5156 = vmatprep.subr.bf16.mxu0 %v3034
  %5157 = vmatpush1.bf16.msra.mxu0 %v3033
  %5158 = vmatprep.subr.bf16.mxu0 %v3038
  %5159 = vmatpush1.bf16.msra.mxu0 %v3037
  %5160 = vmatprep.subr.bf16.mxu0 %v3042
  %5161 = vmatpush1.bf16.msra.mxu0 %v3041
  %5162 = vmatprep.subr.bf16.mxu0 %v3046
  %5163 = vmatpush1.bf16.msra.mxu0 %v3045
  %5164 = vmatprep.subr.bf16.mxu0 %v3050
  %5165 = vmatpush1.bf16.msra.mxu0 %v3049
  %5166 = vmatprep.subr.bf16.mxu0 %v3054
  %5167 = vmatpush1.bf16.msra.mxu0 %v3053
  %5168 = vmatprep.subr.bf16.mxu0 %v3058
  %5169 = vmatpush1.bf16.msra.mxu0 %v3057
  %5170 = vmatprep.subr.bf16.mxu0 %v3062
  %5171 = vmatpush1.bf16.msra.mxu0 %v3061
  %5172 = vmatprep.subr.bf16.mxu0 %v3066
  %5173 = vmatpush1.bf16.msra.mxu0 %v3065
  %5174 = vmatprep.subr.bf16.mxu0 %v3070
  %5175 = vmatpush1.bf16.msra.mxu0 %v3069
  %5176 = vmatprep.subr.bf16.mxu0 %v3074
  %5177 = vmatpush1.bf16.msra.mxu0 %v3073
  %5178 = vmatprep.subr.bf16.mxu0 %v3078
  %5179 = vmatpush1.bf16.msra.mxu0 %v3077
  %5180 = vmatprep.subr.bf16.mxu0 %v3082
  %5181 = vmatpush1.bf16.msra.mxu0 %v3081
  %5182 = vmatprep.subr.bf16.mxu0 %v3086
  %5183 = vmatpush1.bf16.msra.mxu0 %v3085
  %5184 = vmatprep.subr.bf16.mxu0 %v3090
  %5185 = vmatpush1.bf16.msra.mxu0 %v3089
  %5186 = vmatprep.subr.bf16.mxu0 %v3094
  %5187 = vmatpush1.bf16.msra.mxu0 %v3093
  %5188 = vmatprep.mubr.bf16.mxu0 %v1036
  %5189 = vmatmul.mubr.bf16.gmra.mrb[0].mxu0 %v1035
  %v5190 = vpop.f32.mrb[0].mxu0
  %v5191 = vadd.f32 %v5078, %v5190
  %v5192 = vpop.f32.mrb[0].mxu0
  %v5193 = vadd.f32 %v5080, %v5192
  %v5194 = vpop.f32.mrb[0].mxu0
  %v5195 = vadd.f32 %v5082, %v5194
  %v5196 = vpop.f32.mrb[0].mxu0
  %v5197 = vadd.f32 %v5084, %v5196
  %5198 = vmatprep.mubr.bf16.mxu0 %v1052
  %5199 = vmatmul.mubr.bf16.gmra.mrb[0].mxu0 %v1051
  %v5200 = vpop.f32.mrb[0].mxu0
  %v5201 = vadd.f32 %v5088, %v5200
  %v5202 = vpop.f32.mrb[0].mxu0
  %v5203 = vadd.f32 %v5090, %v5202
  %v5204 = vpop.f32.mrb[0].mxu0
  %v5205 = vadd.f32 %v5092, %v5204
  %v5206 = vpop.f32.mrb[0].mxu0
  %v5207 = vadd.f32 %v5094, %v5206
  %5208 = vmatprep.mubr.bf16.mxu0 %v1068
  %5209 = vmatmul.mubr.bf16.gmra.mrb[0].mxu0 %v1067
  %v5210 = vpop.f32.mrb[0].mxu0
  %v5211 = vadd.f32 %v5098, %v5210
  %v5212 = vpop.f32.mrb[0].mxu0
  %v5213 = vadd.f32 %v5100, %v5212
  %v5214 = vpop.f32.mrb[0].mxu0
  %v5215 = vadd.f32 %v5102, %v5214
  %v5216 = vpop.f32.mrb[0].mxu0
  %v5217 = vadd.f32 %v5104, %v5216
  %5218 = vmatprep.mubr.bf16.mxu0 %v1084
  %5219 = vmatmul.mubr.bf16.gmra.mrb[0].mxu0 %v1083
  %v5220 = vpop.f32.mrb[0].mxu0
  %v5221 = vadd.f32 %v5108, %v5220
  %v5222 = vpop.f32.mrb[0].mxu0
  %v5223 = vadd.f32 %v5110, %v5222
  %v5224 = vpop.f32.mrb[0].mxu0
  %v5225 = vadd.f32 %v5112, %v5224
  %v5226 = vpop.f32.mrb[0].mxu0
  %v5227 = vadd.f32 %v5114, %v5226
  %5228 = vmatprep.mubr.bf16.mxu0 %v1100
  %5229 = vmatmul.mubr.bf16.gmra.mrb[0].mxu0 %v1099
  %v5230 = vpop.f32.mrb[0].mxu0
  %v5231 = vadd.f32 %v5118, %v5230
  %v5232 = vpop.f32.mrb[0].mxu0
  %v5233 = vadd.f32 %v5120, %v5232
  %v5234 = vpop.f32.mrb[0].mxu0
  %v5235 = vadd.f32 %v5122, %v5234
  %v5236 = vpop.f32.mrb[0].mxu0
  %v5237 = vadd.f32 %v5124, %v5236
  %5238 = vmatprep.mubr.bf16.mxu0 %v1116
  %5239 = vmatmul.mubr.bf16.gmra.mrb[0].mxu0 %v1115
  %v5240 = vpop.f32.mrb[0].mxu0
  %v5241 = vadd.f32 %v5128, %v5240
  %v5242 = vpop.f32.mrb[0].mxu0
  %v5243 = vadd.f32 %v5130, %v5242
  %v5244 = vpop.f32.mrb[0].mxu0
  %v5245 = vadd.f32 %v5132, %v5244
  %v5246 = vpop.f32.mrb[0].mxu0
  %v5247 = vadd.f32 %v5134, %v5246
  %5248 = vmatprep.mubr.bf16.mxu0 %v1132
  %5249 = vmatmul.mubr.bf16.gmra.mrb[0].mxu0 %v1131
  %v5250 = vpop.f32.mrb[0].mxu0
  %v5251 = vadd.f32 %v5138, %v5250
  %v5252 = vpop.f32.mrb[0].mxu0
  %v5253 = vadd.f32 %v5140, %v5252
  %v5254 = vpop.f32.mrb[0].mxu0
  %v5255 = vadd.f32 %v5142, %v5254
  %v5256 = vpop.f32.mrb[0].mxu0
  %v5257 = vadd.f32 %v5144, %v5256
  %5258 = vmatprep.mubr.bf16.mxu0 %v1148
  %5259 = vmatmul.mubr.bf16.gmra.mrb[0].mxu0 %v1147
  %v5260 = vpop.f32.mrb[0].mxu0
  %v5261 = vadd.f32 %v5148, %v5260
  %v5262 = vpop.f32.mrb[0].mxu0
  %v5263 = vadd.f32 %v5150, %v5262
  %v5264 = vpop.f32.mrb[0].mxu0
  %v5265 = vadd.f32 %v5152, %v5264
  %v5266 = vpop.f32.mrb[0].mxu0
  %v5267 = vadd.f32 %v5154, %v5266
  %5268 = vdwg.mxu0
  %5269 = vmatprep.subr.bf16.mxu0 %v3098
  %5270 = vmatpush1.bf16.msra.mxu0 %v3097
  %5271 = vmatprep.subr.bf16.mxu0 %v3102
  %5272 = vmatpush1.bf16.msra.mxu0 %v3101
  %5273 = vmatprep.subr.bf16.mxu0 %v3106
  %5274 = vmatpush1.bf16.msra.mxu0 %v3105
  %5275 = vmatprep.subr.bf16.mxu0 %v3110
  %5276 = vmatpush1.bf16.msra.mxu0 %v3109
  %5277 = vmatprep.subr.bf16.mxu0 %v3114
  %5278 = vmatpush1.bf16.msra.mxu0 %v3113
  %5279 = vmatprep.subr.bf16.mxu0 %v3118
  %5280 = vmatpush1.bf16.msra.mxu0 %v3117
  %5281 = vmatprep.subr.bf16.mxu0 %v3122
  %5282 = vmatpush1.bf16.msra.mxu0 %v3121
  %5283 = vmatprep.subr.bf16.mxu0 %v3126
  %5284 = vmatpush1.bf16.msra.mxu0 %v3125
  %5285 = vmatprep.subr.bf16.mxu0 %v3130
  %5286 = vmatpush1.bf16.msra.mxu0 %v3129
  %5287 = vmatprep.subr.bf16.mxu0 %v3134
  %5288 = vmatpush1.bf16.msra.mxu0 %v3133
  %5289 = vmatprep.subr.bf16.mxu0 %v3138
  %5290 = vmatpush1.bf16.msra.mxu0 %v3137
  %5291 = vmatprep.subr.bf16.mxu0 %v3142
  %5292 = vmatpush1.bf16.msra.mxu0 %v3141
  %5293 = vmatprep.subr.bf16.mxu0 %v3146
  %5294 = vmatpush1.bf16.msra.mxu0 %v3145
  %5295 = vmatprep.subr.bf16.mxu0 %v3150
  %5296 = vmatpush1.bf16.msra.mxu0 %v3149
  %5297 = vmatprep.subr.bf16.mxu0 %v3154
  %5298 = vmatpush1.bf16.msra.mxu0 %v3153
  %5299 = vmatprep.subr.bf16.mxu0 %v3158
  %5300 = vmatpush1.bf16.msra.mxu0 %v3157
  %5301 = vmatprep.mubr.bf16.mxu0 %v1038
  %5302 = vmatmul.mubr.bf16.gmra.mrb[0].mxu0 %v1037
  %v5303 = vpop.f32.mrb[0].mxu0
  %v5304 = vadd.f32 %v5191, %v5303
  %v5305 = vpop.f32.mrb[0].mxu0
  %v5306 = vadd.f32 %v5193, %v5305
  %v5307 = vpop.f32.mrb[0].mxu0
  %v5308 = vadd.f32 %v5195, %v5307
  %v5309 = vpop.f32.mrb[0].mxu0
  %v5310 = vadd.f32 %v5197, %v5309
  %5311 = vmatprep.mubr.bf16.mxu0 %v1054
  %5312 = vmatmul.mubr.bf16.gmra.mrb[0].mxu0 %v1053
  %v5313 = vpop.f32.mrb[0].mxu0
  %v5314 = vadd.f32 %v5201, %v5313
  %v5315 = vpop.f32.mrb[0].mxu0
  %v5316 = vadd.f32 %v5203, %v5315
  %v5317 = vpop.f32.mrb[0].mxu0
  %v5318 = vadd.f32 %v5205, %v5317
  %v5319 = vpop.f32.mrb[0].mxu0
  %v5320 = vadd.f32 %v5207, %v5319
  %5321 = vmatprep.mubr.bf16.mxu0 %v1070
  %5322 = vmatmul.mubr.bf16.gmra.mrb[0].mxu0 %v1069
  %v5323 = vpop.f32.mrb[0].mxu0
  %v5324 = vadd.f32 %v5211, %v5323
  %v5325 = vpop.f32.mrb[0].mxu0
  %v5326 = vadd.f32 %v5213, %v5325
  %v5327 = vpop.f32.mrb[0].mxu0
  %v5328 = vadd.f32 %v5215, %v5327
  %v5329 = vpop.f32.mrb[0].mxu0
  %v5330 = vadd.f32 %v5217, %v5329
  %5331 = vmatprep.mubr.bf16.mxu0 %v1086
  %5332 = vmatmul.mubr.bf16.gmra.mrb[0].mxu0 %v1085
  %v5333 = vpop.f32.mrb[0].mxu0
  %v5334 = vadd.f32 %v5221, %v5333
  %v5335 = vpop.f32.mrb[0].mxu0
  %v5336 = vadd.f32 %v5223, %v5335
  %v5337 = vpop.f32.mrb[0].mxu0
  %v5338 = vadd.f32 %v5225, %v5337
  %v5339 = vpop.f32.mrb[0].mxu0
  %v5340 = vadd.f32 %v5227, %v5339
  %5341 = vmatprep.mubr.bf16.mxu0 %v1102
  %5342 = vmatmul.mubr.bf16.gmra.mrb[0].mxu0 %v1101
  %v5343 = vpop.f32.mrb[0].mxu0
  %v5344 = vadd.f32 %v5231, %v5343
  %v5345 = vpop.f32.mrb[0].mxu0
  %v5346 = vadd.f32 %v5233, %v5345
  %v5347 = vpop.f32.mrb[0].mxu0
  %v5348 = vadd.f32 %v5235, %v5347
  %v5349 = vpop.f32.mrb[0].mxu0
  %v5350 = vadd.f32 %v5237, %v5349
  %5351 = vmatprep.mubr.bf16.mxu0 %v1118
  %5352 = vmatmul.mubr.bf16.gmra.mrb[0].mxu0 %v1117
  %v5353 = vpop.f32.mrb[0].mxu0
  %v5354 = vadd.f32 %v5241, %v5353
  %v5355 = vpop.f32.mrb[0].mxu0
  %v5356 = vadd.f32 %v5243, %v5355
  %v5357 = vpop.f32.mrb[0].mxu0
  %v5358 = vadd.f32 %v5245, %v5357
  %v5359 = vpop.f32.mrb[0].mxu0
  %v5360 = vadd.f32 %v5247, %v5359
  %5361 = vmatprep.mubr.bf16.mxu0 %v1134
  %5362 = vmatmul.mubr.bf16.gmra.mrb[0].mxu0 %v1133
  %v5363 = vpop.f32.mrb[0].mxu0
  %v5364 = vadd.f32 %v5251, %v5363
  %v5365 = vpop.f32.mrb[0].mxu0
  %v5366 = vadd.f32 %v5253, %v5365
  %v5367 = vpop.f32.mrb[0].mxu0
  %v5368 = vadd.f32 %v5255, %v5367
  %v5369 = vpop.f32.mrb[0].mxu0
  %v5370 = vadd.f32 %v5257, %v5369
  %5371 = vmatprep.mubr.bf16.mxu0 %v1150
  %5372 = vmatmul.mubr.bf16.gmra.mrb[0].mxu0 %v1149
  %v5373 = vpop.f32.mrb[0].mxu0
  %v5374 = vadd.f32 %v5261, %v5373
  %v5375 = vpop.f32.mrb[0].mxu0
  %v5376 = vadd.f32 %v5263, %v5375
  %v5377 = vpop.f32.mrb[0].mxu0
  %v5378 = vadd.f32 %v5265, %v5377
  %v5379 = vpop.f32.mrb[0].mxu0
  %v5380 = vadd.f32 %v5267, %v5379
  %5381 = vdwg.mxu0
  %5382 = vmatprep.subr.bf16.mxu0 %v3162
  %5383 = vmatpush1.bf16.msra.mxu0 %v3161
  %5384 = vmatprep.subr.bf16.mxu0 %v3166
  %5385 = vmatpush1.bf16.msra.mxu0 %v3165
  %5386 = vmatprep.subr.bf16.mxu0 %v3170
  %5387 = vmatpush1.bf16.msra.mxu0 %v3169
  %5388 = vmatprep.subr.bf16.mxu0 %v3174
  %5389 = vmatpush1.bf16.msra.mxu0 %v3173
  %5390 = vmatprep.subr.bf16.mxu0 %v3178
  %5391 = vmatpush1.bf16.msra.mxu0 %v3177
  %5392 = vmatprep.subr.bf16.mxu0 %v3182
  %5393 = vmatpush1.bf16.msra.mxu0 %v3181
  %5394 = vmatprep.subr.bf16.mxu0 %v3186
  %5395 = vmatpush1.bf16.msra.mxu0 %v3185
  %5396 = vmatprep.subr.bf16.mxu0 %v3190
  %5397 = vmatpush1.bf16.msra.mxu0 %v3189
  %5398 = vmatprep.subr.bf16.mxu0 %v3194
  %5399 = vmatpush1.bf16.msra.mxu0 %v3193
  %5400 = vmatprep.subr.bf16.mxu0 %v3198
  %5401 = vmatpush1.bf16.msra.mxu0 %v3197
  %5402 = vmatprep.subr.bf16.mxu0 %v3202
  %5403 = vmatpush1.bf16.msra.mxu0 %v3201
  %5404 = vmatprep.subr.bf16.mxu0 %v3206
  %5405 = vmatpush1.bf16.msra.mxu0 %v3205
  %5406 = vmatprep.subr.bf16.mxu0 %v3210
  %5407 = vmatpush1.bf16.msra.mxu0 %v3209
  %5408 = vmatprep.subr.bf16.mxu0 %v3214
  %5409 = vmatpush1.bf16.msra.mxu0 %v3213
  %5410 = vmatprep.subr.bf16.mxu0 %v3218
  %5411 = vmatpush1.bf16.msra.mxu0 %v3217
  %5412 = vmatprep.subr.bf16.mxu0 %v3222
  %5413 = vmatpush1.bf16.msra.mxu0 %v3221
  %5414 = vmatprep.mubr.bf16.mxu0 %v1040
  %5415 = vmatmul.mubr.bf16.gmra.mrb[0].mxu0 %v1039
  %v5416 = vpop.f32.mrb[0].mxu0
  %v5417 = vadd.f32 %v5304, %v5416
  %v5418 = vpop.f32.mrb[0].mxu0
  %v5419 = vadd.f32 %v5306, %v5418
  %v5420 = vpop.f32.mrb[0].mxu0
  %v5421 = vadd.f32 %v5308, %v5420
  %v5422 = vpop.f32.mrb[0].mxu0
  %v5423 = vadd.f32 %v5310, %v5422
  %5424 = vmatprep.mubr.bf16.mxu0 %v1056
  %5425 = vmatmul.mubr.bf16.gmra.mrb[0].mxu0 %v1055
  %v5426 = vpop.f32.mrb[0].mxu0
  %v5427 = vadd.f32 %v5314, %v5426
  %v5428 = vpop.f32.mrb[0].mxu0
  %v5429 = vadd.f32 %v5316, %v5428
  %v5430 = vpop.f32.mrb[0].mxu0
  %v5431 = vadd.f32 %v5318, %v5430
  %v5432 = vpop.f32.mrb[0].mxu0
  %v5433 = vadd.f32 %v5320, %v5432
  %5434 = vmatprep.mubr.bf16.mxu0 %v1072
  %5435 = vmatmul.mubr.bf16.gmra.mrb[0].mxu0 %v1071
  %v5436 = vpop.f32.mrb[0].mxu0
  %v5437 = vadd.f32 %v5324, %v5436
  %v5438 = vpop.f32.mrb[0].mxu0
  %v5439 = vadd.f32 %v5326, %v5438
  %v5440 = vpop.f32.mrb[0].mxu0
  %v5441 = vadd.f32 %v5328, %v5440
  %v5442 = vpop.f32.mrb[0].mxu0
  %v5443 = vadd.f32 %v5330, %v5442
  %5444 = vmatprep.mubr.bf16.mxu0 %v1088
  %5445 = vmatmul.mubr.bf16.gmra.mrb[0].mxu0 %v1087
  %v5446 = vpop.f32.mrb[0].mxu0
  %v5447 = vadd.f32 %v5334, %v5446
  %v5448 = vpop.f32.mrb[0].mxu0
  %v5449 = vadd.f32 %v5336, %v5448
  %v5450 = vpop.f32.mrb[0].mxu0
  %v5451 = vadd.f32 %v5338, %v5450
  %v5452 = vpop.f32.mrb[0].mxu0
  %v5453 = vadd.f32 %v5340, %v5452
  %5454 = vmatprep.mubr.bf16.mxu0 %v1104
  %5455 = vmatmul.mubr.bf16.gmra.mrb[0].mxu0 %v1103
  %v5456 = vpop.f32.mrb[0].mxu0
  %v5457 = vadd.f32 %v5344, %v5456
  %v5458 = vpop.f32.mrb[0].mxu0
  %v5459 = vadd.f32 %v5346, %v5458
  %v5460 = vpop.f32.mrb[0].mxu0
  %v5461 = vadd.f32 %v5348, %v5460
  %v5462 = vpop.f32.mrb[0].mxu0
  %v5463 = vadd.f32 %v5350, %v5462
  %5464 = vmatprep.mubr.bf16.mxu0 %v1120
  %5465 = vmatmul.mubr.bf16.gmra.mrb[0].mxu0 %v1119
  %v5466 = vpop.f32.mrb[0].mxu0
  %v5467 = vadd.f32 %v5354, %v5466
  %v5468 = vpop.f32.mrb[0].mxu0
  %v5469 = vadd.f32 %v5356, %v5468
  %v5470 = vpop.f32.mrb[0].mxu0
  %v5471 = vadd.f32 %v5358, %v5470
  %v5472 = vpop.f32.mrb[0].mxu0
  %v5473 = vadd.f32 %v5360, %v5472
  %5474 = vmatprep.mubr.bf16.mxu0 %v1136
  %5475 = vmatmul.mubr.bf16.gmra.mrb[0].mxu0 %v1135
  %v5476 = vpop.f32.mrb[0].mxu0
  %v5477 = vadd.f32 %v5364, %v5476
  %v5478 = vpop.f32.mrb[0].mxu0
  %v5479 = vadd.f32 %v5366, %v5478
  %v5480 = vpop.f32.mrb[0].mxu0
  %v5481 = vadd.f32 %v5368, %v5480
  %v5482 = vpop.f32.mrb[0].mxu0
  %v5483 = vadd.f32 %v5370, %v5482
  %5484 = vmatprep.mubr.bf16.mxu0 %v1152
  %5485 = vmatmul.mubr.bf16.gmra.mrb[0].mxu0 %v1151
  %v5486 = vpop.f32.mrb[0].mxu0
  %v5487 = vadd.f32 %v5374, %v5486
  %v5488 = vpop.f32.mrb[0].mxu0
  %v5489 = vadd.f32 %v5376, %v5488
  %v5490 = vpop.f32.mrb[0].mxu0
  %v5491 = vadd.f32 %v5378, %v5490
  %v5492 = vpop.f32.mrb[0].mxu0
  %v5493 = vadd.f32 %v5380, %v5492
  %5494 = vdwg.mxu0
  %5495 = vmatprep.subr.bf16.mxu0 %v3226
  %5496 = vmatpush1.bf16.msra.mxu0 %v3225
  %5497 = vmatprep.subr.bf16.mxu0 %v3230
  %5498 = vmatpush1.bf16.msra.mxu0 %v3229
  %5499 = vmatprep.subr.bf16.mxu0 %v3234
  %5500 = vmatpush1.bf16.msra.mxu0 %v3233
  %5501 = vmatprep.subr.bf16.mxu0 %v3238
  %5502 = vmatpush1.bf16.msra.mxu0 %v3237
  %5503 = vmatprep.subr.bf16.mxu0 %v3242
  %5504 = vmatpush1.bf16.msra.mxu0 %v3241
  %5505 = vmatprep.subr.bf16.mxu0 %v3246
  %5506 = vmatpush1.bf16.msra.mxu0 %v3245
  %5507 = vmatprep.subr.bf16.mxu0 %v3250
  %5508 = vmatpush1.bf16.msra.mxu0 %v3249
  %5509 = vmatprep.subr.bf16.mxu0 %v3254
  %5510 = vmatpush1.bf16.msra.mxu0 %v3253
  %5511 = vmatprep.subr.bf16.mxu0 %v3258
  %5512 = vmatpush1.bf16.msra.mxu0 %v3257
  %5513 = vmatprep.subr.bf16.mxu0 %v3262
  %5514 = vmatpush1.bf16.msra.mxu0 %v3261
  %5515 = vmatprep.subr.bf16.mxu0 %v3266
  %5516 = vmatpush1.bf16.msra.mxu0 %v3265
  %5517 = vmatprep.subr.bf16.mxu0 %v3270
  %5518 = vmatpush1.bf16.msra.mxu0 %v3269
  %5519 = vmatprep.subr.bf16.mxu0 %v3274
  %5520 = vmatpush1.bf16.msra.mxu0 %v3273
  %5521 = vmatprep.subr.bf16.mxu0 0
  %5522 = vmatpush1.bf16.msra.mxu0 0
  %5523 = vmatprep.subr.bf16.mxu0 0
  %5524 = vmatpush1.bf16.msra.mxu0 0
  %5525 = vmatprep.subr.bf16.mxu0 0
  %5526 = vmatpush1.bf16.msra.mxu0 0
  %5527 = vmatprep.mubr.bf16.mxu0 %v3777
  %5528 = vmatmul.mubr.bf16.gmra.mrb[0].mxu0 %v1041
  %v5529 = vpop.f32.mrb[0].mxu0
  %v5530 = vadd.f32 %v5417, %v5529
  %v5531 = vpop.f32.mrb[0].mxu0
  %v5532 = vadd.f32 %v5419, %v5531
  %v5533 = vpop.f32.mrb[0].mxu0
  %v5534 = vadd.f32 %v5421, %v5533
  %v5535 = vpop.f32.mrb[0].mxu0
  %v5536 = vadd.f32 %v5423, %v5535
  %5537 = vmatprep.mubr.bf16.mxu0 %v3780
  %5538 = vmatmul.mubr.bf16.gmra.mrb[0].mxu0 %v1057
  %v5539 = vpop.f32.mrb[0].mxu0
  %v5540 = vadd.f32 %v5427, %v5539
  %v5541 = vpop.f32.mrb[0].mxu0
  %v5542 = vadd.f32 %v5429, %v5541
  %v5543 = vpop.f32.mrb[0].mxu0
  %v5544 = vadd.f32 %v5431, %v5543
  %v5545 = vpop.f32.mrb[0].mxu0
  %v5546 = vadd.f32 %v5433, %v5545
  %5547 = vmatprep.mubr.bf16.mxu0 %v3783
  %5548 = vmatmul.mubr.bf16.gmra.mrb[0].mxu0 %v1073
  %v5549 = vpop.f32.mrb[0].mxu0
  %v5550 = vadd.f32 %v5437, %v5549
  %v5551 = vpop.f32.mrb[0].mxu0
  %v5552 = vadd.f32 %v5439, %v5551
  %v5553 = vpop.f32.mrb[0].mxu0
  %v5554 = vadd.f32 %v5441, %v5553
  %v5555 = vpop.f32.mrb[0].mxu0
  %v5556 = vadd.f32 %v5443, %v5555
  %5557 = vmatprep.mubr.bf16.mxu0 %v3786
  %5558 = vmatmul.mubr.bf16.gmra.mrb[0].mxu0 %v1089
  %v5559 = vpop.f32.mrb[0].mxu0
  %v5560 = vadd.f32 %v5447, %v5559
  %v5561 = vpop.f32.mrb[0].mxu0
  %v5562 = vadd.f32 %v5449, %v5561
  %v5563 = vpop.f32.mrb[0].mxu0
  %v5564 = vadd.f32 %v5451, %v5563
  %v5565 = vpop.f32.mrb[0].mxu0
  %v5566 = vadd.f32 %v5453, %v5565
  %5567 = vmatprep.mubr.bf16.mxu0 %v3789
  %5568 = vmatmul.mubr.bf16.gmra.mrb[0].mxu0 %v1105
  %v5569 = vpop.f32.mrb[0].mxu0
  %v5570 = vadd.f32 %v5457, %v5569
  %v5571 = vpop.f32.mrb[0].mxu0
  %v5572 = vadd.f32 %v5459, %v5571
  %v5573 = vpop.f32.mrb[0].mxu0
  %v5574 = vadd.f32 %v5461, %v5573
  %v5575 = vpop.f32.mrb[0].mxu0
  %v5576 = vadd.f32 %v5463, %v5575
  %5577 = vmatprep.mubr.bf16.mxu0 %v3792
  %5578 = vmatmul.mubr.bf16.gmra.mrb[0].mxu0 %v1121
  %v5579 = vpop.f32.mrb[0].mxu0
  %v5580 = vadd.f32 %v5467, %v5579
  %v5581 = vpop.f32.mrb[0].mxu0
  %v5582 = vadd.f32 %v5469, %v5581
  %v5583 = vpop.f32.mrb[0].mxu0
  %v5584 = vadd.f32 %v5471, %v5583
  %v5585 = vpop.f32.mrb[0].mxu0
  %v5586 = vadd.f32 %v5473, %v5585
  %5587 = vmatprep.mubr.bf16.mxu0 %v3795
  %5588 = vmatmul.mubr.bf16.gmra.mrb[0].mxu0 %v1137
  %v5589 = vpop.f32.mrb[0].mxu0
  %v5590 = vadd.f32 %v5477, %v5589
  %v5591 = vpop.f32.mrb[0].mxu0
  %v5592 = vadd.f32 %v5479, %v5591
  %v5593 = vpop.f32.mrb[0].mxu0
  %v5594 = vadd.f32 %v5481, %v5593
  %v5595 = vpop.f32.mrb[0].mxu0
  %v5596 = vadd.f32 %v5483, %v5595
  %5597 = vmatprep.mubr.bf16.mxu0 %v3798
  %5598 = vmatmul.mubr.bf16.gmra.mrb[0].mxu0 %v1153
  %v5599 = vpop.f32.mrb[0].mxu0
  %v5600 = vadd.f32 %v5487, %v5599
  %v5601 = vpop.f32.mrb[0].mxu0
  %v5602 = vadd.f32 %v5489, %v5601
  %v5603 = vpop.f32.mrb[0].mxu0
  %v5604 = vadd.f32 %v5491, %v5603
  %v5605 = vpop.f32.mrb[0].mxu0
  %v5606 = vadd.f32 %v5493, %v5605
  %5607 = vdwg.mxu0
  %v5608 = vmax.f32 %v4626, %v4628
  %v5609 = vmax.f32 %v4630, %v4632
  %v5610 = vmax.f32 %v4636, %v4638
  %v5611 = vmax.f32 %v4640, %v4642
  %v5612 = vmax.f32 %v4646, %v4648
  %v5613 = vmax.f32 %v4650, %v4652
  %v5614 = vmax.f32 %v4656, %v4658
  %v5615 = vmax.f32 %v4660, %v4662
  %v5616 = vmax.f32 %v4666, %v4668
  %v5617 = vmax.f32 %v4670, %v4672
  %v5618 = vmax.f32 %v4676, %v4678
  %v5619 = vmax.f32 %v4680, %v4682
  %v5620 = vmax.f32 %v4686, %v4688
  %v5621 = vmax.f32 %v4690, %v4692
  %v5622 = vmax.f32 %v4696, %v4698
  %v5623 = vmax.f32 %v4700, %v4702
  %v5624 = vmax.f32 %v5530, %v5532
  %v5625 = vmax.f32 %v5534, %v5536
  %v5626 = vmax.f32 %v5540, %v5542
  %v5627 = vmax.f32 %v5544, %v5546
  %v5628 = vmax.f32 %v5550, %v5552
  %v5629 = vmax.f32 %v5554, %v5556
  %v5630 = vmax.f32 %v5560, %v5562
  %v5631 = vmax.f32 %v5564, %v5566
  %v5632 = vmax.f32 %v5570, %v5572
  %v5633 = vmax.f32 %v5574, %v5576
  %v5634 = vmax.f32 %v5580, %v5582
  %v5635 = vmax.f32 %v5584, %v5586
  %v5636 = vmax.f32 %v5590, %v5592
  %v5637 = vmax.f32 %v5594, %v5596
  %v5638 = vmax.f32 %v5600, %v5602
  %v5639 = vmax.f32 %v5604, %v5606
  %v5640 = vmax.f32 %v5608, %v5624
  %v5641 = vmax.f32 %v5609, %v5625
  %v5642 = vmax.f32 %v5610, %v5626
  %v5643 = vmax.f32 %v5611, %v5627
  %v5644 = vmax.f32 %v5612, %v5628
  %v5645 = vmax.f32 %v5613, %v5629
  %v5646 = vmax.f32 %v5614, %v5630
  %v5647 = vmax.f32 %v5615, %v5631
  %v5648 = vmax.f32 %v5616, %v5632
  %v5649 = vmax.f32 %v5617, %v5633
  %v5650 = vmax.f32 %v5618, %v5634
  %v5651 = vmax.f32 %v5619, %v5635
  %v5652 = vmax.f32 %v5620, %v5636
  %v5653 = vmax.f32 %v5621, %v5637
  %v5654 = vmax.f32 %v5622, %v5638
  %v5655 = vmax.f32 %v5623, %v5639
  %v5656 = vld [vmem:[%s2] sm:$0x1]
  %v5658 = vlaneseq
  %v5659 = vshrl.u32 %v5658, 7
  %v5660 = vsub.s32 0, %v5659
  %v5661 = vrot.slane %v5656, %v5660
  %v5663 = vadd.f32 %v5640, %v5661
  %v5664 = vadd.f32 %v5641, %v5661
  %v5665 = vadd.f32 %v5642, %v5661
  %v5666 = vadd.f32 %v5643, %v5661
  %v5667 = vadd.f32 %v5644, %v5661
  %v5668 = vadd.f32 %v5645, %v5661
  %v5669 = vadd.f32 %v5646, %v5661
  %v5670 = vadd.f32 %v5647, %v5661
  %v5671 = vadd.f32 %v5648, %v5661
  %v5672 = vadd.f32 %v5649, %v5661
  %v5673 = vadd.f32 %v5650, %v5661
  %v5674 = vadd.f32 %v5651, %v5661
  %v5675 = vadd.f32 %v5652, %v5661
  %v5676 = vadd.f32 %v5653, %v5661
  %v5677 = vadd.f32 %v5654, %v5661
  %v5678 = vadd.f32 %v5655, %v5661
  %v5679 = vmax.f32 %v5663, 0.0
  %v5680 = vmax.f32 %v5664, 0.0
  %v5681 = vmax.f32 %v5665, 0.0
  %v5682 = vmax.f32 %v5666, 0.0
  %v5683 = vmax.f32 %v5667, 0.0
  %v5684 = vmax.f32 %v5668, 0.0
  %v5685 = vmax.f32 %v5669, 0.0
  %v5686 = vmax.f32 %v5670, 0.0
  %v5687 = vmax.f32 %v5671, 0.0
  %v5688 = vmax.f32 %v5672, 0.0
  %v5689 = vmax.f32 %v5673, 0.0
  %v5690 = vmax.f32 %v5674, 0.0
  %v5691 = vmax.f32 %v5675, 0.0
  %v5692 = vmax.f32 %v5676, 0.0
  %v5693 = vmax.f32 %v5677, 0.0
  %v5694 = vmax.f32 %v5678, 0.0
  %v5695 = vpack.c.bf16 %v5680, %v5679
  %v5696 = vpack.c.bf16 %v5682, %v5681
  %v5697 = vpack.c.bf16 %v5684, %v5683
  %v5698 = vpack.c.bf16 %v5686, %v5685
  %v5699 = vpack.c.bf16 %v5688, %v5687
  %v5700 = vpack.c.bf16 %v5690, %v5689
  %v5701 = vpack.c.bf16 %v5692, %v5691
  %v5702 = vpack.c.bf16 %v5694, %v5693
  %v5711 = vunpack.c.l.b16 %v5695
  %v5712 = vunpack.c.h.b16 %v5695
  %v5713 = vunpack.c.l.b16 %v5696
  %v5714 = vunpack.c.h.b16 %v5696
  %v5715 = vunpack.c.l.b16 %v5697
  %v5716 = vunpack.c.h.b16 %v5697
  %v5717 = vunpack.c.l.b16 %v5698
  %v5718 = vunpack.c.h.b16 %v5698
  %v5719 = vunpack.c.l.b16 %v5699
  %v5720 = vunpack.c.h.b16 %v5699
  %v5721 = vunpack.c.l.b16 %v5700
  %v5722 = vunpack.c.h.b16 %v5700
  %v5723 = vunpack.c.l.b16 %v5701
  %v5724 = vunpack.c.h.b16 %v5701
  %v5725 = vunpack.c.l.b16 %v5702
  %v5726 = vunpack.c.h.b16 %v5702
  %v5727 = vpack.c.b16 %v5711, %v5711
  %v5728 = vpack.c.b16 %v5712, %v5712
  %v5729 = vpack.c.b16 %v5713, %v5713
  %v5730 = vpack.c.b16 %v5714, %v5714
  %v5731 = vpack.c.b16 %v5715, %v5715
  %v5732 = vpack.c.b16 %v5716, %v5716
  %v5733 = vpack.c.b16 %v5717, %v5717
  %v5734 = vpack.c.b16 %v5718, %v5718
  %v5735 = vpack.c.b16 %v5719, %v5719
  %v5736 = vpack.c.b16 %v5720, %v5720
  %v5737 = vpack.c.b16 %v5721, %v5721
  %v5738 = vpack.c.b16 %v5722, %v5722
  %v5739 = vpack.c.b16 %v5723, %v5723
  %v5740 = vpack.c.b16 %v5724, %v5724
  %v5741 = vpack.c.b16 %v5725, %v5725
  %v5742 = vpack.c.b16 %v5726, %v5726
  %5759 = vst [vmem:[%s3] sm:$0xf] %v5727
  %5760 = vst [vmem:[%s3 + $0x4] sm:$0xf] %v5728
  %5761 = vst [vmem:[%s3 + $0x8] sm:$0xf] %v5729
  %5762 = vst [vmem:[%s3 + $0xc] sm:$0xf] %v5730
  %5763 = vst [vmem:[%s3 + $0x10] sm:$0xf] %v5731
  %5764 = vst [vmem:[%s3 + $0x14] sm:$0xf] %v5732
  %5765 = vst [vmem:[%s3 + $0x18] sm:$0xf] %v5733
  %5766 = vst [vmem:[%s3 + $0x1c] sm:$0xf] %v5734
  %5767 = vst [vmem:[%s3 + $0x20] sm:$0xf] %v5735
  %5768 = vst [vmem:[%s3 + $0x24] sm:$0xf] %v5736
  %5769 = vst [vmem:[%s3 + $0x28] sm:$0xf] %v5737
  %5770 = vst [vmem:[%s3 + $0x2c] sm:$0xf] %v5738
  %5771 = vst [vmem:[%s3 + $0x30] sm:$0xf] %v5739
  %5772 = vst [vmem:[%s3 + $0x34] sm:$0xf] %v5740
  %5773 = vst [vmem:[%s3 + $0x38] sm:$0xf] %v5741
  %5774 = vst [vmem:[%s3 + $0x3c] sm:$0xf] %v5742
  // Predicated region
  $region14: #{encoder_rnn_forward.5} parent=0 // pred_check
    _
  $region15: #{encoder_rnn_forward.5} parent=0 // pred_check_branch
    %5776 = sbr.rel (0) target = $region17
  $region16: #{encoder_rnn_forward.5} parent=0 // pred_region
    _
  $region17: #{encoder_rnn_forward.5} parent=0 // pred_fallthru
    _
  // Predicated region
  $region18: #{encoder_rnn_forward.5} parent=0 // pred_check
    _
  $region19: #{encoder_rnn_forward.5} parent=0 // pred_check_branch
    %5778 = sbr.rel (0) target = $region21
  $region20: #{encoder_rnn_forward.5} parent=0 // pred_region
    _
  $region21: #{encoder_rnn_forward.5} parent=0 // pred_fallthru
    _

// kernel: encoder_rnn_forward.7
$region0: #{encoder_rnn_forward.7}
  #allocation0 [shape = 'u32[]', space=smem, size = 0x4, offset = 0x4, fixed_abs, tag = 'smem constant byte address 0x4 - core index']
  #allocation1 [shape = 'u32[144,128]{1,0:T(1,128)}', space=vmem, size = 0x12000, scoped, tag = 'internal scratch']
  %s0 = inlined_call_operand.vmem [shape: f32[4,8,384], index: 0, kind: input, shape index: {}]
  %s1 = inlined_call_operand.vmem [shape: f32[2,8,128], index: 1, kind: input, shape index: {}]
  %s2 = inlined_call_operand.vmem [shape: bf16[128,384], index: 2, kind: input, shape index: {}]
  %s3 = inlined_call_operand.vmem [shape: f32[1,384], index: 3, kind: input, shape index: {}]
  %s4 = inlined_call_operand.vmem [shape: bf16[256,512], index: 4, kind: input, shape index: {}]
  %s5 = inlined_call_operand.vmem [shape: f32[1,512], index: 5, kind: input, shape index: {}]
  %s6 = inlined_call_operand.vmem [shape: bf16[128,128], index: 6, kind: input, shape index: {}]
  %s7 = inlined_call_operand.vmem [shape: f32[1,128], index: 7, kind: input, shape index: {}]
  %s8 = inlined_call_operand.vmem [shape: f32[4,8,128], index: 8, kind: output, shape index: {0}]
  %s9 = inlined_call_operand.vmem [shape: f32[2,8,128], index: 9, kind: output, shape index: {1}]
  %10 = xla_tuple %s8, %s9
  %s11 = sld [smem:[#allocation0]]
  $region50: #{encoder_rnn_forward.7} parent=0
    _
  %s13 = ssub.s32 1, %s11
  %s14 = scalar_select 0, %s13, %s11
  // Predicated region
  $region2: #{encoder_rnn_forward.7} parent=0 // pred_check
    _
  $region3: #{encoder_rnn_forward.7} parent=0 // pred_check_branch
    %16 = sbr.rel (0) target = $region5
  $region4: #{encoder_rnn_forward.7} parent=0 // pred_region
    _
  $region5: #{encoder_rnn_forward.7} parent=0 // pred_fallthru
    _
  // Predicated region
  $region6: #{encoder_rnn_forward.7} parent=0 // pred_check
    _
  $region7: #{encoder_rnn_forward.7} parent=0 // pred_check_branch
    %18 = sbr.rel (0) target = $region9
  $region8: #{encoder_rnn_forward.7} parent=0 // pred_region
    _
  $region9: #{encoder_rnn_forward.7} parent=0 // pred_fallthru
    _
  // Predicated region
  $region10: #{encoder_rnn_forward.7} parent=0 // pred_check
    _
  $region11: #{encoder_rnn_forward.7} parent=0 // pred_check_branch
    %20 = sbr.rel (0) target = $region13
  $region12: #{encoder_rnn_forward.7} parent=0 // pred_region
    _
  $region13: #{encoder_rnn_forward.7} parent=0 // pred_fallthru
    _
  // Predicated region
  $region14: #{encoder_rnn_forward.7} parent=0 // pred_check
    _
  $region15: #{encoder_rnn_forward.7} parent=0 // pred_check_branch
    %22 = sbr.rel (0) target = $region17
  $region16: #{encoder_rnn_forward.7} parent=0 // pred_region
    _
  $region17: #{encoder_rnn_forward.7} parent=0 // pred_fallthru
    _
  // Predicated region
  $region18: #{encoder_rnn_forward.7} parent=0 // pred_check
    _
  $region19: #{encoder_rnn_forward.7} parent=0 // pred_check_branch
    %24 = sbr.rel (0) target = $region21
  $region20: #{encoder_rnn_forward.7} parent=0 // pred_region
    _
  $region21: #{encoder_rnn_forward.7} parent=0 // pred_fallthru
    _
  // Predicated region
  $region22: #{encoder_rnn_forward.7} parent=0 // pred_check
    _
  $region23: #{encoder_rnn_forward.7} parent=0 // pred_check_branch
    %26 = sbr.rel (0) target = $region25
  $region24: #{encoder_rnn_forward.7} parent=0 // pred_region
    _
  $region25: #{encoder_rnn_forward.7} parent=0 // pred_fallthru
    _
  // Predicated region
  $region26: #{encoder_rnn_forward.7} parent=0 // pred_check
    _
  $region27: #{encoder_rnn_forward.7} parent=0 // pred_check_branch
    %28 = sbr.rel (0) target = $region29
  $region28: #{encoder_rnn_forward.7} parent=0 // pred_region
    _
  $region29: #{encoder_rnn_forward.7} parent=0 // pred_fallthru
    _
  // Predicated region
  $region30: #{encoder_rnn_forward.7} parent=0 // pred_check
    _
  $region31: #{encoder_rnn_forward.7} parent=0 // pred_check_branch
    %30 = sbr.rel (0) target = $region33
  $region32: #{encoder_rnn_forward.7} parent=0 // pred_region
    _
  $region33: #{encoder_rnn_forward.7} parent=0 // pred_fallthru
    _
  %v32 = vld [vmem:[%s2] sm:$0xff]
  %v33 = vld [vmem:[%s2 + $0x8] sm:$0xf]
  %v34 = vld [vmem:[%s2 + $0xc] sm:$0xff]
  %v35 = vld [vmem:[%s2 + $0x14] sm:$0xf]
  %v36 = vld [vmem:[%s2 + $0x18] sm:$0xff]
  %v37 = vld [vmem:[%s2 + $0x20] sm:$0xf]
  %v38 = vld [vmem:[%s2 + $0x24] sm:$0xff]
  %v39 = vld [vmem:[%s2 + $0x2c] sm:$0xf]
  %v40 = vld [vmem:[%s2 + $0x30] sm:$0xff]
  %v41 = vld [vmem:[%s2 + $0x38] sm:$0xf]
  %v42 = vld [vmem:[%s2 + $0x3c] sm:$0xff]
  %v43 = vld [vmem:[%s2 + $0x44] sm:$0xf]
  %v44 = vld [vmem:[%s2 + $0x48] sm:$0xff]
  %v45 = vld [vmem:[%s2 + $0x50] sm:$0xf]
  %v46 = vld [vmem:[%s2 + $0x54] sm:$0xff]
  %v47 = vld [vmem:[%s2 + $0x5c] sm:$0xf]
  %v48 = vld [vmem:[%s2 + $0x60] sm:$0xff]
  %v49 = vld [vmem:[%s2 + $0x68] sm:$0xf]
  %v50 = vld [vmem:[%s2 + $0x6c] sm:$0xff]
  %v51 = vld [vmem:[%s2 + $0x74] sm:$0xf]
  %v52 = vld [vmem:[%s2 + $0x78] sm:$0xff]
  %v53 = vld [vmem:[%s2 + $0x80] sm:$0xf]
  %v54 = vld [vmem:[%s2 + $0x84] sm:$0xff]
  %v55 = vld [vmem:[%s2 + $0x8c] sm:$0xf]
  %v56 = vld [vmem:[%s2 + $0x90] sm:$0xff]
  %v57 = vld [vmem:[%s2 + $0x98] sm:$0xf]
  %v58 = vld [vmem:[%s2 + $0x9c] sm:$0xff]
  %v59 = vld [vmem:[%s2 + $0xa4] sm:$0xf]
  %v60 = vld [vmem:[%s2 + $0xa8] sm:$0xff]
  %v61 = vld [vmem:[%s2 + $0xb0] sm:$0xf]
  %v62 = vld [vmem:[%s2 + $0xb4] sm:$0xff]
  %v63 = vld [vmem:[%s2 + $0xbc] sm:$0xf]
  %v64 = vld [vmem:[%s3] sm:$0x7]
  %v65 = vld [vmem:[%s4] sm:$0xff]
  %v66 = vld [vmem:[%s4 + $0x8] sm:$0xff]
  %v67 = vld [vmem:[%s4 + $0x10] sm:$0xff]
  %v68 = vld [vmem:[%s4 + $0x18] sm:$0xff]
  %v69 = vld [vmem:[%s4 + $0x20] sm:$0xff]
  %v70 = vld [vmem:[%s4 + $0x28] sm:$0xff]
  %v71 = vld [vmem:[%s4 + $0x30] sm:$0xff]
  %v72 = vld [vmem:[%s4 + $0x38] sm:$0xff]
  %v73 = vld [vmem:[%s4 + $0x40] sm:$0xff]
  %v74 = vld [vmem:[%s4 + $0x48] sm:$0xff]
  %v75 = vld [vmem:[%s4 + $0x50] sm:$0xff]
  %v76 = vld [vmem:[%s4 + $0x58] sm:$0xff]
  %v77 = vld [vmem:[%s4 + $0x60] sm:$0xff]
  %v78 = vld [vmem:[%s4 + $0x68] sm:$0xff]
  %v79 = vld [vmem:[%s4 + $0x70] sm:$0xff]
  %v80 = vld [vmem:[%s4 + $0x78] sm:$0xff]
  %v81 = vld [vmem:[%s4 + $0x80] sm:$0xff]
  %v82 = vld [vmem:[%s4 + $0x88] sm:$0xff]
  %v83 = vld [vmem:[%s4 + $0x90] sm:$0xff]
  %v84 = vld [vmem:[%s4 + $0x98] sm:$0xff]
  %v85 = vld [vmem:[%s4 + $0xa0] sm:$0xff]
  %v86 = vld [vmem:[%s4 + $0xa8] sm:$0xff]
  %v87 = vld [vmem:[%s4 + $0xb0] sm:$0xff]
  %v88 = vld [vmem:[%s4 + $0xb8] sm:$0xff]
  %v89 = vld [vmem:[%s4 + $0xc0] sm:$0xff]
  %v90 = vld [vmem:[%s4 + $0xc8] sm:$0xff]
  %v91 = vld [vmem:[%s4 + $0xd0] sm:$0xff]
  %v92 = vld [vmem:[%s4 + $0xd8] sm:$0xff]
  %v93 = vld [vmem:[%s4 + $0xe0] sm:$0xff]
  %v94 = vld [vmem:[%s4 + $0xe8] sm:$0xff]
  %v95 = vld [vmem:[%s4 + $0xf0] sm:$0xff]
  %v96 = vld [vmem:[%s4 + $0xf8] sm:$0xff]
  %v97 = vld [vmem:[%s4 + $0x100] sm:$0xff]
  %v98 = vld [vmem:[%s4 + $0x108] sm:$0xff]
  %v99 = vld [vmem:[%s4 + $0x110] sm:$0xff]
  %v100 = vld [vmem:[%s4 + $0x118] sm:$0xff]
  %v101 = vld [vmem:[%s4 + $0x120] sm:$0xff]
  %v102 = vld [vmem:[%s4 + $0x128] sm:$0xff]
  %v103 = vld [vmem:[%s4 + $0x130] sm:$0xff]
  %v104 = vld [vmem:[%s4 + $0x138] sm:$0xff]
  %v105 = vld [vmem:[%s4 + $0x140] sm:$0xff]
  %v106 = vld [vmem:[%s4 + $0x148] sm:$0xff]
  %v107 = vld [vmem:[%s4 + $0x150] sm:$0xff]
  %v108 = vld [vmem:[%s4 + $0x158] sm:$0xff]
  %v109 = vld [vmem:[%s4 + $0x160] sm:$0xff]
  %v110 = vld [vmem:[%s4 + $0x168] sm:$0xff]
  %v111 = vld [vmem:[%s4 + $0x170] sm:$0xff]
  %v112 = vld [vmem:[%s4 + $0x178] sm:$0xff]
  %v113 = vld [vmem:[%s4 + $0x180] sm:$0xff]
  %v114 = vld [vmem:[%s4 + $0x188] sm:$0xff]
  %v115 = vld [vmem:[%s4 + $0x190] sm:$0xff]
  %v116 = vld [vmem:[%s4 + $0x198] sm:$0xff]
  %v117 = vld [vmem:[%s4 + $0x1a0] sm:$0xff]
  %v118 = vld [vmem:[%s4 + $0x1a8] sm:$0xff]
  %v119 = vld [vmem:[%s4 + $0x1b0] sm:$0xff]
  %v120 = vld [vmem:[%s4 + $0x1b8] sm:$0xff]
  %v121 = vld [vmem:[%s4 + $0x1c0] sm:$0xff]
  %v122 = vld [vmem:[%s4 + $0x1c8] sm:$0xff]
  %v123 = vld [vmem:[%s4 + $0x1d0] sm:$0xff]
  %v124 = vld [vmem:[%s4 + $0x1d8] sm:$0xff]
  %v125 = vld [vmem:[%s4 + $0x1e0] sm:$0xff]
  %v126 = vld [vmem:[%s4 + $0x1e8] sm:$0xff]
  %v127 = vld [vmem:[%s4 + $0x1f0] sm:$0xff]
  %v128 = vld [vmem:[%s4 + $0x1f8] sm:$0xff]
  %v129 = vld [vmem:[%s5] sm:$0xf]
  %v130 = vld [vmem:[%s6] sm:$0xf]
  %v131 = vld [vmem:[%s6 + $0x4] sm:$0xf]
  %v132 = vld [vmem:[%s6 + $0x8] sm:$0xf]
  %v133 = vld [vmem:[%s6 + $0xc] sm:$0xf]
  %v134 = vld [vmem:[%s6 + $0x10] sm:$0xf]
  %v135 = vld [vmem:[%s6 + $0x14] sm:$0xf]
  %v136 = vld [vmem:[%s6 + $0x18] sm:$0xf]
  %v137 = vld [vmem:[%s6 + $0x1c] sm:$0xf]
  %v138 = vld [vmem:[%s6 + $0x20] sm:$0xf]
  %v139 = vld [vmem:[%s6 + $0x24] sm:$0xf]
  %v140 = vld [vmem:[%s6 + $0x28] sm:$0xf]
  %v141 = vld [vmem:[%s6 + $0x2c] sm:$0xf]
  %v142 = vld [vmem:[%s6 + $0x30] sm:$0xf]
  %v143 = vld [vmem:[%s6 + $0x34] sm:$0xf]
  %v144 = vld [vmem:[%s6 + $0x38] sm:$0xf]
  %v145 = vld [vmem:[%s6 + $0x3c] sm:$0xf]
  %v146 = vld [vmem:[%s7] sm:$0x1]
  %v147 = vld [vmem:[%s1] sm:$0xff]
  %s148 = scalar_lea.vmem %s1, 8
  %v149 = vld [vmem:[%s148] sm:$0xff]
  %v150 = vld [vmem:[%s0] sm:$0xff]
  %v151 = vld [vmem:[%s0 + $0x8] sm:$0xff]
  %v152 = vld [vmem:[%s0 + $0x10] sm:$0xff]
  %v153 = vpack.c.bf16 %v147, %v147
  %v155 = vlaneseq
  %v156 = vshrl.u32 %v155, 7
  %v157 = vsub.s32 0, %v156
  %v158 = vrot.slane %v64, %v157
  %v159 = vlaneseq
  %v160 = vshrl.u32 %v159, 7
  %v161 = vsub.s32 1, %v160
  %v162 = vrot.slane %v64, %v161
  %v163 = vlaneseq
  %v164 = vshrl.u32 %v163, 7
  %v165 = vsub.s32 2, %v164
  %v166 = vrot.slane %v64, %v165
  %v202 = vunpack.c.l.b16 %v32
  %v203 = vunpack.c.h.b16 %v32
  %v204 = vunpack.c.l.b16 %v33
  %v205 = vunpack.c.l.b16 %v34
  %v206 = vunpack.c.h.b16 %v34
  %v207 = vunpack.c.l.b16 %v35
  %v208 = vunpack.c.l.b16 %v36
  %v209 = vunpack.c.h.b16 %v36
  %v210 = vunpack.c.l.b16 %v37
  %v211 = vunpack.c.l.b16 %v38
  %v212 = vunpack.c.h.b16 %v38
  %v213 = vunpack.c.l.b16 %v39
  %v214 = vunpack.c.l.b16 %v40
  %v215 = vunpack.c.h.b16 %v40
  %v216 = vunpack.c.l.b16 %v41
  %v217 = vunpack.c.l.b16 %v42
  %v218 = vunpack.c.h.b16 %v42
  %v219 = vunpack.c.l.b16 %v43
  %v220 = vunpack.c.l.b16 %v44
  %v221 = vunpack.c.h.b16 %v44
  %v222 = vunpack.c.l.b16 %v45
  %v223 = vunpack.c.l.b16 %v46
  %v224 = vunpack.c.h.b16 %v46
  %v225 = vunpack.c.l.b16 %v47
  %v226 = vunpack.c.l.b16 %v48
  %v227 = vunpack.c.h.b16 %v48
  %v228 = vunpack.c.l.b16 %v49
  %v229 = vunpack.c.l.b16 %v50
  %v230 = vunpack.c.h.b16 %v50
  %v231 = vunpack.c.l.b16 %v51
  %v232 = vunpack.c.l.b16 %v52
  %v233 = vunpack.c.h.b16 %v52
  %v234 = vunpack.c.l.b16 %v53
  %v235 = vunpack.c.l.b16 %v54
  %v236 = vunpack.c.h.b16 %v54
  %v237 = vunpack.c.l.b16 %v55
  %v238 = vunpack.c.l.b16 %v56
  %v239 = vunpack.c.h.b16 %v56
  %v240 = vunpack.c.l.b16 %v57
  %v241 = vunpack.c.l.b16 %v58
  %v242 = vunpack.c.h.b16 %v58
  %v243 = vunpack.c.l.b16 %v59
  %v244 = vunpack.c.l.b16 %v60
  %v245 = vunpack.c.h.b16 %v60
  %v246 = vunpack.c.l.b16 %v61
  %v247 = vunpack.c.l.b16 %v62
  %v248 = vunpack.c.h.b16 %v62
  %v249 = vunpack.c.l.b16 %v63
  %v250 = vpack.c.b16 %v205, %v202
  %v251 = vpack.c.b16 %v206, %v203
  %v252 = vpack.c.b16 %v207, %v204
  %v253 = vpack.c.b16 %v211, %v208
  %v254 = vpack.c.b16 %v212, %v209
  %v255 = vpack.c.b16 %v213, %v210
  %v256 = vpack.c.b16 %v217, %v214
  %v257 = vpack.c.b16 %v218, %v215
  %v258 = vpack.c.b16 %v219, %v216
  %v259 = vpack.c.b16 %v223, %v220
  %v260 = vpack.c.b16 %v224, %v221
  %v261 = vpack.c.b16 %v225, %v222
  %v262 = vpack.c.b16 %v229, %v226
  %v263 = vpack.c.b16 %v230, %v227
  %v264 = vpack.c.b16 %v231, %v228
  %v265 = vpack.c.b16 %v235, %v232
  %v266 = vpack.c.b16 %v236, %v233
  %v267 = vpack.c.b16 %v237, %v234
  %v268 = vpack.c.b16 %v241, %v238
  %v269 = vpack.c.b16 %v242, %v239
  %v270 = vpack.c.b16 %v243, %v240
  %v271 = vpack.c.b16 %v247, %v244
  %v272 = vpack.c.b16 %v248, %v245
  %v273 = vpack.c.b16 %v249, %v246
  %298 = vmatprep.subr.bf16.mxu0 %v251
  %299 = vmatpush1.bf16.msra.mxu0 %v250
  %300 = vmatprep.subr.bf16.mxu0 %v254
  %301 = vmatpush1.bf16.msra.mxu0 %v253
  %302 = vmatprep.subr.bf16.mxu0 %v257
  %303 = vmatpush1.bf16.msra.mxu0 %v256
  %304 = vmatprep.subr.bf16.mxu0 %v260
  %305 = vmatpush1.bf16.msra.mxu0 %v259
  %306 = vmatprep.subr.bf16.mxu0 %v263
  %307 = vmatpush1.bf16.msra.mxu0 %v262
  %308 = vmatprep.subr.bf16.mxu0 %v266
  %309 = vmatpush1.bf16.msra.mxu0 %v265
  %310 = vmatprep.subr.bf16.mxu0 %v269
  %311 = vmatpush1.bf16.msra.mxu0 %v268
  %312 = vmatprep.subr.bf16.mxu0 %v272
  %313 = vmatpush1.bf16.msra.mxu0 %v271
  %314 = vmatprep.subr.bf16.mxu0 0
  %315 = vmatpush1.bf16.msra.mxu0 0
  %316 = vmatprep.subr.bf16.mxu0 0
  %317 = vmatpush1.bf16.msra.mxu0 0
  %318 = vmatprep.subr.bf16.mxu0 0
  %319 = vmatpush1.bf16.msra.mxu0 0
  %320 = vmatprep.subr.bf16.mxu0 0
  %321 = vmatpush1.bf16.msra.mxu0 0
  %322 = vmatprep.subr.bf16.mxu0 0
  %323 = vmatpush1.bf16.msra.mxu0 0
  %324 = vmatprep.subr.bf16.mxu0 0
  %325 = vmatpush1.bf16.msra.mxu0 0
  %326 = vmatprep.subr.bf16.mxu0 0
  %327 = vmatpush1.bf16.msra.mxu0 0
  %328 = vmatprep.subr.bf16.mxu0 0
  %329 = vmatpush1.bf16.msra.mxu0 0
  %330 = vmatprep.mubr.bf16.mxu0 0
  %331 = vmatmul.mubr.bf16.gmra.mrb[0].mxu0 %v153
  %v332 = vpop.f32.mrb[0].mxu0
  %v333 = vadd.f32 %v158, %v332
  %v334 = vpop.f32.mrb[0].mxu0
  %v335 = vadd.f32 %v162, %v334
  %v336 = vpop.f32.mrb[0].mxu0
  %v337 = vpop.f32.mrb[0].mxu0
  %338 = vdwg.mxu0
  %339 = vmatprep.subr.bf16.mxu0 0
  %340 = vmatpush1.bf16.msra.mxu0 %v252
  %341 = vmatprep.subr.bf16.mxu0 0
  %342 = vmatpush1.bf16.msra.mxu0 %v255
  %343 = vmatprep.subr.bf16.mxu0 0
  %344 = vmatpush1.bf16.msra.mxu0 %v258
  %345 = vmatprep.subr.bf16.mxu0 0
  %346 = vmatpush1.bf16.msra.mxu0 %v261
  %347 = vmatprep.subr.bf16.mxu0 0
  %348 = vmatpush1.bf16.msra.mxu0 %v264
  %349 = vmatprep.subr.bf16.mxu0 0
  %350 = vmatpush1.bf16.msra.mxu0 %v267
  %351 = vmatprep.subr.bf16.mxu0 0
  %352 = vmatpush1.bf16.msra.mxu0 %v270
  %353 = vmatprep.subr.bf16.mxu0 0
  %354 = vmatpush1.bf16.msra.mxu0 %v273
  %355 = vmatprep.subr.bf16.mxu0 0
  %356 = vmatpush1.bf16.msra.mxu0 0
  %357 = vmatprep.subr.bf16.mxu0 0
  %358 = vmatpush1.bf16.msra.mxu0 0
  %359 = vmatprep.subr.bf16.mxu0 0
  %360 = vmatpush1.bf16.msra.mxu0 0
  %361 = vmatprep.subr.bf16.mxu0 0
  %362 = vmatpush1.bf16.msra.mxu0 0
  %363 = vmatprep.subr.bf16.mxu0 0
  %364 = vmatpush1.bf16.msra.mxu0 0
  %365 = vmatprep.subr.bf16.mxu0 0
  %366 = vmatpush1.bf16.msra.mxu0 0
  %367 = vmatprep.subr.bf16.mxu0 0
  %368 = vmatpush1.bf16.msra.mxu0 0
  %369 = vmatprep.subr.bf16.mxu0 0
  %370 = vmatpush1.bf16.msra.mxu0 0
  %371 = vmatprep.mubr.bf16.mxu0 0
  %372 = vmatmul.mubr.bf16.gmra.mrb[0].mxu0 %v153
  %v373 = vpop.f32.mrb[0].mxu0
  %v374 = vadd.f32 %v166, %v373
  %v375 = vpop.f32.mrb[0].mxu0
  %v376 = vpop.f32.mrb[0].mxu0
  %v377 = vpop.f32.mrb[0].mxu0
  %378 = vdwg.mxu0
  %v379 = vadd.f32 %v150, %v333
  %v380 = vxor.u32 %v379, 2147483648
  %v381 = vmul.f32 %v380, 1.442695
  %v382 = vpow.pop %v381
  %v383 = vadd.f32 %v382, 1.0
  %v384 = vrcp.pop %v383
  %v385 = vmul.f32 1.0, %v384
  %v386 = vadd.f32 %v151, %v335
  %v387 = vxor.u32 %v386, 2147483648
  %v388 = vmul.f32 %v387, 1.442695
  %v389 = vpow.pop %v388
  %v390 = vadd.f32 %v389, 1.0
  %v391 = vrcp.pop %v390
  %v392 = vmul.f32 1.0, %v391
  %v393 = vmul.f32 %v385, %v374
  %v394 = vadd.f32 %v152, %v393
  %v395 = vtanh.pop %v394
  %v396 = vsub.f32 1.0, %v392
  %v397 = vmul.f32 %v396, %v395
  %v398 = vmul.f32 %v392, %v147
  %v399 = vadd.f32 %v397, %v398
  %v400 = vpack.c.bf16 %v399, %v399
  %v401 = vpack.c.bf16 %v149, %v149
  %v434 = vunpack.c.l.b16 %v97
  %v435 = vunpack.c.h.b16 %v97
  %v436 = vunpack.c.l.b16 %v98
  %v437 = vunpack.c.h.b16 %v98
  %v438 = vunpack.c.l.b16 %v99
  %v439 = vunpack.c.h.b16 %v99
  %v440 = vunpack.c.l.b16 %v100
  %v441 = vunpack.c.h.b16 %v100
  %v442 = vunpack.c.l.b16 %v101
  %v443 = vunpack.c.h.b16 %v101
  %v444 = vunpack.c.l.b16 %v102
  %v445 = vunpack.c.h.b16 %v102
  %v446 = vunpack.c.l.b16 %v103
  %v447 = vunpack.c.h.b16 %v103
  %v448 = vunpack.c.l.b16 %v104
  %v449 = vunpack.c.h.b16 %v104
  %v450 = vunpack.c.l.b16 %v105
  %v451 = vunpack.c.h.b16 %v105
  %v452 = vunpack.c.l.b16 %v106
  %v453 = vunpack.c.h.b16 %v106
  %v454 = vunpack.c.l.b16 %v107
  %v455 = vunpack.c.h.b16 %v107
  %v456 = vunpack.c.l.b16 %v108
  %v457 = vunpack.c.h.b16 %v108
  %v458 = vunpack.c.l.b16 %v109
  %v459 = vunpack.c.h.b16 %v109
  %v460 = vunpack.c.l.b16 %v110
  %v461 = vunpack.c.h.b16 %v110
  %v462 = vunpack.c.l.b16 %v111
  %v463 = vunpack.c.h.b16 %v111
  %v464 = vunpack.c.l.b16 %v112
  %v465 = vunpack.c.h.b16 %v112
  %v466 = vunpack.c.l.b16 %v113
  %v467 = vunpack.c.h.b16 %v113
  %v468 = vunpack.c.l.b16 %v114
  %v469 = vunpack.c.h.b16 %v114
  %v470 = vunpack.c.l.b16 %v115
  %v471 = vunpack.c.h.b16 %v115
  %v472 = vunpack.c.l.b16 %v116
  %v473 = vunpack.c.h.b16 %v116
  %v474 = vunpack.c.l.b16 %v117
  %v475 = vunpack.c.h.b16 %v117
  %v476 = vunpack.c.l.b16 %v118
  %v477 = vunpack.c.h.b16 %v118
  %v478 = vunpack.c.l.b16 %v119
  %v479 = vunpack.c.h.b16 %v119
  %v480 = vunpack.c.l.b16 %v120
  %v481 = vunpack.c.h.b16 %v120
  %v482 = vunpack.c.l.b16 %v121
  %v483 = vunpack.c.h.b16 %v121
  %v484 = vunpack.c.l.b16 %v122
  %v485 = vunpack.c.h.b16 %v122
  %v486 = vunpack.c.l.b16 %v123
  %v487 = vunpack.c.h.b16 %v123
  %v488 = vunpack.c.l.b16 %v124
  %v489 = vunpack.c.h.b16 %v124
  %v490 = vunpack.c.l.b16 %v125
  %v491 = vunpack.c.h.b16 %v125
  %v492 = vunpack.c.l.b16 %v126
  %v493 = vunpack.c.h.b16 %v126
  %v494 = vunpack.c.l.b16 %v127
  %v495 = vunpack.c.h.b16 %v127
  %v496 = vunpack.c.l.b16 %v128
  %v497 = vunpack.c.h.b16 %v128
  %v498 = vpack.c.b16 %v438, %v434
  %v499 = vpack.c.b16 %v439, %v435
  %v500 = vpack.c.b16 %v440, %v436
  %v501 = vpack.c.b16 %v441, %v437
  %v502 = vpack.c.b16 %v446, %v442
  %v503 = vpack.c.b16 %v447, %v443
  %v504 = vpack.c.b16 %v448, %v444
  %v505 = vpack.c.b16 %v449, %v445
  %v506 = vpack.c.b16 %v454, %v450
  %v507 = vpack.c.b16 %v455, %v451
  %v508 = vpack.c.b16 %v456, %v452
  %v509 = vpack.c.b16 %v457, %v453
  %v510 = vpack.c.b16 %v462, %v458
  %v511 = vpack.c.b16 %v463, %v459
  %v512 = vpack.c.b16 %v464, %v460
  %v513 = vpack.c.b16 %v465, %v461
  %v514 = vpack.c.b16 %v470, %v466
  %v515 = vpack.c.b16 %v471, %v467
  %v516 = vpack.c.b16 %v472, %v468
  %v517 = vpack.c.b16 %v473, %v469
  %v518 = vpack.c.b16 %v478, %v474
  %v519 = vpack.c.b16 %v479, %v475
  %v520 = vpack.c.b16 %v480, %v476
  %v521 = vpack.c.b16 %v481, %v477
  %v522 = vpack.c.b16 %v486, %v482
  %v523 = vpack.c.b16 %v487, %v483
  %v524 = vpack.c.b16 %v488, %v484
  %v525 = vpack.c.b16 %v489, %v485
  %v526 = vpack.c.b16 %v494, %v490
  %v527 = vpack.c.b16 %v495, %v491
  %v528 = vpack.c.b16 %v496, %v492
  %v529 = vpack.c.b16 %v497, %v493
  %562 = vmatprep.subr.bf16.mxu0 %v499
  %563 = vmatpush1.bf16.msra.mxu0 %v498
  %564 = vmatprep.subr.bf16.mxu0 %v503
  %565 = vmatpush1.bf16.msra.mxu0 %v502
  %566 = vmatprep.subr.bf16.mxu0 %v507
  %567 = vmatpush1.bf16.msra.mxu0 %v506
  %568 = vmatprep.subr.bf16.mxu0 %v511
  %569 = vmatpush1.bf16.msra.mxu0 %v510
  %570 = vmatprep.subr.bf16.mxu0 %v515
  %571 = vmatpush1.bf16.msra.mxu0 %v514
  %572 = vmatprep.subr.bf16.mxu0 %v519
  %573 = vmatpush1.bf16.msra.mxu0 %v518
  %574 = vmatprep.subr.bf16.mxu0 %v523
  %575 = vmatpush1.bf16.msra.mxu0 %v522
  %576 = vmatprep.subr.bf16.mxu0 %v527
  %577 = vmatpush1.bf16.msra.mxu0 %v526
  %578 = vmatprep.subr.bf16.mxu0 0
  %579 = vmatpush1.bf16.msra.mxu0 0
  %580 = vmatprep.subr.bf16.mxu0 0
  %581 = vmatpush1.bf16.msra.mxu0 0
  %582 = vmatprep.subr.bf16.mxu0 0
  %583 = vmatpush1.bf16.msra.mxu0 0
  %584 = vmatprep.subr.bf16.mxu0 0
  %585 = vmatpush1.bf16.msra.mxu0 0
  %586 = vmatprep.subr.bf16.mxu0 0
  %587 = vmatpush1.bf16.msra.mxu0 0
  %588 = vmatprep.subr.bf16.mxu0 0
  %589 = vmatpush1.bf16.msra.mxu0 0
  %590 = vmatprep.subr.bf16.mxu0 0
  %591 = vmatpush1.bf16.msra.mxu0 0
  %592 = vmatprep.subr.bf16.mxu0 0
  %593 = vmatpush1.bf16.msra.mxu0 0
  %594 = vmatprep.mubr.bf16.mxu0 0
  %595 = vmatmul.mubr.bf16.gmra.mrb[0].mxu0 %v401
  %v596 = vpop.f32.mrb[0].mxu0
  %v597 = vadd.f32 0.0, %v596
  %v598 = vpop.f32.mrb[0].mxu0
  %v599 = vadd.f32 0.0, %v598
  %v600 = vpop.f32.mrb[0].mxu0
  %v601 = vpop.f32.mrb[0].mxu0
  %602 = vdwg.mxu0
  %603 = vmatprep.subr.bf16.mxu0 %v501
  %604 = vmatpush1.bf16.msra.mxu0 %v500
  %605 = vmatprep.subr.bf16.mxu0 %v505
  %606 = vmatpush1.bf16.msra.mxu0 %v504
  %607 = vmatprep.subr.bf16.mxu0 %v509
  %608 = vmatpush1.bf16.msra.mxu0 %v508
  %609 = vmatprep.subr.bf16.mxu0 %v513
  %610 = vmatpush1.bf16.msra.mxu0 %v512
  %611 = vmatprep.subr.bf16.mxu0 %v517
  %612 = vmatpush1.bf16.msra.mxu0 %v516
  %613 = vmatprep.subr.bf16.mxu0 %v521
  %614 = vmatpush1.bf16.msra.mxu0 %v520
  %615 = vmatprep.subr.bf16.mxu0 %v525
  %616 = vmatpush1.bf16.msra.mxu0 %v524
  %617 = vmatprep.subr.bf16.mxu0 %v529
  %618 = vmatpush1.bf16.msra.mxu0 %v528
  %619 = vmatprep.subr.bf16.mxu0 0
  %620 = vmatpush1.bf16.msra.mxu0 0
  %621 = vmatprep.subr.bf16.mxu0 0
  %622 = vmatpush1.bf16.msra.mxu0 0
  %623 = vmatprep.subr.bf16.mxu0 0
  %624 = vmatpush1.bf16.msra.mxu0 0
  %625 = vmatprep.subr.bf16.mxu0 0
  %626 = vmatpush1.bf16.msra.mxu0 0
  %627 = vmatprep.subr.bf16.mxu0 0
  %628 = vmatpush1.bf16.msra.mxu0 0
  %629 = vmatprep.subr.bf16.mxu0 0
  %630 = vmatpush1.bf16.msra.mxu0 0
  %631 = vmatprep.subr.bf16.mxu0 0
  %632 = vmatpush1.bf16.msra.mxu0 0
  %633 = vmatprep.subr.bf16.mxu0 0
  %634 = vmatpush1.bf16.msra.mxu0 0
  %635 = vmatprep.mubr.bf16.mxu0 0
  %636 = vmatmul.mubr.bf16.gmra.mrb[0].mxu0 %v401
  %v637 = vpop.f32.mrb[0].mxu0
  %v638 = vadd.f32 0.0, %v637
  %v639 = vpop.f32.mrb[0].mxu0
  %v640 = vadd.f32 0.0, %v639
  %v641 = vpop.f32.mrb[0].mxu0
  %v642 = vpop.f32.mrb[0].mxu0
  %643 = vdwg.mxu0
  %v676 = vunpack.c.l.b16 %v65
  %v677 = vunpack.c.h.b16 %v65
  %v678 = vunpack.c.l.b16 %v66
  %v679 = vunpack.c.h.b16 %v66
  %v680 = vunpack.c.l.b16 %v67
  %v681 = vunpack.c.h.b16 %v67
  %v682 = vunpack.c.l.b16 %v68
  %v683 = vunpack.c.h.b16 %v68
  %v684 = vunpack.c.l.b16 %v69
  %v685 = vunpack.c.h.b16 %v69
  %v686 = vunpack.c.l.b16 %v70
  %v687 = vunpack.c.h.b16 %v70
  %v688 = vunpack.c.l.b16 %v71
  %v689 = vunpack.c.h.b16 %v71
  %v690 = vunpack.c.l.b16 %v72
  %v691 = vunpack.c.h.b16 %v72
  %v692 = vunpack.c.l.b16 %v73
  %v693 = vunpack.c.h.b16 %v73
  %v694 = vunpack.c.l.b16 %v74
  %v695 = vunpack.c.h.b16 %v74
  %v696 = vunpack.c.l.b16 %v75
  %v697 = vunpack.c.h.b16 %v75
  %v698 = vunpack.c.l.b16 %v76
  %v699 = vunpack.c.h.b16 %v76
  %v700 = vunpack.c.l.b16 %v77
  %v701 = vunpack.c.h.b16 %v77
  %v702 = vunpack.c.l.b16 %v78
  %v703 = vunpack.c.h.b16 %v78
  %v704 = vunpack.c.l.b16 %v79
  %v705 = vunpack.c.h.b16 %v79
  %v706 = vunpack.c.l.b16 %v80
  %v707 = vunpack.c.h.b16 %v80
  %v708 = vunpack.c.l.b16 %v81
  %v709 = vunpack.c.h.b16 %v81
  %v710 = vunpack.c.l.b16 %v82
  %v711 = vunpack.c.h.b16 %v82
  %v712 = vunpack.c.l.b16 %v83
  %v713 = vunpack.c.h.b16 %v83
  %v714 = vunpack.c.l.b16 %v84
  %v715 = vunpack.c.h.b16 %v84
  %v716 = vunpack.c.l.b16 %v85
  %v717 = vunpack.c.h.b16 %v85
  %v718 = vunpack.c.l.b16 %v86
  %v719 = vunpack.c.h.b16 %v86
  %v720 = vunpack.c.l.b16 %v87
  %v721 = vunpack.c.h.b16 %v87
  %v722 = vunpack.c.l.b16 %v88
  %v723 = vunpack.c.h.b16 %v88
  %v724 = vunpack.c.l.b16 %v89
  %v725 = vunpack.c.h.b16 %v89
  %v726 = vunpack.c.l.b16 %v90
  %v727 = vunpack.c.h.b16 %v90
  %v728 = vunpack.c.l.b16 %v91
  %v729 = vunpack.c.h.b16 %v91
  %v730 = vunpack.c.l.b16 %v92
  %v731 = vunpack.c.h.b16 %v92
  %v732 = vunpack.c.l.b16 %v93
  %v733 = vunpack.c.h.b16 %v93
  %v734 = vunpack.c.l.b16 %v94
  %v735 = vunpack.c.h.b16 %v94
  %v736 = vunpack.c.l.b16 %v95
  %v737 = vunpack.c.h.b16 %v95
  %v738 = vunpack.c.l.b16 %v96
  %v739 = vunpack.c.h.b16 %v96
  %v740 = vpack.c.b16 %v680, %v676
  %v741 = vpack.c.b16 %v681, %v677
  %v742 = vpack.c.b16 %v682, %v678
  %v743 = vpack.c.b16 %v683, %v679
  %v744 = vpack.c.b16 %v688, %v684
  %v745 = vpack.c.b16 %v689, %v685
  %v746 = vpack.c.b16 %v690, %v686
  %v747 = vpack.c.b16 %v691, %v687
  %v748 = vpack.c.b16 %v696, %v692
  %v749 = vpack.c.b16 %v697, %v693
  %v750 = vpack.c.b16 %v698, %v694
  %v751 = vpack.c.b16 %v699, %v695
  %v752 = vpack.c.b16 %v704, %v700
  %v753 = vpack.c.b16 %v705, %v701
  %v754 = vpack.c.b16 %v706, %v702
  %v755 = vpack.c.b16 %v707, %v703
  %v756 = vpack.c.b16 %v712, %v708
  %v757 = vpack.c.b16 %v713, %v709
  %v758 = vpack.c.b16 %v714, %v710
  %v759 = vpack.c.b16 %v715, %v711
  %v760 = vpack.c.b16 %v720, %v716
  %v761 = vpack.c.b16 %v721, %v717
  %v762 = vpack.c.b16 %v722, %v718
  %v763 = vpack.c.b16 %v723, %v719
  %v764 = vpack.c.b16 %v728, %v724
  %v765 = vpack.c.b16 %v729, %v725
  %v766 = vpack.c.b16 %v730, %v726
  %v767 = vpack.c.b16 %v731, %v727
  %v768 = vpack.c.b16 %v736, %v732
  %v769 = vpack.c.b16 %v737, %v733
  %v770 = vpack.c.b16 %v738, %v734
  %v771 = vpack.c.b16 %v739, %v735
  %804 = vmatprep.subr.bf16.mxu0 %v741
  %805 = vmatpush1.bf16.msra.mxu0 %v740
  %806 = vmatprep.subr.bf16.mxu0 %v745
  %807 = vmatpush1.bf16.msra.mxu0 %v744
  %808 = vmatprep.subr.bf16.mxu0 %v749
  %809 = vmatpush1.bf16.msra.mxu0 %v748
  %810 = vmatprep.subr.bf16.mxu0 %v753
  %811 = vmatpush1.bf16.msra.mxu0 %v752
  %812 = vmatprep.subr.bf16.mxu0 %v757
  %813 = vmatpush1.bf16.msra.mxu0 %v756
  %814 = vmatprep.subr.bf16.mxu0 %v761
  %815 = vmatpush1.bf16.msra.mxu0 %v760
  %816 = vmatprep.subr.bf16.mxu0 %v765
  %817 = vmatpush1.bf16.msra.mxu0 %v764
  %818 = vmatprep.subr.bf16.mxu0 %v769
  %819 = vmatpush1.bf16.msra.mxu0 %v768
  %820 = vmatprep.subr.bf16.mxu0 0
  %821 = vmatpush1.bf16.msra.mxu0 0
  %822 = vmatprep.subr.bf16.mxu0 0
  %823 = vmatpush1.bf16.msra.mxu0 0
  %824 = vmatprep.subr.bf16.mxu0 0
  %825 = vmatpush1.bf16.msra.mxu0 0
  %826 = vmatprep.subr.bf16.mxu0 0
  %827 = vmatpush1.bf16.msra.mxu0 0
  %828 = vmatprep.subr.bf16.mxu0 0
  %829 = vmatpush1.bf16.msra.mxu0 0
  %830 = vmatprep.subr.bf16.mxu0 0
  %831 = vmatpush1.bf16.msra.mxu0 0
  %832 = vmatprep.subr.bf16.mxu0 0
  %833 = vmatpush1.bf16.msra.mxu0 0
  %834 = vmatprep.subr.bf16.mxu0 0
  %835 = vmatpush1.bf16.msra.mxu0 0
  %836 = vmatprep.mubr.bf16.mxu0 0
  %837 = vmatmul.mubr.bf16.gmra.mrb[0].mxu0 %v400
  %v838 = vpop.f32.mrb[0].mxu0
  %v839 = vadd.f32 %v597, %v838
  %v840 = vpop.f32.mrb[0].mxu0
  %v841 = vadd.f32 %v599, %v840
  %v842 = vpop.f32.mrb[0].mxu0
  %v843 = vpop.f32.mrb[0].mxu0
  %844 = vdwg.mxu0
  %845 = vmatprep.subr.bf16.mxu0 %v743
  %846 = vmatpush1.bf16.msra.mxu0 %v742
  %847 = vmatprep.subr.bf16.mxu0 %v747
  %848 = vmatpush1.bf16.msra.mxu0 %v746
  %849 = vmatprep.subr.bf16.mxu0 %v751
  %850 = vmatpush1.bf16.msra.mxu0 %v750
  %851 = vmatprep.subr.bf16.mxu0 %v755
  %852 = vmatpush1.bf16.msra.mxu0 %v754
  %853 = vmatprep.subr.bf16.mxu0 %v759
  %854 = vmatpush1.bf16.msra.mxu0 %v758
  %855 = vmatprep.subr.bf16.mxu0 %v763
  %856 = vmatpush1.bf16.msra.mxu0 %v762
  %857 = vmatprep.subr.bf16.mxu0 %v767
  %858 = vmatpush1.bf16.msra.mxu0 %v766
  %859 = vmatprep.subr.bf16.mxu0 %v771
  %860 = vmatpush1.bf16.msra.mxu0 %v770
  %861 = vmatprep.subr.bf16.mxu0 0
  %862 = vmatpush1.bf16.msra.mxu0 0
  %863 = vmatprep.subr.bf16.mxu0 0
  %864 = vmatpush1.bf16.msra.mxu0 0
  %865 = vmatprep.subr.bf16.mxu0 0
  %866 = vmatpush1.bf16.msra.mxu0 0
  %867 = vmatprep.subr.bf16.mxu0 0
  %868 = vmatpush1.bf16.msra.mxu0 0
  %869 = vmatprep.subr.bf16.mxu0 0
  %870 = vmatpush1.bf16.msra.mxu0 0
  %871 = vmatprep.subr.bf16.mxu0 0
  %872 = vmatpush1.bf16.msra.mxu0 0
  %873 = vmatprep.subr.bf16.mxu0 0
  %874 = vmatpush1.bf16.msra.mxu0 0
  %875 = vmatprep.subr.bf16.mxu0 0
  %876 = vmatpush1.bf16.msra.mxu0 0
  %877 = vmatprep.mubr.bf16.mxu0 0
  %878 = vmatmul.mubr.bf16.gmra.mrb[0].mxu0 %v400
  %v879 = vpop.f32.mrb[0].mxu0
  %v880 = vadd.f32 %v638, %v879
  %v881 = vpop.f32.mrb[0].mxu0
  %v882 = vadd.f32 %v640, %v881
  %v883 = vpop.f32.mrb[0].mxu0
  %v884 = vpop.f32.mrb[0].mxu0
  %885 = vdwg.mxu0
  %v887 = vlaneseq
  %v888 = vshrl.u32 %v887, 7
  %v889 = vsub.s32 0, %v888
  %v890 = vrot.slane %v129, %v889
  %v891 = vlaneseq
  %v892 = vshrl.u32 %v891, 7
  %v893 = vsub.s32 1, %v892
  %v894 = vrot.slane %v129, %v893
  %v895 = vlaneseq
  %v896 = vshrl.u32 %v895, 7
  %v897 = vsub.s32 2, %v896
  %v898 = vrot.slane %v129, %v897
  %v899 = vlaneseq
  %v900 = vshrl.u32 %v899, 7
  %v901 = vsub.s32 3, %v900
  %v902 = vrot.slane %v129, %v901
  %v907 = vadd.f32 %v839, %v890
  %v908 = vadd.f32 %v841, %v894
  %v909 = vadd.f32 %v880, %v898
  %v910 = vadd.f32 %v882, %v902
  %v911 = vxor.u32 %v907, 2147483648
  %v912 = vmul.f32 %v911, 1.442695
  %v913 = vpow.pop %v912
  %v914 = vadd.f32 %v913, 1.0
  %v915 = vrcp.pop %v914
  %v916 = vmul.f32 1.0, %v915
  %v917 = vxor.u32 %v908, 2147483648
  %v918 = vmul.f32 %v917, 1.442695
  %v919 = vpow.pop %v918
  %v920 = vadd.f32 %v919, 1.0
  %v921 = vrcp.pop %v920
  %v922 = vmul.f32 1.0, %v921
  %v923 = vmul.f32 %v916, %v910
  %v924 = vadd.f32 %v909, %v923
  %v925 = vtanh.pop %v924
  %v926 = vsub.f32 1.0, %v922
  %v927 = vmul.f32 %v926, %v925
  %v928 = vmul.f32 %v922, %v149
  %v929 = vadd.f32 %v927, %v928
  %v930 = vpack.c.bf16 %v929, %v929
  %v932 = vlaneseq
  %v933 = vshrl.u32 %v932, 7
  %v934 = vsub.s32 0, %v933
  %v935 = vrot.slane %v146, %v934
  %v953 = vunpack.c.l.b16 %v130
  %v954 = vunpack.c.l.b16 %v131
  %v955 = vunpack.c.l.b16 %v132
  %v956 = vunpack.c.l.b16 %v133
  %v957 = vunpack.c.l.b16 %v134
  %v958 = vunpack.c.l.b16 %v135
  %v959 = vunpack.c.l.b16 %v136
  %v960 = vunpack.c.l.b16 %v137
  %v961 = vunpack.c.l.b16 %v138
  %v962 = vunpack.c.l.b16 %v139
  %v963 = vunpack.c.l.b16 %v140
  %v964 = vunpack.c.l.b16 %v141
  %v965 = vunpack.c.l.b16 %v142
  %v966 = vunpack.c.l.b16 %v143
  %v967 = vunpack.c.l.b16 %v144
  %v968 = vunpack.c.l.b16 %v145
  %v969 = vpack.c.b16 %v954, %v953
  %v970 = vpack.c.b16 %v956, %v955
  %v971 = vpack.c.b16 %v958, %v957
  %v972 = vpack.c.b16 %v960, %v959
  %v973 = vpack.c.b16 %v962, %v961
  %v974 = vpack.c.b16 %v964, %v963
  %v975 = vpack.c.b16 %v966, %v965
  %v976 = vpack.c.b16 %v968, %v967
  %985 = vmatprep.subr.bf16.mxu0 0
  %986 = vmatpush1.bf16.msra.mxu0 %v969
  %987 = vmatprep.subr.bf16.mxu0 0
  %988 = vmatpush1.bf16.msra.mxu0 %v970
  %989 = vmatprep.subr.bf16.mxu0 0
  %990 = vmatpush1.bf16.msra.mxu0 %v971
  %991 = vmatprep.subr.bf16.mxu0 0
  %992 = vmatpush1.bf16.msra.mxu0 %v972
  %993 = vmatprep.subr.bf16.mxu0 0
  %994 = vmatpush1.bf16.msra.mxu0 %v973
  %995 = vmatprep.subr.bf16.mxu0 0
  %996 = vmatpush1.bf16.msra.mxu0 %v974
  %997 = vmatprep.subr.bf16.mxu0 0
  %998 = vmatpush1.bf16.msra.mxu0 %v975
  %999 = vmatprep.subr.bf16.mxu0 0
  %1000 = vmatpush1.bf16.msra.mxu0 %v976
  %1001 = vmatprep.subr.bf16.mxu0 0
  %1002 = vmatpush1.bf16.msra.mxu0 0
  %1003 = vmatprep.subr.bf16.mxu0 0
  %1004 = vmatpush1.bf16.msra.mxu0 0
  %1005 = vmatprep.subr.bf16.mxu0 0
  %1006 = vmatpush1.bf16.msra.mxu0 0
  %1007 = vmatprep.subr.bf16.mxu0 0
  %1008 = vmatpush1.bf16.msra.mxu0 0
  %1009 = vmatprep.subr.bf16.mxu0 0
  %1010 = vmatpush1.bf16.msra.mxu0 0
  %1011 = vmatprep.subr.bf16.mxu0 0
  %1012 = vmatpush1.bf16.msra.mxu0 0
  %1013 = vmatprep.subr.bf16.mxu0 0
  %1014 = vmatpush1.bf16.msra.mxu0 0
  %1015 = vmatprep.subr.bf16.mxu0 0
  %1016 = vmatpush1.bf16.msra.mxu0 0
  %1017 = vmatprep.mubr.bf16.mxu0 0
  %1018 = vmatmul.mubr.bf16.gmra.mrb[0].mxu0 %v930
  %v1019 = vpop.f32.mrb[0].mxu0
  %v1020 = vadd.f32 %v935, %v1019
  %v1021 = vpop.f32.mrb[0].mxu0
  %v1022 = vpop.f32.mrb[0].mxu0
  %v1023 = vpop.f32.mrb[0].mxu0
  %1024 = vdwg.mxu0
  %v1025 = vmax.f32 %v1020, 0.0
  %1026 = vst [vmem:[%s8] sm:$0xff] %v1025
  %s1027 = scalar_lea.vmem %s0, 24
  %v1028 = vld [vmem:[%s1027] sm:$0xff]
  %v1029 = vld [vmem:[%s1027 + $0x8] sm:$0xff]
  %v1030 = vld [vmem:[%s1027 + $0x10] sm:$0xff]
  %1031 = vmatprep.subr.bf16.mxu0 %v251
  %1032 = vmatpush1.bf16.msra.mxu0 %v250
  %1033 = vmatprep.subr.bf16.mxu0 %v254
  %1034 = vmatpush1.bf16.msra.mxu0 %v253
  %1035 = vmatprep.subr.bf16.mxu0 %v257
  %1036 = vmatpush1.bf16.msra.mxu0 %v256
  %1037 = vmatprep.subr.bf16.mxu0 %v260
  %1038 = vmatpush1.bf16.msra.mxu0 %v259
  %1039 = vmatprep.subr.bf16.mxu0 %v263
  %1040 = vmatpush1.bf16.msra.mxu0 %v262
  %1041 = vmatprep.subr.bf16.mxu0 %v266
  %1042 = vmatpush1.bf16.msra.mxu0 %v265
  %1043 = vmatprep.subr.bf16.mxu0 %v269
  %1044 = vmatpush1.bf16.msra.mxu0 %v268
  %1045 = vmatprep.subr.bf16.mxu0 %v272
  %1046 = vmatpush1.bf16.msra.mxu0 %v271
  %1047 = vmatprep.subr.bf16.mxu0 0
  %1048 = vmatpush1.bf16.msra.mxu0 0
  %1049 = vmatprep.subr.bf16.mxu0 0
  %1050 = vmatpush1.bf16.msra.mxu0 0
  %1051 = vmatprep.subr.bf16.mxu0 0
  %1052 = vmatpush1.bf16.msra.mxu0 0
  %1053 = vmatprep.subr.bf16.mxu0 0
  %1054 = vmatpush1.bf16.msra.mxu0 0
  %1055 = vmatprep.subr.bf16.mxu0 0
  %1056 = vmatpush1.bf16.msra.mxu0 0
  %1057 = vmatprep.subr.bf16.mxu0 0
  %1058 = vmatpush1.bf16.msra.mxu0 0
  %1059 = vmatprep.subr.bf16.mxu0 0
  %1060 = vmatpush1.bf16.msra.mxu0 0
  %1061 = vmatprep.subr.bf16.mxu0 0
  %1062 = vmatpush1.bf16.msra.mxu0 0
  %1063 = vmatprep.mubr.bf16.mxu0 0
  %1064 = vmatmul.mubr.bf16.gmra.mrb[0].mxu0 %v400
  %v1065 = vpop.f32.mrb[0].mxu0
  %v1066 = vadd.f32 %v158, %v1065
  %v1067 = vpop.f32.mrb[0].mxu0
  %v1068 = vadd.f32 %v162, %v1067
  %v1069 = vpop.f32.mrb[0].mxu0
  %v1070 = vpop.f32.mrb[0].mxu0
  %1071 = vdwg.mxu0
  %1072 = vmatprep.subr.bf16.mxu0 0
  %1073 = vmatpush1.bf16.msra.mxu0 %v252
  %1074 = vmatprep.subr.bf16.mxu0 0
  %1075 = vmatpush1.bf16.msra.mxu0 %v255
  %1076 = vmatprep.subr.bf16.mxu0 0
  %1077 = vmatpush1.bf16.msra.mxu0 %v258
  %1078 = vmatprep.subr.bf16.mxu0 0
  %1079 = vmatpush1.bf16.msra.mxu0 %v261
  %1080 = vmatprep.subr.bf16.mxu0 0
  %1081 = vmatpush1.bf16.msra.mxu0 %v264
  %1082 = vmatprep.subr.bf16.mxu0 0
  %1083 = vmatpush1.bf16.msra.mxu0 %v267
  %1084 = vmatprep.subr.bf16.mxu0 0
  %1085 = vmatpush1.bf16.msra.mxu0 %v270
  %1086 = vmatprep.subr.bf16.mxu0 0
  %1087 = vmatpush1.bf16.msra.mxu0 %v273
  %1088 = vmatprep.subr.bf16.mxu0 0
  %1089 = vmatpush1.bf16.msra.mxu0 0
  %1090 = vmatprep.subr.bf16.mxu0 0
  %1091 = vmatpush1.bf16.msra.mxu0 0
  %1092 = vmatprep.subr.bf16.mxu0 0
  %1093 = vmatpush1.bf16.msra.mxu0 0
  %1094 = vmatprep.subr.bf16.mxu0 0
  %1095 = vmatpush1.bf16.msra.mxu0 0
  %1096 = vmatprep.subr.bf16.mxu0 0
  %1097 = vmatpush1.bf16.msra.mxu0 0
  %1098 = vmatprep.subr.bf16.mxu0 0
  %1099 = vmatpush1.bf16.msra.mxu0 0
  %1100 = vmatprep.subr.bf16.mxu0 0
  %1101 = vmatpush1.bf16.msra.mxu0 0
  %1102 = vmatprep.subr.bf16.mxu0 0
  %1103 = vmatpush1.bf16.msra.mxu0 0
  %1104 = vmatprep.mubr.bf16.mxu0 0
  %1105 = vmatmul.mubr.bf16.gmra.mrb[0].mxu0 %v400
  %v1106 = vpop.f32.mrb[0].mxu0
  %v1107 = vadd.f32 %v166, %v1106
  %v1108 = vpop.f32.mrb[0].mxu0
  %v1109 = vpop.f32.mrb[0].mxu0
  %v1110 = vpop.f32.mrb[0].mxu0
  %1111 = vdwg.mxu0
  %v1112 = vadd.f32 %v1028, %v1066
  %v1113 = vxor.u32 %v1112, 2147483648
  %v1114 = vmul.f32 %v1113, 1.442695
  %v1115 = vpow.pop %v1114
  %v1116 = vadd.f32 %v1115, 1.0
  %v1117 = vrcp.pop %v1116
  %v1118 = vmul.f32 1.0, %v1117
  %v1119 = vadd.f32 %v1029, %v1068
  %v1120 = vxor.u32 %v1119, 2147483648
  %v1121 = vmul.f32 %v1120, 1.442695
  %v1122 = vpow.pop %v1121
  %v1123 = vadd.f32 %v1122, 1.0
  %v1124 = vrcp.pop %v1123
  %v1125 = vmul.f32 1.0, %v1124
  %v1126 = vmul.f32 %v1118, %v1107
  %v1127 = vadd.f32 %v1030, %v1126
  %v1128 = vtanh.pop %v1127
  %v1129 = vsub.f32 1.0, %v1125
  %v1130 = vmul.f32 %v1129, %v1128
  %v1131 = vmul.f32 %v1125, %v399
  %v1132 = vadd.f32 %v1130, %v1131
  %v1133 = vpack.c.bf16 %v1132, %v1132
  %1134 = vmatprep.subr.bf16.mxu0 %v499
  %1135 = vmatpush1.bf16.msra.mxu0 %v498
  %1136 = vmatprep.subr.bf16.mxu0 %v503
  %1137 = vmatpush1.bf16.msra.mxu0 %v502
  %1138 = vmatprep.subr.bf16.mxu0 %v507
  %1139 = vmatpush1.bf16.msra.mxu0 %v506
  %1140 = vmatprep.subr.bf16.mxu0 %v511
  %1141 = vmatpush1.bf16.msra.mxu0 %v510
  %1142 = vmatprep.subr.bf16.mxu0 %v515
  %1143 = vmatpush1.bf16.msra.mxu0 %v514
  %1144 = vmatprep.subr.bf16.mxu0 %v519
  %1145 = vmatpush1.bf16.msra.mxu0 %v518
  %1146 = vmatprep.subr.bf16.mxu0 %v523
  %1147 = vmatpush1.bf16.msra.mxu0 %v522
  %1148 = vmatprep.subr.bf16.mxu0 %v527
  %1149 = vmatpush1.bf16.msra.mxu0 %v526
  %1150 = vmatprep.subr.bf16.mxu0 0
  %1151 = vmatpush1.bf16.msra.mxu0 0
  %1152 = vmatprep.subr.bf16.mxu0 0
  %1153 = vmatpush1.bf16.msra.mxu0 0
  %1154 = vmatprep.subr.bf16.mxu0 0
  %1155 = vmatpush1.bf16.msra.mxu0 0
  %1156 = vmatprep.subr.bf16.mxu0 0
  %1157 = vmatpush1.bf16.msra.mxu0 0
  %1158 = vmatprep.subr.bf16.mxu0 0
  %1159 = vmatpush1.bf16.msra.mxu0 0
  %1160 = vmatprep.subr.bf16.mxu0 0
  %1161 = vmatpush1.bf16.msra.mxu0 0
  %1162 = vmatprep.subr.bf16.mxu0 0
  %1163 = vmatpush1.bf16.msra.mxu0 0
  %1164 = vmatprep.subr.bf16.mxu0 0
  %1165 = vmatpush1.bf16.msra.mxu0 0
  %1166 = vmatprep.mubr.bf16.mxu0 0
  %1167 = vmatmul.mubr.bf16.gmra.mrb[0].mxu0 %v930
  %v1168 = vpop.f32.mrb[0].mxu0
  %v1169 = vadd.f32 0.0, %v1168
  %v1170 = vpop.f32.mrb[0].mxu0
  %v1171 = vadd.f32 0.0, %v1170
  %v1172 = vpop.f32.mrb[0].mxu0
  %v1173 = vpop.f32.mrb[0].mxu0
  %1174 = vdwg.mxu0
  %1175 = vmatprep.subr.bf16.mxu0 %v501
  %1176 = vmatpush1.bf16.msra.mxu0 %v500
  %1177 = vmatprep.subr.bf16.mxu0 %v505
  %1178 = vmatpush1.bf16.msra.mxu0 %v504
  %1179 = vmatprep.subr.bf16.mxu0 %v509
  %1180 = vmatpush1.bf16.msra.mxu0 %v508
  %1181 = vmatprep.subr.bf16.mxu0 %v513
  %1182 = vmatpush1.bf16.msra.mxu0 %v512
  %1183 = vmatprep.subr.bf16.mxu0 %v517
  %1184 = vmatpush1.bf16.msra.mxu0 %v516
  %1185 = vmatprep.subr.bf16.mxu0 %v521
  %1186 = vmatpush1.bf16.msra.mxu0 %v520
  %1187 = vmatprep.subr.bf16.mxu0 %v525
  %1188 = vmatpush1.bf16.msra.mxu0 %v524
  %1189 = vmatprep.subr.bf16.mxu0 %v529
  %1190 = vmatpush1.bf16.msra.mxu0 %v528
  %1191 = vmatprep.subr.bf16.mxu0 0
  %1192 = vmatpush1.bf16.msra.mxu0 0
  %1193 = vmatprep.subr.bf16.mxu0 0
  %1194 = vmatpush1.bf16.msra.mxu0 0
  %1195 = vmatprep.subr.bf16.mxu0 0
  %1196 = vmatpush1.bf16.msra.mxu0 0
  %1197 = vmatprep.subr.bf16.mxu0 0
  %1198 = vmatpush1.bf16.msra.mxu0 0
  %1199 = vmatprep.subr.bf16.mxu0 0
  %1200 = vmatpush1.bf16.msra.mxu0 0
  %1201 = vmatprep.subr.bf16.mxu0 0
  %1202 = vmatpush1.bf16.msra.mxu0 0
  %1203 = vmatprep.subr.bf16.mxu0 0
  %1204 = vmatpush1.bf16.msra.mxu0 0
  %1205 = vmatprep.subr.bf16.mxu0 0
  %1206 = vmatpush1.bf16.msra.mxu0 0
  %1207 = vmatprep.mubr.bf16.mxu0 0
  %1208 = vmatmul.mubr.bf16.gmra.mrb[0].mxu0 %v930
  %v1209 = vpop.f32.mrb[0].mxu0
  %v1210 = vadd.f32 0.0, %v1209
  %v1211 = vpop.f32.mrb[0].mxu0
  %v1212 = vadd.f32 0.0, %v1211
  %v1213 = vpop.f32.mrb[0].mxu0
  %v1214 = vpop.f32.mrb[0].mxu0
  %1215 = vdwg.mxu0
  %1216 = vmatprep.subr.bf16.mxu0 %v741
  %1217 = vmatpush1.bf16.msra.mxu0 %v740
  %1218 = vmatprep.subr.bf16.mxu0 %v745
  %1219 = vmatpush1.bf16.msra.mxu0 %v744
  %1220 = vmatprep.subr.bf16.mxu0 %v749
  %1221 = vmatpush1.bf16.msra.mxu0 %v748
  %1222 = vmatprep.subr.bf16.mxu0 %v753
  %1223 = vmatpush1.bf16.msra.mxu0 %v752
  %1224 = vmatprep.subr.bf16.mxu0 %v757
  %1225 = vmatpush1.bf16.msra.mxu0 %v756
  %1226 = vmatprep.subr.bf16.mxu0 %v761
  %1227 = vmatpush1.bf16.msra.mxu0 %v760
  %1228 = vmatprep.subr.bf16.mxu0 %v765
  %1229 = vmatpush1.bf16.msra.mxu0 %v764
  %1230 = vmatprep.subr.bf16.mxu0 %v769
  %1231 = vmatpush1.bf16.msra.mxu0 %v768
  %1232 = vmatprep.subr.bf16.mxu0 0
  %1233 = vmatpush1.bf16.msra.mxu0 0
  %1234 = vmatprep.subr.bf16.mxu0 0
  %1235 = vmatpush1.bf16.msra.mxu0 0
  %1236 = vmatprep.subr.bf16.mxu0 0
  %1237 = vmatpush1.bf16.msra.mxu0 0
  %1238 = vmatprep.subr.bf16.mxu0 0
  %1239 = vmatpush1.bf16.msra.mxu0 0
  %1240 = vmatprep.subr.bf16.mxu0 0
  %1241 = vmatpush1.bf16.msra.mxu0 0
  %1242 = vmatprep.subr.bf16.mxu0 0
  %1243 = vmatpush1.bf16.msra.mxu0 0
  %1244 = vmatprep.subr.bf16.mxu0 0
  %1245 = vmatpush1.bf16.msra.mxu0 0
  %1246 = vmatprep.subr.bf16.mxu0 0
  %1247 = vmatpush1.bf16.msra.mxu0 0
  %1248 = vmatprep.mubr.bf16.mxu0 0
  %1249 = vmatmul.mubr.bf16.gmra.mrb[0].mxu0 %v1133
  %v1250 = vpop.f32.mrb[0].mxu0
  %v1251 = vadd.f32 %v1169, %v1250
  %v1252 = vpop.f32.mrb[0].mxu0
  %v1253 = vadd.f32 %v1171, %v1252
  %v1254 = vpop.f32.mrb[0].mxu0
  %v1255 = vpop.f32.mrb[0].mxu0
  %1256 = vdwg.mxu0
  %1257 = vmatprep.subr.bf16.mxu0 %v743
  %1258 = vmatpush1.bf16.msra.mxu0 %v742
  %1259 = vmatprep.subr.bf16.mxu0 %v747
  %1260 = vmatpush1.bf16.msra.mxu0 %v746
  %1261 = vmatprep.subr.bf16.mxu0 %v751
  %1262 = vmatpush1.bf16.msra.mxu0 %v750
  %1263 = vmatprep.subr.bf16.mxu0 %v755
  %1264 = vmatpush1.bf16.msra.mxu0 %v754
  %1265 = vmatprep.subr.bf16.mxu0 %v759
  %1266 = vmatpush1.bf16.msra.mxu0 %v758
  %1267 = vmatprep.subr.bf16.mxu0 %v763
  %1268 = vmatpush1.bf16.msra.mxu0 %v762
  %1269 = vmatprep.subr.bf16.mxu0 %v767
  %1270 = vmatpush1.bf16.msra.mxu0 %v766
  %1271 = vmatprep.subr.bf16.mxu0 %v771
  %1272 = vmatpush1.bf16.msra.mxu0 %v770
  %1273 = vmatprep.subr.bf16.mxu0 0
  %1274 = vmatpush1.bf16.msra.mxu0 0
  %1275 = vmatprep.subr.bf16.mxu0 0
  %1276 = vmatpush1.bf16.msra.mxu0 0
  %1277 = vmatprep.subr.bf16.mxu0 0
  %1278 = vmatpush1.bf16.msra.mxu0 0
  %1279 = vmatprep.subr.bf16.mxu0 0
  %1280 = vmatpush1.bf16.msra.mxu0 0
  %1281 = vmatprep.subr.bf16.mxu0 0
  %1282 = vmatpush1.bf16.msra.mxu0 0
  %1283 = vmatprep.subr.bf16.mxu0 0
  %1284 = vmatpush1.bf16.msra.mxu0 0
  %1285 = vmatprep.subr.bf16.mxu0 0
  %1286 = vmatpush1.bf16.msra.mxu0 0
  %1287 = vmatprep.subr.bf16.mxu0 0
  %1288 = vmatpush1.bf16.msra.mxu0 0
  %1289 = vmatprep.mubr.bf16.mxu0 0
  %1290 = vmatmul.mubr.bf16.gmra.mrb[0].mxu0 %v1133
  %v1291 = vpop.f32.mrb[0].mxu0
  %v1292 = vadd.f32 %v1210, %v1291
  %v1293 = vpop.f32.mrb[0].mxu0
  %v1294 = vadd.f32 %v1212, %v1293
  %v1295 = vpop.f32.mrb[0].mxu0
  %v1296 = vpop.f32.mrb[0].mxu0
  %1297 = vdwg.mxu0
  %v1298 = vadd.f32 %v1251, %v890
  %v1299 = vadd.f32 %v1253, %v894
  %v1300 = vadd.f32 %v1292, %v898
  %v1301 = vadd.f32 %v1294, %v902
  %v1302 = vxor.u32 %v1298, 2147483648
  %v1303 = vmul.f32 %v1302, 1.442695
  %v1304 = vpow.pop %v1303
  %v1305 = vadd.f32 %v1304, 1.0
  %v1306 = vrcp.pop %v1305
  %v1307 = vmul.f32 1.0, %v1306
  %v1308 = vxor.u32 %v1299, 2147483648
  %v1309 = vmul.f32 %v1308, 1.442695
  %v1310 = vpow.pop %v1309
  %v1311 = vadd.f32 %v1310, 1.0
  %v1312 = vrcp.pop %v1311
  %v1313 = vmul.f32 1.0, %v1312
  %v1314 = vmul.f32 %v1307, %v1301
  %v1315 = vadd.f32 %v1300, %v1314
  %v1316 = vtanh.pop %v1315
  %v1317 = vsub.f32 1.0, %v1313
  %v1318 = vmul.f32 %v1317, %v1316
  %v1319 = vmul.f32 %v1313, %v929
  %v1320 = vadd.f32 %v1318, %v1319
  %v1321 = vpack.c.bf16 %v1320, %v1320
  %1322 = vmatprep.subr.bf16.mxu0 0
  %1323 = vmatpush1.bf16.msra.mxu0 %v969
  %1324 = vmatprep.subr.bf16.mxu0 0
  %1325 = vmatpush1.bf16.msra.mxu0 %v970
  %1326 = vmatprep.subr.bf16.mxu0 0
  %1327 = vmatpush1.bf16.msra.mxu0 %v971
  %1328 = vmatprep.subr.bf16.mxu0 0
  %1329 = vmatpush1.bf16.msra.mxu0 %v972
  %1330 = vmatprep.subr.bf16.mxu0 0
  %1331 = vmatpush1.bf16.msra.mxu0 %v973
  %1332 = vmatprep.subr.bf16.mxu0 0
  %1333 = vmatpush1.bf16.msra.mxu0 %v974
  %1334 = vmatprep.subr.bf16.mxu0 0
  %1335 = vmatpush1.bf16.msra.mxu0 %v975
  %1336 = vmatprep.subr.bf16.mxu0 0
  %1337 = vmatpush1.bf16.msra.mxu0 %v976
  %1338 = vmatprep.subr.bf16.mxu0 0
  %1339 = vmatpush1.bf16.msra.mxu0 0
  %1340 = vmatprep.subr.bf16.mxu0 0
  %1341 = vmatpush1.bf16.msra.mxu0 0
  %1342 = vmatprep.subr.bf16.mxu0 0
  %1343 = vmatpush1.bf16.msra.mxu0 0
  %1344 = vmatprep.subr.bf16.mxu0 0
  %1345 = vmatpush1.bf16.msra.mxu0 0
  %1346 = vmatprep.subr.bf16.mxu0 0
  %1347 = vmatpush1.bf16.msra.mxu0 0
  %1348 = vmatprep.subr.bf16.mxu0 0
  %1349 = vmatpush1.bf16.msra.mxu0 0
  %1350 = vmatprep.subr.bf16.mxu0 0
  %1351 = vmatpush1.bf16.msra.mxu0 0
  %1352 = vmatprep.subr.bf16.mxu0 0
  %1353 = vmatpush1.bf16.msra.mxu0 0
  %1354 = vmatprep.mubr.bf16.mxu0 0
  %1355 = vmatmul.mubr.bf16.gmra.mrb[0].mxu0 %v1321
  %v1356 = vpop.f32.mrb[0].mxu0
  %v1357 = vadd.f32 %v935, %v1356
  %v1358 = vpop.f32.mrb[0].mxu0
  %v1359 = vpop.f32.mrb[0].mxu0
  %v1360 = vpop.f32.mrb[0].mxu0
  %1361 = vdwg.mxu0
  %v1362 = vmax.f32 %v1357, 0.0
  %s1363 = scalar_lea.vmem %s8, 8
  %1364 = vst [vmem:[%s1363] sm:$0xff] %v1362
  %s1365 = scalar_lea.vmem %s0, 48
  %v1366 = vld [vmem:[%s1365] sm:$0xff]
  %v1367 = vld [vmem:[%s1365 + $0x8] sm:$0xff]
  %v1368 = vld [vmem:[%s1365 + $0x10] sm:$0xff]
  %1369 = vmatprep.subr.bf16.mxu0 %v251
  %1370 = vmatpush1.bf16.msra.mxu0 %v250
  %1371 = vmatprep.subr.bf16.mxu0 %v254
  %1372 = vmatpush1.bf16.msra.mxu0 %v253
  %1373 = vmatprep.subr.bf16.mxu0 %v257
  %1374 = vmatpush1.bf16.msra.mxu0 %v256
  %1375 = vmatprep.subr.bf16.mxu0 %v260
  %1376 = vmatpush1.bf16.msra.mxu0 %v259
  %1377 = vmatprep.subr.bf16.mxu0 %v263
  %1378 = vmatpush1.bf16.msra.mxu0 %v262
  %1379 = vmatprep.subr.bf16.mxu0 %v266
  %1380 = vmatpush1.bf16.msra.mxu0 %v265
  %1381 = vmatprep.subr.bf16.mxu0 %v269
  %1382 = vmatpush1.bf16.msra.mxu0 %v268
  %1383 = vmatprep.subr.bf16.mxu0 %v272
  %1384 = vmatpush1.bf16.msra.mxu0 %v271
  %1385 = vmatprep.subr.bf16.mxu0 0
  %1386 = vmatpush1.bf16.msra.mxu0 0
  %1387 = vmatprep.subr.bf16.mxu0 0
  %1388 = vmatpush1.bf16.msra.mxu0 0
  %1389 = vmatprep.subr.bf16.mxu0 0
  %1390 = vmatpush1.bf16.msra.mxu0 0
  %1391 = vmatprep.subr.bf16.mxu0 0
  %1392 = vmatpush1.bf16.msra.mxu0 0
  %1393 = vmatprep.subr.bf16.mxu0 0
  %1394 = vmatpush1.bf16.msra.mxu0 0
  %1395 = vmatprep.subr.bf16.mxu0 0
  %1396 = vmatpush1.bf16.msra.mxu0 0
  %1397 = vmatprep.subr.bf16.mxu0 0
  %1398 = vmatpush1.bf16.msra.mxu0 0
  %1399 = vmatprep.subr.bf16.mxu0 0
  %1400 = vmatpush1.bf16.msra.mxu0 0
  %1401 = vmatprep.mubr.bf16.mxu0 0
  %1402 = vmatmul.mubr.bf16.gmra.mrb[0].mxu0 %v1133
  %v1403 = vpop.f32.mrb[0].mxu0
  %v1404 = vadd.f32 %v158, %v1403
  %v1405 = vpop.f32.mrb[0].mxu0
  %v1406 = vadd.f32 %v162, %v1405
  %v1407 = vpop.f32.mrb[0].mxu0
  %v1408 = vpop.f32.mrb[0].mxu0
  %1409 = vdwg.mxu0
  %1410 = vmatprep.subr.bf16.mxu0 0
  %1411 = vmatpush1.bf16.msra.mxu0 %v252
  %1412 = vmatprep.subr.bf16.mxu0 0
  %1413 = vmatpush1.bf16.msra.mxu0 %v255
  %1414 = vmatprep.subr.bf16.mxu0 0
  %1415 = vmatpush1.bf16.msra.mxu0 %v258
  %1416 = vmatprep.subr.bf16.mxu0 0
  %1417 = vmatpush1.bf16.msra.mxu0 %v261
  %1418 = vmatprep.subr.bf16.mxu0 0
  %1419 = vmatpush1.bf16.msra.mxu0 %v264
  %1420 = vmatprep.subr.bf16.mxu0 0
  %1421 = vmatpush1.bf16.msra.mxu0 %v267
  %1422 = vmatprep.subr.bf16.mxu0 0
  %1423 = vmatpush1.bf16.msra.mxu0 %v270
  %1424 = vmatprep.subr.bf16.mxu0 0
  %1425 = vmatpush1.bf16.msra.mxu0 %v273
  %1426 = vmatprep.subr.bf16.mxu0 0
  %1427 = vmatpush1.bf16.msra.mxu0 0
  %1428 = vmatprep.subr.bf16.mxu0 0
  %1429 = vmatpush1.bf16.msra.mxu0 0
  %1430 = vmatprep.subr.bf16.mxu0 0
  %1431 = vmatpush1.bf16.msra.mxu0 0
  %1432 = vmatprep.subr.bf16.mxu0 0
  %1433 = vmatpush1.bf16.msra.mxu0 0
  %1434 = vmatprep.subr.bf16.mxu0 0
  %1435 = vmatpush1.bf16.msra.mxu0 0
  %1436 = vmatprep.subr.bf16.mxu0 0
  %1437 = vmatpush1.bf16.msra.mxu0 0
  %1438 = vmatprep.subr.bf16.mxu0 0
  %1439 = vmatpush1.bf16.msra.mxu0 0
  %1440 = vmatprep.subr.bf16.mxu0 0
  %1441 = vmatpush1.bf16.msra.mxu0 0
  %1442 = vmatprep.mubr.bf16.mxu0 0
  %1443 = vmatmul.mubr.bf16.gmra.mrb[0].mxu0 %v1133
  %v1444 = vpop.f32.mrb[0].mxu0
  %v1445 = vadd.f32 %v166, %v1444
  %v1446 = vpop.f32.mrb[0].mxu0
  %v1447 = vpop.f32.mrb[0].mxu0
  %v1448 = vpop.f32.mrb[0].mxu0
  %1449 = vdwg.mxu0
  %v1450 = vadd.f32 %v1366, %v1404
  %v1451 = vxor.u32 %v1450, 2147483648
  %v1452 = vmul.f32 %v1451, 1.442695
  %v1453 = vpow.pop %v1452
  %v1454 = vadd.f32 %v1453, 1.0
  %v1455 = vrcp.pop %v1454
  %v1456 = vmul.f32 1.0, %v1455
  %v1457 = vadd.f32 %v1367, %v1406
  %v1458 = vxor.u32 %v1457, 2147483648
  %v1459 = vmul.f32 %v1458, 1.442695
  %v1460 = vpow.pop %v1459
  %v1461 = vadd.f32 %v1460, 1.0
  %v1462 = vrcp.pop %v1461
  %v1463 = vmul.f32 1.0, %v1462
  %v1464 = vmul.f32 %v1456, %v1445
  %v1465 = vadd.f32 %v1368, %v1464
  %v1466 = vtanh.pop %v1465
  %v1467 = vsub.f32 1.0, %v1463
  %v1468 = vmul.f32 %v1467, %v1466
  %v1469 = vmul.f32 %v1463, %v1132
  %v1470 = vadd.f32 %v1468, %v1469
  %v1471 = vpack.c.bf16 %v1470, %v1470
  %1472 = vmatprep.subr.bf16.mxu0 %v499
  %1473 = vmatpush1.bf16.msra.mxu0 %v498
  %1474 = vmatprep.subr.bf16.mxu0 %v503
  %1475 = vmatpush1.bf16.msra.mxu0 %v502
  %1476 = vmatprep.subr.bf16.mxu0 %v507
  %1477 = vmatpush1.bf16.msra.mxu0 %v506
  %1478 = vmatprep.subr.bf16.mxu0 %v511
  %1479 = vmatpush1.bf16.msra.mxu0 %v510
  %1480 = vmatprep.subr.bf16.mxu0 %v515
  %1481 = vmatpush1.bf16.msra.mxu0 %v514
  %1482 = vmatprep.subr.bf16.mxu0 %v519
  %1483 = vmatpush1.bf16.msra.mxu0 %v518
  %1484 = vmatprep.subr.bf16.mxu0 %v523
  %1485 = vmatpush1.bf16.msra.mxu0 %v522
  %1486 = vmatprep.subr.bf16.mxu0 %v527
  %1487 = vmatpush1.bf16.msra.mxu0 %v526
  %1488 = vmatprep.subr.bf16.mxu0 0
  %1489 = vmatpush1.bf16.msra.mxu0 0
  %1490 = vmatprep.subr.bf16.mxu0 0
  %1491 = vmatpush1.bf16.msra.mxu0 0
  %1492 = vmatprep.subr.bf16.mxu0 0
  %1493 = vmatpush1.bf16.msra.mxu0 0
  %1494 = vmatprep.subr.bf16.mxu0 0
  %1495 = vmatpush1.bf16.msra.mxu0 0
  %1496 = vmatprep.subr.bf16.mxu0 0
  %1497 = vmatpush1.bf16.msra.mxu0 0
  %1498 = vmatprep.subr.bf16.mxu0 0
  %1499 = vmatpush1.bf16.msra.mxu0 0
  %1500 = vmatprep.subr.bf16.mxu0 0
  %1501 = vmatpush1.bf16.msra.mxu0 0
  %1502 = vmatprep.subr.bf16.mxu0 0
  %1503 = vmatpush1.bf16.msra.mxu0 0
  %1504 = vmatprep.mubr.bf16.mxu0 0
  %1505 = vmatmul.mubr.bf16.gmra.mrb[0].mxu0 %v1321
  %v1506 = vpop.f32.mrb[0].mxu0
  %v1507 = vadd.f32 0.0, %v1506
  %v1508 = vpop.f32.mrb[0].mxu0
  %v1509 = vadd.f32 0.0, %v1508
  %v1510 = vpop.f32.mrb[0].mxu0
  %v1511 = vpop.f32.mrb[0].mxu0
  %1512 = vdwg.mxu0
  %1513 = vmatprep.subr.bf16.mxu0 %v501
  %1514 = vmatpush1.bf16.msra.mxu0 %v500
  %1515 = vmatprep.subr.bf16.mxu0 %v505
  %1516 = vmatpush1.bf16.msra.mxu0 %v504
  %1517 = vmatprep.subr.bf16.mxu0 %v509
  %1518 = vmatpush1.bf16.msra.mxu0 %v508
  %1519 = vmatprep.subr.bf16.mxu0 %v513
  %1520 = vmatpush1.bf16.msra.mxu0 %v512
  %1521 = vmatprep.subr.bf16.mxu0 %v517
  %1522 = vmatpush1.bf16.msra.mxu0 %v516
  %1523 = vmatprep.subr.bf16.mxu0 %v521
  %1524 = vmatpush1.bf16.msra.mxu0 %v520
  %1525 = vmatprep.subr.bf16.mxu0 %v525
  %1526 = vmatpush1.bf16.msra.mxu0 %v524
  %1527 = vmatprep.subr.bf16.mxu0 %v529
  %1528 = vmatpush1.bf16.msra.mxu0 %v528
  %1529 = vmatprep.subr.bf16.mxu0 0
  %1530 = vmatpush1.bf16.msra.mxu0 0
  %1531 = vmatprep.subr.bf16.mxu0 0
  %1532 = vmatpush1.bf16.msra.mxu0 0
  %1533 = vmatprep.subr.bf16.mxu0 0
  %1534 = vmatpush1.bf16.msra.mxu0 0
  %1535 = vmatprep.subr.bf16.mxu0 0
  %1536 = vmatpush1.bf16.msra.mxu0 0
  %1537 = vmatprep.subr.bf16.mxu0 0
  %1538 = vmatpush1.bf16.msra.mxu0 0
  %1539 = vmatprep.subr.bf16.mxu0 0
  %1540 = vmatpush1.bf16.msra.mxu0 0
  %1541 = vmatprep.subr.bf16.mxu0 0
  %1542 = vmatpush1.bf16.msra.mxu0 0
  %1543 = vmatprep.subr.bf16.mxu0 0
  %1544 = vmatpush1.bf16.msra.mxu0 0
  %1545 = vmatprep.mubr.bf16.mxu0 0
  %1546 = vmatmul.mubr.bf16.gmra.mrb[0].mxu0 %v1321
  %v1547 = vpop.f32.mrb[0].mxu0
  %v1548 = vadd.f32 0.0, %v1547
  %v1549 = vpop.f32.mrb[0].mxu0
  %v1550 = vadd.f32 0.0, %v1549
  %v1551 = vpop.f32.mrb[0].mxu0
  %v1552 = vpop.f32.mrb[0].mxu0
  %1553 = vdwg.mxu0
  %1554 = vmatprep.subr.bf16.mxu0 %v741
  %1555 = vmatpush1.bf16.msra.mxu0 %v740
  %1556 = vmatprep.subr.bf16.mxu0 %v745
  %1557 = vmatpush1.bf16.msra.mxu0 %v744
  %1558 = vmatprep.subr.bf16.mxu0 %v749
  %1559 = vmatpush1.bf16.msra.mxu0 %v748
  %1560 = vmatprep.subr.bf16.mxu0 %v753
  %1561 = vmatpush1.bf16.msra.mxu0 %v752
  %1562 = vmatprep.subr.bf16.mxu0 %v757
  %1563 = vmatpush1.bf16.msra.mxu0 %v756
  %1564 = vmatprep.subr.bf16.mxu0 %v761
  %1565 = vmatpush1.bf16.msra.mxu0 %v760
  %1566 = vmatprep.subr.bf16.mxu0 %v765
  %1567 = vmatpush1.bf16.msra.mxu0 %v764
  %1568 = vmatprep.subr.bf16.mxu0 %v769
  %1569 = vmatpush1.bf16.msra.mxu0 %v768
  %1570 = vmatprep.subr.bf16.mxu0 0
  %1571 = vmatpush1.bf16.msra.mxu0 0
  %1572 = vmatprep.subr.bf16.mxu0 0
  %1573 = vmatpush1.bf16.msra.mxu0 0
  %1574 = vmatprep.subr.bf16.mxu0 0
  %1575 = vmatpush1.bf16.msra.mxu0 0
  %1576 = vmatprep.subr.bf16.mxu0 0
  %1577 = vmatpush1.bf16.msra.mxu0 0
  %1578 = vmatprep.subr.bf16.mxu0 0
  %1579 = vmatpush1.bf16.msra.mxu0 0
  %1580 = vmatprep.subr.bf16.mxu0 0
  %1581 = vmatpush1.bf16.msra.mxu0 0
  %1582 = vmatprep.subr.bf16.mxu0 0
  %1583 = vmatpush1.bf16.msra.mxu0 0
  %1584 = vmatprep.subr.bf16.mxu0 0
  %1585 = vmatpush1.bf16.msra.mxu0 0
  %1586 = vmatprep.mubr.bf16.mxu0 0
  %1587 = vmatmul.mubr.bf16.gmra.mrb[0].mxu0 %v1471
  %v1588 = vpop.f32.mrb[0].mxu0
  %v1589 = vadd.f32 %v1507, %v1588
  %v1590 = vpop.f32.mrb[0].mxu0
  %v1591 = vadd.f32 %v1509, %v1590
  %v1592 = vpop.f32.mrb[0].mxu0
  %v1593 = vpop.f32.mrb[0].mxu0
  %1594 = vdwg.mxu0
  %1595 = vmatprep.subr.bf16.mxu0 %v743
  %1596 = vmatpush1.bf16.msra.mxu0 %v742
  %1597 = vmatprep.subr.bf16.mxu0 %v747
  %1598 = vmatpush1.bf16.msra.mxu0 %v746
  %1599 = vmatprep.subr.bf16.mxu0 %v751
  %1600 = vmatpush1.bf16.msra.mxu0 %v750
  %1601 = vmatprep.subr.bf16.mxu0 %v755
  %1602 = vmatpush1.bf16.msra.mxu0 %v754
  %1603 = vmatprep.subr.bf16.mxu0 %v759
  %1604 = vmatpush1.bf16.msra.mxu0 %v758
  %1605 = vmatprep.subr.bf16.mxu0 %v763
  %1606 = vmatpush1.bf16.msra.mxu0 %v762
  %1607 = vmatprep.subr.bf16.mxu0 %v767
  %1608 = vmatpush1.bf16.msra.mxu0 %v766
  %1609 = vmatprep.subr.bf16.mxu0 %v771
  %1610 = vmatpush1.bf16.msra.mxu0 %v770
  %1611 = vmatprep.subr.bf16.mxu0 0
  %1612 = vmatpush1.bf16.msra.mxu0 0
  %1613 = vmatprep.subr.bf16.mxu0 0
  %1614 = vmatpush1.bf16.msra.mxu0 0
  %1615 = vmatprep.subr.bf16.mxu0 0
  %1616 = vmatpush1.bf16.msra.mxu0 0
  %1617 = vmatprep.subr.bf16.mxu0 0
  %1618 = vmatpush1.bf16.msra.mxu0 0
  %1619 = vmatprep.subr.bf16.mxu0 0
  %1620 = vmatpush1.bf16.msra.mxu0 0
  %1621 = vmatprep.subr.bf16.mxu0 0
  %1622 = vmatpush1.bf16.msra.mxu0 0
  %1623 = vmatprep.subr.bf16.mxu0 0
  %1624 = vmatpush1.bf16.msra.mxu0 0
  %1625 = vmatprep.subr.bf16.mxu0 0
  %1626 = vmatpush1.bf16.msra.mxu0 0
  %1627 = vmatprep.mubr.bf16.mxu0 0
  %1628 = vmatmul.mubr.bf16.gmra.mrb[0].mxu0 %v1471
  %v1629 = vpop.f32.mrb[0].mxu0
  %v1630 = vadd.f32 %v1548, %v1629
  %v1631 = vpop.f32.mrb[0].mxu0
  %v1632 = vadd.f32 %v1550, %v1631
  %v1633 = vpop.f32.mrb[0].mxu0
  %v1634 = vpop.f32.mrb[0].mxu0
  %1635 = vdwg.mxu0
  %v1636 = vadd.f32 %v1589, %v890
  %v1637 = vadd.f32 %v1591, %v894
  %v1638 = vadd.f32 %v1630, %v898
  %v1639 = vadd.f32 %v1632, %v902
  %v1640 = vxor.u32 %v1636, 2147483648
  %v1641 = vmul.f32 %v1640, 1.442695
  %v1642 = vpow.pop %v1641
  %v1643 = vadd.f32 %v1642, 1.0
  %v1644 = vrcp.pop %v1643
  %v1645 = vmul.f32 1.0, %v1644
  %v1646 = vxor.u32 %v1637, 2147483648
  %v1647 = vmul.f32 %v1646, 1.442695
  %v1648 = vpow.pop %v1647
  %v1649 = vadd.f32 %v1648, 1.0
  %v1650 = vrcp.pop %v1649
  %v1651 = vmul.f32 1.0, %v1650
  %v1652 = vmul.f32 %v1645, %v1639
  %v1653 = vadd.f32 %v1638, %v1652
  %v1654 = vtanh.pop %v1653
  %v1655 = vsub.f32 1.0, %v1651
  %v1656 = vmul.f32 %v1655, %v1654
  %v1657 = vmul.f32 %v1651, %v1320
  %v1658 = vadd.f32 %v1656, %v1657
  %v1659 = vpack.c.bf16 %v1658, %v1658
  %1660 = vmatprep.subr.bf16.mxu0 0
  %1661 = vmatpush1.bf16.msra.mxu0 %v969
  %1662 = vmatprep.subr.bf16.mxu0 0
  %1663 = vmatpush1.bf16.msra.mxu0 %v970
  %1664 = vmatprep.subr.bf16.mxu0 0
  %1665 = vmatpush1.bf16.msra.mxu0 %v971
  %1666 = vmatprep.subr.bf16.mxu0 0
  %1667 = vmatpush1.bf16.msra.mxu0 %v972
  %1668 = vmatprep.subr.bf16.mxu0 0
  %1669 = vmatpush1.bf16.msra.mxu0 %v973
  %1670 = vmatprep.subr.bf16.mxu0 0
  %1671 = vmatpush1.bf16.msra.mxu0 %v974
  %1672 = vmatprep.subr.bf16.mxu0 0
  %1673 = vmatpush1.bf16.msra.mxu0 %v975
  %1674 = vmatprep.subr.bf16.mxu0 0
  %1675 = vmatpush1.bf16.msra.mxu0 %v976
  %1676 = vmatprep.subr.bf16.mxu0 0
  %1677 = vmatpush1.bf16.msra.mxu0 0
  %1678 = vmatprep.subr.bf16.mxu0 0
  %1679 = vmatpush1.bf16.msra.mxu0 0
  %1680 = vmatprep.subr.bf16.mxu0 0
  %1681 = vmatpush1.bf16.msra.mxu0 0
  %1682 = vmatprep.subr.bf16.mxu0 0
  %1683 = vmatpush1.bf16.msra.mxu0 0
  %1684 = vmatprep.subr.bf16.mxu0 0
  %1685 = vmatpush1.bf16.msra.mxu0 0
  %1686 = vmatprep.subr.bf16.mxu0 0
  %1687 = vmatpush1.bf16.msra.mxu0 0
  %1688 = vmatprep.subr.bf16.mxu0 0
  %1689 = vmatpush1.bf16.msra.mxu0 0
  %1690 = vmatprep.subr.bf16.mxu0 0
  %1691 = vmatpush1.bf16.msra.mxu0 0
  %1692 = vmatprep.mubr.bf16.mxu0 0
  %1693 = vmatmul.mubr.bf16.gmra.mrb[0].mxu0 %v1659
  %v1694 = vpop.f32.mrb[0].mxu0
  %v1695 = vadd.f32 %v935, %v1694
  %v1696 = vpop.f32.mrb[0].mxu0
  %v1697 = vpop.f32.mrb[0].mxu0
  %v1698 = vpop.f32.mrb[0].mxu0
  %1699 = vdwg.mxu0
  %v1700 = vmax.f32 %v1695, 0.0
  %s1701 = scalar_lea.vmem %s8, 16
  %1702 = vst [vmem:[%s1701] sm:$0xff] %v1700
  %s1703 = scalar_lea.vmem %s0, 72
  %v1704 = vld [vmem:[%s1703] sm:$0xff]
  %v1705 = vld [vmem:[%s1703 + $0x8] sm:$0xff]
  %v1706 = vld [vmem:[%s1703 + $0x10] sm:$0xff]
  %1707 = vmatprep.subr.bf16.mxu0 %v251
  %1708 = vmatpush1.bf16.msra.mxu0 %v250
  %1709 = vmatprep.subr.bf16.mxu0 %v254
  %1710 = vmatpush1.bf16.msra.mxu0 %v253
  %1711 = vmatprep.subr.bf16.mxu0 %v257
  %1712 = vmatpush1.bf16.msra.mxu0 %v256
  %1713 = vmatprep.subr.bf16.mxu0 %v260
  %1714 = vmatpush1.bf16.msra.mxu0 %v259
  %1715 = vmatprep.subr.bf16.mxu0 %v263
  %1716 = vmatpush1.bf16.msra.mxu0 %v262
  %1717 = vmatprep.subr.bf16.mxu0 %v266
  %1718 = vmatpush1.bf16.msra.mxu0 %v265
  %1719 = vmatprep.subr.bf16.mxu0 %v269
  %1720 = vmatpush1.bf16.msra.mxu0 %v268
  %1721 = vmatprep.subr.bf16.mxu0 %v272
  %1722 = vmatpush1.bf16.msra.mxu0 %v271
  %1723 = vmatprep.subr.bf16.mxu0 0
  %1724 = vmatpush1.bf16.msra.mxu0 0
  %1725 = vmatprep.subr.bf16.mxu0 0
  %1726 = vmatpush1.bf16.msra.mxu0 0
  %1727 = vmatprep.subr.bf16.mxu0 0
  %1728 = vmatpush1.bf16.msra.mxu0 0
  %1729 = vmatprep.subr.bf16.mxu0 0
  %1730 = vmatpush1.bf16.msra.mxu0 0
  %1731 = vmatprep.subr.bf16.mxu0 0
  %1732 = vmatpush1.bf16.msra.mxu0 0
  %1733 = vmatprep.subr.bf16.mxu0 0
  %1734 = vmatpush1.bf16.msra.mxu0 0
  %1735 = vmatprep.subr.bf16.mxu0 0
  %1736 = vmatpush1.bf16.msra.mxu0 0
  %1737 = vmatprep.subr.bf16.mxu0 0
  %1738 = vmatpush1.bf16.msra.mxu0 0
  %1739 = vmatprep.mubr.bf16.mxu0 0
  %1740 = vmatmul.mubr.bf16.gmra.mrb[0].mxu0 %v1471
  %v1741 = vpop.f32.mrb[0].mxu0
  %v1742 = vadd.f32 %v158, %v1741
  %v1743 = vpop.f32.mrb[0].mxu0
  %v1744 = vadd.f32 %v162, %v1743
  %v1745 = vpop.f32.mrb[0].mxu0
  %v1746 = vpop.f32.mrb[0].mxu0
  %1747 = vdwg.mxu0
  %1748 = vmatprep.subr.bf16.mxu0 0
  %1749 = vmatpush1.bf16.msra.mxu0 %v252
  %1750 = vmatprep.subr.bf16.mxu0 0
  %1751 = vmatpush1.bf16.msra.mxu0 %v255
  %1752 = vmatprep.subr.bf16.mxu0 0
  %1753 = vmatpush1.bf16.msra.mxu0 %v258
  %1754 = vmatprep.subr.bf16.mxu0 0
  %1755 = vmatpush1.bf16.msra.mxu0 %v261
  %1756 = vmatprep.subr.bf16.mxu0 0
  %1757 = vmatpush1.bf16.msra.mxu0 %v264
  %1758 = vmatprep.subr.bf16.mxu0 0
  %1759 = vmatpush1.bf16.msra.mxu0 %v267
  %1760 = vmatprep.subr.bf16.mxu0 0
  %1761 = vmatpush1.bf16.msra.mxu0 %v270
  %1762 = vmatprep.subr.bf16.mxu0 0
  %1763 = vmatpush1.bf16.msra.mxu0 %v273
  %1764 = vmatprep.subr.bf16.mxu0 0
  %1765 = vmatpush1.bf16.msra.mxu0 0
  %1766 = vmatprep.subr.bf16.mxu0 0
  %1767 = vmatpush1.bf16.msra.mxu0 0
  %1768 = vmatprep.subr.bf16.mxu0 0
  %1769 = vmatpush1.bf16.msra.mxu0 0
  %1770 = vmatprep.subr.bf16.mxu0 0
  %1771 = vmatpush1.bf16.msra.mxu0 0
  %1772 = vmatprep.subr.bf16.mxu0 0
  %1773 = vmatpush1.bf16.msra.mxu0 0
  %1774 = vmatprep.subr.bf16.mxu0 0
  %1775 = vmatpush1.bf16.msra.mxu0 0
  %1776 = vmatprep.subr.bf16.mxu0 0
  %1777 = vmatpush1.bf16.msra.mxu0 0
  %1778 = vmatprep.subr.bf16.mxu0 0
  %1779 = vmatpush1.bf16.msra.mxu0 0
  %1780 = vmatprep.mubr.bf16.mxu0 0
  %1781 = vmatmul.mubr.bf16.gmra.mrb[0].mxu0 %v1471
  %v1782 = vpop.f32.mrb[0].mxu0
  %v1783 = vadd.f32 %v166, %v1782
  %v1784 = vpop.f32.mrb[0].mxu0
  %v1785 = vpop.f32.mrb[0].mxu0
  %v1786 = vpop.f32.mrb[0].mxu0
  %1787 = vdwg.mxu0
  %v1788 = vadd.f32 %v1704, %v1742
  %v1789 = vxor.u32 %v1788, 2147483648
  %v1790 = vmul.f32 %v1789, 1.442695
  %v1791 = vpow.pop %v1790
  %v1792 = vadd.f32 %v1791, 1.0
  %v1793 = vrcp.pop %v1792
  %v1794 = vmul.f32 1.0, %v1793
  %v1795 = vadd.f32 %v1705, %v1744
  %v1796 = vxor.u32 %v1795, 2147483648
  %v1797 = vmul.f32 %v1796, 1.442695
  %v1798 = vpow.pop %v1797
  %v1799 = vadd.f32 %v1798, 1.0
  %v1800 = vrcp.pop %v1799
  %v1801 = vmul.f32 1.0, %v1800
  %v1802 = vmul.f32 %v1794, %v1783
  %v1803 = vadd.f32 %v1706, %v1802
  %v1804 = vtanh.pop %v1803
  %v1805 = vsub.f32 1.0, %v1801
  %v1806 = vmul.f32 %v1805, %v1804
  %v1807 = vmul.f32 %v1801, %v1470
  %v1808 = vadd.f32 %v1806, %v1807
  %v1809 = vpack.c.bf16 %v1808, %v1808
  %1810 = vmatprep.subr.bf16.mxu0 %v499
  %1811 = vmatpush1.bf16.msra.mxu0 %v498
  %1812 = vmatprep.subr.bf16.mxu0 %v503
  %1813 = vmatpush1.bf16.msra.mxu0 %v502
  %1814 = vmatprep.subr.bf16.mxu0 %v507
  %1815 = vmatpush1.bf16.msra.mxu0 %v506
  %1816 = vmatprep.subr.bf16.mxu0 %v511
  %1817 = vmatpush1.bf16.msra.mxu0 %v510
  %1818 = vmatprep.subr.bf16.mxu0 %v515
  %1819 = vmatpush1.bf16.msra.mxu0 %v514
  %1820 = vmatprep.subr.bf16.mxu0 %v519
  %1821 = vmatpush1.bf16.msra.mxu0 %v518
  %1822 = vmatprep.subr.bf16.mxu0 %v523
  %1823 = vmatpush1.bf16.msra.mxu0 %v522
  %1824 = vmatprep.subr.bf16.mxu0 %v527
  %1825 = vmatpush1.bf16.msra.mxu0 %v526
  %1826 = vmatprep.subr.bf16.mxu0 0
  %1827 = vmatpush1.bf16.msra.mxu0 0
  %1828 = vmatprep.subr.bf16.mxu0 0
  %1829 = vmatpush1.bf16.msra.mxu0 0
  %1830 = vmatprep.subr.bf16.mxu0 0
  %1831 = vmatpush1.bf16.msra.mxu0 0
  %1832 = vmatprep.subr.bf16.mxu0 0
  %1833 = vmatpush1.bf16.msra.mxu0 0
  %1834 = vmatprep.subr.bf16.mxu0 0
  %1835 = vmatpush1.bf16.msra.mxu0 0
  %1836 = vmatprep.subr.bf16.mxu0 0
  %1837 = vmatpush1.bf16.msra.mxu0 0
  %1838 = vmatprep.subr.bf16.mxu0 0
  %1839 = vmatpush1.bf16.msra.mxu0 0
  %1840 = vmatprep.subr.bf16.mxu0 0
  %1841 = vmatpush1.bf16.msra.mxu0 0
  %1842 = vmatprep.mubr.bf16.mxu0 0
  %1843 = vmatmul.mubr.bf16.gmra.mrb[0].mxu0 %v1659
  %v1844 = vpop.f32.mrb[0].mxu0
  %v1845 = vadd.f32 0.0, %v1844
  %v1846 = vpop.f32.mrb[0].mxu0
  %v1847 = vadd.f32 0.0, %v1846
  %v1848 = vpop.f32.mrb[0].mxu0
  %v1849 = vpop.f32.mrb[0].mxu0
  %1850 = vdwg.mxu0
  %1851 = vmatprep.subr.bf16.mxu0 %v501
  %1852 = vmatpush1.bf16.msra.mxu0 %v500
  %1853 = vmatprep.subr.bf16.mxu0 %v505
  %1854 = vmatpush1.bf16.msra.mxu0 %v504
  %1855 = vmatprep.subr.bf16.mxu0 %v509
  %1856 = vmatpush1.bf16.msra.mxu0 %v508
  %1857 = vmatprep.subr.bf16.mxu0 %v513
  %1858 = vmatpush1.bf16.msra.mxu0 %v512
  %1859 = vmatprep.subr.bf16.mxu0 %v517
  %1860 = vmatpush1.bf16.msra.mxu0 %v516
  %1861 = vmatprep.subr.bf16.mxu0 %v521
  %1862 = vmatpush1.bf16.msra.mxu0 %v520
  %1863 = vmatprep.subr.bf16.mxu0 %v525
  %1864 = vmatpush1.bf16.msra.mxu0 %v524
  %1865 = vmatprep.subr.bf16.mxu0 %v529
  %1866 = vmatpush1.bf16.msra.mxu0 %v528
  %1867 = vmatprep.subr.bf16.mxu0 0
  %1868 = vmatpush1.bf16.msra.mxu0 0
  %1869 = vmatprep.subr.bf16.mxu0 0
  %1870 = vmatpush1.bf16.msra.mxu0 0
  %1871 = vmatprep.subr.bf16.mxu0 0
  %1872 = vmatpush1.bf16.msra.mxu0 0
  %1873 = vmatprep.subr.bf16.mxu0 0
  %1874 = vmatpush1.bf16.msra.mxu0 0
  %1875 = vmatprep.subr.bf16.mxu0 0
  %1876 = vmatpush1.bf16.msra.mxu0 0
  %1877 = vmatprep.subr.bf16.mxu0 0
  %1878 = vmatpush1.bf16.msra.mxu0 0
  %1879 = vmatprep.subr.bf16.mxu0 0
  %1880 = vmatpush1.bf16.msra.mxu0 0
  %1881 = vmatprep.subr.bf16.mxu0 0
  %1882 = vmatpush1.bf16.msra.mxu0 0
  %1883 = vmatprep.mubr.bf16.mxu0 0
  %1884 = vmatmul.mubr.bf16.gmra.mrb[0].mxu0 %v1659
  %v1885 = vpop.f32.mrb[0].mxu0
  %v1886 = vadd.f32 0.0, %v1885
  %v1887 = vpop.f32.mrb[0].mxu0
  %v1888 = vadd.f32 0.0, %v1887
  %v1889 = vpop.f32.mrb[0].mxu0
  %v1890 = vpop.f32.mrb[0].mxu0
  %1891 = vdwg.mxu0
  %1892 = vmatprep.subr.bf16.mxu0 %v741
  %1893 = vmatpush1.bf16.msra.mxu0 %v740
  %1894 = vmatprep.subr.bf16.mxu0 %v745
  %1895 = vmatpush1.bf16.msra.mxu0 %v744
  %1896 = vmatprep.subr.bf16.mxu0 %v749
  %1897 = vmatpush1.bf16.msra.mxu0 %v748
  %1898 = vmatprep.subr.bf16.mxu0 %v753
  %1899 = vmatpush1.bf16.msra.mxu0 %v752
  %1900 = vmatprep.subr.bf16.mxu0 %v757
  %1901 = vmatpush1.bf16.msra.mxu0 %v756
  %1902 = vmatprep.subr.bf16.mxu0 %v761
  %1903 = vmatpush1.bf16.msra.mxu0 %v760
  %1904 = vmatprep.subr.bf16.mxu0 %v765
  %1905 = vmatpush1.bf16.msra.mxu0 %v764
  %1906 = vmatprep.subr.bf16.mxu0 %v769
  %1907 = vmatpush1.bf16.msra.mxu0 %v768
  %1908 = vmatprep.subr.bf16.mxu0 0
  %1909 = vmatpush1.bf16.msra.mxu0 0
  %1910 = vmatprep.subr.bf16.mxu0 0
  %1911 = vmatpush1.bf16.msra.mxu0 0
  %1912 = vmatprep.subr.bf16.mxu0 0
  %1913 = vmatpush1.bf16.msra.mxu0 0
  %1914 = vmatprep.subr.bf16.mxu0 0
  %1915 = vmatpush1.bf16.msra.mxu0 0
  %1916 = vmatprep.subr.bf16.mxu0 0
  %1917 = vmatpush1.bf16.msra.mxu0 0
  %1918 = vmatprep.subr.bf16.mxu0 0
  %1919 = vmatpush1.bf16.msra.mxu0 0
  %1920 = vmatprep.subr.bf16.mxu0 0
  %1921 = vmatpush1.bf16.msra.mxu0 0
  %1922 = vmatprep.subr.bf16.mxu0 0
  %1923 = vmatpush1.bf16.msra.mxu0 0
  %1924 = vmatprep.mubr.bf16.mxu0 0
  %1925 = vmatmul.mubr.bf16.gmra.mrb[0].mxu0 %v1809
  %v1926 = vpop.f32.mrb[0].mxu0
  %v1927 = vadd.f32 %v1845, %v1926
  %v1928 = vpop.f32.mrb[0].mxu0
  %v1929 = vadd.f32 %v1847, %v1928
  %v1930 = vpop.f32.mrb[0].mxu0
  %v1931 = vpop.f32.mrb[0].mxu0
  %1932 = vdwg.mxu0
  %1933 = vmatprep.subr.bf16.mxu0 %v743
  %1934 = vmatpush1.bf16.msra.mxu0 %v742
  %1935 = vmatprep.subr.bf16.mxu0 %v747
  %1936 = vmatpush1.bf16.msra.mxu0 %v746
  %1937 = vmatprep.subr.bf16.mxu0 %v751
  %1938 = vmatpush1.bf16.msra.mxu0 %v750
  %1939 = vmatprep.subr.bf16.mxu0 %v755
  %1940 = vmatpush1.bf16.msra.mxu0 %v754
  %1941 = vmatprep.subr.bf16.mxu0 %v759
  %1942 = vmatpush1.bf16.msra.mxu0 %v758
  %1943 = vmatprep.subr.bf16.mxu0 %v763
  %1944 = vmatpush1.bf16.msra.mxu0 %v762
  %1945 = vmatprep.subr.bf16.mxu0 %v767
  %1946 = vmatpush1.bf16.msra.mxu0 %v766
  %1947 = vmatprep.subr.bf16.mxu0 %v771
  %1948 = vmatpush1.bf16.msra.mxu0 %v770
  %1949 = vmatprep.subr.bf16.mxu0 0
  %1950 = vmatpush1.bf16.msra.mxu0 0
  %1951 = vmatprep.subr.bf16.mxu0 0
  %1952 = vmatpush1.bf16.msra.mxu0 0
  %1953 = vmatprep.subr.bf16.mxu0 0
  %1954 = vmatpush1.bf16.msra.mxu0 0
  %1955 = vmatprep.subr.bf16.mxu0 0
  %1956 = vmatpush1.bf16.msra.mxu0 0
  %1957 = vmatprep.subr.bf16.mxu0 0
  %1958 = vmatpush1.bf16.msra.mxu0 0
  %1959 = vmatprep.subr.bf16.mxu0 0
  %1960 = vmatpush1.bf16.msra.mxu0 0
  %1961 = vmatprep.subr.bf16.mxu0 0
  %1962 = vmatpush1.bf16.msra.mxu0 0
  %1963 = vmatprep.subr.bf16.mxu0 0
  %1964 = vmatpush1.bf16.msra.mxu0 0
  %1965 = vmatprep.mubr.bf16.mxu0 0
  %1966 = vmatmul.mubr.bf16.gmra.mrb[0].mxu0 %v1809
  %v1967 = vpop.f32.mrb[0].mxu0
  %v1968 = vadd.f32 %v1886, %v1967
  %v1969 = vpop.f32.mrb[0].mxu0
  %v1970 = vadd.f32 %v1888, %v1969
  %v1971 = vpop.f32.mrb[0].mxu0
  %v1972 = vpop.f32.mrb[0].mxu0
  %1973 = vdwg.mxu0
  %v1974 = vadd.f32 %v1927, %v890
  %v1975 = vadd.f32 %v1929, %v894
  %v1976 = vadd.f32 %v1968, %v898
  %v1977 = vadd.f32 %v1970, %v902
  %v1978 = vxor.u32 %v1974, 2147483648
  %v1979 = vmul.f32 %v1978, 1.442695
  %v1980 = vpow.pop %v1979
  %v1981 = vadd.f32 %v1980, 1.0
  %v1982 = vrcp.pop %v1981
  %v1983 = vmul.f32 1.0, %v1982
  %v1984 = vxor.u32 %v1975, 2147483648
  %v1985 = vmul.f32 %v1984, 1.442695
  %v1986 = vpow.pop %v1985
  %v1987 = vadd.f32 %v1986, 1.0
  %v1988 = vrcp.pop %v1987
  %v1989 = vmul.f32 1.0, %v1988
  %v1990 = vmul.f32 %v1983, %v1977
  %v1991 = vadd.f32 %v1976, %v1990
  %v1992 = vtanh.pop %v1991
  %v1993 = vsub.f32 1.0, %v1989
  %v1994 = vmul.f32 %v1993, %v1992
  %v1995 = vmul.f32 %v1989, %v1658
  %v1996 = vadd.f32 %v1994, %v1995
  %v1997 = vpack.c.bf16 %v1996, %v1996
  %1998 = vmatprep.subr.bf16.mxu0 0
  %1999 = vmatpush1.bf16.msra.mxu0 %v969
  %2000 = vmatprep.subr.bf16.mxu0 0
  %2001 = vmatpush1.bf16.msra.mxu0 %v970
  %2002 = vmatprep.subr.bf16.mxu0 0
  %2003 = vmatpush1.bf16.msra.mxu0 %v971
  %2004 = vmatprep.subr.bf16.mxu0 0
  %2005 = vmatpush1.bf16.msra.mxu0 %v972
  %2006 = vmatprep.subr.bf16.mxu0 0
  %2007 = vmatpush1.bf16.msra.mxu0 %v973
  %2008 = vmatprep.subr.bf16.mxu0 0
  %2009 = vmatpush1.bf16.msra.mxu0 %v974
  %2010 = vmatprep.subr.bf16.mxu0 0
  %2011 = vmatpush1.bf16.msra.mxu0 %v975
  %2012 = vmatprep.subr.bf16.mxu0 0
  %2013 = vmatpush1.bf16.msra.mxu0 %v976
  %2014 = vmatprep.subr.bf16.mxu0 0
  %2015 = vmatpush1.bf16.msra.mxu0 0
  %2016 = vmatprep.subr.bf16.mxu0 0
  %2017 = vmatpush1.bf16.msra.mxu0 0
  %2018 = vmatprep.subr.bf16.mxu0 0
  %2019 = vmatpush1.bf16.msra.mxu0 0
  %2020 = vmatprep.subr.bf16.mxu0 0
  %2021 = vmatpush1.bf16.msra.mxu0 0
  %2022 = vmatprep.subr.bf16.mxu0 0
  %2023 = vmatpush1.bf16.msra.mxu0 0
  %2024 = vmatprep.subr.bf16.mxu0 0
  %2025 = vmatpush1.bf16.msra.mxu0 0
  %2026 = vmatprep.subr.bf16.mxu0 0
  %2027 = vmatpush1.bf16.msra.mxu0 0
  %2028 = vmatprep.subr.bf16.mxu0 0
  %2029 = vmatpush1.bf16.msra.mxu0 0
  %2030 = vmatprep.mubr.bf16.mxu0 0
  %2031 = vmatmul.mubr.bf16.gmra.mrb[0].mxu0 %v1997
  %v2032 = vpop.f32.mrb[0].mxu0
  %v2033 = vadd.f32 %v935, %v2032
  %v2034 = vpop.f32.mrb[0].mxu0
  %v2035 = vpop.f32.mrb[0].mxu0
  %v2036 = vpop.f32.mrb[0].mxu0
  %2037 = vdwg.mxu0
  %v2038 = vmax.f32 %v2033, 0.0
  %s2039 = scalar_lea.vmem %s8, 24
  %2040 = vst [vmem:[%s2039] sm:$0xff] %v2038
  %2041 = vst [vmem:[%s9] sm:$0xff] %v1808
  %s2042 = scalar_lea.vmem %s9, 8
  %2043 = vst [vmem:[%s2042] sm:$0xff] %v1996
  // Predicated region
  $region34: #{encoder_rnn_forward.7} parent=0 // pred_check
    _
  $region35: #{encoder_rnn_forward.7} parent=0 // pred_check_branch
    %2045 = sbr.rel (0) target = $region37
  $region36: #{encoder_rnn_forward.7} parent=0 // pred_region
    _
  $region37: #{encoder_rnn_forward.7} parent=0 // pred_fallthru
    _
  // Predicated region
  $region38: #{encoder_rnn_forward.7} parent=0 // pred_check
    _
  $region39: #{encoder_rnn_forward.7} parent=0 // pred_check_branch
    %2047 = sbr.rel (0) target = $region41
  $region40: #{encoder_rnn_forward.7} parent=0 // pred_region
    _
  $region41: #{encoder_rnn_forward.7} parent=0 // pred_fallthru
    _
  // Predicated region
  $region42: #{encoder_rnn_forward.7} parent=0 // pred_check
    _
  $region43: #{encoder_rnn_forward.7} parent=0 // pred_check_branch
    %2049 = sbr.rel (0) target = $region45
  $region44: #{encoder_rnn_forward.7} parent=0 // pred_region
    _
  $region45: #{encoder_rnn_forward.7} parent=0 // pred_fallthru
    _
  // Predicated region
  $region46: #{encoder_rnn_forward.7} parent=0 // pred_check
    _
  $region47: #{encoder_rnn_forward.7} parent=0 // pred_check_branch
    %2051 = sbr.rel (0) target = $region49
  $region48: #{encoder_rnn_forward.7} parent=0 // pred_region
    _
  $region49: #{encoder_rnn_forward.7} parent=0 // pred_fallthru
    _

</llo_original>
